<compile_context>
chip_gen: v5e
topology: v5e:2x2
jax: 0.10.0
libtpu: 0.0.40
codegen_flags: <defaults>
</compile_context>

<pallas_src>
import functools

import jax
import jax.numpy as jnp
from jax.experimental import pallas as pl
from jax.experimental.pallas import tpu as pltpu

MIN_DEPTH = 0.1
MAX_DEPTH = 100.0
_MIN_DISP = 1.0 / MAX_DEPTH      # 0.01
_MAX_DISP = 1.0 / MIN_DEPTH      # 10.0


def _round_up(x, m):
    return (x + m - 1) // m * m


# ----------------------------------------------------------------------------
# Fused Pallas kernel: one (TH x W) depth row-tile per grid step
# ----------------------------------------------------------------------------
def _depthnet_kernel(img_hbm, w1_ref, w2_ref, b1_ref, b2_ref, o_ref,
                     buf_ref, sem_ref, *, H, W, Wp, TH, Hp, C_in, C_mid):
    """Encoder conv3x3+ReLU -> depth conv3x3 -> fused sigmoid/disp_to_depth.

    img_hbm : (B*Hp*C_in, Wp) f32  HBM   zero-padded image, rows interleaved as
                                         (batch, padded_row, channel)
    w1_ref  : (3, C_mid, 3*C_in)   VMEM  encoder weights, one (co, dy*C_in+ci)
                                         matrix per dx tap
    w2_ref  : (3, 3, C_mid)        VMEM  depth-head weights, one (dy, ci)
                                         matrix per dx tap
    b1_ref  : (C_mid, 1)           VMEM  encoder bias (lane-broadcast column)
    b2_ref  : (1,)                 SMEM  depth-head bias
    o_ref   : (1, TH, W)           VMEM  output depth rows (lane axis = W)
    buf_ref : (2, (TH+4)*C_in, Wp) VMEM  double-buffered halo row tile
    sem_ref : DMA((2,))                  per-slot DMA semaphores
    """
    tile_rows = (TH + 4) * C_in

    b = pl.program_id(0)
    r = pl.program_id(1)
    n_r = pl.num_programs(1)
    slot = r & 1

    # ---- manual halo-tile DMA, double-buffered across the sequential row axis
    def start_fetch(row_tile, dst_slot):
        start = (b * Hp + row_tile * TH) * C_in
        pltpu.make_async_copy(
            img_hbm.at[pl.ds(start, tile_rows), :],
            buf_ref.at[dst_slot],
            sem_ref.at[dst_slot],
        ).start()

    @pl.when(r == 0)                         # prime once per batch element
    def _():
        start_fetch(0, 0)

    # wait for this step's tile (issued above, or prefetched by step r-1)
    pltpu.make_async_copy(
        img_hbm.at[pl.ds(0, tile_rows), :], buf_ref.at[slot], sem_ref.at[slot],
    ).wait()

    @pl.when(r + 1 < n_r)                    # prefetch next tile (overlapped)
    def _():
        start_fetch(r + 1, 1 - slot)

    r0 = r * TH

    # feature-column validity: the depth head zero-pads the HxW *feature* map,
    # so feature columns xf = -1 (c == 0) and xf >= W (c >= W+1) must be zero.
    col = jax.lax.broadcasted_iota(jnp.int32, (1, Wp), 1)
    col_ok = jnp.logical_and(col >= 1, col <= W)

    pending = {}                             # partial conv2 sums per output row
    for fl in range(TH + 2):                 # feature rows r0-1 .. r0+TH
        yf = r0 + (fl - 1)                   # global feature row index
        row_ok = jnp.logical_and(yf >= 0, yf < H)

        # (3*C_in, Wp) im2col slab for this feature row; the (row, channel)
        # interleaved layout makes it one contiguous row range (no reshapes).
        slab = buf_ref[slot, pl.ds(fl * C_in, 3 * C_in), :]

        # ---- encoder conv3x3 (C_in -> C_mid) + ReLU on the MXU, per dx tap;
        #      the dx lane shift is a (nearly free) XLU roll.
        acc = jnp.zeros((C_mid, Wp), jnp.float32)
        for dx in range(3):
            s = slab if dx == 0 else pltpu.roll(slab, Wp - dx, axis=1)
            acc = acc + jnp.dot(w1_ref[dx], s,
                                preferred_element_type=jnp.float32)
        feat = jnp.maximum(acc + b1_ref[...], 0.0)
        feat = jnp.where(jnp.logical_and(row_ok, col_ok), feat, 0.0)

        # ---- depth-head conv3x3 (C_mid -> 1) on the MXU: 3 dy rows per dx tap
        c2 = jnp.zeros((3, Wp), jnp.float32)
        for dx in range(3):
            f = feat if dx == 0 else pltpu.roll(feat, Wp - dx, axis=1)
            c2 = c2 + jnp.dot(w2_ref[dx], f,
                              preferred_element_type=jnp.float32)

        # scatter the 3 dy contributions to the output rows they belong to;
        # each output row is stored exactly once, when its last tap arrives.
        for dy in range(3):
            ro = fl - dy
            if 0 <= ro < TH:
                contrib = c2[dy, :W]
                pending[ro] = contrib if ro not in pending else pending[ro] + contrib
                if dy == 2:                  # row complete -> single store
                    o_ref[0, ro, :] = pending.pop(ro)

    # ---- fused sigmoid + disp_to_depth epilogue (one EUP exp + one divide):
    #      depth = 1/(dmin + (dmax-dmin)*sigmoid(z)) = (1+e^-z)/(dmax + dmin*e^-z)
    z = o_ref[0, :, :] + b2_ref[0]
    t = jnp.exp(-jnp.maximum(z, -60.0))      # clamp avoids inf/inf for huge -z
    o_ref[0, :, :] = (1.0 + t) / (_MAX_DISP + _MIN_DISP * t)


# ----------------------------------------------------------------------------
# Wrapper
# ----------------------------------------------------------------------------
def depthnet_forward(img_nchw, params):
    """img: (B, C_in, H, W) float32 -> depth: (B, 1, H, W) float32."""
    B, C_in, H, W = img_nchw.shape
    w1, b1 = params["enc_w"], params["enc_b"]     # (C_mid, C_in, 3, 3), (C_mid,)
    w2, b2 = params["dep_w"], params["dep_b"]     # (1, C_mid, 3, 3), (1,)
    C_mid = w1.shape[0]

    TH = 8 if H <= 8 else 16                      # cap tile height (perf review)
    H_pad = _round_up(H, TH)                      # pad H instead of TH=H fallback
    n_row_tiles = H_pad // TH
    Hp = H_pad + 4                                # +2 halo rows top & bottom
    Wp = _round_up(W + 4, 128)                    # lane-dense working width

    x = img_nchw.astype(jnp.float32)
    x = jnp.pad(x, ((0, 0), (0, 0),
                    (2, 2 + (H_pad - H)),         # conv halo + height padding
                    (2, Wp - W - 2)))             # conv halo + lane padding
    # interleave (row, channel) so each im2col slab is a contiguous row range
    img2d = x.transpose(0, 2, 1, 3).reshape(B * Hp * C_in, Wp)

    # per-dx weight matrices; K axis ordered (dy, ci) to match the slab rows
    w1_dx = jnp.transpose(w1.astype(jnp.float32), (3, 0, 2, 1)).reshape(
        3, C_mid, 3 * C_in)                                    # (dx, co, dy*C_in+ci)
    w2_dx = jnp.transpose(w2[0].astype(jnp.float32), (2, 1, 0))  # (dx, dy, ci)
    b1_col = b1.astype(jnp.float32).reshape(C_mid, 1)
    b2_s = b2.astype(jnp.float32).reshape(1)

    kernel = functools.partial(_depthnet_kernel, H=H, W=W, Wp=Wp, TH=TH,
                               Hp=Hp, C_in=C_in, C_mid=C_mid)

    depth = pl.pallas_call(
        kernel,
        out_shape=jax.ShapeDtypeStruct((B, H_pad, W), jnp.float32),
        grid=(B, n_row_tiles),
        in_specs=[
            pl.BlockSpec(memory_space=pl.ANY),                       # image (HBM)
            pl.BlockSpec((3, C_mid, 3 * C_in), lambda b, r: (0, 0, 0)),
            pl.BlockSpec((3, 3, C_mid), lambda b, r: (0, 0, 0)),
            pl.BlockSpec((C_mid, 1), lambda b, r: (0, 0)),
            pl.BlockSpec(memory_space=pltpu.MemorySpace.SMEM),       # b2 scalar
        ],
        out_specs=pl.BlockSpec((1, TH, W), lambda b, r: (b, r, 0)),
        scratch_shapes=[
            pltpu.VMEM((2, (TH + 4) * C_in, Wp), jnp.float32),       # halo tiles
            pltpu.SemaphoreType.DMA((2,)),
        ],
        compiler_params=pltpu.CompilerParams(
            # batch axis may be sharded across cores (v7x megacore); the row
            # axis is sequential per batch element so cross-step prefetch and
            # slot reuse are legal on every generation.
            dimension_semantics=("parallel", "arbitrary"),
            vmem_limit_bytes=48 * 1024 * 1024,   # v7x-safe; actual use is tiny
        ),
    )(img2d, w1_dx, w2_dx, b1_col, b2_s)

    return depth[:, :H, :][:, None, :, :]         # (B, 1, H, W) NCHW


def init_params(key):
    k1, k2, k3, k4 = jax.random.split(key, 4)
    return {
        "enc_w": 0.1 * jax.random.normal(k1, (16, 3, 3, 3), jnp.float32),
        "enc_b": 0.1 * jax.random.normal(k2, (16,), jnp.float32),
        "dep_w": 0.1 * jax.random.normal(k3, (1, 16, 3, 3), jnp.float32),
        "dep_b": 0.1 * jax.random.normal(k4, (1,), jnp.float32),
    }


# ----------------------------------------------------------------------------
# Pure-JAX reference (sanity check)
# ----------------------------------------------------------------------------
def _reference(img_nchw, params):
    def conv(x, w, b):
        return jax.lax.conv_general_dilated(
            x, w, (1, 1), ((1, 1), (1, 1)),
            dimension_numbers=("NCHW", "OIHW", "NCHW")) + b[None, :, None, None]

    feat = jnp.maximum(conv(img_nchw, params["enc_w"], params["enc_b"]), 0.0)
    disp = jax.nn.sigmoid(conv(feat, params["dep_w"], params["dep_b"]))
    return 1.0 / (_MIN_DISP + (_MAX_DISP - _MIN_DISP) * disp)


if __name__ == "__main__":
    key = jax.random.PRNGKey(0)
    kp, kx = jax.random.split(key)
    params = init_params(kp)
    # small but non-trivial: H=40 exercises H padding + multiple row tiles,
    # W=24 exercises lane padding; B=2 exercises the batch grid axis.
    img = jax.random.uniform(kx, (2, 3, 40, 24), jnp.float32)

    depth = jax.jit(depthnet_forward)(img, params)
    depth = jax.block_until_ready(depth)

    ref = _reference(img, params)
    assert depth.shape == (2, 1, 40, 24)
    # Tolerance 2e-3: the fused kernel accumulates the 3x3 convs via MXU f32
    # matmuls (default matmul precision), the reference via XLA's conv.
    err = float(jnp.max(jnp.abs(depth - ref)))
    assert jnp.allclose(depth, ref, rtol=2e-3, atol=2e-3), f"mismatch {err}"

    print("KERNEL_OK")
</pallas_src>

<mosaic_0001>
module attributes {stable_mosaic.version = 11 : i64} {
  func.func @_depthnet_kernel(%arg0: i32, %arg1: i32, %arg2: memref<312x128xf32, #tpu.memory_space<any>>, %arg3: memref<3x16x9xf32, #tpu.memory_space<vmem>>, %arg4: memref<3x3x16xf32, #tpu.memory_space<vmem>>, %arg5: memref<16x1xf32, #tpu.memory_space<vmem>>, %arg6: memref<1xf32, #tpu.memory_space<smem>>, %arg7: memref<1x16x24xf32, #tpu.memory_space<vmem>>, %arg8: memref<2x60x128xf32, #tpu.memory_space<vmem>>, %arg9: memref<2x!tpu.dma_semaphore, #tpu.memory_space<semaphore_mem>>) attributes {dimension_semantics = [#tpu.dimension_semantics<parallel>, #tpu.dimension_semantics<arbitrary>], iteration_bounds = array<i64: 2, 3>, scalar_prefetch = 0 : i64, scratch_operands = 2 : i64, tpu.core_type = #tpu.core_type<tc>, window_params = [{}, {pipeline_mode = #tpu.pipeline_mode<synchronous>, transform_indices = @transform_1, window_bounds = array<i64: 3, 16, 9>}, {pipeline_mode = #tpu.pipeline_mode<synchronous>, transform_indices = @transform_2, window_bounds = array<i64: 3, 3, 16>}, {pipeline_mode = #tpu.pipeline_mode<synchronous>, transform_indices = @transform_3, window_bounds = array<i64: 16, 1>}, {transform_indices = @transform_4, window_bounds = array<i64: 1>}, {transform_indices = @transform_5, window_bounds = array<i64: 1, 16, 24>}]} {
    %c1_i32 = arith.constant 1 : i32
    %0 = arith.andi %arg1, %c1_i32 : i32
    %c0_i32 = arith.constant 0 : i32
    %1 = arith.cmpi eq, %arg1, %c0_i32 : i32
    %2 = arith.extui %1 : i1 to i32
    %c0_i32_0 = arith.constant 0 : i32
    %3 = arith.cmpi ne, %2, %c0_i32_0 : i32
    scf.if %3 {
      %c52_i32 = arith.constant 52 : i32
      %1080 = arith.muli %arg0, %c52_i32 : i32
      %c0_i32_724 = arith.constant 0 : i32
      %1081 = arith.addi %1080, %c0_i32_724 : i32
      %c3_i32_725 = arith.constant 3 : i32
      %1082 = arith.muli %1081, %c3_i32_725 : i32
      %c0_i32_726 = arith.constant 0 : i32
      %c0_i32_727 = arith.constant 0 : i32
      %c0_i32_728 = arith.constant 0 : i32
      %1083 = tpu.memref_slice %arg2[%1082, %c0_i32_728] : memref<312x128xf32, #tpu.memory_space<any>> -> memref<60x128xf32, #tpu.memory_space<any>>
      %c0_i32_729 = arith.constant 0 : i32
      %c0_i32_730 = arith.constant 0 : i32
      %1084 = tpu.memref_slice %arg8[%c0_i32_726, %c0_i32_729, %c0_i32_730] : memref<2x60x128xf32, #tpu.memory_space<vmem>> -> memref<1x60x128xf32, #tpu.memory_space<vmem>>
      %1085 = tpu.memref_squeeze %1084 : memref<1x60x128xf32, #tpu.memory_space<vmem>> -> memref<60x128xf32, #tpu.memory_space<vmem>>
      %1086 = tpu.memref_slice %arg9[%c0_i32_727] : memref<2x!tpu.dma_semaphore, #tpu.memory_space<semaphore_mem>> -> memref<1x!tpu.dma_semaphore, #tpu.memory_space<semaphore_mem>>
      %1087 = tpu.memref_squeeze %1086 : memref<1x!tpu.dma_semaphore, #tpu.memory_space<semaphore_mem>> -> memref<!tpu.dma_semaphore, #tpu.memory_space<semaphore_mem>>
      tpu.enqueue_dma source(%1083 : memref<60x128xf32, #tpu.memory_space<any>>) target(%1085 : memref<60x128xf32, #tpu.memory_space<vmem>>) target_semaphore(%1087 : memref<!tpu.dma_semaphore, #tpu.memory_space<semaphore_mem>>)
    } else {
    }
    %c0_i32_1 = arith.constant 0 : i32
    %c0_i32_2 = arith.constant 0 : i32
    %4 = tpu.memref_slice %arg2[%c0_i32_1, %c0_i32_2] : memref<312x128xf32, #tpu.memory_space<any>> -> memref<60x128xf32, #tpu.memory_space<any>>
    %c0_i32_3 = arith.constant 0 : i32
    %c0_i32_4 = arith.constant 0 : i32
    %5 = tpu.memref_slice %arg8[%0, %c0_i32_3, %c0_i32_4] : memref<2x60x128xf32, #tpu.memory_space<vmem>> -> memref<1x60x128xf32, #tpu.memory_space<vmem>>
    %6 = tpu.memref_squeeze %5 : memref<1x60x128xf32, #tpu.memory_space<vmem>> -> memref<60x128xf32, #tpu.memory_space<vmem>>
    %7 = tpu.memref_slice %arg9[%0] : memref<2x!tpu.dma_semaphore, #tpu.memory_space<semaphore_mem>> -> memref<1x!tpu.dma_semaphore, #tpu.memory_space<semaphore_mem>>
    %8 = tpu.memref_squeeze %7 : memref<1x!tpu.dma_semaphore, #tpu.memory_space<semaphore_mem>> -> memref<!tpu.dma_semaphore, #tpu.memory_space<semaphore_mem>>
    tpu.wait_dma2 semaphore(%8 : memref<!tpu.dma_semaphore, #tpu.memory_space<semaphore_mem>>) src(%4 : memref<60x128xf32, #tpu.memory_space<any>>) dst(%6 : memref<60x128xf32, #tpu.memory_space<vmem>>)
    %c1_i32_5 = arith.constant 1 : i32
    %9 = arith.addi %arg1, %c1_i32_5 : i32
    %c3_i32 = arith.constant 3 : i32
    %10 = arith.cmpi slt, %9, %c3_i32 : i32
    %11 = arith.extui %10 : i1 to i32
    %c0_i32_6 = arith.constant 0 : i32
    %12 = arith.cmpi ne, %11, %c0_i32_6 : i32
    scf.if %12 {
      %c1_i32_724 = arith.constant 1 : i32
      %1080 = arith.addi %arg1, %c1_i32_724 : i32
      %c1_i32_725 = arith.constant 1 : i32
      %1081 = arith.subi %c1_i32_725, %0 : i32
      %c52_i32 = arith.constant 52 : i32
      %1082 = arith.muli %arg0, %c52_i32 : i32
      %c16_i32_726 = arith.constant 16 : i32
      %1083 = arith.muli %1080, %c16_i32_726 : i32
      %1084 = arith.addi %1082, %1083 : i32
      %c3_i32_727 = arith.constant 3 : i32
      %1085 = arith.muli %1084, %c3_i32_727 : i32
      %c0_i32_728 = arith.constant 0 : i32
      %1086 = tpu.memref_slice %arg2[%1085, %c0_i32_728] : memref<312x128xf32, #tpu.memory_space<any>> -> memref<60x128xf32, #tpu.memory_space<any>>
      %c0_i32_729 = arith.constant 0 : i32
      %c0_i32_730 = arith.constant 0 : i32
      %1087 = tpu.memref_slice %arg8[%1081, %c0_i32_729, %c0_i32_730] : memref<2x60x128xf32, #tpu.memory_space<vmem>> -> memref<1x60x128xf32, #tpu.memory_space<vmem>>
      %1088 = tpu.memref_squeeze %1087 : memref<1x60x128xf32, #tpu.memory_space<vmem>> -> memref<60x128xf32, #tpu.memory_space<vmem>>
      %1089 = tpu.memref_slice %arg9[%1081] : memref<2x!tpu.dma_semaphore, #tpu.memory_space<semaphore_mem>> -> memref<1x!tpu.dma_semaphore, #tpu.memory_space<semaphore_mem>>
      %1090 = tpu.memref_squeeze %1089 : memref<1x!tpu.dma_semaphore, #tpu.memory_space<semaphore_mem>> -> memref<!tpu.dma_semaphore, #tpu.memory_space<semaphore_mem>>
      tpu.enqueue_dma source(%1086 : memref<60x128xf32, #tpu.memory_space<any>>) target(%1088 : memref<60x128xf32, #tpu.memory_space<vmem>>) target_semaphore(%1090 : memref<!tpu.dma_semaphore, #tpu.memory_space<semaphore_mem>>)
    } else {
    }
    %c16_i32 = arith.constant 16 : i32
    %13 = arith.muli %arg1, %c16_i32 : i32
    %14 = tpu.iota {dimensions = array<i32: 1>} : vector<1x128xi32>
    %c1_i32_7 = arith.constant 1 : i32
    %15 = vector.broadcast %c1_i32_7 : i32 to vector<1x128xi32>
    %16 = arith.cmpi sge, %14, %15 : vector<1x128xi32>
    %c24_i32 = arith.constant 24 : i32
    %17 = vector.broadcast %c24_i32 : i32 to vector<1x128xi32>
    %18 = arith.cmpi sle, %14, %17 : vector<1x128xi32>
    %19 = arith.andi %16, %18 : vector<1x128xi1>
    %c-1_i32 = arith.constant -1 : i32
    %20 = arith.addi %13, %c-1_i32 : i32
    %c0_i32_8 = arith.constant 0 : i32
    %21 = arith.cmpi sge, %20, %c0_i32_8 : i32
    %c40_i32 = arith.constant 40 : i32
    %22 = arith.cmpi slt, %20, %c40_i32 : i32
    %23 = arith.andi %21, %22 : i1
    %24 = arith.index_cast %0 : i32 to index
    %c0 = arith.constant 0 : index
    %c0_9 = arith.constant 0 : index
    %25 = vector.load %arg8[%24, %c0, %c0_9] : memref<2x60x128xf32, #tpu.memory_space<vmem>>, vector<1x9x128xf32>
    %26 = vector.shape_cast %25 : vector<1x9x128xf32> to vector<9x128xf32>
    %cst = arith.constant 0.000000e+00 : f32
    %27 = vector.broadcast %cst : f32 to vector<16x128xf32>
    %c0_10 = arith.constant 0 : index
    %c0_11 = arith.constant 0 : index
    %c0_12 = arith.constant 0 : index
    %28 = vector.load %arg3[%c0_10, %c0_11, %c0_12] : memref<3x16x9xf32, #tpu.memory_space<vmem>>, vector<1x16x9xf32>
    %29 = vector.shape_cast %28 : vector<1x16x9xf32> to vector<16x9xf32>
    %cst_13 = arith.constant dense<0.000000e+00> : vector<16x128xf32>
    %30 = tpu.matmul %29, %26, %cst_13 {dimension_numbers = #tpu.dot_dimension_numbers<[1], [0], [0], [1], [0, 0, 1, 1], [], []>} : vector<16x9xf32>, vector<9x128xf32>, vector<16x128xf32> -> vector<16x128xf32>
    %31 = arith.addf %27, %30 : vector<16x128xf32>
    %c127_i32 = arith.constant 127 : i32
    %32 = tpu.dynamic_rotate %26 by %c127_i32 dim 1 : vector<9x128xf32>, i32 -> vector<9x128xf32>
    %c1 = arith.constant 1 : index
    %c0_14 = arith.constant 0 : index
    %c0_15 = arith.constant 0 : index
    %33 = vector.load %arg3[%c1, %c0_14, %c0_15] : memref<3x16x9xf32, #tpu.memory_space<vmem>>, vector<1x16x9xf32>
    %34 = vector.shape_cast %33 : vector<1x16x9xf32> to vector<16x9xf32>
    %cst_16 = arith.constant dense<0.000000e+00> : vector<16x128xf32>
    %35 = tpu.matmul %34, %32, %cst_16 {dimension_numbers = #tpu.dot_dimension_numbers<[1], [0], [0], [1], [0, 0, 1, 1], [], []>} : vector<16x9xf32>, vector<9x128xf32>, vector<16x128xf32> -> vector<16x128xf32>
    %36 = arith.addf %31, %35 : vector<16x128xf32>
    %c126_i32 = arith.constant 126 : i32
    %37 = tpu.dynamic_rotate %26 by %c126_i32 dim 1 : vector<9x128xf32>, i32 -> vector<9x128xf32>
    %c2 = arith.constant 2 : index
    %c0_17 = arith.constant 0 : index
    %c0_18 = arith.constant 0 : index
    %38 = vector.load %arg3[%c2, %c0_17, %c0_18] : memref<3x16x9xf32, #tpu.memory_space<vmem>>, vector<1x16x9xf32>
    %39 = vector.shape_cast %38 : vector<1x16x9xf32> to vector<16x9xf32>
    %cst_19 = arith.constant dense<0.000000e+00> : vector<16x128xf32>
    %40 = tpu.matmul %39, %37, %cst_19 {dimension_numbers = #tpu.dot_dimension_numbers<[1], [0], [0], [1], [0, 0, 1, 1], [], []>} : vector<16x9xf32>, vector<9x128xf32>, vector<16x128xf32> -> vector<16x128xf32>
    %41 = arith.addf %36, %40 : vector<16x128xf32>
    %c0_20 = arith.constant 0 : index
    %c0_21 = arith.constant 0 : index
    %42 = vector.load %arg5[%c0_20, %c0_21] : memref<16x1xf32, #tpu.memory_space<vmem>>, vector<16x1xf32>
    %43 = vector.broadcast %42 : vector<16x1xf32> to vector<16x128xf32>
    %44 = arith.addf %41, %43 : vector<16x128xf32>
    %cst_22 = arith.constant 0.000000e+00 : f32
    %45 = vector.broadcast %cst_22 : f32 to vector<16x128xf32>
    %46 = arith.maximumf %44, %45 : vector<16x128xf32>
    %47 = vector.broadcast %23 : i1 to vector<1x128xi1>
    %48 = arith.andi %47, %19 : vector<1x128xi1>
    %cst_23 = arith.constant 0.000000e+00 : f32
    %49 = vector.shape_cast %48 : vector<1x128xi1> to vector<1x128xi1>
    %50 = vector.broadcast %49 : vector<1x128xi1> to vector<16x128xi1>
    %51 = vector.broadcast %cst_23 : f32 to vector<16x128xf32>
    %52 = arith.select %50, %46, %51 : vector<16x128xi1>, vector<16x128xf32>
    %cst_24 = arith.constant 0.000000e+00 : f32
    %53 = vector.broadcast %cst_24 : f32 to vector<3x128xf32>
    %c0_25 = arith.constant 0 : index
    %c0_26 = arith.constant 0 : index
    %c0_27 = arith.constant 0 : index
    %54 = vector.load %arg4[%c0_25, %c0_26, %c0_27] : memref<3x3x16xf32, #tpu.memory_space<vmem>>, vector<1x3x16xf32>
    %55 = vector.shape_cast %54 : vector<1x3x16xf32> to vector<3x16xf32>
    %cst_28 = arith.constant dense<0.000000e+00> : vector<3x128xf32>
    %56 = tpu.matmul %55, %52, %cst_28 {dimension_numbers = #tpu.dot_dimension_numbers<[1], [0], [0], [1], [0, 0, 1, 1], [], []>} : vector<3x16xf32>, vector<16x128xf32>, vector<3x128xf32> -> vector<3x128xf32>
    %57 = arith.addf %53, %56 : vector<3x128xf32>
    %c127_i32_29 = arith.constant 127 : i32
    %58 = tpu.dynamic_rotate %52 by %c127_i32_29 dim 1 : vector<16x128xf32>, i32 -> vector<16x128xf32>
    %c1_30 = arith.constant 1 : index
    %c0_31 = arith.constant 0 : index
    %c0_32 = arith.constant 0 : index
    %59 = vector.load %arg4[%c1_30, %c0_31, %c0_32] : memref<3x3x16xf32, #tpu.memory_space<vmem>>, vector<1x3x16xf32>
    %60 = vector.shape_cast %59 : vector<1x3x16xf32> to vector<3x16xf32>
    %cst_33 = arith.constant dense<0.000000e+00> : vector<3x128xf32>
    %61 = tpu.matmul %60, %58, %cst_33 {dimension_numbers = #tpu.dot_dimension_numbers<[1], [0], [0], [1], [0, 0, 1, 1], [], []>} : vector<3x16xf32>, vector<16x128xf32>, vector<3x128xf32> -> vector<3x128xf32>
    %62 = arith.addf %57, %61 : vector<3x128xf32>
    %c126_i32_34 = arith.constant 126 : i32
    %63 = tpu.dynamic_rotate %52 by %c126_i32_34 dim 1 : vector<16x128xf32>, i32 -> vector<16x128xf32>
    %c2_35 = arith.constant 2 : index
    %c0_36 = arith.constant 0 : index
    %c0_37 = arith.constant 0 : index
    %64 = vector.load %arg4[%c2_35, %c0_36, %c0_37] : memref<3x3x16xf32, #tpu.memory_space<vmem>>, vector<1x3x16xf32>
    %65 = vector.shape_cast %64 : vector<1x3x16xf32> to vector<3x16xf32>
    %cst_38 = arith.constant dense<0.000000e+00> : vector<3x128xf32>
    %66 = tpu.matmul %65, %63, %cst_38 {dimension_numbers = #tpu.dot_dimension_numbers<[1], [0], [0], [1], [0, 0, 1, 1], [], []>} : vector<3x16xf32>, vector<16x128xf32>, vector<3x128xf32> -> vector<3x128xf32>
    %67 = arith.addf %62, %66 : vector<3x128xf32>
    %68 = vector.extract_strided_slice %67 {offsets = [0, 0], sizes = [1, 24], strides = [1, 1]} : vector<3x128xf32> to vector<1x24xf32>
    %69 = vector.shape_cast %68 : vector<1x24xf32> to vector<24xf32>
    %c0_i32_39 = arith.constant 0 : i32
    %70 = arith.addi %13, %c0_i32_39 : i32
    %c0_i32_40 = arith.constant 0 : i32
    %71 = arith.cmpi sge, %70, %c0_i32_40 : i32
    %c40_i32_41 = arith.constant 40 : i32
    %72 = arith.cmpi slt, %70, %c40_i32_41 : i32
    %73 = arith.andi %71, %72 : i1
    %74 = arith.index_cast %0 : i32 to index
    %c3 = arith.constant 3 : index
    %c0_42 = arith.constant 0 : index
    %75 = vector.load %arg8[%74, %c3, %c0_42] : memref<2x60x128xf32, #tpu.memory_space<vmem>>, vector<1x9x128xf32>
    %76 = vector.shape_cast %75 : vector<1x9x128xf32> to vector<9x128xf32>
    %cst_43 = arith.constant 0.000000e+00 : f32
    %77 = vector.broadcast %cst_43 : f32 to vector<16x128xf32>
    %c0_44 = arith.constant 0 : index
    %c0_45 = arith.constant 0 : index
    %c0_46 = arith.constant 0 : index
    %78 = vector.load %arg3[%c0_44, %c0_45, %c0_46] : memref<3x16x9xf32, #tpu.memory_space<vmem>>, vector<1x16x9xf32>
    %79 = vector.shape_cast %78 : vector<1x16x9xf32> to vector<16x9xf32>
    %cst_47 = arith.constant dense<0.000000e+00> : vector<16x128xf32>
    %80 = tpu.matmul %79, %76, %cst_47 {dimension_numbers = #tpu.dot_dimension_numbers<[1], [0], [0], [1], [0, 0, 1, 1], [], []>} : vector<16x9xf32>, vector<9x128xf32>, vector<16x128xf32> -> vector<16x128xf32>
    %81 = arith.addf %77, %80 : vector<16x128xf32>
    %c127_i32_48 = arith.constant 127 : i32
    %82 = tpu.dynamic_rotate %76 by %c127_i32_48 dim 1 : vector<9x128xf32>, i32 -> vector<9x128xf32>
    %c1_49 = arith.constant 1 : index
    %c0_50 = arith.constant 0 : index
    %c0_51 = arith.constant 0 : index
    %83 = vector.load %arg3[%c1_49, %c0_50, %c0_51] : memref<3x16x9xf32, #tpu.memory_space<vmem>>, vector<1x16x9xf32>
    %84 = vector.shape_cast %83 : vector<1x16x9xf32> to vector<16x9xf32>
    %cst_52 = arith.constant dense<0.000000e+00> : vector<16x128xf32>
    %85 = tpu.matmul %84, %82, %cst_52 {dimension_numbers = #tpu.dot_dimension_numbers<[1], [0], [0], [1], [0, 0, 1, 1], [], []>} : vector<16x9xf32>, vector<9x128xf32>, vector<16x128xf32> -> vector<16x128xf32>
    %86 = arith.addf %81, %85 : vector<16x128xf32>
    %c126_i32_53 = arith.constant 126 : i32
    %87 = tpu.dynamic_rotate %76 by %c126_i32_53 dim 1 : vector<9x128xf32>, i32 -> vector<9x128xf32>
    %c2_54 = arith.constant 2 : index
    %c0_55 = arith.constant 0 : index
    %c0_56 = arith.constant 0 : index
    %88 = vector.load %arg3[%c2_54, %c0_55, %c0_56] : memref<3x16x9xf32, #tpu.memory_space<vmem>>, vector<1x16x9xf32>
    %89 = vector.shape_cast %88 : vector<1x16x9xf32> to vector<16x9xf32>
    %cst_57 = arith.constant dense<0.000000e+00> : vector<16x128xf32>
    %90 = tpu.matmul %89, %87, %cst_57 {dimension_numbers = #tpu.dot_dimension_numbers<[1], [0], [0], [1], [0, 0, 1, 1], [], []>} : vector<16x9xf32>, vector<9x128xf32>, vector<16x128xf32> -> vector<16x128xf32>
    %91 = arith.addf %86, %90 : vector<16x128xf32>
    %c0_58 = arith.constant 0 : index
    %c0_59 = arith.constant 0 : index
    %92 = vector.load %arg5[%c0_58, %c0_59] : memref<16x1xf32, #tpu.memory_space<vmem>>, vector<16x1xf32>
    %93 = vector.broadcast %92 : vector<16x1xf32> to vector<16x128xf32>
    %94 = arith.addf %91, %93 : vector<16x128xf32>
    %cst_60 = arith.constant 0.000000e+00 : f32
    %95 = vector.broadcast %cst_60 : f32 to vector<16x128xf32>
    %96 = arith.maximumf %94, %95 : vector<16x128xf32>
    %97 = vector.broadcast %73 : i1 to vector<1x128xi1>
    %98 = arith.andi %97, %19 : vector<1x128xi1>
    %cst_61 = arith.constant 0.000000e+00 : f32
    %99 = vector.shape_cast %98 : vector<1x128xi1> to vector<1x128xi1>
    %100 = vector.broadcast %99 : vector<1x128xi1> to vector<16x128xi1>
    %101 = vector.broadcast %cst_61 : f32 to vector<16x128xf32>
    %102 = arith.select %100, %96, %101 : vector<16x128xi1>, vector<16x128xf32>
    %cst_62 = arith.constant 0.000000e+00 : f32
    %103 = vector.broadcast %cst_62 : f32 to vector<3x128xf32>
    %c0_63 = arith.constant 0 : index
    %c0_64 = arith.constant 0 : index
    %c0_65 = arith.constant 0 : index
    %104 = vector.load %arg4[%c0_63, %c0_64, %c0_65] : memref<3x3x16xf32, #tpu.memory_space<vmem>>, vector<1x3x16xf32>
    %105 = vector.shape_cast %104 : vector<1x3x16xf32> to vector<3x16xf32>
    %cst_66 = arith.constant dense<0.000000e+00> : vector<3x128xf32>
    %106 = tpu.matmul %105, %102, %cst_66 {dimension_numbers = #tpu.dot_dimension_numbers<[1], [0], [0], [1], [0, 0, 1, 1], [], []>} : vector<3x16xf32>, vector<16x128xf32>, vector<3x128xf32> -> vector<3x128xf32>
    %107 = arith.addf %103, %106 : vector<3x128xf32>
    %c127_i32_67 = arith.constant 127 : i32
    %108 = tpu.dynamic_rotate %102 by %c127_i32_67 dim 1 : vector<16x128xf32>, i32 -> vector<16x128xf32>
    %c1_68 = arith.constant 1 : index
    %c0_69 = arith.constant 0 : index
    %c0_70 = arith.constant 0 : index
    %109 = vector.load %arg4[%c1_68, %c0_69, %c0_70] : memref<3x3x16xf32, #tpu.memory_space<vmem>>, vector<1x3x16xf32>
    %110 = vector.shape_cast %109 : vector<1x3x16xf32> to vector<3x16xf32>
    %cst_71 = arith.constant dense<0.000000e+00> : vector<3x128xf32>
    %111 = tpu.matmul %110, %108, %cst_71 {dimension_numbers = #tpu.dot_dimension_numbers<[1], [0], [0], [1], [0, 0, 1, 1], [], []>} : vector<3x16xf32>, vector<16x128xf32>, vector<3x128xf32> -> vector<3x128xf32>
    %112 = arith.addf %107, %111 : vector<3x128xf32>
    %c126_i32_72 = arith.constant 126 : i32
    %113 = tpu.dynamic_rotate %102 by %c126_i32_72 dim 1 : vector<16x128xf32>, i32 -> vector<16x128xf32>
    %c2_73 = arith.constant 2 : index
    %c0_74 = arith.constant 0 : index
    %c0_75 = arith.constant 0 : index
    %114 = vector.load %arg4[%c2_73, %c0_74, %c0_75] : memref<3x3x16xf32, #tpu.memory_space<vmem>>, vector<1x3x16xf32>
    %115 = vector.shape_cast %114 : vector<1x3x16xf32> to vector<3x16xf32>
    %cst_76 = arith.constant dense<0.000000e+00> : vector<3x128xf32>
    %116 = tpu.matmul %115, %113, %cst_76 {dimension_numbers = #tpu.dot_dimension_numbers<[1], [0], [0], [1], [0, 0, 1, 1], [], []>} : vector<3x16xf32>, vector<16x128xf32>, vector<3x128xf32> -> vector<3x128xf32>
    %117 = arith.addf %112, %116 : vector<3x128xf32>
    %118 = vector.extract_strided_slice %117 {offsets = [0, 0], sizes = [1, 24], strides = [1, 1]} : vector<3x128xf32> to vector<1x24xf32>
    %119 = vector.shape_cast %118 : vector<1x24xf32> to vector<24xf32>
    %120 = vector.extract_strided_slice %117 {offsets = [1, 0], sizes = [1, 24], strides = [1, 1]} : vector<3x128xf32> to vector<1x24xf32>
    %121 = vector.shape_cast %120 : vector<1x24xf32> to vector<24xf32>
    %122 = arith.addf %69, %121 : vector<24xf32>
    %c1_i32_77 = arith.constant 1 : i32
    %123 = arith.addi %13, %c1_i32_77 : i32
    %c0_i32_78 = arith.constant 0 : i32
    %124 = arith.cmpi sge, %123, %c0_i32_78 : i32
    %c40_i32_79 = arith.constant 40 : i32
    %125 = arith.cmpi slt, %123, %c40_i32_79 : i32
    %126 = arith.andi %124, %125 : i1
    %127 = arith.index_cast %0 : i32 to index
    %c6 = arith.constant 6 : index
    %c0_80 = arith.constant 0 : index
    %128 = vector.load %arg8[%127, %c6, %c0_80] : memref<2x60x128xf32, #tpu.memory_space<vmem>>, vector<1x9x128xf32>
    %129 = vector.shape_cast %128 : vector<1x9x128xf32> to vector<9x128xf32>
    %cst_81 = arith.constant 0.000000e+00 : f32
    %130 = vector.broadcast %cst_81 : f32 to vector<16x128xf32>
    %c0_82 = arith.constant 0 : index
    %c0_83 = arith.constant 0 : index
    %c0_84 = arith.constant 0 : index
    %131 = vector.load %arg3[%c0_82, %c0_83, %c0_84] : memref<3x16x9xf32, #tpu.memory_space<vmem>>, vector<1x16x9xf32>
    %132 = vector.shape_cast %131 : vector<1x16x9xf32> to vector<16x9xf32>
    %cst_85 = arith.constant dense<0.000000e+00> : vector<16x128xf32>
    %133 = tpu.matmul %132, %129, %cst_85 {dimension_numbers = #tpu.dot_dimension_numbers<[1], [0], [0], [1], [0, 0, 1, 1], [], []>} : vector<16x9xf32>, vector<9x128xf32>, vector<16x128xf32> -> vector<16x128xf32>
    %134 = arith.addf %130, %133 : vector<16x128xf32>
    %c127_i32_86 = arith.constant 127 : i32
    %135 = tpu.dynamic_rotate %129 by %c127_i32_86 dim 1 : vector<9x128xf32>, i32 -> vector<9x128xf32>
    %c1_87 = arith.constant 1 : index
    %c0_88 = arith.constant 0 : index
    %c0_89 = arith.constant 0 : index
    %136 = vector.load %arg3[%c1_87, %c0_88, %c0_89] : memref<3x16x9xf32, #tpu.memory_space<vmem>>, vector<1x16x9xf32>
    %137 = vector.shape_cast %136 : vector<1x16x9xf32> to vector<16x9xf32>
    %cst_90 = arith.constant dense<0.000000e+00> : vector<16x128xf32>
    %138 = tpu.matmul %137, %135, %cst_90 {dimension_numbers = #tpu.dot_dimension_numbers<[1], [0], [0], [1], [0, 0, 1, 1], [], []>} : vector<16x9xf32>, vector<9x128xf32>, vector<16x128xf32> -> vector<16x128xf32>
    %139 = arith.addf %134, %138 : vector<16x128xf32>
    %c126_i32_91 = arith.constant 126 : i32
    %140 = tpu.dynamic_rotate %129 by %c126_i32_91 dim 1 : vector<9x128xf32>, i32 -> vector<9x128xf32>
    %c2_92 = arith.constant 2 : index
    %c0_93 = arith.constant 0 : index
    %c0_94 = arith.constant 0 : index
    %141 = vector.load %arg3[%c2_92, %c0_93, %c0_94] : memref<3x16x9xf32, #tpu.memory_space<vmem>>, vector<1x16x9xf32>
    %142 = vector.shape_cast %141 : vector<1x16x9xf32> to vector<16x9xf32>
    %cst_95 = arith.constant dense<0.000000e+00> : vector<16x128xf32>
    %143 = tpu.matmul %142, %140, %cst_95 {dimension_numbers = #tpu.dot_dimension_numbers<[1], [0], [0], [1], [0, 0, 1, 1], [], []>} : vector<16x9xf32>, vector<9x128xf32>, vector<16x128xf32> -> vector<16x128xf32>
    %144 = arith.addf %139, %143 : vector<16x128xf32>
    %c0_96 = arith.constant 0 : index
    %c0_97 = arith.constant 0 : index
    %145 = vector.load %arg5[%c0_96, %c0_97] : memref<16x1xf32, #tpu.memory_space<vmem>>, vector<16x1xf32>
    %146 = vector.broadcast %145 : vector<16x1xf32> to vector<16x128xf32>
    %147 = arith.addf %144, %146 : vector<16x128xf32>
    %cst_98 = arith.constant 0.000000e+00 : f32
    %148 = vector.broadcast %cst_98 : f32 to vector<16x128xf32>
    %149 = arith.maximumf %147, %148 : vector<16x128xf32>
    %150 = vector.broadcast %126 : i1 to vector<1x128xi1>
    %151 = arith.andi %150, %19 : vector<1x128xi1>
    %cst_99 = arith.constant 0.000000e+00 : f32
    %152 = vector.shape_cast %151 : vector<1x128xi1> to vector<1x128xi1>
    %153 = vector.broadcast %152 : vector<1x128xi1> to vector<16x128xi1>
    %154 = vector.broadcast %cst_99 : f32 to vector<16x128xf32>
    %155 = arith.select %153, %149, %154 : vector<16x128xi1>, vector<16x128xf32>
    %cst_100 = arith.constant 0.000000e+00 : f32
    %156 = vector.broadcast %cst_100 : f32 to vector<3x128xf32>
    %c0_101 = arith.constant 0 : index
    %c0_102 = arith.constant 0 : index
    %c0_103 = arith.constant 0 : index
    %157 = vector.load %arg4[%c0_101, %c0_102, %c0_103] : memref<3x3x16xf32, #tpu.memory_space<vmem>>, vector<1x3x16xf32>
    %158 = vector.shape_cast %157 : vector<1x3x16xf32> to vector<3x16xf32>
    %cst_104 = arith.constant dense<0.000000e+00> : vector<3x128xf32>
    %159 = tpu.matmul %158, %155, %cst_104 {dimension_numbers = #tpu.dot_dimension_numbers<[1], [0], [0], [1], [0, 0, 1, 1], [], []>} : vector<3x16xf32>, vector<16x128xf32>, vector<3x128xf32> -> vector<3x128xf32>
    %160 = arith.addf %156, %159 : vector<3x128xf32>
    %c127_i32_105 = arith.constant 127 : i32
    %161 = tpu.dynamic_rotate %155 by %c127_i32_105 dim 1 : vector<16x128xf32>, i32 -> vector<16x128xf32>
    %c1_106 = arith.constant 1 : index
    %c0_107 = arith.constant 0 : index
    %c0_108 = arith.constant 0 : index
    %162 = vector.load %arg4[%c1_106, %c0_107, %c0_108] : memref<3x3x16xf32, #tpu.memory_space<vmem>>, vector<1x3x16xf32>
    %163 = vector.shape_cast %162 : vector<1x3x16xf32> to vector<3x16xf32>
    %cst_109 = arith.constant dense<0.000000e+00> : vector<3x128xf32>
    %164 = tpu.matmul %163, %161, %cst_109 {dimension_numbers = #tpu.dot_dimension_numbers<[1], [0], [0], [1], [0, 0, 1, 1], [], []>} : vector<3x16xf32>, vector<16x128xf32>, vector<3x128xf32> -> vector<3x128xf32>
    %165 = arith.addf %160, %164 : vector<3x128xf32>
    %c126_i32_110 = arith.constant 126 : i32
    %166 = tpu.dynamic_rotate %155 by %c126_i32_110 dim 1 : vector<16x128xf32>, i32 -> vector<16x128xf32>
    %c2_111 = arith.constant 2 : index
    %c0_112 = arith.constant 0 : index
    %c0_113 = arith.constant 0 : index
    %167 = vector.load %arg4[%c2_111, %c0_112, %c0_113] : memref<3x3x16xf32, #tpu.memory_space<vmem>>, vector<1x3x16xf32>
    %168 = vector.shape_cast %167 : vector<1x3x16xf32> to vector<3x16xf32>
    %cst_114 = arith.constant dense<0.000000e+00> : vector<3x128xf32>
    %169 = tpu.matmul %168, %166, %cst_114 {dimension_numbers = #tpu.dot_dimension_numbers<[1], [0], [0], [1], [0, 0, 1, 1], [], []>} : vector<3x16xf32>, vector<16x128xf32>, vector<3x128xf32> -> vector<3x128xf32>
    %170 = arith.addf %165, %169 : vector<3x128xf32>
    %171 = vector.extract_strided_slice %170 {offsets = [0, 0], sizes = [1, 24], strides = [1, 1]} : vector<3x128xf32> to vector<1x24xf32>
    %172 = vector.shape_cast %171 : vector<1x24xf32> to vector<24xf32>
    %173 = vector.extract_strided_slice %170 {offsets = [1, 0], sizes = [1, 24], strides = [1, 1]} : vector<3x128xf32> to vector<1x24xf32>
    %174 = vector.shape_cast %173 : vector<1x24xf32> to vector<24xf32>
    %175 = arith.addf %119, %174 : vector<24xf32>
    %176 = vector.extract_strided_slice %170 {offsets = [2, 0], sizes = [1, 24], strides = [1, 1]} : vector<3x128xf32> to vector<1x24xf32>
    %177 = vector.shape_cast %176 : vector<1x24xf32> to vector<24xf32>
    %178 = arith.addf %122, %177 : vector<24xf32>
    %c0_115 = arith.constant 0 : index
    %c0_116 = arith.constant 0 : index
    %c0_117 = arith.constant 0 : index
    %179 = vector.load %arg7[%c0_115, %c0_116, %c0_117] : memref<1x16x24xf32, #tpu.memory_space<vmem>>, vector<1x1x24xf32>
    %180 = vector.shape_cast %179 : vector<1x1x24xf32> to vector<24xf32>
    %181 = vector.shape_cast %178 : vector<24xf32> to vector<1x1x24xf32>
    tpu.vector_store %arg7[%c0_115, %c0_116, %c0_117], %181 {strides = array<i32>} : memref<1x16x24xf32, #tpu.memory_space<vmem>>, vector<1x1x24xf32>,
    %c2_i32 = arith.constant 2 : i32
    %182 = arith.addi %13, %c2_i32 : i32
    %c0_i32_118 = arith.constant 0 : i32
    %183 = arith.cmpi sge, %182, %c0_i32_118 : i32
    %c40_i32_119 = arith.constant 40 : i32
    %184 = arith.cmpi slt, %182, %c40_i32_119 : i32
    %185 = arith.andi %183, %184 : i1
    %186 = arith.index_cast %0 : i32 to index
    %c9 = arith.constant 9 : index
    %c0_120 = arith.constant 0 : index
    %187 = vector.load %arg8[%186, %c9, %c0_120] : memref<2x60x128xf32, #tpu.memory_space<vmem>>, vector<1x9x128xf32>
    %188 = vector.shape_cast %187 : vector<1x9x128xf32> to vector<9x128xf32>
    %cst_121 = arith.constant 0.000000e+00 : f32
    %189 = vector.broadcast %cst_121 : f32 to vector<16x128xf32>
    %c0_122 = arith.constant 0 : index
    %c0_123 = arith.constant 0 : index
    %c0_124 = arith.constant 0 : index
    %190 = vector.load %arg3[%c0_122, %c0_123, %c0_124] : memref<3x16x9xf32, #tpu.memory_space<vmem>>, vector<1x16x9xf32>
    %191 = vector.shape_cast %190 : vector<1x16x9xf32> to vector<16x9xf32>
    %cst_125 = arith.constant dense<0.000000e+00> : vector<16x128xf32>
    %192 = tpu.matmul %191, %188, %cst_125 {dimension_numbers = #tpu.dot_dimension_numbers<[1], [0], [0], [1], [0, 0, 1, 1], [], []>} : vector<16x9xf32>, vector<9x128xf32>, vector<16x128xf32> -> vector<16x128xf32>
    %193 = arith.addf %189, %192 : vector<16x128xf32>
    %c127_i32_126 = arith.constant 127 : i32
    %194 = tpu.dynamic_rotate %188 by %c127_i32_126 dim 1 : vector<9x128xf32>, i32 -> vector<9x128xf32>
    %c1_127 = arith.constant 1 : index
    %c0_128 = arith.constant 0 : index
    %c0_129 = arith.constant 0 : index
    %195 = vector.load %arg3[%c1_127, %c0_128, %c0_129] : memref<3x16x9xf32, #tpu.memory_space<vmem>>, vector<1x16x9xf32>
    %196 = vector.shape_cast %195 : vector<1x16x9xf32> to vector<16x9xf32>
    %cst_130 = arith.constant dense<0.000000e+00> : vector<16x128xf32>
    %197 = tpu.matmul %196, %194, %cst_130 {dimension_numbers = #tpu.dot_dimension_numbers<[1], [0], [0], [1], [0, 0, 1, 1], [], []>} : vector<16x9xf32>, vector<9x128xf32>, vector<16x128xf32> -> vector<16x128xf32>
    %198 = arith.addf %193, %197 : vector<16x128xf32>
    %c126_i32_131 = arith.constant 126 : i32
    %199 = tpu.dynamic_rotate %188 by %c126_i32_131 dim 1 : vector<9x128xf32>, i32 -> vector<9x128xf32>
    %c2_132 = arith.constant 2 : index
    %c0_133 = arith.constant 0 : index
    %c0_134 = arith.constant 0 : index
    %200 = vector.load %arg3[%c2_132, %c0_133, %c0_134] : memref<3x16x9xf32, #tpu.memory_space<vmem>>, vector<1x16x9xf32>
    %201 = vector.shape_cast %200 : vector<1x16x9xf32> to vector<16x9xf32>
    %cst_135 = arith.constant dense<0.000000e+00> : vector<16x128xf32>
    %202 = tpu.matmul %201, %199, %cst_135 {dimension_numbers = #tpu.dot_dimension_numbers<[1], [0], [0], [1], [0, 0, 1, 1], [], []>} : vector<16x9xf32>, vector<9x128xf32>, vector<16x128xf32> -> vector<16x128xf32>
    %203 = arith.addf %198, %202 : vector<16x128xf32>
    %c0_136 = arith.constant 0 : index
    %c0_137 = arith.constant 0 : index
    %204 = vector.load %arg5[%c0_136, %c0_137] : memref<16x1xf32, #tpu.memory_space<vmem>>, vector<16x1xf32>
    %205 = vector.broadcast %204 : vector<16x1xf32> to vector<16x128xf32>
    %206 = arith.addf %203, %205 : vector<16x128xf32>
    %cst_138 = arith.constant 0.000000e+00 : f32
    %207 = vector.broadcast %cst_138 : f32 to vector<16x128xf32>
    %208 = arith.maximumf %206, %207 : vector<16x128xf32>
    %209 = vector.broadcast %185 : i1 to vector<1x128xi1>
    %210 = arith.andi %209, %19 : vector<1x128xi1>
    %cst_139 = arith.constant 0.000000e+00 : f32
    %211 = vector.shape_cast %210 : vector<1x128xi1> to vector<1x128xi1>
    %212 = vector.broadcast %211 : vector<1x128xi1> to vector<16x128xi1>
    %213 = vector.broadcast %cst_139 : f32 to vector<16x128xf32>
    %214 = arith.select %212, %208, %213 : vector<16x128xi1>, vector<16x128xf32>
    %cst_140 = arith.constant 0.000000e+00 : f32
    %215 = vector.broadcast %cst_140 : f32 to vector<3x128xf32>
    %c0_141 = arith.constant 0 : index
    %c0_142 = arith.constant 0 : index
    %c0_143 = arith.constant 0 : index
    %216 = vector.load %arg4[%c0_141, %c0_142, %c0_143] : memref<3x3x16xf32, #tpu.memory_space<vmem>>, vector<1x3x16xf32>
    %217 = vector.shape_cast %216 : vector<1x3x16xf32> to vector<3x16xf32>
    %cst_144 = arith.constant dense<0.000000e+00> : vector<3x128xf32>
    %218 = tpu.matmul %217, %214, %cst_144 {dimension_numbers = #tpu.dot_dimension_numbers<[1], [0], [0], [1], [0, 0, 1, 1], [], []>} : vector<3x16xf32>, vector<16x128xf32>, vector<3x128xf32> -> vector<3x128xf32>
    %219 = arith.addf %215, %218 : vector<3x128xf32>
    %c127_i32_145 = arith.constant 127 : i32
    %220 = tpu.dynamic_rotate %214 by %c127_i32_145 dim 1 : vector<16x128xf32>, i32 -> vector<16x128xf32>
    %c1_146 = arith.constant 1 : index
    %c0_147 = arith.constant 0 : index
    %c0_148 = arith.constant 0 : index
    %221 = vector.load %arg4[%c1_146, %c0_147, %c0_148] : memref<3x3x16xf32, #tpu.memory_space<vmem>>, vector<1x3x16xf32>
    %222 = vector.shape_cast %221 : vector<1x3x16xf32> to vector<3x16xf32>
    %cst_149 = arith.constant dense<0.000000e+00> : vector<3x128xf32>
    %223 = tpu.matmul %222, %220, %cst_149 {dimension_numbers = #tpu.dot_dimension_numbers<[1], [0], [0], [1], [0, 0, 1, 1], [], []>} : vector<3x16xf32>, vector<16x128xf32>, vector<3x128xf32> -> vector<3x128xf32>
    %224 = arith.addf %219, %223 : vector<3x128xf32>
    %c126_i32_150 = arith.constant 126 : i32
    %225 = tpu.dynamic_rotate %214 by %c126_i32_150 dim 1 : vector<16x128xf32>, i32 -> vector<16x128xf32>
    %c2_151 = arith.constant 2 : index
    %c0_152 = arith.constant 0 : index
    %c0_153 = arith.constant 0 : index
    %226 = vector.load %arg4[%c2_151, %c0_152, %c0_153] : memref<3x3x16xf32, #tpu.memory_space<vmem>>, vector<1x3x16xf32>
    %227 = vector.shape_cast %226 : vector<1x3x16xf32> to vector<3x16xf32>
    %cst_154 = arith.constant dense<0.000000e+00> : vector<3x128xf32>
    %228 = tpu.matmul %227, %225, %cst_154 {dimension_numbers = #tpu.dot_dimension_numbers<[1], [0], [0], [1], [0, 0, 1, 1], [], []>} : vector<3x16xf32>, vector<16x128xf32>, vector<3x128xf32> -> vector<3x128xf32>
    %229 = arith.addf %224, %228 : vector<3x128xf32>
    %230 = vector.extract_strided_slice %229 {offsets = [0, 0], sizes = [1, 24], strides = [1, 1]} : vector<3x128xf32> to vector<1x24xf32>
    %231 = vector.shape_cast %230 : vector<1x24xf32> to vector<24xf32>
    %232 = vector.extract_strided_slice %229 {offsets = [1, 0], sizes = [1, 24], strides = [1, 1]} : vector<3x128xf32> to vector<1x24xf32>
    %233 = vector.shape_cast %232 : vector<1x24xf32> to vector<24xf32>
    %234 = arith.addf %172, %233 : vector<24xf32>
    %235 = vector.extract_strided_slice %229 {offsets = [2, 0], sizes = [1, 24], strides = [1, 1]} : vector<3x128xf32> to vector<1x24xf32>
    %236 = vector.shape_cast %235 : vector<1x24xf32> to vector<24xf32>
    %237 = arith.addf %175, %236 : vector<24xf32>
    %c0_155 = arith.constant 0 : index
    %c1_156 = arith.constant 1 : index
    %c0_157 = arith.constant 0 : index
    %238 = vector.load %arg7[%c0_155, %c1_156, %c0_157] : memref<1x16x24xf32, #tpu.memory_space<vmem>>, vector<1x1x24xf32>
    %239 = vector.shape_cast %238 : vector<1x1x24xf32> to vector<24xf32>
    %240 = vector.shape_cast %237 : vector<24xf32> to vector<1x1x24xf32>
    tpu.vector_store %arg7[%c0_155, %c1_156, %c0_157], %240 {strides = array<i32>} : memref<1x16x24xf32, #tpu.memory_space<vmem>>, vector<1x1x24xf32>,
    %c3_i32_158 = arith.constant 3 : i32
    %241 = arith.addi %13, %c3_i32_158 : i32
    %c0_i32_159 = arith.constant 0 : i32
    %242 = arith.cmpi sge, %241, %c0_i32_159 : i32
    %c40_i32_160 = arith.constant 40 : i32
    %243 = arith.cmpi slt, %241, %c40_i32_160 : i32
    %244 = arith.andi %242, %243 : i1
    %245 = arith.index_cast %0 : i32 to index
    %c12 = arith.constant 12 : index
    %c0_161 = arith.constant 0 : index
    %246 = vector.load %arg8[%245, %c12, %c0_161] : memref<2x60x128xf32, #tpu.memory_space<vmem>>, vector<1x9x128xf32>
    %247 = vector.shape_cast %246 : vector<1x9x128xf32> to vector<9x128xf32>
    %cst_162 = arith.constant 0.000000e+00 : f32
    %248 = vector.broadcast %cst_162 : f32 to vector<16x128xf32>
    %c0_163 = arith.constant 0 : index
    %c0_164 = arith.constant 0 : index
    %c0_165 = arith.constant 0 : index
    %249 = vector.load %arg3[%c0_163, %c0_164, %c0_165] : memref<3x16x9xf32, #tpu.memory_space<vmem>>, vector<1x16x9xf32>
    %250 = vector.shape_cast %249 : vector<1x16x9xf32> to vector<16x9xf32>
    %cst_166 = arith.constant dense<0.000000e+00> : vector<16x128xf32>
    %251 = tpu.matmul %250, %247, %cst_166 {dimension_numbers = #tpu.dot_dimension_numbers<[1], [0], [0], [1], [0, 0, 1, 1], [], []>} : vector<16x9xf32>, vector<9x128xf32>, vector<16x128xf32> -> vector<16x128xf32>
    %252 = arith.addf %248, %251 : vector<16x128xf32>
    %c127_i32_167 = arith.constant 127 : i32
    %253 = tpu.dynamic_rotate %247 by %c127_i32_167 dim 1 : vector<9x128xf32>, i32 -> vector<9x128xf32>
    %c1_168 = arith.constant 1 : index
    %c0_169 = arith.constant 0 : index
    %c0_170 = arith.constant 0 : index
    %254 = vector.load %arg3[%c1_168, %c0_169, %c0_170] : memref<3x16x9xf32, #tpu.memory_space<vmem>>, vector<1x16x9xf32>
    %255 = vector.shape_cast %254 : vector<1x16x9xf32> to vector<16x9xf32>
    %cst_171 = arith.constant dense<0.000000e+00> : vector<16x128xf32>
    %256 = tpu.matmul %255, %253, %cst_171 {dimension_numbers = #tpu.dot_dimension_numbers<[1], [0], [0], [1], [0, 0, 1, 1], [], []>} : vector<16x9xf32>, vector<9x128xf32>, vector<16x128xf32> -> vector<16x128xf32>
    %257 = arith.addf %252, %256 : vector<16x128xf32>
    %c126_i32_172 = arith.constant 126 : i32
    %258 = tpu.dynamic_rotate %247 by %c126_i32_172 dim 1 : vector<9x128xf32>, i32 -> vector<9x128xf32>
    %c2_173 = arith.constant 2 : index
    %c0_174 = arith.constant 0 : index
    %c0_175 = arith.constant 0 : index
    %259 = vector.load %arg3[%c2_173, %c0_174, %c0_175] : memref<3x16x9xf32, #tpu.memory_space<vmem>>, vector<1x16x9xf32>
    %260 = vector.shape_cast %259 : vector<1x16x9xf32> to vector<16x9xf32>
    %cst_176 = arith.constant dense<0.000000e+00> : vector<16x128xf32>
    %261 = tpu.matmul %260, %258, %cst_176 {dimension_numbers = #tpu.dot_dimension_numbers<[1], [0], [0], [1], [0, 0, 1, 1], [], []>} : vector<16x9xf32>, vector<9x128xf32>, vector<16x128xf32> -> vector<16x128xf32>
    %262 = arith.addf %257, %261 : vector<16x128xf32>
    %c0_177 = arith.constant 0 : index
    %c0_178 = arith.constant 0 : index
    %263 = vector.load %arg5[%c0_177, %c0_178] : memref<16x1xf32, #tpu.memory_space<vmem>>, vector<16x1xf32>
    %264 = vector.broadcast %263 : vector<16x1xf32> to vector<16x128xf32>
    %265 = arith.addf %262, %264 : vector<16x128xf32>
    %cst_179 = arith.constant 0.000000e+00 : f32
    %266 = vector.broadcast %cst_179 : f32 to vector<16x128xf32>
    %267 = arith.maximumf %265, %266 : vector<16x128xf32>
    %268 = vector.broadcast %244 : i1 to vector<1x128xi1>
    %269 = arith.andi %268, %19 : vector<1x128xi1>
    %cst_180 = arith.constant 0.000000e+00 : f32
    %270 = vector.shape_cast %269 : vector<1x128xi1> to vector<1x128xi1>
    %271 = vector.broadcast %270 : vector<1x128xi1> to vector<16x128xi1>
    %272 = vector.broadcast %cst_180 : f32 to vector<16x128xf32>
    %273 = arith.select %271, %267, %272 : vector<16x128xi1>, vector<16x128xf32>
    %cst_181 = arith.constant 0.000000e+00 : f32
    %274 = vector.broadcast %cst_181 : f32 to vector<3x128xf32>
    %c0_182 = arith.constant 0 : index
    %c0_183 = arith.constant 0 : index
    %c0_184 = arith.constant 0 : index
    %275 = vector.load %arg4[%c0_182, %c0_183, %c0_184] : memref<3x3x16xf32, #tpu.memory_space<vmem>>, vector<1x3x16xf32>
    %276 = vector.shape_cast %275 : vector<1x3x16xf32> to vector<3x16xf32>
    %cst_185 = arith.constant dense<0.000000e+00> : vector<3x128xf32>
    %277 = tpu.matmul %276, %273, %cst_185 {dimension_numbers = #tpu.dot_dimension_numbers<[1], [0], [0], [1], [0, 0, 1, 1], [], []>} : vector<3x16xf32>, vector<16x128xf32>, vector<3x128xf32> -> vector<3x128xf32>
    %278 = arith.addf %274, %277 : vector<3x128xf32>
    %c127_i32_186 = arith.constant 127 : i32
    %279 = tpu.dynamic_rotate %273 by %c127_i32_186 dim 1 : vector<16x128xf32>, i32 -> vector<16x128xf32>
    %c1_187 = arith.constant 1 : index
    %c0_188 = arith.constant 0 : index
    %c0_189 = arith.constant 0 : index
    %280 = vector.load %arg4[%c1_187, %c0_188, %c0_189] : memref<3x3x16xf32, #tpu.memory_space<vmem>>, vector<1x3x16xf32>
    %281 = vector.shape_cast %280 : vector<1x3x16xf32> to vector<3x16xf32>
    %cst_190 = arith.constant dense<0.000000e+00> : vector<3x128xf32>
    %282 = tpu.matmul %281, %279, %cst_190 {dimension_numbers = #tpu.dot_dimension_numbers<[1], [0], [0], [1], [0, 0, 1, 1], [], []>} : vector<3x16xf32>, vector<16x128xf32>, vector<3x128xf32> -> vector<3x128xf32>
    %283 = arith.addf %278, %282 : vector<3x128xf32>
    %c126_i32_191 = arith.constant 126 : i32
    %284 = tpu.dynamic_rotate %273 by %c126_i32_191 dim 1 : vector<16x128xf32>, i32 -> vector<16x128xf32>
    %c2_192 = arith.constant 2 : index
    %c0_193 = arith.constant 0 : index
    %c0_194 = arith.constant 0 : index
    %285 = vector.load %arg4[%c2_192, %c0_193, %c0_194] : memref<3x3x16xf32, #tpu.memory_space<vmem>>, vector<1x3x16xf32>
    %286 = vector.shape_cast %285 : vector<1x3x16xf32> to vector<3x16xf32>
    %cst_195 = arith.constant dense<0.000000e+00> : vector<3x128xf32>
    %287 = tpu.matmul %286, %284, %cst_195 {dimension_numbers = #tpu.dot_dimension_numbers<[1], [0], [0], [1], [0, 0, 1, 1], [], []>} : vector<3x16xf32>, vector<16x128xf32>, vector<3x128xf32> -> vector<3x128xf32>
    %288 = arith.addf %283, %287 : vector<3x128xf32>
    %289 = vector.extract_strided_slice %288 {offsets = [0, 0], sizes = [1, 24], strides = [1, 1]} : vector<3x128xf32> to vector<1x24xf32>
    %290 = vector.shape_cast %289 : vector<1x24xf32> to vector<24xf32>
    %291 = vector.extract_strided_slice %288 {offsets = [1, 0], sizes = [1, 24], strides = [1, 1]} : vector<3x128xf32> to vector<1x24xf32>
    %292 = vector.shape_cast %291 : vector<1x24xf32> to vector<24xf32>
    %293 = arith.addf %231, %292 : vector<24xf32>
    %294 = vector.extract_strided_slice %288 {offsets = [2, 0], sizes = [1, 24], strides = [1, 1]} : vector<3x128xf32> to vector<1x24xf32>
    %295 = vector.shape_cast %294 : vector<1x24xf32> to vector<24xf32>
    %296 = arith.addf %234, %295 : vector<24xf32>
    %c0_196 = arith.constant 0 : index
    %c2_197 = arith.constant 2 : index
    %c0_198 = arith.constant 0 : index
    %297 = vector.load %arg7[%c0_196, %c2_197, %c0_198] : memref<1x16x24xf32, #tpu.memory_space<vmem>>, vector<1x1x24xf32>
    %298 = vector.shape_cast %297 : vector<1x1x24xf32> to vector<24xf32>
    %299 = vector.shape_cast %296 : vector<24xf32> to vector<1x1x24xf32>
    tpu.vector_store %arg7[%c0_196, %c2_197, %c0_198], %299 {strides = array<i32>} : memref<1x16x24xf32, #tpu.memory_space<vmem>>, vector<1x1x24xf32>,
    %c4_i32 = arith.constant 4 : i32
    %300 = arith.addi %13, %c4_i32 : i32
    %c0_i32_199 = arith.constant 0 : i32
    %301 = arith.cmpi sge, %300, %c0_i32_199 : i32
    %c40_i32_200 = arith.constant 40 : i32
    %302 = arith.cmpi slt, %300, %c40_i32_200 : i32
    %303 = arith.andi %301, %302 : i1
    %304 = arith.index_cast %0 : i32 to index
    %c15 = arith.constant 15 : index
    %c0_201 = arith.constant 0 : index
    %305 = vector.load %arg8[%304, %c15, %c0_201] : memref<2x60x128xf32, #tpu.memory_space<vmem>>, vector<1x9x128xf32>
    %306 = vector.shape_cast %305 : vector<1x9x128xf32> to vector<9x128xf32>
    %cst_202 = arith.constant 0.000000e+00 : f32
    %307 = vector.broadcast %cst_202 : f32 to vector<16x128xf32>
    %c0_203 = arith.constant 0 : index
    %c0_204 = arith.constant 0 : index
    %c0_205 = arith.constant 0 : index
    %308 = vector.load %arg3[%c0_203, %c0_204, %c0_205] : memref<3x16x9xf32, #tpu.memory_space<vmem>>, vector<1x16x9xf32>
    %309 = vector.shape_cast %308 : vector<1x16x9xf32> to vector<16x9xf32>
    %cst_206 = arith.constant dense<0.000000e+00> : vector<16x128xf32>
    %310 = tpu.matmul %309, %306, %cst_206 {dimension_numbers = #tpu.dot_dimension_numbers<[1], [0], [0], [1], [0, 0, 1, 1], [], []>} : vector<16x9xf32>, vector<9x128xf32>, vector<16x128xf32> -> vector<16x128xf32>
    %311 = arith.addf %307, %310 : vector<16x128xf32>
    %c127_i32_207 = arith.constant 127 : i32
    %312 = tpu.dynamic_rotate %306 by %c127_i32_207 dim 1 : vector<9x128xf32>, i32 -> vector<9x128xf32>
    %c1_208 = arith.constant 1 : index
    %c0_209 = arith.constant 0 : index
    %c0_210 = arith.constant 0 : index
    %313 = vector.load %arg3[%c1_208, %c0_209, %c0_210] : memref<3x16x9xf32, #tpu.memory_space<vmem>>, vector<1x16x9xf32>
    %314 = vector.shape_cast %313 : vector<1x16x9xf32> to vector<16x9xf32>
    %cst_211 = arith.constant dense<0.000000e+00> : vector<16x128xf32>
    %315 = tpu.matmul %314, %312, %cst_211 {dimension_numbers = #tpu.dot_dimension_numbers<[1], [0], [0], [1], [0, 0, 1, 1], [], []>} : vector<16x9xf32>, vector<9x128xf32>, vector<16x128xf32> -> vector<16x128xf32>
    %316 = arith.addf %311, %315 : vector<16x128xf32>
    %c126_i32_212 = arith.constant 126 : i32
    %317 = tpu.dynamic_rotate %306 by %c126_i32_212 dim 1 : vector<9x128xf32>, i32 -> vector<9x128xf32>
    %c2_213 = arith.constant 2 : index
    %c0_214 = arith.constant 0 : index
    %c0_215 = arith.constant 0 : index
    %318 = vector.load %arg3[%c2_213, %c0_214, %c0_215] : memref<3x16x9xf32, #tpu.memory_space<vmem>>, vector<1x16x9xf32>
    %319 = vector.shape_cast %318 : vector<1x16x9xf32> to vector<16x9xf32>
    %cst_216 = arith.constant dense<0.000000e+00> : vector<16x128xf32>
    %320 = tpu.matmul %319, %317, %cst_216 {dimension_numbers = #tpu.dot_dimension_numbers<[1], [0], [0], [1], [0, 0, 1, 1], [], []>} : vector<16x9xf32>, vector<9x128xf32>, vector<16x128xf32> -> vector<16x128xf32>
    %321 = arith.addf %316, %320 : vector<16x128xf32>
    %c0_217 = arith.constant 0 : index
    %c0_218 = arith.constant 0 : index
    %322 = vector.load %arg5[%c0_217, %c0_218] : memref<16x1xf32, #tpu.memory_space<vmem>>, vector<16x1xf32>
    %323 = vector.broadcast %322 : vector<16x1xf32> to vector<16x128xf32>
    %324 = arith.addf %321, %323 : vector<16x128xf32>
    %cst_219 = arith.constant 0.000000e+00 : f32
    %325 = vector.broadcast %cst_219 : f32 to vector<16x128xf32>
    %326 = arith.maximumf %324, %325 : vector<16x128xf32>
    %327 = vector.broadcast %303 : i1 to vector<1x128xi1>
    %328 = arith.andi %327, %19 : vector<1x128xi1>
    %cst_220 = arith.constant 0.000000e+00 : f32
    %329 = vector.shape_cast %328 : vector<1x128xi1> to vector<1x128xi1>
    %330 = vector.broadcast %329 : vector<1x128xi1> to vector<16x128xi1>
    %331 = vector.broadcast %cst_220 : f32 to vector<16x128xf32>
    %332 = arith.select %330, %326, %331 : vector<16x128xi1>, vector<16x128xf32>
    %cst_221 = arith.constant 0.000000e+00 : f32
    %333 = vector.broadcast %cst_221 : f32 to vector<3x128xf32>
    %c0_222 = arith.constant 0 : index
    %c0_223 = arith.constant 0 : index
    %c0_224 = arith.constant 0 : index
    %334 = vector.load %arg4[%c0_222, %c0_223, %c0_224] : memref<3x3x16xf32, #tpu.memory_space<vmem>>, vector<1x3x16xf32>
    %335 = vector.shape_cast %334 : vector<1x3x16xf32> to vector<3x16xf32>
    %cst_225 = arith.constant dense<0.000000e+00> : vector<3x128xf32>
    %336 = tpu.matmul %335, %332, %cst_225 {dimension_numbers = #tpu.dot_dimension_numbers<[1], [0], [0], [1], [0, 0, 1, 1], [], []>} : vector<3x16xf32>, vector<16x128xf32>, vector<3x128xf32> -> vector<3x128xf32>
    %337 = arith.addf %333, %336 : vector<3x128xf32>
    %c127_i32_226 = arith.constant 127 : i32
    %338 = tpu.dynamic_rotate %332 by %c127_i32_226 dim 1 : vector<16x128xf32>, i32 -> vector<16x128xf32>
    %c1_227 = arith.constant 1 : index
    %c0_228 = arith.constant 0 : index
    %c0_229 = arith.constant 0 : index
    %339 = vector.load %arg4[%c1_227, %c0_228, %c0_229] : memref<3x3x16xf32, #tpu.memory_space<vmem>>, vector<1x3x16xf32>
    %340 = vector.shape_cast %339 : vector<1x3x16xf32> to vector<3x16xf32>
    %cst_230 = arith.constant dense<0.000000e+00> : vector<3x128xf32>
    %341 = tpu.matmul %340, %338, %cst_230 {dimension_numbers = #tpu.dot_dimension_numbers<[1], [0], [0], [1], [0, 0, 1, 1], [], []>} : vector<3x16xf32>, vector<16x128xf32>, vector<3x128xf32> -> vector<3x128xf32>
    %342 = arith.addf %337, %341 : vector<3x128xf32>
    %c126_i32_231 = arith.constant 126 : i32
    %343 = tpu.dynamic_rotate %332 by %c126_i32_231 dim 1 : vector<16x128xf32>, i32 -> vector<16x128xf32>
    %c2_232 = arith.constant 2 : index
    %c0_233 = arith.constant 0 : index
    %c0_234 = arith.constant 0 : index
    %344 = vector.load %arg4[%c2_232, %c0_233, %c0_234] : memref<3x3x16xf32, #tpu.memory_space<vmem>>, vector<1x3x16xf32>
    %345 = vector.shape_cast %344 : vector<1x3x16xf32> to vector<3x16xf32>
    %cst_235 = arith.constant dense<0.000000e+00> : vector<3x128xf32>
    %346 = tpu.matmul %345, %343, %cst_235 {dimension_numbers = #tpu.dot_dimension_numbers<[1], [0], [0], [1], [0, 0, 1, 1], [], []>} : vector<3x16xf32>, vector<16x128xf32>, vector<3x128xf32> -> vector<3x128xf32>
    %347 = arith.addf %342, %346 : vector<3x128xf32>
    %348 = vector.extract_strided_slice %347 {offsets = [0, 0], sizes = [1, 24], strides = [1, 1]} : vector<3x128xf32> to vector<1x24xf32>
    %349 = vector.shape_cast %348 : vector<1x24xf32> to vector<24xf32>
    %350 = vector.extract_strided_slice %347 {offsets = [1, 0], sizes = [1, 24], strides = [1, 1]} : vector<3x128xf32> to vector<1x24xf32>
    %351 = vector.shape_cast %350 : vector<1x24xf32> to vector<24xf32>
    %352 = arith.addf %290, %351 : vector<24xf32>
    %353 = vector.extract_strided_slice %347 {offsets = [2, 0], sizes = [1, 24], strides = [1, 1]} : vector<3x128xf32> to vector<1x24xf32>
    %354 = vector.shape_cast %353 : vector<1x24xf32> to vector<24xf32>
    %355 = arith.addf %293, %354 : vector<24xf32>
    %c0_236 = arith.constant 0 : index
    %c3_237 = arith.constant 3 : index
    %c0_238 = arith.constant 0 : index
    %356 = vector.load %arg7[%c0_236, %c3_237, %c0_238] : memref<1x16x24xf32, #tpu.memory_space<vmem>>, vector<1x1x24xf32>
    %357 = vector.shape_cast %356 : vector<1x1x24xf32> to vector<24xf32>
    %358 = vector.shape_cast %355 : vector<24xf32> to vector<1x1x24xf32>
    tpu.vector_store %arg7[%c0_236, %c3_237, %c0_238], %358 {strides = array<i32>} : memref<1x16x24xf32, #tpu.memory_space<vmem>>, vector<1x1x24xf32>,
    %c5_i32 = arith.constant 5 : i32
    %359 = arith.addi %13, %c5_i32 : i32
    %c0_i32_239 = arith.constant 0 : i32
    %360 = arith.cmpi sge, %359, %c0_i32_239 : i32
    %c40_i32_240 = arith.constant 40 : i32
    %361 = arith.cmpi slt, %359, %c40_i32_240 : i32
    %362 = arith.andi %360, %361 : i1
    %363 = arith.index_cast %0 : i32 to index
    %c18 = arith.constant 18 : index
    %c0_241 = arith.constant 0 : index
    %364 = vector.load %arg8[%363, %c18, %c0_241] : memref<2x60x128xf32, #tpu.memory_space<vmem>>, vector<1x9x128xf32>
    %365 = vector.shape_cast %364 : vector<1x9x128xf32> to vector<9x128xf32>
    %cst_242 = arith.constant 0.000000e+00 : f32
    %366 = vector.broadcast %cst_242 : f32 to vector<16x128xf32>
    %c0_243 = arith.constant 0 : index
    %c0_244 = arith.constant 0 : index
    %c0_245 = arith.constant 0 : index
    %367 = vector.load %arg3[%c0_243, %c0_244, %c0_245] : memref<3x16x9xf32, #tpu.memory_space<vmem>>, vector<1x16x9xf32>
    %368 = vector.shape_cast %367 : vector<1x16x9xf32> to vector<16x9xf32>
    %cst_246 = arith.constant dense<0.000000e+00> : vector<16x128xf32>
    %369 = tpu.matmul %368, %365, %cst_246 {dimension_numbers = #tpu.dot_dimension_numbers<[1], [0], [0], [1], [0, 0, 1, 1], [], []>} : vector<16x9xf32>, vector<9x128xf32>, vector<16x128xf32> -> vector<16x128xf32>
    %370 = arith.addf %366, %369 : vector<16x128xf32>
    %c127_i32_247 = arith.constant 127 : i32
    %371 = tpu.dynamic_rotate %365 by %c127_i32_247 dim 1 : vector<9x128xf32>, i32 -> vector<9x128xf32>
    %c1_248 = arith.constant 1 : index
    %c0_249 = arith.constant 0 : index
    %c0_250 = arith.constant 0 : index
    %372 = vector.load %arg3[%c1_248, %c0_249, %c0_250] : memref<3x16x9xf32, #tpu.memory_space<vmem>>, vector<1x16x9xf32>
    %373 = vector.shape_cast %372 : vector<1x16x9xf32> to vector<16x9xf32>
    %cst_251 = arith.constant dense<0.000000e+00> : vector<16x128xf32>
    %374 = tpu.matmul %373, %371, %cst_251 {dimension_numbers = #tpu.dot_dimension_numbers<[1], [0], [0], [1], [0, 0, 1, 1], [], []>} : vector<16x9xf32>, vector<9x128xf32>, vector<16x128xf32> -> vector<16x128xf32>
    %375 = arith.addf %370, %374 : vector<16x128xf32>
    %c126_i32_252 = arith.constant 126 : i32
    %376 = tpu.dynamic_rotate %365 by %c126_i32_252 dim 1 : vector<9x128xf32>, i32 -> vector<9x128xf32>
    %c2_253 = arith.constant 2 : index
    %c0_254 = arith.constant 0 : index
    %c0_255 = arith.constant 0 : index
    %377 = vector.load %arg3[%c2_253, %c0_254, %c0_255] : memref<3x16x9xf32, #tpu.memory_space<vmem>>, vector<1x16x9xf32>
    %378 = vector.shape_cast %377 : vector<1x16x9xf32> to vector<16x9xf32>
    %cst_256 = arith.constant dense<0.000000e+00> : vector<16x128xf32>
    %379 = tpu.matmul %378, %376, %cst_256 {dimension_numbers = #tpu.dot_dimension_numbers<[1], [0], [0], [1], [0, 0, 1, 1], [], []>} : vector<16x9xf32>, vector<9x128xf32>, vector<16x128xf32> -> vector<16x128xf32>
    %380 = arith.addf %375, %379 : vector<16x128xf32>
    %c0_257 = arith.constant 0 : index
    %c0_258 = arith.constant 0 : index
    %381 = vector.load %arg5[%c0_257, %c0_258] : memref<16x1xf32, #tpu.memory_space<vmem>>, vector<16x1xf32>
    %382 = vector.broadcast %381 : vector<16x1xf32> to vector<16x128xf32>
    %383 = arith.addf %380, %382 : vector<16x128xf32>
    %cst_259 = arith.constant 0.000000e+00 : f32
    %384 = vector.broadcast %cst_259 : f32 to vector<16x128xf32>
    %385 = arith.maximumf %383, %384 : vector<16x128xf32>
    %386 = vector.broadcast %362 : i1 to vector<1x128xi1>
    %387 = arith.andi %386, %19 : vector<1x128xi1>
    %cst_260 = arith.constant 0.000000e+00 : f32
    %388 = vector.shape_cast %387 : vector<1x128xi1> to vector<1x128xi1>
    %389 = vector.broadcast %388 : vector<1x128xi1> to vector<16x128xi1>
    %390 = vector.broadcast %cst_260 : f32 to vector<16x128xf32>
    %391 = arith.select %389, %385, %390 : vector<16x128xi1>, vector<16x128xf32>
    %cst_261 = arith.constant 0.000000e+00 : f32
    %392 = vector.broadcast %cst_261 : f32 to vector<3x128xf32>
    %c0_262 = arith.constant 0 : index
    %c0_263 = arith.constant 0 : index
    %c0_264 = arith.constant 0 : index
    %393 = vector.load %arg4[%c0_262, %c0_263, %c0_264] : memref<3x3x16xf32, #tpu.memory_space<vmem>>, vector<1x3x16xf32>
    %394 = vector.shape_cast %393 : vector<1x3x16xf32> to vector<3x16xf32>
    %cst_265 = arith.constant dense<0.000000e+00> : vector<3x128xf32>
    %395 = tpu.matmul %394, %391, %cst_265 {dimension_numbers = #tpu.dot_dimension_numbers<[1], [0], [0], [1], [0, 0, 1, 1], [], []>} : vector<3x16xf32>, vector<16x128xf32>, vector<3x128xf32> -> vector<3x128xf32>
    %396 = arith.addf %392, %395 : vector<3x128xf32>
    %c127_i32_266 = arith.constant 127 : i32
    %397 = tpu.dynamic_rotate %391 by %c127_i32_266 dim 1 : vector<16x128xf32>, i32 -> vector<16x128xf32>
    %c1_267 = arith.constant 1 : index
    %c0_268 = arith.constant 0 : index
    %c0_269 = arith.constant 0 : index
    %398 = vector.load %arg4[%c1_267, %c0_268, %c0_269] : memref<3x3x16xf32, #tpu.memory_space<vmem>>, vector<1x3x16xf32>
    %399 = vector.shape_cast %398 : vector<1x3x16xf32> to vector<3x16xf32>
    %cst_270 = arith.constant dense<0.000000e+00> : vector<3x128xf32>
    %400 = tpu.matmul %399, %397, %cst_270 {dimension_numbers = #tpu.dot_dimension_numbers<[1], [0], [0], [1], [0, 0, 1, 1], [], []>} : vector<3x16xf32>, vector<16x128xf32>, vector<3x128xf32> -> vector<3x128xf32>
    %401 = arith.addf %396, %400 : vector<3x128xf32>
    %c126_i32_271 = arith.constant 126 : i32
    %402 = tpu.dynamic_rotate %391 by %c126_i32_271 dim 1 : vector<16x128xf32>, i32 -> vector<16x128xf32>
    %c2_272 = arith.constant 2 : index
    %c0_273 = arith.constant 0 : index
    %c0_274 = arith.constant 0 : index
    %403 = vector.load %arg4[%c2_272, %c0_273, %c0_274] : memref<3x3x16xf32, #tpu.memory_space<vmem>>, vector<1x3x16xf32>
    %404 = vector.shape_cast %403 : vector<1x3x16xf32> to vector<3x16xf32>
    %cst_275 = arith.constant dense<0.000000e+00> : vector<3x128xf32>
    %405 = tpu.matmul %404, %402, %cst_275 {dimension_numbers = #tpu.dot_dimension_numbers<[1], [0], [0], [1], [0, 0, 1, 1], [], []>} : vector<3x16xf32>, vector<16x128xf32>, vector<3x128xf32> -> vector<3x128xf32>
    %406 = arith.addf %401, %405 : vector<3x128xf32>
    %407 = vector.extract_strided_slice %406 {offsets = [0, 0], sizes = [1, 24], strides = [1, 1]} : vector<3x128xf32> to vector<1x24xf32>
    %408 = vector.shape_cast %407 : vector<1x24xf32> to vector<24xf32>
    %409 = vector.extract_strided_slice %406 {offsets = [1, 0], sizes = [1, 24], strides = [1, 1]} : vector<3x128xf32> to vector<1x24xf32>
    %410 = vector.shape_cast %409 : vector<1x24xf32> to vector<24xf32>
    %411 = arith.addf %349, %410 : vector<24xf32>
    %412 = vector.extract_strided_slice %406 {offsets = [2, 0], sizes = [1, 24], strides = [1, 1]} : vector<3x128xf32> to vector<1x24xf32>
    %413 = vector.shape_cast %412 : vector<1x24xf32> to vector<24xf32>
    %414 = arith.addf %352, %413 : vector<24xf32>
    %c0_276 = arith.constant 0 : index
    %c4 = arith.constant 4 : index
    %c0_277 = arith.constant 0 : index
    %415 = vector.load %arg7[%c0_276, %c4, %c0_277] : memref<1x16x24xf32, #tpu.memory_space<vmem>>, vector<1x1x24xf32>
    %416 = vector.shape_cast %415 : vector<1x1x24xf32> to vector<24xf32>
    %417 = vector.shape_cast %414 : vector<24xf32> to vector<1x1x24xf32>
    tpu.vector_store %arg7[%c0_276, %c4, %c0_277], %417 {strides = array<i32>} : memref<1x16x24xf32, #tpu.memory_space<vmem>>, vector<1x1x24xf32>,
    %c6_i32 = arith.constant 6 : i32
    %418 = arith.addi %13, %c6_i32 : i32
    %c0_i32_278 = arith.constant 0 : i32
    %419 = arith.cmpi sge, %418, %c0_i32_278 : i32
    %c40_i32_279 = arith.constant 40 : i32
    %420 = arith.cmpi slt, %418, %c40_i32_279 : i32
    %421 = arith.andi %419, %420 : i1
    %422 = arith.index_cast %0 : i32 to index
    %c21 = arith.constant 21 : index
    %c0_280 = arith.constant 0 : index
    %423 = vector.load %arg8[%422, %c21, %c0_280] : memref<2x60x128xf32, #tpu.memory_space<vmem>>, vector<1x9x128xf32>
    %424 = vector.shape_cast %423 : vector<1x9x128xf32> to vector<9x128xf32>
    %cst_281 = arith.constant 0.000000e+00 : f32
    %425 = vector.broadcast %cst_281 : f32 to vector<16x128xf32>
    %c0_282 = arith.constant 0 : index
    %c0_283 = arith.constant 0 : index
    %c0_284 = arith.constant 0 : index
    %426 = vector.load %arg3[%c0_282, %c0_283, %c0_284] : memref<3x16x9xf32, #tpu.memory_space<vmem>>, vector<1x16x9xf32>
    %427 = vector.shape_cast %426 : vector<1x16x9xf32> to vector<16x9xf32>
    %cst_285 = arith.constant dense<0.000000e+00> : vector<16x128xf32>
    %428 = tpu.matmul %427, %424, %cst_285 {dimension_numbers = #tpu.dot_dimension_numbers<[1], [0], [0], [1], [0, 0, 1, 1], [], []>} : vector<16x9xf32>, vector<9x128xf32>, vector<16x128xf32> -> vector<16x128xf32>
    %429 = arith.addf %425, %428 : vector<16x128xf32>
    %c127_i32_286 = arith.constant 127 : i32
    %430 = tpu.dynamic_rotate %424 by %c127_i32_286 dim 1 : vector<9x128xf32>, i32 -> vector<9x128xf32>
    %c1_287 = arith.constant 1 : index
    %c0_288 = arith.constant 0 : index
    %c0_289 = arith.constant 0 : index
    %431 = vector.load %arg3[%c1_287, %c0_288, %c0_289] : memref<3x16x9xf32, #tpu.memory_space<vmem>>, vector<1x16x9xf32>
    %432 = vector.shape_cast %431 : vector<1x16x9xf32> to vector<16x9xf32>
    %cst_290 = arith.constant dense<0.000000e+00> : vector<16x128xf32>
    %433 = tpu.matmul %432, %430, %cst_290 {dimension_numbers = #tpu.dot_dimension_numbers<[1], [0], [0], [1], [0, 0, 1, 1], [], []>} : vector<16x9xf32>, vector<9x128xf32>, vector<16x128xf32> -> vector<16x128xf32>
    %434 = arith.addf %429, %433 : vector<16x128xf32>
    %c126_i32_291 = arith.constant 126 : i32
    %435 = tpu.dynamic_rotate %424 by %c126_i32_291 dim 1 : vector<9x128xf32>, i32 -> vector<9x128xf32>
    %c2_292 = arith.constant 2 : index
    %c0_293 = arith.constant 0 : index
    %c0_294 = arith.constant 0 : index
    %436 = vector.load %arg3[%c2_292, %c0_293, %c0_294] : memref<3x16x9xf32, #tpu.memory_space<vmem>>, vector<1x16x9xf32>
    %437 = vector.shape_cast %436 : vector<1x16x9xf32> to vector<16x9xf32>
    %cst_295 = arith.constant dense<0.000000e+00> : vector<16x128xf32>
    %438 = tpu.matmul %437, %435, %cst_295 {dimension_numbers = #tpu.dot_dimension_numbers<[1], [0], [0], [1], [0, 0, 1, 1], [], []>} : vector<16x9xf32>, vector<9x128xf32>, vector<16x128xf32> -> vector<16x128xf32>
    %439 = arith.addf %434, %438 : vector<16x128xf32>
    %c0_296 = arith.constant 0 : index
    %c0_297 = arith.constant 0 : index
    %440 = vector.load %arg5[%c0_296, %c0_297] : memref<16x1xf32, #tpu.memory_space<vmem>>, vector<16x1xf32>
    %441 = vector.broadcast %440 : vector<16x1xf32> to vector<16x128xf32>
    %442 = arith.addf %439, %441 : vector<16x128xf32>
    %cst_298 = arith.constant 0.000000e+00 : f32
    %443 = vector.broadcast %cst_298 : f32 to vector<16x128xf32>
    %444 = arith.maximumf %442, %443 : vector<16x128xf32>
    %445 = vector.broadcast %421 : i1 to vector<1x128xi1>
    %446 = arith.andi %445, %19 : vector<1x128xi1>
    %cst_299 = arith.constant 0.000000e+00 : f32
    %447 = vector.shape_cast %446 : vector<1x128xi1> to vector<1x128xi1>
    %448 = vector.broadcast %447 : vector<1x128xi1> to vector<16x128xi1>
    %449 = vector.broadcast %cst_299 : f32 to vector<16x128xf32>
    %450 = arith.select %448, %444, %449 : vector<16x128xi1>, vector<16x128xf32>
    %cst_300 = arith.constant 0.000000e+00 : f32
    %451 = vector.broadcast %cst_300 : f32 to vector<3x128xf32>
    %c0_301 = arith.constant 0 : index
    %c0_302 = arith.constant 0 : index
    %c0_303 = arith.constant 0 : index
    %452 = vector.load %arg4[%c0_301, %c0_302, %c0_303] : memref<3x3x16xf32, #tpu.memory_space<vmem>>, vector<1x3x16xf32>
    %453 = vector.shape_cast %452 : vector<1x3x16xf32> to vector<3x16xf32>
    %cst_304 = arith.constant dense<0.000000e+00> : vector<3x128xf32>
    %454 = tpu.matmul %453, %450, %cst_304 {dimension_numbers = #tpu.dot_dimension_numbers<[1], [0], [0], [1], [0, 0, 1, 1], [], []>} : vector<3x16xf32>, vector<16x128xf32>, vector<3x128xf32> -> vector<3x128xf32>
    %455 = arith.addf %451, %454 : vector<3x128xf32>
    %c127_i32_305 = arith.constant 127 : i32
    %456 = tpu.dynamic_rotate %450 by %c127_i32_305 dim 1 : vector<16x128xf32>, i32 -> vector<16x128xf32>
    %c1_306 = arith.constant 1 : index
    %c0_307 = arith.constant 0 : index
    %c0_308 = arith.constant 0 : index
    %457 = vector.load %arg4[%c1_306, %c0_307, %c0_308] : memref<3x3x16xf32, #tpu.memory_space<vmem>>, vector<1x3x16xf32>
    %458 = vector.shape_cast %457 : vector<1x3x16xf32> to vector<3x16xf32>
    %cst_309 = arith.constant dense<0.000000e+00> : vector<3x128xf32>
    %459 = tpu.matmul %458, %456, %cst_309 {dimension_numbers = #tpu.dot_dimension_numbers<[1], [0], [0], [1], [0, 0, 1, 1], [], []>} : vector<3x16xf32>, vector<16x128xf32>, vector<3x128xf32> -> vector<3x128xf32>
    %460 = arith.addf %455, %459 : vector<3x128xf32>
    %c126_i32_310 = arith.constant 126 : i32
    %461 = tpu.dynamic_rotate %450 by %c126_i32_310 dim 1 : vector<16x128xf32>, i32 -> vector<16x128xf32>
    %c2_311 = arith.constant 2 : index
    %c0_312 = arith.constant 0 : index
    %c0_313 = arith.constant 0 : index
    %462 = vector.load %arg4[%c2_311, %c0_312, %c0_313] : memref<3x3x16xf32, #tpu.memory_space<vmem>>, vector<1x3x16xf32>
    %463 = vector.shape_cast %462 : vector<1x3x16xf32> to vector<3x16xf32>
    %cst_314 = arith.constant dense<0.000000e+00> : vector<3x128xf32>
    %464 = tpu.matmul %463, %461, %cst_314 {dimension_numbers = #tpu.dot_dimension_numbers<[1], [0], [0], [1], [0, 0, 1, 1], [], []>} : vector<3x16xf32>, vector<16x128xf32>, vector<3x128xf32> -> vector<3x128xf32>
    %465 = arith.addf %460, %464 : vector<3x128xf32>
    %466 = vector.extract_strided_slice %465 {offsets = [0, 0], sizes = [1, 24], strides = [1, 1]} : vector<3x128xf32> to vector<1x24xf32>
    %467 = vector.shape_cast %466 : vector<1x24xf32> to vector<24xf32>
    %468 = vector.extract_strided_slice %465 {offsets = [1, 0], sizes = [1, 24], strides = [1, 1]} : vector<3x128xf32> to vector<1x24xf32>
    %469 = vector.shape_cast %468 : vector<1x24xf32> to vector<24xf32>
    %470 = arith.addf %408, %469 : vector<24xf32>
    %471 = vector.extract_strided_slice %465 {offsets = [2, 0], sizes = [1, 24], strides = [1, 1]} : vector<3x128xf32> to vector<1x24xf32>
    %472 = vector.shape_cast %471 : vector<1x24xf32> to vector<24xf32>
    %473 = arith.addf %411, %472 : vector<24xf32>
    %c0_315 = arith.constant 0 : index
    %c5 = arith.constant 5 : index
    %c0_316 = arith.constant 0 : index
    %474 = vector.load %arg7[%c0_315, %c5, %c0_316] : memref<1x16x24xf32, #tpu.memory_space<vmem>>, vector<1x1x24xf32>
    %475 = vector.shape_cast %474 : vector<1x1x24xf32> to vector<24xf32>
    %476 = vector.shape_cast %473 : vector<24xf32> to vector<1x1x24xf32>
    tpu.vector_store %arg7[%c0_315, %c5, %c0_316], %476 {strides = array<i32>} : memref<1x16x24xf32, #tpu.memory_space<vmem>>, vector<1x1x24xf32>,
    %c7_i32 = arith.constant 7 : i32
    %477 = arith.addi %13, %c7_i32 : i32
    %c0_i32_317 = arith.constant 0 : i32
    %478 = arith.cmpi sge, %477, %c0_i32_317 : i32
    %c40_i32_318 = arith.constant 40 : i32
    %479 = arith.cmpi slt, %477, %c40_i32_318 : i32
    %480 = arith.andi %478, %479 : i1
    %481 = arith.index_cast %0 : i32 to index
    %c24 = arith.constant 24 : index
    %c0_319 = arith.constant 0 : index
    %482 = vector.load %arg8[%481, %c24, %c0_319] : memref<2x60x128xf32, #tpu.memory_space<vmem>>, vector<1x9x128xf32>
    %483 = vector.shape_cast %482 : vector<1x9x128xf32> to vector<9x128xf32>
    %cst_320 = arith.constant 0.000000e+00 : f32
    %484 = vector.broadcast %cst_320 : f32 to vector<16x128xf32>
    %c0_321 = arith.constant 0 : index
    %c0_322 = arith.constant 0 : index
    %c0_323 = arith.constant 0 : index
    %485 = vector.load %arg3[%c0_321, %c0_322, %c0_323] : memref<3x16x9xf32, #tpu.memory_space<vmem>>, vector<1x16x9xf32>
    %486 = vector.shape_cast %485 : vector<1x16x9xf32> to vector<16x9xf32>
    %cst_324 = arith.constant dense<0.000000e+00> : vector<16x128xf32>
    %487 = tpu.matmul %486, %483, %cst_324 {dimension_numbers = #tpu.dot_dimension_numbers<[1], [0], [0], [1], [0, 0, 1, 1], [], []>} : vector<16x9xf32>, vector<9x128xf32>, vector<16x128xf32> -> vector<16x128xf32>
    %488 = arith.addf %484, %487 : vector<16x128xf32>
    %c127_i32_325 = arith.constant 127 : i32
    %489 = tpu.dynamic_rotate %483 by %c127_i32_325 dim 1 : vector<9x128xf32>, i32 -> vector<9x128xf32>
    %c1_326 = arith.constant 1 : index
    %c0_327 = arith.constant 0 : index
    %c0_328 = arith.constant 0 : index
    %490 = vector.load %arg3[%c1_326, %c0_327, %c0_328] : memref<3x16x9xf32, #tpu.memory_space<vmem>>, vector<1x16x9xf32>
    %491 = vector.shape_cast %490 : vector<1x16x9xf32> to vector<16x9xf32>
    %cst_329 = arith.constant dense<0.000000e+00> : vector<16x128xf32>
    %492 = tpu.matmul %491, %489, %cst_329 {dimension_numbers = #tpu.dot_dimension_numbers<[1], [0], [0], [1], [0, 0, 1, 1], [], []>} : vector<16x9xf32>, vector<9x128xf32>, vector<16x128xf32> -> vector<16x128xf32>
    %493 = arith.addf %488, %492 : vector<16x128xf32>
    %c126_i32_330 = arith.constant 126 : i32
    %494 = tpu.dynamic_rotate %483 by %c126_i32_330 dim 1 : vector<9x128xf32>, i32 -> vector<9x128xf32>
    %c2_331 = arith.constant 2 : index
    %c0_332 = arith.constant 0 : index
    %c0_333 = arith.constant 0 : index
    %495 = vector.load %arg3[%c2_331, %c0_332, %c0_333] : memref<3x16x9xf32, #tpu.memory_space<vmem>>, vector<1x16x9xf32>
    %496 = vector.shape_cast %495 : vector<1x16x9xf32> to vector<16x9xf32>
    %cst_334 = arith.constant dense<0.000000e+00> : vector<16x128xf32>
    %497 = tpu.matmul %496, %494, %cst_334 {dimension_numbers = #tpu.dot_dimension_numbers<[1], [0], [0], [1], [0, 0, 1, 1], [], []>} : vector<16x9xf32>, vector<9x128xf32>, vector<16x128xf32> -> vector<16x128xf32>
    %498 = arith.addf %493, %497 : vector<16x128xf32>
    %c0_335 = arith.constant 0 : index
    %c0_336 = arith.constant 0 : index
    %499 = vector.load %arg5[%c0_335, %c0_336] : memref<16x1xf32, #tpu.memory_space<vmem>>, vector<16x1xf32>
    %500 = vector.broadcast %499 : vector<16x1xf32> to vector<16x128xf32>
    %501 = arith.addf %498, %500 : vector<16x128xf32>
    %cst_337 = arith.constant 0.000000e+00 : f32
    %502 = vector.broadcast %cst_337 : f32 to vector<16x128xf32>
    %503 = arith.maximumf %501, %502 : vector<16x128xf32>
    %504 = vector.broadcast %480 : i1 to vector<1x128xi1>
    %505 = arith.andi %504, %19 : vector<1x128xi1>
    %cst_338 = arith.constant 0.000000e+00 : f32
    %506 = vector.shape_cast %505 : vector<1x128xi1> to vector<1x128xi1>
    %507 = vector.broadcast %506 : vector<1x128xi1> to vector<16x128xi1>
    %508 = vector.broadcast %cst_338 : f32 to vector<16x128xf32>
    %509 = arith.select %507, %503, %508 : vector<16x128xi1>, vector<16x128xf32>
    %cst_339 = arith.constant 0.000000e+00 : f32
    %510 = vector.broadcast %cst_339 : f32 to vector<3x128xf32>
    %c0_340 = arith.constant 0 : index
    %c0_341 = arith.constant 0 : index
    %c0_342 = arith.constant 0 : index
    %511 = vector.load %arg4[%c0_340, %c0_341, %c0_342] : memref<3x3x16xf32, #tpu.memory_space<vmem>>, vector<1x3x16xf32>
    %512 = vector.shape_cast %511 : vector<1x3x16xf32> to vector<3x16xf32>
    %cst_343 = arith.constant dense<0.000000e+00> : vector<3x128xf32>
    %513 = tpu.matmul %512, %509, %cst_343 {dimension_numbers = #tpu.dot_dimension_numbers<[1], [0], [0], [1], [0, 0, 1, 1], [], []>} : vector<3x16xf32>, vector<16x128xf32>, vector<3x128xf32> -> vector<3x128xf32>
    %514 = arith.addf %510, %513 : vector<3x128xf32>
    %c127_i32_344 = arith.constant 127 : i32
    %515 = tpu.dynamic_rotate %509 by %c127_i32_344 dim 1 : vector<16x128xf32>, i32 -> vector<16x128xf32>
    %c1_345 = arith.constant 1 : index
    %c0_346 = arith.constant 0 : index
    %c0_347 = arith.constant 0 : index
    %516 = vector.load %arg4[%c1_345, %c0_346, %c0_347] : memref<3x3x16xf32, #tpu.memory_space<vmem>>, vector<1x3x16xf32>
    %517 = vector.shape_cast %516 : vector<1x3x16xf32> to vector<3x16xf32>
    %cst_348 = arith.constant dense<0.000000e+00> : vector<3x128xf32>
    %518 = tpu.matmul %517, %515, %cst_348 {dimension_numbers = #tpu.dot_dimension_numbers<[1], [0], [0], [1], [0, 0, 1, 1], [], []>} : vector<3x16xf32>, vector<16x128xf32>, vector<3x128xf32> -> vector<3x128xf32>
    %519 = arith.addf %514, %518 : vector<3x128xf32>
    %c126_i32_349 = arith.constant 126 : i32
    %520 = tpu.dynamic_rotate %509 by %c126_i32_349 dim 1 : vector<16x128xf32>, i32 -> vector<16x128xf32>
    %c2_350 = arith.constant 2 : index
    %c0_351 = arith.constant 0 : index
    %c0_352 = arith.constant 0 : index
    %521 = vector.load %arg4[%c2_350, %c0_351, %c0_352] : memref<3x3x16xf32, #tpu.memory_space<vmem>>, vector<1x3x16xf32>
    %522 = vector.shape_cast %521 : vector<1x3x16xf32> to vector<3x16xf32>
    %cst_353 = arith.constant dense<0.000000e+00> : vector<3x128xf32>
    %523 = tpu.matmul %522, %520, %cst_353 {dimension_numbers = #tpu.dot_dimension_numbers<[1], [0], [0], [1], [0, 0, 1, 1], [], []>} : vector<3x16xf32>, vector<16x128xf32>, vector<3x128xf32> -> vector<3x128xf32>
    %524 = arith.addf %519, %523 : vector<3x128xf32>
    %525 = vector.extract_strided_slice %524 {offsets = [0, 0], sizes = [1, 24], strides = [1, 1]} : vector<3x128xf32> to vector<1x24xf32>
    %526 = vector.shape_cast %525 : vector<1x24xf32> to vector<24xf32>
    %527 = vector.extract_strided_slice %524 {offsets = [1, 0], sizes = [1, 24], strides = [1, 1]} : vector<3x128xf32> to vector<1x24xf32>
    %528 = vector.shape_cast %527 : vector<1x24xf32> to vector<24xf32>
    %529 = arith.addf %467, %528 : vector<24xf32>
    %530 = vector.extract_strided_slice %524 {offsets = [2, 0], sizes = [1, 24], strides = [1, 1]} : vector<3x128xf32> to vector<1x24xf32>
    %531 = vector.shape_cast %530 : vector<1x24xf32> to vector<24xf32>
    %532 = arith.addf %470, %531 : vector<24xf32>
    %c0_354 = arith.constant 0 : index
    %c6_355 = arith.constant 6 : index
    %c0_356 = arith.constant 0 : index
    %533 = vector.load %arg7[%c0_354, %c6_355, %c0_356] : memref<1x16x24xf32, #tpu.memory_space<vmem>>, vector<1x1x24xf32>
    %534 = vector.shape_cast %533 : vector<1x1x24xf32> to vector<24xf32>
    %535 = vector.shape_cast %532 : vector<24xf32> to vector<1x1x24xf32>
    tpu.vector_store %arg7[%c0_354, %c6_355, %c0_356], %535 {strides = array<i32>} : memref<1x16x24xf32, #tpu.memory_space<vmem>>, vector<1x1x24xf32>,
    %c8_i32 = arith.constant 8 : i32
    %536 = arith.addi %13, %c8_i32 : i32
    %c0_i32_357 = arith.constant 0 : i32
    %537 = arith.cmpi sge, %536, %c0_i32_357 : i32
    %c40_i32_358 = arith.constant 40 : i32
    %538 = arith.cmpi slt, %536, %c40_i32_358 : i32
    %539 = arith.andi %537, %538 : i1
    %540 = arith.index_cast %0 : i32 to index
    %c27 = arith.constant 27 : index
    %c0_359 = arith.constant 0 : index
    %541 = vector.load %arg8[%540, %c27, %c0_359] : memref<2x60x128xf32, #tpu.memory_space<vmem>>, vector<1x9x128xf32>
    %542 = vector.shape_cast %541 : vector<1x9x128xf32> to vector<9x128xf32>
    %cst_360 = arith.constant 0.000000e+00 : f32
    %543 = vector.broadcast %cst_360 : f32 to vector<16x128xf32>
    %c0_361 = arith.constant 0 : index
    %c0_362 = arith.constant 0 : index
    %c0_363 = arith.constant 0 : index
    %544 = vector.load %arg3[%c0_361, %c0_362, %c0_363] : memref<3x16x9xf32, #tpu.memory_space<vmem>>, vector<1x16x9xf32>
    %545 = vector.shape_cast %544 : vector<1x16x9xf32> to vector<16x9xf32>
    %cst_364 = arith.constant dense<0.000000e+00> : vector<16x128xf32>
    %546 = tpu.matmul %545, %542, %cst_364 {dimension_numbers = #tpu.dot_dimension_numbers<[1], [0], [0], [1], [0, 0, 1, 1], [], []>} : vector<16x9xf32>, vector<9x128xf32>, vector<16x128xf32> -> vector<16x128xf32>
    %547 = arith.addf %543, %546 : vector<16x128xf32>
    %c127_i32_365 = arith.constant 127 : i32
    %548 = tpu.dynamic_rotate %542 by %c127_i32_365 dim 1 : vector<9x128xf32>, i32 -> vector<9x128xf32>
    %c1_366 = arith.constant 1 : index
    %c0_367 = arith.constant 0 : index
    %c0_368 = arith.constant 0 : index
    %549 = vector.load %arg3[%c1_366, %c0_367, %c0_368] : memref<3x16x9xf32, #tpu.memory_space<vmem>>, vector<1x16x9xf32>
    %550 = vector.shape_cast %549 : vector<1x16x9xf32> to vector<16x9xf32>
    %cst_369 = arith.constant dense<0.000000e+00> : vector<16x128xf32>
    %551 = tpu.matmul %550, %548, %cst_369 {dimension_numbers = #tpu.dot_dimension_numbers<[1], [0], [0], [1], [0, 0, 1, 1], [], []>} : vector<16x9xf32>, vector<9x128xf32>, vector<16x128xf32> -> vector<16x128xf32>
    %552 = arith.addf %547, %551 : vector<16x128xf32>
    %c126_i32_370 = arith.constant 126 : i32
    %553 = tpu.dynamic_rotate %542 by %c126_i32_370 dim 1 : vector<9x128xf32>, i32 -> vector<9x128xf32>
    %c2_371 = arith.constant 2 : index
    %c0_372 = arith.constant 0 : index
    %c0_373 = arith.constant 0 : index
    %554 = vector.load %arg3[%c2_371, %c0_372, %c0_373] : memref<3x16x9xf32, #tpu.memory_space<vmem>>, vector<1x16x9xf32>
    %555 = vector.shape_cast %554 : vector<1x16x9xf32> to vector<16x9xf32>
    %cst_374 = arith.constant dense<0.000000e+00> : vector<16x128xf32>
    %556 = tpu.matmul %555, %553, %cst_374 {dimension_numbers = #tpu.dot_dimension_numbers<[1], [0], [0], [1], [0, 0, 1, 1], [], []>} : vector<16x9xf32>, vector<9x128xf32>, vector<16x128xf32> -> vector<16x128xf32>
    %557 = arith.addf %552, %556 : vector<16x128xf32>
    %c0_375 = arith.constant 0 : index
    %c0_376 = arith.constant 0 : index
    %558 = vector.load %arg5[%c0_375, %c0_376] : memref<16x1xf32, #tpu.memory_space<vmem>>, vector<16x1xf32>
    %559 = vector.broadcast %558 : vector<16x1xf32> to vector<16x128xf32>
    %560 = arith.addf %557, %559 : vector<16x128xf32>
    %cst_377 = arith.constant 0.000000e+00 : f32
    %561 = vector.broadcast %cst_377 : f32 to vector<16x128xf32>
    %562 = arith.maximumf %560, %561 : vector<16x128xf32>
    %563 = vector.broadcast %539 : i1 to vector<1x128xi1>
    %564 = arith.andi %563, %19 : vector<1x128xi1>
    %cst_378 = arith.constant 0.000000e+00 : f32
    %565 = vector.shape_cast %564 : vector<1x128xi1> to vector<1x128xi1>
    %566 = vector.broadcast %565 : vector<1x128xi1> to vector<16x128xi1>
    %567 = vector.broadcast %cst_378 : f32 to vector<16x128xf32>
    %568 = arith.select %566, %562, %567 : vector<16x128xi1>, vector<16x128xf32>
    %cst_379 = arith.constant 0.000000e+00 : f32
    %569 = vector.broadcast %cst_379 : f32 to vector<3x128xf32>
    %c0_380 = arith.constant 0 : index
    %c0_381 = arith.constant 0 : index
    %c0_382 = arith.constant 0 : index
    %570 = vector.load %arg4[%c0_380, %c0_381, %c0_382] : memref<3x3x16xf32, #tpu.memory_space<vmem>>, vector<1x3x16xf32>
    %571 = vector.shape_cast %570 : vector<1x3x16xf32> to vector<3x16xf32>
    %cst_383 = arith.constant dense<0.000000e+00> : vector<3x128xf32>
    %572 = tpu.matmul %571, %568, %cst_383 {dimension_numbers = #tpu.dot_dimension_numbers<[1], [0], [0], [1], [0, 0, 1, 1], [], []>} : vector<3x16xf32>, vector<16x128xf32>, vector<3x128xf32> -> vector<3x128xf32>
    %573 = arith.addf %569, %572 : vector<3x128xf32>
    %c127_i32_384 = arith.constant 127 : i32
    %574 = tpu.dynamic_rotate %568 by %c127_i32_384 dim 1 : vector<16x128xf32>, i32 -> vector<16x128xf32>
    %c1_385 = arith.constant 1 : index
    %c0_386 = arith.constant 0 : index
    %c0_387 = arith.constant 0 : index
    %575 = vector.load %arg4[%c1_385, %c0_386, %c0_387] : memref<3x3x16xf32, #tpu.memory_space<vmem>>, vector<1x3x16xf32>
    %576 = vector.shape_cast %575 : vector<1x3x16xf32> to vector<3x16xf32>
    %cst_388 = arith.constant dense<0.000000e+00> : vector<3x128xf32>
    %577 = tpu.matmul %576, %574, %cst_388 {dimension_numbers = #tpu.dot_dimension_numbers<[1], [0], [0], [1], [0, 0, 1, 1], [], []>} : vector<3x16xf32>, vector<16x128xf32>, vector<3x128xf32> -> vector<3x128xf32>
    %578 = arith.addf %573, %577 : vector<3x128xf32>
    %c126_i32_389 = arith.constant 126 : i32
    %579 = tpu.dynamic_rotate %568 by %c126_i32_389 dim 1 : vector<16x128xf32>, i32 -> vector<16x128xf32>
    %c2_390 = arith.constant 2 : index
    %c0_391 = arith.constant 0 : index
    %c0_392 = arith.constant 0 : index
    %580 = vector.load %arg4[%c2_390, %c0_391, %c0_392] : memref<3x3x16xf32, #tpu.memory_space<vmem>>, vector<1x3x16xf32>
    %581 = vector.shape_cast %580 : vector<1x3x16xf32> to vector<3x16xf32>
    %cst_393 = arith.constant dense<0.000000e+00> : vector<3x128xf32>
    %582 = tpu.matmul %581, %579, %cst_393 {dimension_numbers = #tpu.dot_dimension_numbers<[1], [0], [0], [1], [0, 0, 1, 1], [], []>} : vector<3x16xf32>, vector<16x128xf32>, vector<3x128xf32> -> vector<3x128xf32>
    %583 = arith.addf %578, %582 : vector<3x128xf32>
    %584 = vector.extract_strided_slice %583 {offsets = [0, 0], sizes = [1, 24], strides = [1, 1]} : vector<3x128xf32> to vector<1x24xf32>
    %585 = vector.shape_cast %584 : vector<1x24xf32> to vector<24xf32>
    %586 = vector.extract_strided_slice %583 {offsets = [1, 0], sizes = [1, 24], strides = [1, 1]} : vector<3x128xf32> to vector<1x24xf32>
    %587 = vector.shape_cast %586 : vector<1x24xf32> to vector<24xf32>
    %588 = arith.addf %526, %587 : vector<24xf32>
    %589 = vector.extract_strided_slice %583 {offsets = [2, 0], sizes = [1, 24], strides = [1, 1]} : vector<3x128xf32> to vector<1x24xf32>
    %590 = vector.shape_cast %589 : vector<1x24xf32> to vector<24xf32>
    %591 = arith.addf %529, %590 : vector<24xf32>
    %c0_394 = arith.constant 0 : index
    %c7 = arith.constant 7 : index
    %c0_395 = arith.constant 0 : index
    %592 = vector.load %arg7[%c0_394, %c7, %c0_395] : memref<1x16x24xf32, #tpu.memory_space<vmem>>, vector<1x1x24xf32>
    %593 = vector.shape_cast %592 : vector<1x1x24xf32> to vector<24xf32>
    %594 = vector.shape_cast %591 : vector<24xf32> to vector<1x1x24xf32>
    tpu.vector_store %arg7[%c0_394, %c7, %c0_395], %594 {strides = array<i32>} : memref<1x16x24xf32, #tpu.memory_space<vmem>>, vector<1x1x24xf32>,
    %c9_i32 = arith.constant 9 : i32
    %595 = arith.addi %13, %c9_i32 : i32
    %c0_i32_396 = arith.constant 0 : i32
    %596 = arith.cmpi sge, %595, %c0_i32_396 : i32
    %c40_i32_397 = arith.constant 40 : i32
    %597 = arith.cmpi slt, %595, %c40_i32_397 : i32
    %598 = arith.andi %596, %597 : i1
    %599 = arith.index_cast %0 : i32 to index
    %c30 = arith.constant 30 : index
    %c0_398 = arith.constant 0 : index
    %600 = vector.load %arg8[%599, %c30, %c0_398] : memref<2x60x128xf32, #tpu.memory_space<vmem>>, vector<1x9x128xf32>
    %601 = vector.shape_cast %600 : vector<1x9x128xf32> to vector<9x128xf32>
    %cst_399 = arith.constant 0.000000e+00 : f32
    %602 = vector.broadcast %cst_399 : f32 to vector<16x128xf32>
    %c0_400 = arith.constant 0 : index
    %c0_401 = arith.constant 0 : index
    %c0_402 = arith.constant 0 : index
    %603 = vector.load %arg3[%c0_400, %c0_401, %c0_402] : memref<3x16x9xf32, #tpu.memory_space<vmem>>, vector<1x16x9xf32>
    %604 = vector.shape_cast %603 : vector<1x16x9xf32> to vector<16x9xf32>
    %cst_403 = arith.constant dense<0.000000e+00> : vector<16x128xf32>
    %605 = tpu.matmul %604, %601, %cst_403 {dimension_numbers = #tpu.dot_dimension_numbers<[1], [0], [0], [1], [0, 0, 1, 1], [], []>} : vector<16x9xf32>, vector<9x128xf32>, vector<16x128xf32> -> vector<16x128xf32>
    %606 = arith.addf %602, %605 : vector<16x128xf32>
    %c127_i32_404 = arith.constant 127 : i32
    %607 = tpu.dynamic_rotate %601 by %c127_i32_404 dim 1 : vector<9x128xf32>, i32 -> vector<9x128xf32>
    %c1_405 = arith.constant 1 : index
    %c0_406 = arith.constant 0 : index
    %c0_407 = arith.constant 0 : index
    %608 = vector.load %arg3[%c1_405, %c0_406, %c0_407] : memref<3x16x9xf32, #tpu.memory_space<vmem>>, vector<1x16x9xf32>
    %609 = vector.shape_cast %608 : vector<1x16x9xf32> to vector<16x9xf32>
    %cst_408 = arith.constant dense<0.000000e+00> : vector<16x128xf32>
    %610 = tpu.matmul %609, %607, %cst_408 {dimension_numbers = #tpu.dot_dimension_numbers<[1], [0], [0], [1], [0, 0, 1, 1], [], []>} : vector<16x9xf32>, vector<9x128xf32>, vector<16x128xf32> -> vector<16x128xf32>
    %611 = arith.addf %606, %610 : vector<16x128xf32>
    %c126_i32_409 = arith.constant 126 : i32
    %612 = tpu.dynamic_rotate %601 by %c126_i32_409 dim 1 : vector<9x128xf32>, i32 -> vector<9x128xf32>
    %c2_410 = arith.constant 2 : index
    %c0_411 = arith.constant 0 : index
    %c0_412 = arith.constant 0 : index
    %613 = vector.load %arg3[%c2_410, %c0_411, %c0_412] : memref<3x16x9xf32, #tpu.memory_space<vmem>>, vector<1x16x9xf32>
    %614 = vector.shape_cast %613 : vector<1x16x9xf32> to vector<16x9xf32>
    %cst_413 = arith.constant dense<0.000000e+00> : vector<16x128xf32>
    %615 = tpu.matmul %614, %612, %cst_413 {dimension_numbers = #tpu.dot_dimension_numbers<[1], [0], [0], [1], [0, 0, 1, 1], [], []>} : vector<16x9xf32>, vector<9x128xf32>, vector<16x128xf32> -> vector<16x128xf32>
    %616 = arith.addf %611, %615 : vector<16x128xf32>
    %c0_414 = arith.constant 0 : index
    %c0_415 = arith.constant 0 : index
    %617 = vector.load %arg5[%c0_414, %c0_415] : memref<16x1xf32, #tpu.memory_space<vmem>>, vector<16x1xf32>
    %618 = vector.broadcast %617 : vector<16x1xf32> to vector<16x128xf32>
    %619 = arith.addf %616, %618 : vector<16x128xf32>
    %cst_416 = arith.constant 0.000000e+00 : f32
    %620 = vector.broadcast %cst_416 : f32 to vector<16x128xf32>
    %621 = arith.maximumf %619, %620 : vector<16x128xf32>
    %622 = vector.broadcast %598 : i1 to vector<1x128xi1>
    %623 = arith.andi %622, %19 : vector<1x128xi1>
    %cst_417 = arith.constant 0.000000e+00 : f32
    %624 = vector.shape_cast %623 : vector<1x128xi1> to vector<1x128xi1>
    %625 = vector.broadcast %624 : vector<1x128xi1> to vector<16x128xi1>
    %626 = vector.broadcast %cst_417 : f32 to vector<16x128xf32>
    %627 = arith.select %625, %621, %626 : vector<16x128xi1>, vector<16x128xf32>
    %cst_418 = arith.constant 0.000000e+00 : f32
    %628 = vector.broadcast %cst_418 : f32 to vector<3x128xf32>
    %c0_419 = arith.constant 0 : index
    %c0_420 = arith.constant 0 : index
    %c0_421 = arith.constant 0 : index
    %629 = vector.load %arg4[%c0_419, %c0_420, %c0_421] : memref<3x3x16xf32, #tpu.memory_space<vmem>>, vector<1x3x16xf32>
    %630 = vector.shape_cast %629 : vector<1x3x16xf32> to vector<3x16xf32>
    %cst_422 = arith.constant dense<0.000000e+00> : vector<3x128xf32>
    %631 = tpu.matmul %630, %627, %cst_422 {dimension_numbers = #tpu.dot_dimension_numbers<[1], [0], [0], [1], [0, 0, 1, 1], [], []>} : vector<3x16xf32>, vector<16x128xf32>, vector<3x128xf32> -> vector<3x128xf32>
    %632 = arith.addf %628, %631 : vector<3x128xf32>
    %c127_i32_423 = arith.constant 127 : i32
    %633 = tpu.dynamic_rotate %627 by %c127_i32_423 dim 1 : vector<16x128xf32>, i32 -> vector<16x128xf32>
    %c1_424 = arith.constant 1 : index
    %c0_425 = arith.constant 0 : index
    %c0_426 = arith.constant 0 : index
    %634 = vector.load %arg4[%c1_424, %c0_425, %c0_426] : memref<3x3x16xf32, #tpu.memory_space<vmem>>, vector<1x3x16xf32>
    %635 = vector.shape_cast %634 : vector<1x3x16xf32> to vector<3x16xf32>
    %cst_427 = arith.constant dense<0.000000e+00> : vector<3x128xf32>
    %636 = tpu.matmul %635, %633, %cst_427 {dimension_numbers = #tpu.dot_dimension_numbers<[1], [0], [0], [1], [0, 0, 1, 1], [], []>} : vector<3x16xf32>, vector<16x128xf32>, vector<3x128xf32> -> vector<3x128xf32>
    %637 = arith.addf %632, %636 : vector<3x128xf32>
    %c126_i32_428 = arith.constant 126 : i32
    %638 = tpu.dynamic_rotate %627 by %c126_i32_428 dim 1 : vector<16x128xf32>, i32 -> vector<16x128xf32>
    %c2_429 = arith.constant 2 : index
    %c0_430 = arith.constant 0 : index
    %c0_431 = arith.constant 0 : index
    %639 = vector.load %arg4[%c2_429, %c0_430, %c0_431] : memref<3x3x16xf32, #tpu.memory_space<vmem>>, vector<1x3x16xf32>
    %640 = vector.shape_cast %639 : vector<1x3x16xf32> to vector<3x16xf32>
    %cst_432 = arith.constant dense<0.000000e+00> : vector<3x128xf32>
    %641 = tpu.matmul %640, %638, %cst_432 {dimension_numbers = #tpu.dot_dimension_numbers<[1], [0], [0], [1], [0, 0, 1, 1], [], []>} : vector<3x16xf32>, vector<16x128xf32>, vector<3x128xf32> -> vector<3x128xf32>
    %642 = arith.addf %637, %641 : vector<3x128xf32>
    %643 = vector.extract_strided_slice %642 {offsets = [0, 0], sizes = [1, 24], strides = [1, 1]} : vector<3x128xf32> to vector<1x24xf32>
    %644 = vector.shape_cast %643 : vector<1x24xf32> to vector<24xf32>
    %645 = vector.extract_strided_slice %642 {offsets = [1, 0], sizes = [1, 24], strides = [1, 1]} : vector<3x128xf32> to vector<1x24xf32>
    %646 = vector.shape_cast %645 : vector<1x24xf32> to vector<24xf32>
    %647 = arith.addf %585, %646 : vector<24xf32>
    %648 = vector.extract_strided_slice %642 {offsets = [2, 0], sizes = [1, 24], strides = [1, 1]} : vector<3x128xf32> to vector<1x24xf32>
    %649 = vector.shape_cast %648 : vector<1x24xf32> to vector<24xf32>
    %650 = arith.addf %588, %649 : vector<24xf32>
    %c0_433 = arith.constant 0 : index
    %c8 = arith.constant 8 : index
    %c0_434 = arith.constant 0 : index
    %651 = vector.load %arg7[%c0_433, %c8, %c0_434] : memref<1x16x24xf32, #tpu.memory_space<vmem>>, vector<1x1x24xf32>
    %652 = vector.shape_cast %651 : vector<1x1x24xf32> to vector<24xf32>
    %653 = vector.shape_cast %650 : vector<24xf32> to vector<1x1x24xf32>
    tpu.vector_store %arg7[%c0_433, %c8, %c0_434], %653 {strides = array<i32>} : memref<1x16x24xf32, #tpu.memory_space<vmem>>, vector<1x1x24xf32>,
    %c10_i32 = arith.constant 10 : i32
    %654 = arith.addi %13, %c10_i32 : i32
    %c0_i32_435 = arith.constant 0 : i32
    %655 = arith.cmpi sge, %654, %c0_i32_435 : i32
    %c40_i32_436 = arith.constant 40 : i32
    %656 = arith.cmpi slt, %654, %c40_i32_436 : i32
    %657 = arith.andi %655, %656 : i1
    %658 = arith.index_cast %0 : i32 to index
    %c33 = arith.constant 33 : index
    %c0_437 = arith.constant 0 : index
    %659 = vector.load %arg8[%658, %c33, %c0_437] : memref<2x60x128xf32, #tpu.memory_space<vmem>>, vector<1x9x128xf32>
    %660 = vector.shape_cast %659 : vector<1x9x128xf32> to vector<9x128xf32>
    %cst_438 = arith.constant 0.000000e+00 : f32
    %661 = vector.broadcast %cst_438 : f32 to vector<16x128xf32>
    %c0_439 = arith.constant 0 : index
    %c0_440 = arith.constant 0 : index
    %c0_441 = arith.constant 0 : index
    %662 = vector.load %arg3[%c0_439, %c0_440, %c0_441] : memref<3x16x9xf32, #tpu.memory_space<vmem>>, vector<1x16x9xf32>
    %663 = vector.shape_cast %662 : vector<1x16x9xf32> to vector<16x9xf32>
    %cst_442 = arith.constant dense<0.000000e+00> : vector<16x128xf32>
    %664 = tpu.matmul %663, %660, %cst_442 {dimension_numbers = #tpu.dot_dimension_numbers<[1], [0], [0], [1], [0, 0, 1, 1], [], []>} : vector<16x9xf32>, vector<9x128xf32>, vector<16x128xf32> -> vector<16x128xf32>
    %665 = arith.addf %661, %664 : vector<16x128xf32>
    %c127_i32_443 = arith.constant 127 : i32
    %666 = tpu.dynamic_rotate %660 by %c127_i32_443 dim 1 : vector<9x128xf32>, i32 -> vector<9x128xf32>
    %c1_444 = arith.constant 1 : index
    %c0_445 = arith.constant 0 : index
    %c0_446 = arith.constant 0 : index
    %667 = vector.load %arg3[%c1_444, %c0_445, %c0_446] : memref<3x16x9xf32, #tpu.memory_space<vmem>>, vector<1x16x9xf32>
    %668 = vector.shape_cast %667 : vector<1x16x9xf32> to vector<16x9xf32>
    %cst_447 = arith.constant dense<0.000000e+00> : vector<16x128xf32>
    %669 = tpu.matmul %668, %666, %cst_447 {dimension_numbers = #tpu.dot_dimension_numbers<[1], [0], [0], [1], [0, 0, 1, 1], [], []>} : vector<16x9xf32>, vector<9x128xf32>, vector<16x128xf32> -> vector<16x128xf32>
    %670 = arith.addf %665, %669 : vector<16x128xf32>
    %c126_i32_448 = arith.constant 126 : i32
    %671 = tpu.dynamic_rotate %660 by %c126_i32_448 dim 1 : vector<9x128xf32>, i32 -> vector<9x128xf32>
    %c2_449 = arith.constant 2 : index
    %c0_450 = arith.constant 0 : index
    %c0_451 = arith.constant 0 : index
    %672 = vector.load %arg3[%c2_449, %c0_450, %c0_451] : memref<3x16x9xf32, #tpu.memory_space<vmem>>, vector<1x16x9xf32>
    %673 = vector.shape_cast %672 : vector<1x16x9xf32> to vector<16x9xf32>
    %cst_452 = arith.constant dense<0.000000e+00> : vector<16x128xf32>
    %674 = tpu.matmul %673, %671, %cst_452 {dimension_numbers = #tpu.dot_dimension_numbers<[1], [0], [0], [1], [0, 0, 1, 1], [], []>} : vector<16x9xf32>, vector<9x128xf32>, vector<16x128xf32> -> vector<16x128xf32>
    %675 = arith.addf %670, %674 : vector<16x128xf32>
    %c0_453 = arith.constant 0 : index
    %c0_454 = arith.constant 0 : index
    %676 = vector.load %arg5[%c0_453, %c0_454] : memref<16x1xf32, #tpu.memory_space<vmem>>, vector<16x1xf32>
    %677 = vector.broadcast %676 : vector<16x1xf32> to vector<16x128xf32>
    %678 = arith.addf %675, %677 : vector<16x128xf32>
    %cst_455 = arith.constant 0.000000e+00 : f32
    %679 = vector.broadcast %cst_455 : f32 to vector<16x128xf32>
    %680 = arith.maximumf %678, %679 : vector<16x128xf32>
    %681 = vector.broadcast %657 : i1 to vector<1x128xi1>
    %682 = arith.andi %681, %19 : vector<1x128xi1>
    %cst_456 = arith.constant 0.000000e+00 : f32
    %683 = vector.shape_cast %682 : vector<1x128xi1> to vector<1x128xi1>
    %684 = vector.broadcast %683 : vector<1x128xi1> to vector<16x128xi1>
    %685 = vector.broadcast %cst_456 : f32 to vector<16x128xf32>
    %686 = arith.select %684, %680, %685 : vector<16x128xi1>, vector<16x128xf32>
    %cst_457 = arith.constant 0.000000e+00 : f32
    %687 = vector.broadcast %cst_457 : f32 to vector<3x128xf32>
    %c0_458 = arith.constant 0 : index
    %c0_459 = arith.constant 0 : index
    %c0_460 = arith.constant 0 : index
    %688 = vector.load %arg4[%c0_458, %c0_459, %c0_460] : memref<3x3x16xf32, #tpu.memory_space<vmem>>, vector<1x3x16xf32>
    %689 = vector.shape_cast %688 : vector<1x3x16xf32> to vector<3x16xf32>
    %cst_461 = arith.constant dense<0.000000e+00> : vector<3x128xf32>
    %690 = tpu.matmul %689, %686, %cst_461 {dimension_numbers = #tpu.dot_dimension_numbers<[1], [0], [0], [1], [0, 0, 1, 1], [], []>} : vector<3x16xf32>, vector<16x128xf32>, vector<3x128xf32> -> vector<3x128xf32>
    %691 = arith.addf %687, %690 : vector<3x128xf32>
    %c127_i32_462 = arith.constant 127 : i32
    %692 = tpu.dynamic_rotate %686 by %c127_i32_462 dim 1 : vector<16x128xf32>, i32 -> vector<16x128xf32>
    %c1_463 = arith.constant 1 : index
    %c0_464 = arith.constant 0 : index
    %c0_465 = arith.constant 0 : index
    %693 = vector.load %arg4[%c1_463, %c0_464, %c0_465] : memref<3x3x16xf32, #tpu.memory_space<vmem>>, vector<1x3x16xf32>
    %694 = vector.shape_cast %693 : vector<1x3x16xf32> to vector<3x16xf32>
    %cst_466 = arith.constant dense<0.000000e+00> : vector<3x128xf32>
    %695 = tpu.matmul %694, %692, %cst_466 {dimension_numbers = #tpu.dot_dimension_numbers<[1], [0], [0], [1], [0, 0, 1, 1], [], []>} : vector<3x16xf32>, vector<16x128xf32>, vector<3x128xf32> -> vector<3x128xf32>
    %696 = arith.addf %691, %695 : vector<3x128xf32>
    %c126_i32_467 = arith.constant 126 : i32
    %697 = tpu.dynamic_rotate %686 by %c126_i32_467 dim 1 : vector<16x128xf32>, i32 -> vector<16x128xf32>
    %c2_468 = arith.constant 2 : index
    %c0_469 = arith.constant 0 : index
    %c0_470 = arith.constant 0 : index
    %698 = vector.load %arg4[%c2_468, %c0_469, %c0_470] : memref<3x3x16xf32, #tpu.memory_space<vmem>>, vector<1x3x16xf32>
    %699 = vector.shape_cast %698 : vector<1x3x16xf32> to vector<3x16xf32>
    %cst_471 = arith.constant dense<0.000000e+00> : vector<3x128xf32>
    %700 = tpu.matmul %699, %697, %cst_471 {dimension_numbers = #tpu.dot_dimension_numbers<[1], [0], [0], [1], [0, 0, 1, 1], [], []>} : vector<3x16xf32>, vector<16x128xf32>, vector<3x128xf32> -> vector<3x128xf32>
    %701 = arith.addf %696, %700 : vector<3x128xf32>
    %702 = vector.extract_strided_slice %701 {offsets = [0, 0], sizes = [1, 24], strides = [1, 1]} : vector<3x128xf32> to vector<1x24xf32>
    %703 = vector.shape_cast %702 : vector<1x24xf32> to vector<24xf32>
    %704 = vector.extract_strided_slice %701 {offsets = [1, 0], sizes = [1, 24], strides = [1, 1]} : vector<3x128xf32> to vector<1x24xf32>
    %705 = vector.shape_cast %704 : vector<1x24xf32> to vector<24xf32>
    %706 = arith.addf %644, %705 : vector<24xf32>
    %707 = vector.extract_strided_slice %701 {offsets = [2, 0], sizes = [1, 24], strides = [1, 1]} : vector<3x128xf32> to vector<1x24xf32>
    %708 = vector.shape_cast %707 : vector<1x24xf32> to vector<24xf32>
    %709 = arith.addf %647, %708 : vector<24xf32>
    %c0_472 = arith.constant 0 : index
    %c9_473 = arith.constant 9 : index
    %c0_474 = arith.constant 0 : index
    %710 = vector.load %arg7[%c0_472, %c9_473, %c0_474] : memref<1x16x24xf32, #tpu.memory_space<vmem>>, vector<1x1x24xf32>
    %711 = vector.shape_cast %710 : vector<1x1x24xf32> to vector<24xf32>
    %712 = vector.shape_cast %709 : vector<24xf32> to vector<1x1x24xf32>
    tpu.vector_store %arg7[%c0_472, %c9_473, %c0_474], %712 {strides = array<i32>} : memref<1x16x24xf32, #tpu.memory_space<vmem>>, vector<1x1x24xf32>,
    %c11_i32 = arith.constant 11 : i32
    %713 = arith.addi %13, %c11_i32 : i32
    %c0_i32_475 = arith.constant 0 : i32
    %714 = arith.cmpi sge, %713, %c0_i32_475 : i32
    %c40_i32_476 = arith.constant 40 : i32
    %715 = arith.cmpi slt, %713, %c40_i32_476 : i32
    %716 = arith.andi %714, %715 : i1
    %717 = arith.index_cast %0 : i32 to index
    %c36 = arith.constant 36 : index
    %c0_477 = arith.constant 0 : index
    %718 = vector.load %arg8[%717, %c36, %c0_477] : memref<2x60x128xf32, #tpu.memory_space<vmem>>, vector<1x9x128xf32>
    %719 = vector.shape_cast %718 : vector<1x9x128xf32> to vector<9x128xf32>
    %cst_478 = arith.constant 0.000000e+00 : f32
    %720 = vector.broadcast %cst_478 : f32 to vector<16x128xf32>
    %c0_479 = arith.constant 0 : index
    %c0_480 = arith.constant 0 : index
    %c0_481 = arith.constant 0 : index
    %721 = vector.load %arg3[%c0_479, %c0_480, %c0_481] : memref<3x16x9xf32, #tpu.memory_space<vmem>>, vector<1x16x9xf32>
    %722 = vector.shape_cast %721 : vector<1x16x9xf32> to vector<16x9xf32>
    %cst_482 = arith.constant dense<0.000000e+00> : vector<16x128xf32>
    %723 = tpu.matmul %722, %719, %cst_482 {dimension_numbers = #tpu.dot_dimension_numbers<[1], [0], [0], [1], [0, 0, 1, 1], [], []>} : vector<16x9xf32>, vector<9x128xf32>, vector<16x128xf32> -> vector<16x128xf32>
    %724 = arith.addf %720, %723 : vector<16x128xf32>
    %c127_i32_483 = arith.constant 127 : i32
    %725 = tpu.dynamic_rotate %719 by %c127_i32_483 dim 1 : vector<9x128xf32>, i32 -> vector<9x128xf32>
    %c1_484 = arith.constant 1 : index
    %c0_485 = arith.constant 0 : index
    %c0_486 = arith.constant 0 : index
    %726 = vector.load %arg3[%c1_484, %c0_485, %c0_486] : memref<3x16x9xf32, #tpu.memory_space<vmem>>, vector<1x16x9xf32>
    %727 = vector.shape_cast %726 : vector<1x16x9xf32> to vector<16x9xf32>
    %cst_487 = arith.constant dense<0.000000e+00> : vector<16x128xf32>
    %728 = tpu.matmul %727, %725, %cst_487 {dimension_numbers = #tpu.dot_dimension_numbers<[1], [0], [0], [1], [0, 0, 1, 1], [], []>} : vector<16x9xf32>, vector<9x128xf32>, vector<16x128xf32> -> vector<16x128xf32>
    %729 = arith.addf %724, %728 : vector<16x128xf32>
    %c126_i32_488 = arith.constant 126 : i32
    %730 = tpu.dynamic_rotate %719 by %c126_i32_488 dim 1 : vector<9x128xf32>, i32 -> vector<9x128xf32>
    %c2_489 = arith.constant 2 : index
    %c0_490 = arith.constant 0 : index
    %c0_491 = arith.constant 0 : index
    %731 = vector.load %arg3[%c2_489, %c0_490, %c0_491] : memref<3x16x9xf32, #tpu.memory_space<vmem>>, vector<1x16x9xf32>
    %732 = vector.shape_cast %731 : vector<1x16x9xf32> to vector<16x9xf32>
    %cst_492 = arith.constant dense<0.000000e+00> : vector<16x128xf32>
    %733 = tpu.matmul %732, %730, %cst_492 {dimension_numbers = #tpu.dot_dimension_numbers<[1], [0], [0], [1], [0, 0, 1, 1], [], []>} : vector<16x9xf32>, vector<9x128xf32>, vector<16x128xf32> -> vector<16x128xf32>
    %734 = arith.addf %729, %733 : vector<16x128xf32>
    %c0_493 = arith.constant 0 : index
    %c0_494 = arith.constant 0 : index
    %735 = vector.load %arg5[%c0_493, %c0_494] : memref<16x1xf32, #tpu.memory_space<vmem>>, vector<16x1xf32>
    %736 = vector.broadcast %735 : vector<16x1xf32> to vector<16x128xf32>
    %737 = arith.addf %734, %736 : vector<16x128xf32>
    %cst_495 = arith.constant 0.000000e+00 : f32
    %738 = vector.broadcast %cst_495 : f32 to vector<16x128xf32>
    %739 = arith.maximumf %737, %738 : vector<16x128xf32>
    %740 = vector.broadcast %716 : i1 to vector<1x128xi1>
    %741 = arith.andi %740, %19 : vector<1x128xi1>
    %cst_496 = arith.constant 0.000000e+00 : f32
    %742 = vector.shape_cast %741 : vector<1x128xi1> to vector<1x128xi1>
    %743 = vector.broadcast %742 : vector<1x128xi1> to vector<16x128xi1>
    %744 = vector.broadcast %cst_496 : f32 to vector<16x128xf32>
    %745 = arith.select %743, %739, %744 : vector<16x128xi1>, vector<16x128xf32>
    %cst_497 = arith.constant 0.000000e+00 : f32
    %746 = vector.broadcast %cst_497 : f32 to vector<3x128xf32>
    %c0_498 = arith.constant 0 : index
    %c0_499 = arith.constant 0 : index
    %c0_500 = arith.constant 0 : index
    %747 = vector.load %arg4[%c0_498, %c0_499, %c0_500] : memref<3x3x16xf32, #tpu.memory_space<vmem>>, vector<1x3x16xf32>
    %748 = vector.shape_cast %747 : vector<1x3x16xf32> to vector<3x16xf32>
    %cst_501 = arith.constant dense<0.000000e+00> : vector<3x128xf32>
    %749 = tpu.matmul %748, %745, %cst_501 {dimension_numbers = #tpu.dot_dimension_numbers<[1], [0], [0], [1], [0, 0, 1, 1], [], []>} : vector<3x16xf32>, vector<16x128xf32>, vector<3x128xf32> -> vector<3x128xf32>
    %750 = arith.addf %746, %749 : vector<3x128xf32>
    %c127_i32_502 = arith.constant 127 : i32
    %751 = tpu.dynamic_rotate %745 by %c127_i32_502 dim 1 : vector<16x128xf32>, i32 -> vector<16x128xf32>
    %c1_503 = arith.constant 1 : index
    %c0_504 = arith.constant 0 : index
    %c0_505 = arith.constant 0 : index
    %752 = vector.load %arg4[%c1_503, %c0_504, %c0_505] : memref<3x3x16xf32, #tpu.memory_space<vmem>>, vector<1x3x16xf32>
    %753 = vector.shape_cast %752 : vector<1x3x16xf32> to vector<3x16xf32>
    %cst_506 = arith.constant dense<0.000000e+00> : vector<3x128xf32>
    %754 = tpu.matmul %753, %751, %cst_506 {dimension_numbers = #tpu.dot_dimension_numbers<[1], [0], [0], [1], [0, 0, 1, 1], [], []>} : vector<3x16xf32>, vector<16x128xf32>, vector<3x128xf32> -> vector<3x128xf32>
    %755 = arith.addf %750, %754 : vector<3x128xf32>
    %c126_i32_507 = arith.constant 126 : i32
    %756 = tpu.dynamic_rotate %745 by %c126_i32_507 dim 1 : vector<16x128xf32>, i32 -> vector<16x128xf32>
    %c2_508 = arith.constant 2 : index
    %c0_509 = arith.constant 0 : index
    %c0_510 = arith.constant 0 : index
    %757 = vector.load %arg4[%c2_508, %c0_509, %c0_510] : memref<3x3x16xf32, #tpu.memory_space<vmem>>, vector<1x3x16xf32>
    %758 = vector.shape_cast %757 : vector<1x3x16xf32> to vector<3x16xf32>
    %cst_511 = arith.constant dense<0.000000e+00> : vector<3x128xf32>
    %759 = tpu.matmul %758, %756, %cst_511 {dimension_numbers = #tpu.dot_dimension_numbers<[1], [0], [0], [1], [0, 0, 1, 1], [], []>} : vector<3x16xf32>, vector<16x128xf32>, vector<3x128xf32> -> vector<3x128xf32>
    %760 = arith.addf %755, %759 : vector<3x128xf32>
    %761 = vector.extract_strided_slice %760 {offsets = [0, 0], sizes = [1, 24], strides = [1, 1]} : vector<3x128xf32> to vector<1x24xf32>
    %762 = vector.shape_cast %761 : vector<1x24xf32> to vector<24xf32>
    %763 = vector.extract_strided_slice %760 {offsets = [1, 0], sizes = [1, 24], strides = [1, 1]} : vector<3x128xf32> to vector<1x24xf32>
    %764 = vector.shape_cast %763 : vector<1x24xf32> to vector<24xf32>
    %765 = arith.addf %703, %764 : vector<24xf32>
    %766 = vector.extract_strided_slice %760 {offsets = [2, 0], sizes = [1, 24], strides = [1, 1]} : vector<3x128xf32> to vector<1x24xf32>
    %767 = vector.shape_cast %766 : vector<1x24xf32> to vector<24xf32>
    %768 = arith.addf %706, %767 : vector<24xf32>
    %c0_512 = arith.constant 0 : index
    %c10 = arith.constant 10 : index
    %c0_513 = arith.constant 0 : index
    %769 = vector.load %arg7[%c0_512, %c10, %c0_513] : memref<1x16x24xf32, #tpu.memory_space<vmem>>, vector<1x1x24xf32>
    %770 = vector.shape_cast %769 : vector<1x1x24xf32> to vector<24xf32>
    %771 = vector.shape_cast %768 : vector<24xf32> to vector<1x1x24xf32>
    tpu.vector_store %arg7[%c0_512, %c10, %c0_513], %771 {strides = array<i32>} : memref<1x16x24xf32, #tpu.memory_space<vmem>>, vector<1x1x24xf32>,
    %c12_i32 = arith.constant 12 : i32
    %772 = arith.addi %13, %c12_i32 : i32
    %c0_i32_514 = arith.constant 0 : i32
    %773 = arith.cmpi sge, %772, %c0_i32_514 : i32
    %c40_i32_515 = arith.constant 40 : i32
    %774 = arith.cmpi slt, %772, %c40_i32_515 : i32
    %775 = arith.andi %773, %774 : i1
    %776 = arith.index_cast %0 : i32 to index
    %c39 = arith.constant 39 : index
    %c0_516 = arith.constant 0 : index
    %777 = vector.load %arg8[%776, %c39, %c0_516] : memref<2x60x128xf32, #tpu.memory_space<vmem>>, vector<1x9x128xf32>
    %778 = vector.shape_cast %777 : vector<1x9x128xf32> to vector<9x128xf32>
    %cst_517 = arith.constant 0.000000e+00 : f32
    %779 = vector.broadcast %cst_517 : f32 to vector<16x128xf32>
    %c0_518 = arith.constant 0 : index
    %c0_519 = arith.constant 0 : index
    %c0_520 = arith.constant 0 : index
    %780 = vector.load %arg3[%c0_518, %c0_519, %c0_520] : memref<3x16x9xf32, #tpu.memory_space<vmem>>, vector<1x16x9xf32>
    %781 = vector.shape_cast %780 : vector<1x16x9xf32> to vector<16x9xf32>
    %cst_521 = arith.constant dense<0.000000e+00> : vector<16x128xf32>
    %782 = tpu.matmul %781, %778, %cst_521 {dimension_numbers = #tpu.dot_dimension_numbers<[1], [0], [0], [1], [0, 0, 1, 1], [], []>} : vector<16x9xf32>, vector<9x128xf32>, vector<16x128xf32> -> vector<16x128xf32>
    %783 = arith.addf %779, %782 : vector<16x128xf32>
    %c127_i32_522 = arith.constant 127 : i32
    %784 = tpu.dynamic_rotate %778 by %c127_i32_522 dim 1 : vector<9x128xf32>, i32 -> vector<9x128xf32>
    %c1_523 = arith.constant 1 : index
    %c0_524 = arith.constant 0 : index
    %c0_525 = arith.constant 0 : index
    %785 = vector.load %arg3[%c1_523, %c0_524, %c0_525] : memref<3x16x9xf32, #tpu.memory_space<vmem>>, vector<1x16x9xf32>
    %786 = vector.shape_cast %785 : vector<1x16x9xf32> to vector<16x9xf32>
    %cst_526 = arith.constant dense<0.000000e+00> : vector<16x128xf32>
    %787 = tpu.matmul %786, %784, %cst_526 {dimension_numbers = #tpu.dot_dimension_numbers<[1], [0], [0], [1], [0, 0, 1, 1], [], []>} : vector<16x9xf32>, vector<9x128xf32>, vector<16x128xf32> -> vector<16x128xf32>
    %788 = arith.addf %783, %787 : vector<16x128xf32>
    %c126_i32_527 = arith.constant 126 : i32
    %789 = tpu.dynamic_rotate %778 by %c126_i32_527 dim 1 : vector<9x128xf32>, i32 -> vector<9x128xf32>
    %c2_528 = arith.constant 2 : index
    %c0_529 = arith.constant 0 : index
    %c0_530 = arith.constant 0 : index
    %790 = vector.load %arg3[%c2_528, %c0_529, %c0_530] : memref<3x16x9xf32, #tpu.memory_space<vmem>>, vector<1x16x9xf32>
    %791 = vector.shape_cast %790 : vector<1x16x9xf32> to vector<16x9xf32>
    %cst_531 = arith.constant dense<0.000000e+00> : vector<16x128xf32>
    %792 = tpu.matmul %791, %789, %cst_531 {dimension_numbers = #tpu.dot_dimension_numbers<[1], [0], [0], [1], [0, 0, 1, 1], [], []>} : vector<16x9xf32>, vector<9x128xf32>, vector<16x128xf32> -> vector<16x128xf32>
    %793 = arith.addf %788, %792 : vector<16x128xf32>
    %c0_532 = arith.constant 0 : index
    %c0_533 = arith.constant 0 : index
    %794 = vector.load %arg5[%c0_532, %c0_533] : memref<16x1xf32, #tpu.memory_space<vmem>>, vector<16x1xf32>
    %795 = vector.broadcast %794 : vector<16x1xf32> to vector<16x128xf32>
    %796 = arith.addf %793, %795 : vector<16x128xf32>
    %cst_534 = arith.constant 0.000000e+00 : f32
    %797 = vector.broadcast %cst_534 : f32 to vector<16x128xf32>
    %798 = arith.maximumf %796, %797 : vector<16x128xf32>
    %799 = vector.broadcast %775 : i1 to vector<1x128xi1>
    %800 = arith.andi %799, %19 : vector<1x128xi1>
    %cst_535 = arith.constant 0.000000e+00 : f32
    %801 = vector.shape_cast %800 : vector<1x128xi1> to vector<1x128xi1>
    %802 = vector.broadcast %801 : vector<1x128xi1> to vector<16x128xi1>
    %803 = vector.broadcast %cst_535 : f32 to vector<16x128xf32>
    %804 = arith.select %802, %798, %803 : vector<16x128xi1>, vector<16x128xf32>
    %cst_536 = arith.constant 0.000000e+00 : f32
    %805 = vector.broadcast %cst_536 : f32 to vector<3x128xf32>
    %c0_537 = arith.constant 0 : index
    %c0_538 = arith.constant 0 : index
    %c0_539 = arith.constant 0 : index
    %806 = vector.load %arg4[%c0_537, %c0_538, %c0_539] : memref<3x3x16xf32, #tpu.memory_space<vmem>>, vector<1x3x16xf32>
    %807 = vector.shape_cast %806 : vector<1x3x16xf32> to vector<3x16xf32>
    %cst_540 = arith.constant dense<0.000000e+00> : vector<3x128xf32>
    %808 = tpu.matmul %807, %804, %cst_540 {dimension_numbers = #tpu.dot_dimension_numbers<[1], [0], [0], [1], [0, 0, 1, 1], [], []>} : vector<3x16xf32>, vector<16x128xf32>, vector<3x128xf32> -> vector<3x128xf32>
    %809 = arith.addf %805, %808 : vector<3x128xf32>
    %c127_i32_541 = arith.constant 127 : i32
    %810 = tpu.dynamic_rotate %804 by %c127_i32_541 dim 1 : vector<16x128xf32>, i32 -> vector<16x128xf32>
    %c1_542 = arith.constant 1 : index
    %c0_543 = arith.constant 0 : index
    %c0_544 = arith.constant 0 : index
    %811 = vector.load %arg4[%c1_542, %c0_543, %c0_544] : memref<3x3x16xf32, #tpu.memory_space<vmem>>, vector<1x3x16xf32>
    %812 = vector.shape_cast %811 : vector<1x3x16xf32> to vector<3x16xf32>
    %cst_545 = arith.constant dense<0.000000e+00> : vector<3x128xf32>
    %813 = tpu.matmul %812, %810, %cst_545 {dimension_numbers = #tpu.dot_dimension_numbers<[1], [0], [0], [1], [0, 0, 1, 1], [], []>} : vector<3x16xf32>, vector<16x128xf32>, vector<3x128xf32> -> vector<3x128xf32>
    %814 = arith.addf %809, %813 : vector<3x128xf32>
    %c126_i32_546 = arith.constant 126 : i32
    %815 = tpu.dynamic_rotate %804 by %c126_i32_546 dim 1 : vector<16x128xf32>, i32 -> vector<16x128xf32>
    %c2_547 = arith.constant 2 : index
    %c0_548 = arith.constant 0 : index
    %c0_549 = arith.constant 0 : index
    %816 = vector.load %arg4[%c2_547, %c0_548, %c0_549] : memref<3x3x16xf32, #tpu.memory_space<vmem>>, vector<1x3x16xf32>
    %817 = vector.shape_cast %816 : vector<1x3x16xf32> to vector<3x16xf32>
    %cst_550 = arith.constant dense<0.000000e+00> : vector<3x128xf32>
    %818 = tpu.matmul %817, %815, %cst_550 {dimension_numbers = #tpu.dot_dimension_numbers<[1], [0], [0], [1], [0, 0, 1, 1], [], []>} : vector<3x16xf32>, vector<16x128xf32>, vector<3x128xf32> -> vector<3x128xf32>
    %819 = arith.addf %814, %818 : vector<3x128xf32>
    %820 = vector.extract_strided_slice %819 {offsets = [0, 0], sizes = [1, 24], strides = [1, 1]} : vector<3x128xf32> to vector<1x24xf32>
    %821 = vector.shape_cast %820 : vector<1x24xf32> to vector<24xf32>
    %822 = vector.extract_strided_slice %819 {offsets = [1, 0], sizes = [1, 24], strides = [1, 1]} : vector<3x128xf32> to vector<1x24xf32>
    %823 = vector.shape_cast %822 : vector<1x24xf32> to vector<24xf32>
    %824 = arith.addf %762, %823 : vector<24xf32>
    %825 = vector.extract_strided_slice %819 {offsets = [2, 0], sizes = [1, 24], strides = [1, 1]} : vector<3x128xf32> to vector<1x24xf32>
    %826 = vector.shape_cast %825 : vector<1x24xf32> to vector<24xf32>
    %827 = arith.addf %765, %826 : vector<24xf32>
    %c0_551 = arith.constant 0 : index
    %c11 = arith.constant 11 : index
    %c0_552 = arith.constant 0 : index
    %828 = vector.load %arg7[%c0_551, %c11, %c0_552] : memref<1x16x24xf32, #tpu.memory_space<vmem>>, vector<1x1x24xf32>
    %829 = vector.shape_cast %828 : vector<1x1x24xf32> to vector<24xf32>
    %830 = vector.shape_cast %827 : vector<24xf32> to vector<1x1x24xf32>
    tpu.vector_store %arg7[%c0_551, %c11, %c0_552], %830 {strides = array<i32>} : memref<1x16x24xf32, #tpu.memory_space<vmem>>, vector<1x1x24xf32>,
    %c13_i32 = arith.constant 13 : i32
    %831 = arith.addi %13, %c13_i32 : i32
    %c0_i32_553 = arith.constant 0 : i32
    %832 = arith.cmpi sge, %831, %c0_i32_553 : i32
    %c40_i32_554 = arith.constant 40 : i32
    %833 = arith.cmpi slt, %831, %c40_i32_554 : i32
    %834 = arith.andi %832, %833 : i1
    %835 = arith.index_cast %0 : i32 to index
    %c42 = arith.constant 42 : index
    %c0_555 = arith.constant 0 : index
    %836 = vector.load %arg8[%835, %c42, %c0_555] : memref<2x60x128xf32, #tpu.memory_space<vmem>>, vector<1x9x128xf32>
    %837 = vector.shape_cast %836 : vector<1x9x128xf32> to vector<9x128xf32>
    %cst_556 = arith.constant 0.000000e+00 : f32
    %838 = vector.broadcast %cst_556 : f32 to vector<16x128xf32>
    %c0_557 = arith.constant 0 : index
    %c0_558 = arith.constant 0 : index
    %c0_559 = arith.constant 0 : index
    %839 = vector.load %arg3[%c0_557, %c0_558, %c0_559] : memref<3x16x9xf32, #tpu.memory_space<vmem>>, vector<1x16x9xf32>
    %840 = vector.shape_cast %839 : vector<1x16x9xf32> to vector<16x9xf32>
    %cst_560 = arith.constant dense<0.000000e+00> : vector<16x128xf32>
    %841 = tpu.matmul %840, %837, %cst_560 {dimension_numbers = #tpu.dot_dimension_numbers<[1], [0], [0], [1], [0, 0, 1, 1], [], []>} : vector<16x9xf32>, vector<9x128xf32>, vector<16x128xf32> -> vector<16x128xf32>
    %842 = arith.addf %838, %841 : vector<16x128xf32>
    %c127_i32_561 = arith.constant 127 : i32
    %843 = tpu.dynamic_rotate %837 by %c127_i32_561 dim 1 : vector<9x128xf32>, i32 -> vector<9x128xf32>
    %c1_562 = arith.constant 1 : index
    %c0_563 = arith.constant 0 : index
    %c0_564 = arith.constant 0 : index
    %844 = vector.load %arg3[%c1_562, %c0_563, %c0_564] : memref<3x16x9xf32, #tpu.memory_space<vmem>>, vector<1x16x9xf32>
    %845 = vector.shape_cast %844 : vector<1x16x9xf32> to vector<16x9xf32>
    %cst_565 = arith.constant dense<0.000000e+00> : vector<16x128xf32>
    %846 = tpu.matmul %845, %843, %cst_565 {dimension_numbers = #tpu.dot_dimension_numbers<[1], [0], [0], [1], [0, 0, 1, 1], [], []>} : vector<16x9xf32>, vector<9x128xf32>, vector<16x128xf32> -> vector<16x128xf32>
    %847 = arith.addf %842, %846 : vector<16x128xf32>
    %c126_i32_566 = arith.constant 126 : i32
    %848 = tpu.dynamic_rotate %837 by %c126_i32_566 dim 1 : vector<9x128xf32>, i32 -> vector<9x128xf32>
    %c2_567 = arith.constant 2 : index
    %c0_568 = arith.constant 0 : index
    %c0_569 = arith.constant 0 : index
    %849 = vector.load %arg3[%c2_567, %c0_568, %c0_569] : memref<3x16x9xf32, #tpu.memory_space<vmem>>, vector<1x16x9xf32>
    %850 = vector.shape_cast %849 : vector<1x16x9xf32> to vector<16x9xf32>
    %cst_570 = arith.constant dense<0.000000e+00> : vector<16x128xf32>
    %851 = tpu.matmul %850, %848, %cst_570 {dimension_numbers = #tpu.dot_dimension_numbers<[1], [0], [0], [1], [0, 0, 1, 1], [], []>} : vector<16x9xf32>, vector<9x128xf32>, vector<16x128xf32> -> vector<16x128xf32>
    %852 = arith.addf %847, %851 : vector<16x128xf32>
    %c0_571 = arith.constant 0 : index
    %c0_572 = arith.constant 0 : index
    %853 = vector.load %arg5[%c0_571, %c0_572] : memref<16x1xf32, #tpu.memory_space<vmem>>, vector<16x1xf32>
    %854 = vector.broadcast %853 : vector<16x1xf32> to vector<16x128xf32>
    %855 = arith.addf %852, %854 : vector<16x128xf32>
    %cst_573 = arith.constant 0.000000e+00 : f32
    %856 = vector.broadcast %cst_573 : f32 to vector<16x128xf32>
    %857 = arith.maximumf %855, %856 : vector<16x128xf32>
    %858 = vector.broadcast %834 : i1 to vector<1x128xi1>
    %859 = arith.andi %858, %19 : vector<1x128xi1>
    %cst_574 = arith.constant 0.000000e+00 : f32
    %860 = vector.shape_cast %859 : vector<1x128xi1> to vector<1x128xi1>
    %861 = vector.broadcast %860 : vector<1x128xi1> to vector<16x128xi1>
    %862 = vector.broadcast %cst_574 : f32 to vector<16x128xf32>
    %863 = arith.select %861, %857, %862 : vector<16x128xi1>, vector<16x128xf32>
    %cst_575 = arith.constant 0.000000e+00 : f32
    %864 = vector.broadcast %cst_575 : f32 to vector<3x128xf32>
    %c0_576 = arith.constant 0 : index
    %c0_577 = arith.constant 0 : index
    %c0_578 = arith.constant 0 : index
    %865 = vector.load %arg4[%c0_576, %c0_577, %c0_578] : memref<3x3x16xf32, #tpu.memory_space<vmem>>, vector<1x3x16xf32>
    %866 = vector.shape_cast %865 : vector<1x3x16xf32> to vector<3x16xf32>
    %cst_579 = arith.constant dense<0.000000e+00> : vector<3x128xf32>
    %867 = tpu.matmul %866, %863, %cst_579 {dimension_numbers = #tpu.dot_dimension_numbers<[1], [0], [0], [1], [0, 0, 1, 1], [], []>} : vector<3x16xf32>, vector<16x128xf32>, vector<3x128xf32> -> vector<3x128xf32>
    %868 = arith.addf %864, %867 : vector<3x128xf32>
    %c127_i32_580 = arith.constant 127 : i32
    %869 = tpu.dynamic_rotate %863 by %c127_i32_580 dim 1 : vector<16x128xf32>, i32 -> vector<16x128xf32>
    %c1_581 = arith.constant 1 : index
    %c0_582 = arith.constant 0 : index
    %c0_583 = arith.constant 0 : index
    %870 = vector.load %arg4[%c1_581, %c0_582, %c0_583] : memref<3x3x16xf32, #tpu.memory_space<vmem>>, vector<1x3x16xf32>
    %871 = vector.shape_cast %870 : vector<1x3x16xf32> to vector<3x16xf32>
    %cst_584 = arith.constant dense<0.000000e+00> : vector<3x128xf32>
    %872 = tpu.matmul %871, %869, %cst_584 {dimension_numbers = #tpu.dot_dimension_numbers<[1], [0], [0], [1], [0, 0, 1, 1], [], []>} : vector<3x16xf32>, vector<16x128xf32>, vector<3x128xf32> -> vector<3x128xf32>
    %873 = arith.addf %868, %872 : vector<3x128xf32>
    %c126_i32_585 = arith.constant 126 : i32
    %874 = tpu.dynamic_rotate %863 by %c126_i32_585 dim 1 : vector<16x128xf32>, i32 -> vector<16x128xf32>
    %c2_586 = arith.constant 2 : index
    %c0_587 = arith.constant 0 : index
    %c0_588 = arith.constant 0 : index
    %875 = vector.load %arg4[%c2_586, %c0_587, %c0_588] : memref<3x3x16xf32, #tpu.memory_space<vmem>>, vector<1x3x16xf32>
    %876 = vector.shape_cast %875 : vector<1x3x16xf32> to vector<3x16xf32>
    %cst_589 = arith.constant dense<0.000000e+00> : vector<3x128xf32>
    %877 = tpu.matmul %876, %874, %cst_589 {dimension_numbers = #tpu.dot_dimension_numbers<[1], [0], [0], [1], [0, 0, 1, 1], [], []>} : vector<3x16xf32>, vector<16x128xf32>, vector<3x128xf32> -> vector<3x128xf32>
    %878 = arith.addf %873, %877 : vector<3x128xf32>
    %879 = vector.extract_strided_slice %878 {offsets = [0, 0], sizes = [1, 24], strides = [1, 1]} : vector<3x128xf32> to vector<1x24xf32>
    %880 = vector.shape_cast %879 : vector<1x24xf32> to vector<24xf32>
    %881 = vector.extract_strided_slice %878 {offsets = [1, 0], sizes = [1, 24], strides = [1, 1]} : vector<3x128xf32> to vector<1x24xf32>
    %882 = vector.shape_cast %881 : vector<1x24xf32> to vector<24xf32>
    %883 = arith.addf %821, %882 : vector<24xf32>
    %884 = vector.extract_strided_slice %878 {offsets = [2, 0], sizes = [1, 24], strides = [1, 1]} : vector<3x128xf32> to vector<1x24xf32>
    %885 = vector.shape_cast %884 : vector<1x24xf32> to vector<24xf32>
    %886 = arith.addf %824, %885 : vector<24xf32>
    %c0_590 = arith.constant 0 : index
    %c12_591 = arith.constant 12 : index
    %c0_592 = arith.constant 0 : index
    %887 = vector.load %arg7[%c0_590, %c12_591, %c0_592] : memref<1x16x24xf32, #tpu.memory_space<vmem>>, vector<1x1x24xf32>
    %888 = vector.shape_cast %887 : vector<1x1x24xf32> to vector<24xf32>
    %889 = vector.shape_cast %886 : vector<24xf32> to vector<1x1x24xf32>
    tpu.vector_store %arg7[%c0_590, %c12_591, %c0_592], %889 {strides = array<i32>} : memref<1x16x24xf32, #tpu.memory_space<vmem>>, vector<1x1x24xf32>,
    %c14_i32 = arith.constant 14 : i32
    %890 = arith.addi %13, %c14_i32 : i32
    %c0_i32_593 = arith.constant 0 : i32
    %891 = arith.cmpi sge, %890, %c0_i32_593 : i32
    %c40_i32_594 = arith.constant 40 : i32
    %892 = arith.cmpi slt, %890, %c40_i32_594 : i32
    %893 = arith.andi %891, %892 : i1
    %894 = arith.index_cast %0 : i32 to index
    %c45 = arith.constant 45 : index
    %c0_595 = arith.constant 0 : index
    %895 = vector.load %arg8[%894, %c45, %c0_595] : memref<2x60x128xf32, #tpu.memory_space<vmem>>, vector<1x9x128xf32>
    %896 = vector.shape_cast %895 : vector<1x9x128xf32> to vector<9x128xf32>
    %cst_596 = arith.constant 0.000000e+00 : f32
    %897 = vector.broadcast %cst_596 : f32 to vector<16x128xf32>
    %c0_597 = arith.constant 0 : index
    %c0_598 = arith.constant 0 : index
    %c0_599 = arith.constant 0 : index
    %898 = vector.load %arg3[%c0_597, %c0_598, %c0_599] : memref<3x16x9xf32, #tpu.memory_space<vmem>>, vector<1x16x9xf32>
    %899 = vector.shape_cast %898 : vector<1x16x9xf32> to vector<16x9xf32>
    %cst_600 = arith.constant dense<0.000000e+00> : vector<16x128xf32>
    %900 = tpu.matmul %899, %896, %cst_600 {dimension_numbers = #tpu.dot_dimension_numbers<[1], [0], [0], [1], [0, 0, 1, 1], [], []>} : vector<16x9xf32>, vector<9x128xf32>, vector<16x128xf32> -> vector<16x128xf32>
    %901 = arith.addf %897, %900 : vector<16x128xf32>
    %c127_i32_601 = arith.constant 127 : i32
    %902 = tpu.dynamic_rotate %896 by %c127_i32_601 dim 1 : vector<9x128xf32>, i32 -> vector<9x128xf32>
    %c1_602 = arith.constant 1 : index
    %c0_603 = arith.constant 0 : index
    %c0_604 = arith.constant 0 : index
    %903 = vector.load %arg3[%c1_602, %c0_603, %c0_604] : memref<3x16x9xf32, #tpu.memory_space<vmem>>, vector<1x16x9xf32>
    %904 = vector.shape_cast %903 : vector<1x16x9xf32> to vector<16x9xf32>
    %cst_605 = arith.constant dense<0.000000e+00> : vector<16x128xf32>
    %905 = tpu.matmul %904, %902, %cst_605 {dimension_numbers = #tpu.dot_dimension_numbers<[1], [0], [0], [1], [0, 0, 1, 1], [], []>} : vector<16x9xf32>, vector<9x128xf32>, vector<16x128xf32> -> vector<16x128xf32>
    %906 = arith.addf %901, %905 : vector<16x128xf32>
    %c126_i32_606 = arith.constant 126 : i32
    %907 = tpu.dynamic_rotate %896 by %c126_i32_606 dim 1 : vector<9x128xf32>, i32 -> vector<9x128xf32>
    %c2_607 = arith.constant 2 : index
    %c0_608 = arith.constant 0 : index
    %c0_609 = arith.constant 0 : index
    %908 = vector.load %arg3[%c2_607, %c0_608, %c0_609] : memref<3x16x9xf32, #tpu.memory_space<vmem>>, vector<1x16x9xf32>
    %909 = vector.shape_cast %908 : vector<1x16x9xf32> to vector<16x9xf32>
    %cst_610 = arith.constant dense<0.000000e+00> : vector<16x128xf32>
    %910 = tpu.matmul %909, %907, %cst_610 {dimension_numbers = #tpu.dot_dimension_numbers<[1], [0], [0], [1], [0, 0, 1, 1], [], []>} : vector<16x9xf32>, vector<9x128xf32>, vector<16x128xf32> -> vector<16x128xf32>
    %911 = arith.addf %906, %910 : vector<16x128xf32>
    %c0_611 = arith.constant 0 : index
    %c0_612 = arith.constant 0 : index
    %912 = vector.load %arg5[%c0_611, %c0_612] : memref<16x1xf32, #tpu.memory_space<vmem>>, vector<16x1xf32>
    %913 = vector.broadcast %912 : vector<16x1xf32> to vector<16x128xf32>
    %914 = arith.addf %911, %913 : vector<16x128xf32>
    %cst_613 = arith.constant 0.000000e+00 : f32
    %915 = vector.broadcast %cst_613 : f32 to vector<16x128xf32>
    %916 = arith.maximumf %914, %915 : vector<16x128xf32>
    %917 = vector.broadcast %893 : i1 to vector<1x128xi1>
    %918 = arith.andi %917, %19 : vector<1x128xi1>
    %cst_614 = arith.constant 0.000000e+00 : f32
    %919 = vector.shape_cast %918 : vector<1x128xi1> to vector<1x128xi1>
    %920 = vector.broadcast %919 : vector<1x128xi1> to vector<16x128xi1>
    %921 = vector.broadcast %cst_614 : f32 to vector<16x128xf32>
    %922 = arith.select %920, %916, %921 : vector<16x128xi1>, vector<16x128xf32>
    %cst_615 = arith.constant 0.000000e+00 : f32
    %923 = vector.broadcast %cst_615 : f32 to vector<3x128xf32>
    %c0_616 = arith.constant 0 : index
    %c0_617 = arith.constant 0 : index
    %c0_618 = arith.constant 0 : index
    %924 = vector.load %arg4[%c0_616, %c0_617, %c0_618] : memref<3x3x16xf32, #tpu.memory_space<vmem>>, vector<1x3x16xf32>
    %925 = vector.shape_cast %924 : vector<1x3x16xf32> to vector<3x16xf32>
    %cst_619 = arith.constant dense<0.000000e+00> : vector<3x128xf32>
    %926 = tpu.matmul %925, %922, %cst_619 {dimension_numbers = #tpu.dot_dimension_numbers<[1], [0], [0], [1], [0, 0, 1, 1], [], []>} : vector<3x16xf32>, vector<16x128xf32>, vector<3x128xf32> -> vector<3x128xf32>
    %927 = arith.addf %923, %926 : vector<3x128xf32>
    %c127_i32_620 = arith.constant 127 : i32
    %928 = tpu.dynamic_rotate %922 by %c127_i32_620 dim 1 : vector<16x128xf32>, i32 -> vector<16x128xf32>
    %c1_621 = arith.constant 1 : index
    %c0_622 = arith.constant 0 : index
    %c0_623 = arith.constant 0 : index
    %929 = vector.load %arg4[%c1_621, %c0_622, %c0_623] : memref<3x3x16xf32, #tpu.memory_space<vmem>>, vector<1x3x16xf32>
    %930 = vector.shape_cast %929 : vector<1x3x16xf32> to vector<3x16xf32>
    %cst_624 = arith.constant dense<0.000000e+00> : vector<3x128xf32>
    %931 = tpu.matmul %930, %928, %cst_624 {dimension_numbers = #tpu.dot_dimension_numbers<[1], [0], [0], [1], [0, 0, 1, 1], [], []>} : vector<3x16xf32>, vector<16x128xf32>, vector<3x128xf32> -> vector<3x128xf32>
    %932 = arith.addf %927, %931 : vector<3x128xf32>
    %c126_i32_625 = arith.constant 126 : i32
    %933 = tpu.dynamic_rotate %922 by %c126_i32_625 dim 1 : vector<16x128xf32>, i32 -> vector<16x128xf32>
    %c2_626 = arith.constant 2 : index
    %c0_627 = arith.constant 0 : index
    %c0_628 = arith.constant 0 : index
    %934 = vector.load %arg4[%c2_626, %c0_627, %c0_628] : memref<3x3x16xf32, #tpu.memory_space<vmem>>, vector<1x3x16xf32>
    %935 = vector.shape_cast %934 : vector<1x3x16xf32> to vector<3x16xf32>
    %cst_629 = arith.constant dense<0.000000e+00> : vector<3x128xf32>
    %936 = tpu.matmul %935, %933, %cst_629 {dimension_numbers = #tpu.dot_dimension_numbers<[1], [0], [0], [1], [0, 0, 1, 1], [], []>} : vector<3x16xf32>, vector<16x128xf32>, vector<3x128xf32> -> vector<3x128xf32>
    %937 = arith.addf %932, %936 : vector<3x128xf32>
    %938 = vector.extract_strided_slice %937 {offsets = [0, 0], sizes = [1, 24], strides = [1, 1]} : vector<3x128xf32> to vector<1x24xf32>
    %939 = vector.shape_cast %938 : vector<1x24xf32> to vector<24xf32>
    %940 = vector.extract_strided_slice %937 {offsets = [1, 0], sizes = [1, 24], strides = [1, 1]} : vector<3x128xf32> to vector<1x24xf32>
    %941 = vector.shape_cast %940 : vector<1x24xf32> to vector<24xf32>
    %942 = arith.addf %880, %941 : vector<24xf32>
    %943 = vector.extract_strided_slice %937 {offsets = [2, 0], sizes = [1, 24], strides = [1, 1]} : vector<3x128xf32> to vector<1x24xf32>
    %944 = vector.shape_cast %943 : vector<1x24xf32> to vector<24xf32>
    %945 = arith.addf %883, %944 : vector<24xf32>
    %c0_630 = arith.constant 0 : index
    %c13 = arith.constant 13 : index
    %c0_631 = arith.constant 0 : index
    %946 = vector.load %arg7[%c0_630, %c13, %c0_631] : memref<1x16x24xf32, #tpu.memory_space<vmem>>, vector<1x1x24xf32>
    %947 = vector.shape_cast %946 : vector<1x1x24xf32> to vector<24xf32>
    %948 = vector.shape_cast %945 : vector<24xf32> to vector<1x1x24xf32>
    tpu.vector_store %arg7[%c0_630, %c13, %c0_631], %948 {strides = array<i32>} : memref<1x16x24xf32, #tpu.memory_space<vmem>>, vector<1x1x24xf32>,
    %c15_i32 = arith.constant 15 : i32
    %949 = arith.addi %13, %c15_i32 : i32
    %c0_i32_632 = arith.constant 0 : i32
    %950 = arith.cmpi sge, %949, %c0_i32_632 : i32
    %c40_i32_633 = arith.constant 40 : i32
    %951 = arith.cmpi slt, %949, %c40_i32_633 : i32
    %952 = arith.andi %950, %951 : i1
    %953 = arith.index_cast %0 : i32 to index
    %c48 = arith.constant 48 : index
    %c0_634 = arith.constant 0 : index
    %954 = vector.load %arg8[%953, %c48, %c0_634] : memref<2x60x128xf32, #tpu.memory_space<vmem>>, vector<1x9x128xf32>
    %955 = vector.shape_cast %954 : vector<1x9x128xf32> to vector<9x128xf32>
    %cst_635 = arith.constant 0.000000e+00 : f32
    %956 = vector.broadcast %cst_635 : f32 to vector<16x128xf32>
    %c0_636 = arith.constant 0 : index
    %c0_637 = arith.constant 0 : index
    %c0_638 = arith.constant 0 : index
    %957 = vector.load %arg3[%c0_636, %c0_637, %c0_638] : memref<3x16x9xf32, #tpu.memory_space<vmem>>, vector<1x16x9xf32>
    %958 = vector.shape_cast %957 : vector<1x16x9xf32> to vector<16x9xf32>
    %cst_639 = arith.constant dense<0.000000e+00> : vector<16x128xf32>
    %959 = tpu.matmul %958, %955, %cst_639 {dimension_numbers = #tpu.dot_dimension_numbers<[1], [0], [0], [1], [0, 0, 1, 1], [], []>} : vector<16x9xf32>, vector<9x128xf32>, vector<16x128xf32> -> vector<16x128xf32>
    %960 = arith.addf %956, %959 : vector<16x128xf32>
    %c127_i32_640 = arith.constant 127 : i32
    %961 = tpu.dynamic_rotate %955 by %c127_i32_640 dim 1 : vector<9x128xf32>, i32 -> vector<9x128xf32>
    %c1_641 = arith.constant 1 : index
    %c0_642 = arith.constant 0 : index
    %c0_643 = arith.constant 0 : index
    %962 = vector.load %arg3[%c1_641, %c0_642, %c0_643] : memref<3x16x9xf32, #tpu.memory_space<vmem>>, vector<1x16x9xf32>
    %963 = vector.shape_cast %962 : vector<1x16x9xf32> to vector<16x9xf32>
    %cst_644 = arith.constant dense<0.000000e+00> : vector<16x128xf32>
    %964 = tpu.matmul %963, %961, %cst_644 {dimension_numbers = #tpu.dot_dimension_numbers<[1], [0], [0], [1], [0, 0, 1, 1], [], []>} : vector<16x9xf32>, vector<9x128xf32>, vector<16x128xf32> -> vector<16x128xf32>
    %965 = arith.addf %960, %964 : vector<16x128xf32>
    %c126_i32_645 = arith.constant 126 : i32
    %966 = tpu.dynamic_rotate %955 by %c126_i32_645 dim 1 : vector<9x128xf32>, i32 -> vector<9x128xf32>
    %c2_646 = arith.constant 2 : index
    %c0_647 = arith.constant 0 : index
    %c0_648 = arith.constant 0 : index
    %967 = vector.load %arg3[%c2_646, %c0_647, %c0_648] : memref<3x16x9xf32, #tpu.memory_space<vmem>>, vector<1x16x9xf32>
    %968 = vector.shape_cast %967 : vector<1x16x9xf32> to vector<16x9xf32>
    %cst_649 = arith.constant dense<0.000000e+00> : vector<16x128xf32>
    %969 = tpu.matmul %968, %966, %cst_649 {dimension_numbers = #tpu.dot_dimension_numbers<[1], [0], [0], [1], [0, 0, 1, 1], [], []>} : vector<16x9xf32>, vector<9x128xf32>, vector<16x128xf32> -> vector<16x128xf32>
    %970 = arith.addf %965, %969 : vector<16x128xf32>
    %c0_650 = arith.constant 0 : index
    %c0_651 = arith.constant 0 : index
    %971 = vector.load %arg5[%c0_650, %c0_651] : memref<16x1xf32, #tpu.memory_space<vmem>>, vector<16x1xf32>
    %972 = vector.broadcast %971 : vector<16x1xf32> to vector<16x128xf32>
    %973 = arith.addf %970, %972 : vector<16x128xf32>
    %cst_652 = arith.constant 0.000000e+00 : f32
    %974 = vector.broadcast %cst_652 : f32 to vector<16x128xf32>
    %975 = arith.maximumf %973, %974 : vector<16x128xf32>
    %976 = vector.broadcast %952 : i1 to vector<1x128xi1>
    %977 = arith.andi %976, %19 : vector<1x128xi1>
    %cst_653 = arith.constant 0.000000e+00 : f32
    %978 = vector.shape_cast %977 : vector<1x128xi1> to vector<1x128xi1>
    %979 = vector.broadcast %978 : vector<1x128xi1> to vector<16x128xi1>
    %980 = vector.broadcast %cst_653 : f32 to vector<16x128xf32>
    %981 = arith.select %979, %975, %980 : vector<16x128xi1>, vector<16x128xf32>
    %cst_654 = arith.constant 0.000000e+00 : f32
    %982 = vector.broadcast %cst_654 : f32 to vector<3x128xf32>
    %c0_655 = arith.constant 0 : index
    %c0_656 = arith.constant 0 : index
    %c0_657 = arith.constant 0 : index
    %983 = vector.load %arg4[%c0_655, %c0_656, %c0_657] : memref<3x3x16xf32, #tpu.memory_space<vmem>>, vector<1x3x16xf32>
    %984 = vector.shape_cast %983 : vector<1x3x16xf32> to vector<3x16xf32>
    %cst_658 = arith.constant dense<0.000000e+00> : vector<3x128xf32>
    %985 = tpu.matmul %984, %981, %cst_658 {dimension_numbers = #tpu.dot_dimension_numbers<[1], [0], [0], [1], [0, 0, 1, 1], [], []>} : vector<3x16xf32>, vector<16x128xf32>, vector<3x128xf32> -> vector<3x128xf32>
    %986 = arith.addf %982, %985 : vector<3x128xf32>
    %c127_i32_659 = arith.constant 127 : i32
    %987 = tpu.dynamic_rotate %981 by %c127_i32_659 dim 1 : vector<16x128xf32>, i32 -> vector<16x128xf32>
    %c1_660 = arith.constant 1 : index
    %c0_661 = arith.constant 0 : index
    %c0_662 = arith.constant 0 : index
    %988 = vector.load %arg4[%c1_660, %c0_661, %c0_662] : memref<3x3x16xf32, #tpu.memory_space<vmem>>, vector<1x3x16xf32>
    %989 = vector.shape_cast %988 : vector<1x3x16xf32> to vector<3x16xf32>
    %cst_663 = arith.constant dense<0.000000e+00> : vector<3x128xf32>
    %990 = tpu.matmul %989, %987, %cst_663 {dimension_numbers = #tpu.dot_dimension_numbers<[1], [0], [0], [1], [0, 0, 1, 1], [], []>} : vector<3x16xf32>, vector<16x128xf32>, vector<3x128xf32> -> vector<3x128xf32>
    %991 = arith.addf %986, %990 : vector<3x128xf32>
    %c126_i32_664 = arith.constant 126 : i32
    %992 = tpu.dynamic_rotate %981 by %c126_i32_664 dim 1 : vector<16x128xf32>, i32 -> vector<16x128xf32>
    %c2_665 = arith.constant 2 : index
    %c0_666 = arith.constant 0 : index
    %c0_667 = arith.constant 0 : index
    %993 = vector.load %arg4[%c2_665, %c0_666, %c0_667] : memref<3x3x16xf32, #tpu.memory_space<vmem>>, vector<1x3x16xf32>
    %994 = vector.shape_cast %993 : vector<1x3x16xf32> to vector<3x16xf32>
    %cst_668 = arith.constant dense<0.000000e+00> : vector<3x128xf32>
    %995 = tpu.matmul %994, %992, %cst_668 {dimension_numbers = #tpu.dot_dimension_numbers<[1], [0], [0], [1], [0, 0, 1, 1], [], []>} : vector<3x16xf32>, vector<16x128xf32>, vector<3x128xf32> -> vector<3x128xf32>
    %996 = arith.addf %991, %995 : vector<3x128xf32>
    %997 = vector.extract_strided_slice %996 {offsets = [1, 0], sizes = [1, 24], strides = [1, 1]} : vector<3x128xf32> to vector<1x24xf32>
    %998 = vector.shape_cast %997 : vector<1x24xf32> to vector<24xf32>
    %999 = arith.addf %939, %998 : vector<24xf32>
    %1000 = vector.extract_strided_slice %996 {offsets = [2, 0], sizes = [1, 24], strides = [1, 1]} : vector<3x128xf32> to vector<1x24xf32>
    %1001 = vector.shape_cast %1000 : vector<1x24xf32> to vector<24xf32>
    %1002 = arith.addf %942, %1001 : vector<24xf32>
    %c0_669 = arith.constant 0 : index
    %c14 = arith.constant 14 : index
    %c0_670 = arith.constant 0 : index
    %1003 = vector.load %arg7[%c0_669, %c14, %c0_670] : memref<1x16x24xf32, #tpu.memory_space<vmem>>, vector<1x1x24xf32>
    %1004 = vector.shape_cast %1003 : vector<1x1x24xf32> to vector<24xf32>
    %1005 = vector.shape_cast %1002 : vector<24xf32> to vector<1x1x24xf32>
    tpu.vector_store %arg7[%c0_669, %c14, %c0_670], %1005 {strides = array<i32>} : memref<1x16x24xf32, #tpu.memory_space<vmem>>, vector<1x1x24xf32>,
    %c16_i32_671 = arith.constant 16 : i32
    %1006 = arith.addi %13, %c16_i32_671 : i32
    %c0_i32_672 = arith.constant 0 : i32
    %1007 = arith.cmpi sge, %1006, %c0_i32_672 : i32
    %c40_i32_673 = arith.constant 40 : i32
    %1008 = arith.cmpi slt, %1006, %c40_i32_673 : i32
    %1009 = arith.andi %1007, %1008 : i1
    %1010 = arith.index_cast %0 : i32 to index
    %c51 = arith.constant 51 : index
    %c0_674 = arith.constant 0 : index
    %1011 = vector.load %arg8[%1010, %c51, %c0_674] : memref<2x60x128xf32, #tpu.memory_space<vmem>>, vector<1x9x128xf32>
    %1012 = vector.shape_cast %1011 : vector<1x9x128xf32> to vector<9x128xf32>
    %cst_675 = arith.constant 0.000000e+00 : f32
    %1013 = vector.broadcast %cst_675 : f32 to vector<16x128xf32>
    %c0_676 = arith.constant 0 : index
    %c0_677 = arith.constant 0 : index
    %c0_678 = arith.constant 0 : index
    %1014 = vector.load %arg3[%c0_676, %c0_677, %c0_678] : memref<3x16x9xf32, #tpu.memory_space<vmem>>, vector<1x16x9xf32>
    %1015 = vector.shape_cast %1014 : vector<1x16x9xf32> to vector<16x9xf32>
    %cst_679 = arith.constant dense<0.000000e+00> : vector<16x128xf32>
    %1016 = tpu.matmul %1015, %1012, %cst_679 {dimension_numbers = #tpu.dot_dimension_numbers<[1], [0], [0], [1], [0, 0, 1, 1], [], []>} : vector<16x9xf32>, vector<9x128xf32>, vector<16x128xf32> -> vector<16x128xf32>
    %1017 = arith.addf %1013, %1016 : vector<16x128xf32>
    %c127_i32_680 = arith.constant 127 : i32
    %1018 = tpu.dynamic_rotate %1012 by %c127_i32_680 dim 1 : vector<9x128xf32>, i32 -> vector<9x128xf32>
    %c1_681 = arith.constant 1 : index
    %c0_682 = arith.constant 0 : index
    %c0_683 = arith.constant 0 : index
    %1019 = vector.load %arg3[%c1_681, %c0_682, %c0_683] : memref<3x16x9xf32, #tpu.memory_space<vmem>>, vector<1x16x9xf32>
    %1020 = vector.shape_cast %1019 : vector<1x16x9xf32> to vector<16x9xf32>
    %cst_684 = arith.constant dense<0.000000e+00> : vector<16x128xf32>
    %1021 = tpu.matmul %1020, %1018, %cst_684 {dimension_numbers = #tpu.dot_dimension_numbers<[1], [0], [0], [1], [0, 0, 1, 1], [], []>} : vector<16x9xf32>, vector<9x128xf32>, vector<16x128xf32> -> vector<16x128xf32>
    %1022 = arith.addf %1017, %1021 : vector<16x128xf32>
    %c126_i32_685 = arith.constant 126 : i32
    %1023 = tpu.dynamic_rotate %1012 by %c126_i32_685 dim 1 : vector<9x128xf32>, i32 -> vector<9x128xf32>
    %c2_686 = arith.constant 2 : index
    %c0_687 = arith.constant 0 : index
    %c0_688 = arith.constant 0 : index
    %1024 = vector.load %arg3[%c2_686, %c0_687, %c0_688] : memref<3x16x9xf32, #tpu.memory_space<vmem>>, vector<1x16x9xf32>
    %1025 = vector.shape_cast %1024 : vector<1x16x9xf32> to vector<16x9xf32>
    %cst_689 = arith.constant dense<0.000000e+00> : vector<16x128xf32>
    %1026 = tpu.matmul %1025, %1023, %cst_689 {dimension_numbers = #tpu.dot_dimension_numbers<[1], [0], [0], [1], [0, 0, 1, 1], [], []>} : vector<16x9xf32>, vector<9x128xf32>, vector<16x128xf32> -> vector<16x128xf32>
    %1027 = arith.addf %1022, %1026 : vector<16x128xf32>
    %c0_690 = arith.constant 0 : index
    %c0_691 = arith.constant 0 : index
    %1028 = vector.load %arg5[%c0_690, %c0_691] : memref<16x1xf32, #tpu.memory_space<vmem>>, vector<16x1xf32>
    %1029 = vector.broadcast %1028 : vector<16x1xf32> to vector<16x128xf32>
    %1030 = arith.addf %1027, %1029 : vector<16x128xf32>
    %cst_692 = arith.constant 0.000000e+00 : f32
    %1031 = vector.broadcast %cst_692 : f32 to vector<16x128xf32>
    %1032 = arith.maximumf %1030, %1031 : vector<16x128xf32>
    %1033 = vector.broadcast %1009 : i1 to vector<1x128xi1>
    %1034 = arith.andi %1033, %19 : vector<1x128xi1>
    %cst_693 = arith.constant 0.000000e+00 : f32
    %1035 = vector.shape_cast %1034 : vector<1x128xi1> to vector<1x128xi1>
    %1036 = vector.broadcast %1035 : vector<1x128xi1> to vector<16x128xi1>
    %1037 = vector.broadcast %cst_693 : f32 to vector<16x128xf32>
    %1038 = arith.select %1036, %1032, %1037 : vector<16x128xi1>, vector<16x128xf32>
    %cst_694 = arith.constant 0.000000e+00 : f32
    %1039 = vector.broadcast %cst_694 : f32 to vector<3x128xf32>
    %c0_695 = arith.constant 0 : index
    %c0_696 = arith.constant 0 : index
    %c0_697 = arith.constant 0 : index
    %1040 = vector.load %arg4[%c0_695, %c0_696, %c0_697] : memref<3x3x16xf32, #tpu.memory_space<vmem>>, vector<1x3x16xf32>
    %1041 = vector.shape_cast %1040 : vector<1x3x16xf32> to vector<3x16xf32>
    %cst_698 = arith.constant dense<0.000000e+00> : vector<3x128xf32>
    %1042 = tpu.matmul %1041, %1038, %cst_698 {dimension_numbers = #tpu.dot_dimension_numbers<[1], [0], [0], [1], [0, 0, 1, 1], [], []>} : vector<3x16xf32>, vector<16x128xf32>, vector<3x128xf32> -> vector<3x128xf32>
    %1043 = arith.addf %1039, %1042 : vector<3x128xf32>
    %c127_i32_699 = arith.constant 127 : i32
    %1044 = tpu.dynamic_rotate %1038 by %c127_i32_699 dim 1 : vector<16x128xf32>, i32 -> vector<16x128xf32>
    %c1_700 = arith.constant 1 : index
    %c0_701 = arith.constant 0 : index
    %c0_702 = arith.constant 0 : index
    %1045 = vector.load %arg4[%c1_700, %c0_701, %c0_702] : memref<3x3x16xf32, #tpu.memory_space<vmem>>, vector<1x3x16xf32>
    %1046 = vector.shape_cast %1045 : vector<1x3x16xf32> to vector<3x16xf32>
    %cst_703 = arith.constant dense<0.000000e+00> : vector<3x128xf32>
    %1047 = tpu.matmul %1046, %1044, %cst_703 {dimension_numbers = #tpu.dot_dimension_numbers<[1], [0], [0], [1], [0, 0, 1, 1], [], []>} : vector<3x16xf32>, vector<16x128xf32>, vector<3x128xf32> -> vector<3x128xf32>
    %1048 = arith.addf %1043, %1047 : vector<3x128xf32>
    %c126_i32_704 = arith.constant 126 : i32
    %1049 = tpu.dynamic_rotate %1038 by %c126_i32_704 dim 1 : vector<16x128xf32>, i32 -> vector<16x128xf32>
    %c2_705 = arith.constant 2 : index
    %c0_706 = arith.constant 0 : index
    %c0_707 = arith.constant 0 : index
    %1050 = vector.load %arg4[%c2_705, %c0_706, %c0_707] : memref<3x3x16xf32, #tpu.memory_space<vmem>>, vector<1x3x16xf32>
    %1051 = vector.shape_cast %1050 : vector<1x3x16xf32> to vector<3x16xf32>
    %cst_708 = arith.constant dense<0.000000e+00> : vector<3x128xf32>
    %1052 = tpu.matmul %1051, %1049, %cst_708 {dimension_numbers = #tpu.dot_dimension_numbers<[1], [0], [0], [1], [0, 0, 1, 1], [], []>} : vector<3x16xf32>, vector<16x128xf32>, vector<3x128xf32> -> vector<3x128xf32>
    %1053 = arith.addf %1048, %1052 : vector<3x128xf32>
    %1054 = vector.extract_strided_slice %1053 {offsets = [2, 0], sizes = [1, 24], strides = [1, 1]} : vector<3x128xf32> to vector<1x24xf32>
    %1055 = vector.shape_cast %1054 : vector<1x24xf32> to vector<24xf32>
    %1056 = arith.addf %999, %1055 : vector<24xf32>
    %c0_709 = arith.constant 0 : index
    %c15_710 = arith.constant 15 : index
    %c0_711 = arith.constant 0 : index
    %1057 = vector.load %arg7[%c0_709, %c15_710, %c0_711] : memref<1x16x24xf32, #tpu.memory_space<vmem>>, vector<1x1x24xf32>
    %1058 = vector.shape_cast %1057 : vector<1x1x24xf32> to vector<24xf32>
    %1059 = vector.shape_cast %1056 : vector<24xf32> to vector<1x1x24xf32>
    tpu.vector_store %arg7[%c0_709, %c15_710, %c0_711], %1059 {strides = array<i32>} : memref<1x16x24xf32, #tpu.memory_space<vmem>>, vector<1x1x24xf32>,
    %c0_712 = arith.constant 0 : index
    %c0_713 = arith.constant 0 : index
    %c0_714 = arith.constant 0 : index
    %1060 = vector.load %arg7[%c0_712, %c0_713, %c0_714] : memref<1x16x24xf32, #tpu.memory_space<vmem>>, vector<1x16x24xf32>
    %1061 = vector.shape_cast %1060 : vector<1x16x24xf32> to vector<16x24xf32>
    %c0_715 = arith.constant 0 : index
    %1062 = memref.load %arg6[%c0_715] : memref<1xf32, #tpu.memory_space<smem>>
    %1063 = vector.broadcast %1062 : f32 to vector<16x24xf32>
    %1064 = arith.addf %1061, %1063 : vector<16x24xf32>
    %cst_716 = arith.constant -6.000000e+01 : f32
    %1065 = vector.broadcast %cst_716 : f32 to vector<16x24xf32>
    %1066 = arith.maximumf %1064, %1065 : vector<16x24xf32>
    %cst_717 = arith.constant 0.000000e+00 : f32
    %1067 = vector.broadcast %cst_717 : f32 to vector<16x24xf32>
    %1068 = arith.subf %1067, %1066 : vector<16x24xf32>
    %1069 = math.exp %1068 : vector<16x24xf32>
    %cst_718 = arith.constant 1.000000e+00 : f32
    %1070 = vector.broadcast %cst_718 : f32 to vector<16x24xf32>
    %1071 = arith.addf %1070, %1069 : vector<16x24xf32>
    %cst_719 = arith.constant 0.00999999977 : f32
    %1072 = vector.broadcast %cst_719 : f32 to vector<16x24xf32>
    %1073 = arith.mulf %1072, %1069 : vector<16x24xf32>
    %cst_720 = arith.constant 1.000000e+01 : f32
    %1074 = vector.broadcast %cst_720 : f32 to vector<16x24xf32>
    %1075 = arith.addf %1074, %1073 : vector<16x24xf32>
    %1076 = arith.divf %1071, %1075 : vector<16x24xf32>
    %c0_721 = arith.constant 0 : index
    %c0_722 = arith.constant 0 : index
    %c0_723 = arith.constant 0 : index
    %1077 = vector.load %arg7[%c0_721, %c0_722, %c0_723] : memref<1x16x24xf32, #tpu.memory_space<vmem>>, vector<1x16x24xf32>
    %1078 = vector.shape_cast %1077 : vector<1x16x24xf32> to vector<16x24xf32>
    %1079 = vector.shape_cast %1076 : vector<16x24xf32> to vector<1x16x24xf32>
    tpu.vector_store %arg7[%c0_721, %c0_722, %c0_723], %1079 {strides = array<i32>} : memref<1x16x24xf32, #tpu.memory_space<vmem>>, vector<1x16x24xf32>,
    return
  }
  func.func @transform_1(%arg0: i32, %arg1: i32) -> (i32, i32, i32) {
    %c0_i32 = arith.constant 0 : i32
    %c0_i32_0 = arith.constant 0 : i32
    %c0_i32_1 = arith.constant 0 : i32
    %c0_i32_2 = arith.constant 0 : i32
    return %c0_i32, %c0_i32_0, %c0_i32_1 : i32, i32, i32
  }
  func.func @transform_2(%arg0: i32, %arg1: i32) -> (i32, i32, i32) {
    %c0_i32 = arith.constant 0 : i32
    %c0_i32_0 = arith.constant 0 : i32
    %c0_i32_1 = arith.constant 0 : i32
    %c0_i32_2 = arith.constant 0 : i32
    return %c0_i32, %c0_i32_0, %c0_i32_1 : i32, i32, i32
  }
  func.func @transform_3(%arg0: i32, %arg1: i32) -> (i32, i32) {
    %c0_i32 = arith.constant 0 : i32
    %c0_i32_0 = arith.constant 0 : i32
    %c0_i32_1 = arith.constant 0 : i32
    return %c0_i32, %c0_i32_0 : i32, i32
  }
  func.func @transform_4(%arg0: i32, %arg1: i32) -> i32 {
    %c0_i32 = arith.constant 0 : i32
    %c0_i32_0 = arith.constant 0 : i32
    return %c0_i32 : i32
  }
  func.func @transform_5(%arg0: i32, %arg1: i32) -> (i32, i32, i32) {
    %c0_i32 = arith.constant 0 : i32
    %c0_i32_0 = arith.constant 0 : i32
    return %arg0, %arg1, %c0_i32 : i32, i32, i32
  }
}

</mosaic_0001>

<llo_original>
// kernel: depthnet_forward.1
$region0: #{depthnet_forward.1}
  #allocation0 [shape = 'u32[]', space=smem, size = 0x4, offset = 0x4, fixed_abs, tag = 'smem constant byte address 0x4 - core index']
  #allocation1 [shape = 'u32[72,128]{1,0:T(1,128)}', space=vmem, size = 0x9000, scoped, tag = 'internal scratch']
  #allocation2 [shape = 'f32[2,60,128]{2,1,0:T(8,128)}', space=vmem, size = 0x10000, scoped, tag = 'scratch operand']
  #allocation3 [shape = 's32[2]{0}', space=sflag, size = 0x8, scoped, tag = 'scratch operand']
  #allocation4 [shape = 'f32[1]{0:T(128)S(6)}', space=smem, size = 0x200, scoped, tag = 'scoped memory for depthnet_forward.1']
  #allocation5 [shape = 's32[]', space=sflag, size = 0x4, offset = 0, fixed_abs, tag = 'sflag constant byte address 0x0 - dummy sync flag']
  #allocation6 [shape = 's32[]', space=sflag, size = 0x4, offset = 0, fixed_abs, tag = 'sflag constant byte address 0x0 - dummy sync flag']
  %s0 = inlined_call_operand.vmem [shape: f32[312,128], index: 0, kind: input, shape index: {}]
  %s1 = inlined_call_operand.vmem [shape: f32[3,16,9], index: 1, kind: input, shape index: {}]
  %s2 = inlined_call_operand.vmem [shape: f32[3,3,16], index: 2, kind: input, shape index: {}]
  %s3 = inlined_call_operand.vmem [shape: f32[16,1], index: 3, kind: input, shape index: {}]
  %s4 = inlined_call_operand.<no memory space> [shape: f32[1], index: 4, kind: input, shape index: {}]
  %s5 = inlined_call_operand.vmem [shape: f32[2,48,24], index: 5, kind: output, shape index: {}]
  %s6 = sld [smem:[#allocation0]]
  $region101: #{depthnet_forward.1} parent=0
    _
  %s8 = ssub.s32 1, %s6
  %s9 = scalar_select 0, %s8, %s6
  %10 = sst [smem:[#allocation4]] %s4
  loop: start=0, step=1, limit=8
  $region2: #{depthnet_forward.1} parent=0 // loop_pre_header
    _
  $region3: #{depthnet_forward.1} parent=0 // loop_header
    %s12 = sphi 0, %s16
    %p13 = scmp.ge.s32.totalorder %s12, 8
    %s19 = sphi 0, %s31
    %s20 = sphi 0, %s27
    %s21 = sphi 0, %s19
    %s22 = sphi 0, %s20
    %s23 = sphi 0, %s21
    %s24 = sphi 0, %s22
    %s32 = sphi 0, %s32
    %s34 = sphi 0, %s32
    %s35 = sphi 0, %s34
    %s49 = sphi 0, %s35
    %s53 = sphi 0, %s53
    %s55 = sphi 0, %s53
    %s56 = sphi 0, %s55
    %s70 = sphi 0, %s56
    %s74 = sphi 0, %s74
    %s76 = sphi 0, %s74
    %s77 = sphi 0, %s76
    %s91 = sphi 0, %s77
    %s95 = sphi 0, %s95
    %s97 = sphi 0, %s95
    %s98 = sphi 0, %s97
    %s112 = sphi 0, %s98
    %s120 = sphi 0, %s122
    %s123 = sphi 0, %s120
    %s124 = sphi 0, %s123
    %s140 = sphi 0, %s124
  $region4: #{depthnet_forward.1} parent=0 // loop_header_branch
    %15 = sbr.rel (%p13) target = $region8
  $region5: #{depthnet_forward.1} parent=0 // loop_body
    %s17 = ssub.s32 %s12, 1
    %s18 = ssub.s32 %s12, 2
    %s25 = sadd.s32 1, %s20
    %p26 = scmp.ge.s32.totalorder %s25, 3
    %s27 = scalar_select %p26, 0, %s25
    %s28 = sadd.s32 1, %s19
    %s29 = scalar_select %p26, %s28, %s19
    %p30 = scmp.ge.s32.totalorder %s29, 2
    %s31 = scalar_select %p30, 0, %s29
    %s33 = sadd.s32 %s32, 1
    %p36 = scmp.eq.s32.totalorder %s12, 5
    %p37 = scmp.ne.s32.totalorder %s32, %s34
    %p38 = scmp.eq.s32.totalorder %s12, 0
    %p39 = por %p37, %p38
    %p40 = scmp.ne.s32.totalorder %s32, %s34
    %p41 = scmp.eq.s32.totalorder %s17, 5
    %p42 = por %p40, %p41
    %p43 = scmp.ne.s32.totalorder %s34, %s35
    %p44 = scmp.eq.s32.totalorder %s17, 0
    %p45 = por %p43, %p44
    %p46 = scmp.ne.s32.totalorder %s34, %s35
    %p47 = scmp.eq.s32.totalorder %s18, 5
    %p48 = por %p46, %p47
    %p50 = scmp.ne.s32.totalorder %s35, %s49
    %p51 = scmp.eq.s32.totalorder %s18, 0
    %p52 = por %p50, %p51
    %s54 = sadd.s32 %s53, 1
    %p57 = scmp.eq.s32.totalorder %s12, 5
    %p58 = scmp.ne.s32.totalorder %s53, %s55
    %p59 = scmp.eq.s32.totalorder %s12, 0
    %p60 = por %p58, %p59
    %p61 = scmp.ne.s32.totalorder %s53, %s55
    %p62 = scmp.eq.s32.totalorder %s17, 5
    %p63 = por %p61, %p62
    %p64 = scmp.ne.s32.totalorder %s55, %s56
    %p65 = scmp.eq.s32.totalorder %s17, 0
    %p66 = por %p64, %p65
    %p67 = scmp.ne.s32.totalorder %s55, %s56
    %p68 = scmp.eq.s32.totalorder %s18, 5
    %p69 = por %p67, %p68
    %p71 = scmp.ne.s32.totalorder %s56, %s70
    %p72 = scmp.eq.s32.totalorder %s18, 0
    %p73 = por %p71, %p72
    %s75 = sadd.s32 %s74, 1
    %p78 = scmp.eq.s32.totalorder %s12, 5
    %p79 = scmp.ne.s32.totalorder %s74, %s76
    %p80 = scmp.eq.s32.totalorder %s12, 0
    %p81 = por %p79, %p80
    %p82 = scmp.ne.s32.totalorder %s74, %s76
    %p83 = scmp.eq.s32.totalorder %s17, 5
    %p84 = por %p82, %p83
    %p85 = scmp.ne.s32.totalorder %s76, %s77
    %p86 = scmp.eq.s32.totalorder %s17, 0
    %p87 = por %p85, %p86
    %p88 = scmp.ne.s32.totalorder %s76, %s77
    %p89 = scmp.eq.s32.totalorder %s18, 5
    %p90 = por %p88, %p89
    %p92 = scmp.ne.s32.totalorder %s77, %s91
    %p93 = scmp.eq.s32.totalorder %s18, 0
    %p94 = por %p92, %p93
    %s96 = sadd.s32 %s95, 1
    %p99 = scmp.eq.s32.totalorder %s12, 5
    %p100 = scmp.ne.s32.totalorder %s95, %s97
    %p101 = scmp.eq.s32.totalorder %s12, 0
    %p102 = por %p100, %p101
    %p103 = scmp.ne.s32.totalorder %s95, %s97
    %p104 = scmp.eq.s32.totalorder %s17, 5
    %p105 = por %p103, %p104
    %p106 = scmp.ne.s32.totalorder %s97, %s98
    %p107 = scmp.eq.s32.totalorder %s17, 0
    %p108 = por %p106, %p107
    %p109 = scmp.ne.s32.totalorder %s97, %s98
    %p110 = scmp.eq.s32.totalorder %s18, 5
    %p111 = por %p109, %p110
    %p113 = scmp.ne.s32.totalorder %s98, %s112
    %p114 = scmp.eq.s32.totalorder %s18, 0
    %p115 = por %p113, %p114
    %s116 = ssub.s32 %s19, %s31
    %s117 = ssub.s32 %s20, %s27
    %s118 = sor.u32 %s116, %s117
    %p119 = scmp.eq.s32.totalorder %s118, 0
    %s121 = sadd.s32 %s120, 1
    %s122 = scalar_select %p119, %s120, %s121
    %p125 = pneg %p119
    %p126 = scmp.eq.s32.totalorder %s12, 5
    %p127 = por %p125, %p126
    %p128 = scmp.ne.s32.totalorder %s120, %s123
    %p129 = scmp.eq.s32.totalorder %s12, 0
    %p130 = por %p128, %p129
    %p131 = scmp.ne.s32.totalorder %s120, %s123
    %p132 = scmp.eq.s32.totalorder %s17, 5
    %p133 = por %p131, %p132
    %p134 = scmp.ne.s32.totalorder %s123, %s124
    %p135 = scmp.eq.s32.totalorder %s17, 0
    %p136 = por %p134, %p135
    %p137 = scmp.ne.s32.totalorder %s123, %s124
    %p138 = scmp.eq.s32.totalorder %s18, 5
    %p139 = por %p137, %p138
    %p141 = scmp.ne.s32.totalorder %s124, %s140
    %p142 = scmp.eq.s32.totalorder %s18, 0
    %p143 = por %p141, %p142
    %p144 = scmp.le.s32.totalorder 1, %s12
    %p145 = scmp.lt.s32.totalorder %s12, 7
    %p146 = pnand %p144, %p145
    %p147 = pneg %p146
    // Predicated region
    $region9: #{depthnet_forward.1} parent=5 // pred_check
      _
    $region10: #{depthnet_forward.1} parent=5 // pred_check_branch
      %149 = sbr.rel (%p146) target = $region12
    $region11: #{depthnet_forward.1} parent=5 // pred_region
      %s150 = ssub.s32 %s12, 1
      // Predicated region
      $region13: #{depthnet_forward.1} parent=11 // pred_check
        %p151 = pneg %p45
      $region14: #{depthnet_forward.1} parent=11 // pred_check_branch
        %153 = sbr.rel (%p151) target = $region16
      $region15: #{depthnet_forward.1} parent=11 // pred_region
        _
      $region16: #{depthnet_forward.1} parent=11 // pred_fallthru
        _
      // Predicated region
      $region17: #{depthnet_forward.1} parent=11 // pred_check
        %p154 = pneg %p66
      $region18: #{depthnet_forward.1} parent=11 // pred_check_branch
        %156 = sbr.rel (%p154) target = $region20
      $region19: #{depthnet_forward.1} parent=11 // pred_region
        _
      $region20: #{depthnet_forward.1} parent=11 // pred_fallthru
        _
      // Predicated region
      $region21: #{depthnet_forward.1} parent=11 // pred_check
        %p157 = pneg %p87
      $region22: #{depthnet_forward.1} parent=11 // pred_check_branch
        %159 = sbr.rel (%p157) target = $region24
      $region23: #{depthnet_forward.1} parent=11 // pred_region
        _
      $region24: #{depthnet_forward.1} parent=11 // pred_fallthru
        _
      // Predicated region
      $region25: #{depthnet_forward.1} parent=11 // pred_check
        %p160 = pneg %p108
      $region26: #{depthnet_forward.1} parent=11 // pred_check_branch
        %162 = sbr.rel (%p160) target = $region28
      $region27: #{depthnet_forward.1} parent=11 // pred_region
        _
      $region28: #{depthnet_forward.1} parent=11 // pred_fallthru
        _
    $region12: #{depthnet_forward.1} parent=5 // pred_fallthru
      _
    %p163 = scmp.lt.s32.totalorder %s12, 6
    // Predicated region
    $region29: #{depthnet_forward.1} parent=5 // pred_check
      %p164 = pneg %p163
    $region30: #{depthnet_forward.1} parent=5 // pred_check_branch
      %166 = sbr.rel (%p164) target = $region32
    $region31: #{depthnet_forward.1} parent=5 // pred_region
      _
    $region32: #{depthnet_forward.1} parent=5 // pred_fallthru
      _
    %p167 = scmp.le.s32.totalorder 1, %s12
    %p168 = scmp.lt.s32.totalorder %s12, 7
    %p169 = pnand %p167, %p168
    %p170 = pneg %p169
    // Predicated region
    $region33: #{depthnet_forward.1} parent=5 // pred_check
      _
    $region34: #{depthnet_forward.1} parent=5 // pred_check_branch
      %172 = sbr.rel (%p169) target = $region36
    $region35: #{depthnet_forward.1} parent=5 // pred_region
      %s173 = ssub.s32 %s12, 1
      %p174 = pneg %p45
      %p175 = pneg %p42
      %p176 = pneg %p66
      %p177 = pneg %p63
      %p178 = pneg %p87
      %p179 = pneg %p84
      %p180 = pneg %p108
      %p181 = pneg %p105
      %p182 = pneg %p136
      %p183 = pneg %p133
      %s184 = smul.u32 2, %s22
      %p185 = scmp.lt.s32.totalorder %s21, 1
      %s186 = scalar_select %p185, %s21, 1
      %p187 = scmp.lt.s32.totalorder %s184, 5
      %s188 = scalar_select %p187, %s184, 5
      %s189 = smul.addr %s186, 6
      %s190 = sadd.s32 %s188, %s189
      %s191 = smul.addr %s190, 8
      %s192 = scalar_lea.vmem %s5, %s191
      %s193 = smul.u32 2, %s22
      %p194 = scmp.lt.s32.totalorder %s21, 1
      %s195 = scalar_select %p194, %s21, 1
      %p196 = scmp.lt.s32.totalorder %s193, 5
      %s197 = scalar_select %p196, %s193, 5
      %s198 = smul.addr %s195, 6
      %s199 = sadd.s32 %s197, %s198
      %s200 = smul.addr %s199, 8
      %s201 = scalar_lea.vmem %s5, %s200
      %s202 = smul.u32 2, %s22
      %s203 = sand.u32 %s22, 1
      %p204 = scmp.eq.s32.totalorder %s22, 0
      // Predicated region
      $region37: #{depthnet_forward.1} parent=35 // pred_check
        %p205 = pneg %p204
      $region38: #{depthnet_forward.1} parent=35 // pred_check_branch
        %207 = sbr.rel (%p205) target = $region40
      $region39: #{depthnet_forward.1} parent=35 // pred_region
        %s208 = smul.u32 %s21, 156
        %s209 = scalar_lea.vmem %s0, %s208
        // Predicated region
        $region41: #{depthnet_forward.1} parent=39 // pred_check
          _
        $region42: #{depthnet_forward.1} parent=39 // pred_check_branch
          %211 = sbr.rel (0) target = $region44
        $region43: #{depthnet_forward.1} parent=39 // pred_region
          %s212 = scalar_lea.vmem %s209, 56
          %s213 = scalar_lea.vmem [#allocation2], 56
          loop: start=0, step=1, limit=1
          $region45: #{depthnet_forward.1} parent=43 // loop_pre_header
            _
          $region46: #{depthnet_forward.1} parent=43 // loop_header
            %s215 = sphi 0, %s219
            %p216 = scmp.ge.s32.totalorder %s215, 1
            %s220 = sphi %s209, %s209
            %s221 = sphi [#allocation2], [#allocation2]
          $region47: #{depthnet_forward.1} parent=43 // loop_header_branch
            %218 = sbr.rel (%p216) target = $region51
          $region48: #{depthnet_forward.1} parent=43 // loop_body
            %v222 = vld [vmem:[%s220] sm:$0xff]
            %223 = vst [vmem:[%s221] sm:$0xff] %v222
            %v224 = vld [vmem:[%s220 + $0x8] sm:$0xff]
            %225 = vst [vmem:[%s221 + $0x8] sm:$0xff] %v224
            %v226 = vld [vmem:[%s220 + $0x10] sm:$0xff]
            %227 = vst [vmem:[%s221 + $0x10] sm:$0xff] %v226
            %v228 = vld [vmem:[%s220 + $0x18] sm:$0xff]
            %229 = vst [vmem:[%s221 + $0x18] sm:$0xff] %v228
            %v230 = vld [vmem:[%s220 + $0x20] sm:$0xff]
            %231 = vst [vmem:[%s221 + $0x20] sm:$0xff] %v230
            %v232 = vld [vmem:[%s220 + $0x28] sm:$0xff]
            %233 = vst [vmem:[%s221 + $0x28] sm:$0xff] %v232
            %v234 = vld [vmem:[%s220 + $0x30] sm:$0xff]
            %235 = vst [vmem:[%s221 + $0x30] sm:$0xff] %v234
          $region49: #{depthnet_forward.1} parent=43 // loop_footer
            %s219 = sadd.s32 1, %s215
          $region50: #{depthnet_forward.1} parent=43 // loop_footer_branch
            %214 = sbr.rel target = $region46
          $region51: #{depthnet_forward.1} parent=43 // loop_exit
            _
          %s237 = ssub.s32 16, 1
          loop: start=0, step=1, limit=1
          $region52: #{depthnet_forward.1} parent=43 // loop_pre_header
            _
          $region53: #{depthnet_forward.1} parent=43 // loop_header
            %s239 = sphi 0, %s243
            %p240 = scmp.ge.s32.totalorder %s239, 1
            %s244 = sphi %s212, %s212
            %s245 = sphi %s213, %s213
          $region54: #{depthnet_forward.1} parent=43 // loop_header_branch
            %242 = sbr.rel (%p240) target = $region58
          $region55: #{depthnet_forward.1} parent=43 // loop_body
            %v246 = vld [vmem:[%s244] sm:%s237]
            %247 = vst [vmem:[%s245] sm:%s237] %v246
          $region56: #{depthnet_forward.1} parent=43 // loop_footer
            %s243 = sadd.s32 1, %s239
          $region57: #{depthnet_forward.1} parent=43 // loop_footer_branch
            %238 = sbr.rel target = $region53
          $region58: #{depthnet_forward.1} parent=43 // loop_exit
            _
        $region44: #{depthnet_forward.1} parent=39 // pred_fallthru
          _
        // Predicated region
        $region59: #{depthnet_forward.1} parent=39 // pred_check
          _
        $region60: #{depthnet_forward.1} parent=39 // pred_check_branch
          %250 = sbr.rel (0) target = $region62
        $region61: #{depthnet_forward.1} parent=39 // pred_region
          %251 = vsyncadd [#allocation3], 960
        $region62: #{depthnet_forward.1} parent=39 // pred_fallthru
          _
      $region40: #{depthnet_forward.1} parent=35 // pred_fallthru
        _
      %s252 = smul.u32 %s203, 64
      %s253 = scalar_lea.vmem [#allocation2], %s252
      %s254 = scalar_lea.sflag [#allocation3], %s203
      %s255 = smul.u32 60, 1
      %s256 = sshll.u32 %s255, 4
      %257 = dma.done %s254, %s256
      %s258 = sadd.s32 %s22, 1
      %p259 = scmp.lt.s32.totalorder %s258, 3
      // Predicated region
      $region63: #{depthnet_forward.1} parent=35 // pred_check
        %p260 = pneg %p259
      $region64: #{depthnet_forward.1} parent=35 // pred_check_branch
        %262 = sbr.rel (%p260) target = $region66
      $region65: #{depthnet_forward.1} parent=35 // pred_region
        %s263 = ssub.s32 1, %s203
        %s264 = smul.u32 %s21, 52
        %s265 = smul.u32 %s258, 16
        %s266 = sadd.s32 %s264, %s265
        %s267 = smul.u32 %s266, 3
        %s268 = scalar_lea.vmem %s0, %s267
        %s269 = smul.u32 %s263, 64
        %s270 = scalar_lea.vmem [#allocation2], %s269
        %s271 = scalar_lea.sflag [#allocation3], %s263
        // Predicated region
        $region67: #{depthnet_forward.1} parent=65 // pred_check
          _
        $region68: #{depthnet_forward.1} parent=65 // pred_check_branch
          %273 = sbr.rel (0) target = $region70
        $region69: #{depthnet_forward.1} parent=65 // pred_region
          %s274 = scalar_lea.vmem %s268, 56
          %s275 = scalar_lea.vmem %s270, 56 [#allocation2]
          loop: start=0, step=1, limit=1
          $region71: #{depthnet_forward.1} parent=69 // loop_pre_header
            _
          $region72: #{depthnet_forward.1} parent=69 // loop_header
            %s277 = sphi 0, %s281
            %p278 = scmp.ge.s32.totalorder %s277, 1
            %s282 = sphi %s268, %s268
            %s283 = sphi %s270, %s270
          $region73: #{depthnet_forward.1} parent=69 // loop_header_branch
            %280 = sbr.rel (%p278) target = $region77
          $region74: #{depthnet_forward.1} parent=69 // loop_body
            %v284 = vld [vmem:[%s282] sm:$0xff]
            %285 = vst [vmem:[%s283] sm:$0xff] %v284
            %v286 = vld [vmem:[%s282 + $0x8] sm:$0xff]
            %287 = vst [vmem:[%s283 + $0x8] sm:$0xff] %v286
            %v288 = vld [vmem:[%s282 + $0x10] sm:$0xff]
            %289 = vst [vmem:[%s283 + $0x10] sm:$0xff] %v288
            %v290 = vld [vmem:[%s282 + $0x18] sm:$0xff]
            %291 = vst [vmem:[%s283 + $0x18] sm:$0xff] %v290
            %v292 = vld [vmem:[%s282 + $0x20] sm:$0xff]
            %293 = vst [vmem:[%s283 + $0x20] sm:$0xff] %v292
            %v294 = vld [vmem:[%s282 + $0x28] sm:$0xff]
            %295 = vst [vmem:[%s283 + $0x28] sm:$0xff] %v294
            %v296 = vld [vmem:[%s282 + $0x30] sm:$0xff]
            %297 = vst [vmem:[%s283 + $0x30] sm:$0xff] %v296
          $region75: #{depthnet_forward.1} parent=69 // loop_footer
            %s281 = sadd.s32 1, %s277
          $region76: #{depthnet_forward.1} parent=69 // loop_footer_branch
            %276 = sbr.rel target = $region72
          $region77: #{depthnet_forward.1} parent=69 // loop_exit
            _
          %s299 = ssub.s32 16, 1
          loop: start=0, step=1, limit=1
          $region78: #{depthnet_forward.1} parent=69 // loop_pre_header
            _
          $region79: #{depthnet_forward.1} parent=69 // loop_header
            %s301 = sphi 0, %s305
            %p302 = scmp.ge.s32.totalorder %s301, 1
            %s306 = sphi %s274, %s274
            %s307 = sphi %s275, %s275
          $region80: #{depthnet_forward.1} parent=69 // loop_header_branch
            %304 = sbr.rel (%p302) target = $region84
          $region81: #{depthnet_forward.1} parent=69 // loop_body
            %v308 = vld [vmem:[%s306] sm:%s299]
            %309 = vst [vmem:[%s307] sm:%s299] %v308
          $region82: #{depthnet_forward.1} parent=69 // loop_footer
            %s305 = sadd.s32 1, %s301
          $region83: #{depthnet_forward.1} parent=69 // loop_footer_branch
            %300 = sbr.rel target = $region79
          $region84: #{depthnet_forward.1} parent=69 // loop_exit
            _
        $region70: #{depthnet_forward.1} parent=65 // pred_fallthru
          _
        // Predicated region
        $region85: #{depthnet_forward.1} parent=65 // pred_check
          _
        $region86: #{depthnet_forward.1} parent=65 // pred_check_branch
          %312 = sbr.rel (0) target = $region88
        $region87: #{depthnet_forward.1} parent=65 // pred_region
          %313 = vsyncadd %s271, 960
        $region88: #{depthnet_forward.1} parent=65 // pred_fallthru
          _
      $region66: #{depthnet_forward.1} parent=35 // pred_fallthru
        _
      %s314 = smul.u32 %s22, 16
      %v315 = vlaneseq
      %v316 = vand.u32 %v315, 127
      %vm317 = vcmp.ge.s32.totalorder %v316, 1
      %vm318 = vcmp.le.s32.totalorder %v316, 24
      %vm319 = vmand %vm317, %vm318
      %s320 = sadd.s32 %s314, 4294967295
      %p321 = scmp.ge.s32.totalorder %s320, 0
      %p322 = scmp.lt.s32.totalorder %s320, 40
      %p323 = pnand %p321, %p322
      %p324 = pneg %p323
      %v325 = vld [vmem:[%s253] sm:$0xff]
      %v326 = vld [vmem:[%s253 + $0x8] sm:$0x1]
      %v327 = vld [vmem:[%s1] sm:$0xff]
      %v328 = vld [vmem:[%s1 + $0x8] sm:$0xff]
      %329 = vrot.lane.b32.xlu0 %v325, 127
      %v330 = vpop.permute.xlu0 %329
      %331 = vrot.lane.b32.xlu0 %v326, 127
      %v332 = vpop.permute.xlu0 %331
      %s333 = scalar_lea.vmem %s1, 16
      %v334 = vld [vmem:[%s333] sm:$0xff]
      %v335 = vld [vmem:[%s333 + $0x8] sm:$0xff]
      %vm336 = vcmask 72704
      %v338 = vsel %vm336, %v334, 0
      %v341 = vsel %vm336, %v335, 0
      %vm343 = vcmask 1040384
      %v345 = vsel %vm343, %v332, 0
      %347 = vmatpush.msra.mxu0 0.0
      %348 = vmatpush.msra.mxu0 0.0
      %349 = vmatpush.msra.mxu0 0.0
      %350 = vmatpush.msra.mxu0 0.0
      %351 = vmatpush.msra.mxu0 0.0
      %352 = vmatpush.msra.mxu0 0.0
      %353 = vmatpush.msra.mxu0 0.0
      %354 = vmatpush.msra.mxu0 0.0
      %355 = vmatpush.msra.mxu0 0.0
      %356 = vmatpush.msra.mxu0 0.0
      %357 = vmatpush.msra.mxu0 0.0
      %358 = vmatpush.msra.mxu0 0.0
      %359 = vmatpush.msra.mxu0 0.0
      %360 = vmatpush.msra.mxu0 0.0
      %361 = vmatpush.msra.mxu0 %v345
      %362 = vmatpush.msra.mxu0 %v330
      %363 = vmatmul.f32.gmra.mxu0 %v338
      %v364 = vpop.f32.mrf.mxu0
      %v365 = vadd.f32 0.0, %v364
      %366 = vmatmul.f32.gmra.mxu0 %v341
      %v367 = vpop.f32.mrf.mxu0
      %v368 = vadd.f32 0.0, %v367
      %369 = vdwg.mxu0
      %v371 = vsel %vm336, %v327, 0
      %v374 = vsel %vm336, %v328, 0
      %v377 = vsel %vm343, %v326, 0
      %379 = vmatpush.msra.mxu0 0.0
      %380 = vmatpush.msra.mxu0 0.0
      %381 = vmatpush.msra.mxu0 0.0
      %382 = vmatpush.msra.mxu0 0.0
      %383 = vmatpush.msra.mxu0 0.0
      %384 = vmatpush.msra.mxu0 0.0
      %385 = vmatpush.msra.mxu0 0.0
      %386 = vmatpush.msra.mxu0 0.0
      %387 = vmatpush.msra.mxu0 0.0
      %388 = vmatpush.msra.mxu0 0.0
      %389 = vmatpush.msra.mxu0 0.0
      %390 = vmatpush.msra.mxu0 0.0
      %391 = vmatpush.msra.mxu0 0.0
      %392 = vmatpush.msra.mxu0 0.0
      %393 = vmatpush.msra.mxu0 %v377
      %394 = vmatpush.msra.mxu0 %v325
      %395 = vmatmul.f32.gmra.mxu0 %v371
      %v396 = vpop.f32.mrf.mxu0
      %v397 = vadd.f32 %v365, %v396
      %398 = vmatmul.f32.gmra.mxu0 %v374
      %v399 = vpop.f32.mrf.mxu0
      %v400 = vadd.f32 %v368, %v399
      %401 = vdwg.mxu0
      %402 = vrot.lane.b32.xlu0 %v325, 126
      %v403 = vpop.permute.xlu0 %402
      %404 = vrot.lane.b32.xlu0 %v326, 126
      %v405 = vpop.permute.xlu0 %404
      %s406 = scalar_lea.vmem %s1, 32
      %v407 = vld [vmem:[%s406] sm:$0xff]
      %v408 = vld [vmem:[%s406 + $0x8] sm:$0xff]
      %v410 = vsel %vm336, %v407, 0
      %v413 = vsel %vm336, %v408, 0
      %v416 = vsel %vm343, %v405, 0
      %418 = vmatpush.msra.mxu0 0.0
      %419 = vmatpush.msra.mxu0 0.0
      %420 = vmatpush.msra.mxu0 0.0
      %421 = vmatpush.msra.mxu0 0.0
      %422 = vmatpush.msra.mxu0 0.0
      %423 = vmatpush.msra.mxu0 0.0
      %424 = vmatpush.msra.mxu0 0.0
      %425 = vmatpush.msra.mxu0 0.0
      %426 = vmatpush.msra.mxu0 0.0
      %427 = vmatpush.msra.mxu0 0.0
      %428 = vmatpush.msra.mxu0 0.0
      %429 = vmatpush.msra.mxu0 0.0
      %430 = vmatpush.msra.mxu0 0.0
      %431 = vmatpush.msra.mxu0 0.0
      %432 = vmatpush.msra.mxu0 %v416
      %433 = vmatpush.msra.mxu0 %v403
      %434 = vmatmul.f32.gmra.mxu0 %v410
      %v435 = vpop.f32.mrf.mxu0
      %v436 = vadd.f32 0.0, %v435
      %437 = vmatmul.f32.gmra.mxu0 %v413
      %v438 = vpop.f32.mrf.mxu0
      %v439 = vadd.f32 0.0, %v438
      %440 = vdwg.mxu0
      %v441 = vadd.f32 %v397, %v436
      %v442 = vadd.f32 %v400, %v439
      %v443 = vld [vmem:[%s3] sm:$0xff]
      %v444 = vld [vmem:[%s3 + $0x8] sm:$0xff]
      %446 = vset.pattern.permute.xlu0 0
      %447 = vperm.xlu0 %446, %v443
      %v448 = vpop.permute.xlu0 %447
      %451 = vset.pattern.permute.xlu0 0
      %452 = vperm.xlu0 %451, %v444
      %v453 = vpop.permute.xlu0 %452
      %v455 = vadd.f32 %v441, %v448
      %v456 = vadd.f32 %v442, %v453
      %v457 = vmax.f32 %v455, 0.0
      %v458 = vmax.f32 %v456, 0.0
      %s459 = scalar_select %p324, 1, 0
      %v460 = vstv %s459
      %vm461 = vcmp.eq.s32.totalorder %v460, 1
      %vm462 = vmand %vm461, %vm319
      %v463 = vsel %vm462, 1, 0
      %vm464 = vcmp.eq.s32.totalorder %v463, 1
      %v465 = vsel %vm464, %v457, 0.0
      %v466 = vsel %vm464, %v458, 0.0
      %v467 = vld [vmem:[%s2] sm:$0x7]
      %468 = vrot.lane.b32.xlu0 %v465, 127
      %v469 = vpop.permute.xlu0 %468
      %470 = vrot.lane.b32.xlu0 %v466, 127
      %v471 = vpop.permute.xlu0 %470
      %s472 = scalar_lea.vmem %s2, 4
      %v473 = vld [vmem:[%s472] sm:$0x7]
      %vm474 = vcmask 130048
      %v476 = vsel %vm474, %v473, 0
      %478 = vmatpush.msra.mxu0 0.0
      %479 = vmatpush.msra.mxu0 0.0
      %480 = vmatpush.msra.mxu0 0.0
      %481 = vmatpush.msra.mxu0 0.0
      %482 = vmatpush.msra.mxu0 0.0
      %483 = vmatpush.msra.mxu0 0.0
      %484 = vmatpush.msra.mxu0 0.0
      %485 = vmatpush.msra.mxu0 0.0
      %486 = vmatpush.msra.mxu0 0.0
      %487 = vmatpush.msra.mxu0 0.0
      %488 = vmatpush.msra.mxu0 0.0
      %489 = vmatpush.msra.mxu0 0.0
      %490 = vmatpush.msra.mxu0 0.0
      %491 = vmatpush.msra.mxu0 0.0
      %492 = vmatpush.msra.mxu0 %v471
      %493 = vmatpush.msra.mxu0 %v469
      %494 = vmatmul.f32.gmra.mxu0 %v476
      %v495 = vpop.f32.mrf.mxu0
      %v496 = vadd.f32 0.0, %v495
      %497 = vdwg.mxu0
      %v499 = vsel %vm474, %v467, 0
      %501 = vmatpush.msra.mxu0 0.0
      %502 = vmatpush.msra.mxu0 0.0
      %503 = vmatpush.msra.mxu0 0.0
      %504 = vmatpush.msra.mxu0 0.0
      %505 = vmatpush.msra.mxu0 0.0
      %506 = vmatpush.msra.mxu0 0.0
      %507 = vmatpush.msra.mxu0 0.0
      %508 = vmatpush.msra.mxu0 0.0
      %509 = vmatpush.msra.mxu0 0.0
      %510 = vmatpush.msra.mxu0 0.0
      %511 = vmatpush.msra.mxu0 0.0
      %512 = vmatpush.msra.mxu0 0.0
      %513 = vmatpush.msra.mxu0 0.0
      %514 = vmatpush.msra.mxu0 0.0
      %515 = vmatpush.msra.mxu0 %v466
      %516 = vmatpush.msra.mxu0 %v465
      %517 = vmatmul.f32.gmra.mxu0 %v499
      %v518 = vpop.f32.mrf.mxu0
      %v519 = vadd.f32 %v496, %v518
      %520 = vdwg.mxu0
      %521 = vrot.lane.b32.xlu0 %v465, 126
      %v522 = vpop.permute.xlu0 %521
      %523 = vrot.lane.b32.xlu0 %v466, 126
      %v524 = vpop.permute.xlu0 %523
      %s525 = scalar_lea.vmem %s2, 8
      %v526 = vld [vmem:[%s525] sm:$0x7]
      %v528 = vsel %vm474, %v526, 0
      %530 = vmatpush.msra.mxu0 0.0
      %531 = vmatpush.msra.mxu0 0.0
      %532 = vmatpush.msra.mxu0 0.0
      %533 = vmatpush.msra.mxu0 0.0
      %534 = vmatpush.msra.mxu0 0.0
      %535 = vmatpush.msra.mxu0 0.0
      %536 = vmatpush.msra.mxu0 0.0
      %537 = vmatpush.msra.mxu0 0.0
      %538 = vmatpush.msra.mxu0 0.0
      %539 = vmatpush.msra.mxu0 0.0
      %540 = vmatpush.msra.mxu0 0.0
      %541 = vmatpush.msra.mxu0 0.0
      %542 = vmatpush.msra.mxu0 0.0
      %543 = vmatpush.msra.mxu0 0.0
      %544 = vmatpush.msra.mxu0 %v524
      %545 = vmatpush.msra.mxu0 %v522
      %546 = vmatmul.f32.gmra.mxu0 %v528
      %v547 = vpop.f32.mrf.mxu0
      %v548 = vadd.f32 0.0, %v547
      %549 = vdwg.mxu0
      %v550 = vadd.f32 %v519, %v548
      %p551 = scmp.ge.s32.totalorder %s314, 0
      %p552 = scmp.lt.s32.totalorder %s314, 40
      %p553 = pnand %p551, %p552
      %p554 = pneg %p553
      %v555 = vld [vmem:[%s253 + $0x3] sm:$0xff]
      %v556 = vld [vmem:[%s253 + $0xb] sm:$0x1]
      %557 = vrot.lane.b32.xlu0 %v555, 127
      %v558 = vpop.permute.xlu0 %557
      %559 = vrot.lane.b32.xlu0 %v556, 127
      %v560 = vpop.permute.xlu0 %559
      %v562 = vsel %vm343, %v560, 0
      %564 = vmatpush.msra.mxu0 0.0
      %565 = vmatpush.msra.mxu0 0.0
      %566 = vmatpush.msra.mxu0 0.0
      %567 = vmatpush.msra.mxu0 0.0
      %568 = vmatpush.msra.mxu0 0.0
      %569 = vmatpush.msra.mxu0 0.0
      %570 = vmatpush.msra.mxu0 0.0
      %571 = vmatpush.msra.mxu0 0.0
      %572 = vmatpush.msra.mxu0 0.0
      %573 = vmatpush.msra.mxu0 0.0
      %574 = vmatpush.msra.mxu0 0.0
      %575 = vmatpush.msra.mxu0 0.0
      %576 = vmatpush.msra.mxu0 0.0
      %577 = vmatpush.msra.mxu0 0.0
      %578 = vmatpush.msra.mxu0 %v562
      %579 = vmatpush.msra.mxu0 %v558
      %580 = vmatmul.f32.gmra.mxu0 %v338
      %v581 = vpop.f32.mrf.mxu0
      %v582 = vadd.f32 0.0, %v581
      %583 = vmatmul.f32.gmra.mxu0 %v341
      %v584 = vpop.f32.mrf.mxu0
      %v585 = vadd.f32 0.0, %v584
      %586 = vdwg.mxu0
      %v588 = vsel %vm343, %v556, 0
      %590 = vmatpush.msra.mxu0 0.0
      %591 = vmatpush.msra.mxu0 0.0
      %592 = vmatpush.msra.mxu0 0.0
      %593 = vmatpush.msra.mxu0 0.0
      %594 = vmatpush.msra.mxu0 0.0
      %595 = vmatpush.msra.mxu0 0.0
      %596 = vmatpush.msra.mxu0 0.0
      %597 = vmatpush.msra.mxu0 0.0
      %598 = vmatpush.msra.mxu0 0.0
      %599 = vmatpush.msra.mxu0 0.0
      %600 = vmatpush.msra.mxu0 0.0
      %601 = vmatpush.msra.mxu0 0.0
      %602 = vmatpush.msra.mxu0 0.0
      %603 = vmatpush.msra.mxu0 0.0
      %604 = vmatpush.msra.mxu0 %v588
      %605 = vmatpush.msra.mxu0 %v555
      %606 = vmatmul.f32.gmra.mxu0 %v371
      %v607 = vpop.f32.mrf.mxu0
      %v608 = vadd.f32 %v582, %v607
      %609 = vmatmul.f32.gmra.mxu0 %v374
      %v610 = vpop.f32.mrf.mxu0
      %v611 = vadd.f32 %v585, %v610
      %612 = vdwg.mxu0
      %613 = vrot.lane.b32.xlu0 %v555, 126
      %v614 = vpop.permute.xlu0 %613
      %615 = vrot.lane.b32.xlu0 %v556, 126
      %v616 = vpop.permute.xlu0 %615
      %v618 = vsel %vm343, %v616, 0
      %620 = vmatpush.msra.mxu0 0.0
      %621 = vmatpush.msra.mxu0 0.0
      %622 = vmatpush.msra.mxu0 0.0
      %623 = vmatpush.msra.mxu0 0.0
      %624 = vmatpush.msra.mxu0 0.0
      %625 = vmatpush.msra.mxu0 0.0
      %626 = vmatpush.msra.mxu0 0.0
      %627 = vmatpush.msra.mxu0 0.0
      %628 = vmatpush.msra.mxu0 0.0
      %629 = vmatpush.msra.mxu0 0.0
      %630 = vmatpush.msra.mxu0 0.0
      %631 = vmatpush.msra.mxu0 0.0
      %632 = vmatpush.msra.mxu0 0.0
      %633 = vmatpush.msra.mxu0 0.0
      %634 = vmatpush.msra.mxu0 %v618
      %635 = vmatpush.msra.mxu0 %v614
      %636 = vmatmul.f32.gmra.mxu0 %v410
      %v637 = vpop.f32.mrf.mxu0
      %v638 = vadd.f32 0.0, %v637
      %639 = vmatmul.f32.gmra.mxu0 %v413
      %v640 = vpop.f32.mrf.mxu0
      %v641 = vadd.f32 0.0, %v640
      %642 = vdwg.mxu0
      %v643 = vadd.f32 %v608, %v638
      %v644 = vadd.f32 %v611, %v641
      %v645 = vadd.f32 %v643, %v448
      %v646 = vadd.f32 %v644, %v453
      %v647 = vmax.f32 %v645, 0.0
      %v648 = vmax.f32 %v646, 0.0
      %s649 = scalar_select %p554, 1, 0
      %v650 = vstv %s649
      %vm651 = vcmp.eq.s32.totalorder %v650, 1
      %vm652 = vmand %vm651, %vm319
      %v653 = vsel %vm652, 1, 0
      %vm654 = vcmp.eq.s32.totalorder %v653, 1
      %v655 = vsel %vm654, %v647, 0.0
      %v656 = vsel %vm654, %v648, 0.0
      %657 = vrot.lane.b32.xlu0 %v655, 127
      %v658 = vpop.permute.xlu0 %657
      %659 = vrot.lane.b32.xlu0 %v656, 127
      %v660 = vpop.permute.xlu0 %659
      %661 = vmatpush.msra.mxu0 0.0
      %662 = vmatpush.msra.mxu0 0.0
      %663 = vmatpush.msra.mxu0 0.0
      %664 = vmatpush.msra.mxu0 0.0
      %665 = vmatpush.msra.mxu0 0.0
      %666 = vmatpush.msra.mxu0 0.0
      %667 = vmatpush.msra.mxu0 0.0
      %668 = vmatpush.msra.mxu0 0.0
      %669 = vmatpush.msra.mxu0 0.0
      %670 = vmatpush.msra.mxu0 0.0
      %671 = vmatpush.msra.mxu0 0.0
      %672 = vmatpush.msra.mxu0 0.0
      %673 = vmatpush.msra.mxu0 0.0
      %674 = vmatpush.msra.mxu0 0.0
      %675 = vmatpush.msra.mxu0 %v660
      %676 = vmatpush.msra.mxu0 %v658
      %677 = vmatmul.f32.gmra.mxu0 %v476
      %v678 = vpop.f32.mrf.mxu0
      %v679 = vadd.f32 0.0, %v678
      %680 = vdwg.mxu0
      %681 = vmatpush.msra.mxu0 0.0
      %682 = vmatpush.msra.mxu0 0.0
      %683 = vmatpush.msra.mxu0 0.0
      %684 = vmatpush.msra.mxu0 0.0
      %685 = vmatpush.msra.mxu0 0.0
      %686 = vmatpush.msra.mxu0 0.0
      %687 = vmatpush.msra.mxu0 0.0
      %688 = vmatpush.msra.mxu0 0.0
      %689 = vmatpush.msra.mxu0 0.0
      %690 = vmatpush.msra.mxu0 0.0
      %691 = vmatpush.msra.mxu0 0.0
      %692 = vmatpush.msra.mxu0 0.0
      %693 = vmatpush.msra.mxu0 0.0
      %694 = vmatpush.msra.mxu0 0.0
      %695 = vmatpush.msra.mxu0 %v656
      %696 = vmatpush.msra.mxu0 %v655
      %697 = vmatmul.f32.gmra.mxu0 %v499
      %v698 = vpop.f32.mrf.mxu0
      %v699 = vadd.f32 %v679, %v698
      %700 = vdwg.mxu0
      %701 = vrot.lane.b32.xlu0 %v655, 126
      %v702 = vpop.permute.xlu0 %701
      %703 = vrot.lane.b32.xlu0 %v656, 126
      %v704 = vpop.permute.xlu0 %703
      %705 = vmatpush.msra.mxu0 0.0
      %706 = vmatpush.msra.mxu0 0.0
      %707 = vmatpush.msra.mxu0 0.0
      %708 = vmatpush.msra.mxu0 0.0
      %709 = vmatpush.msra.mxu0 0.0
      %710 = vmatpush.msra.mxu0 0.0
      %711 = vmatpush.msra.mxu0 0.0
      %712 = vmatpush.msra.mxu0 0.0
      %713 = vmatpush.msra.mxu0 0.0
      %714 = vmatpush.msra.mxu0 0.0
      %715 = vmatpush.msra.mxu0 0.0
      %716 = vmatpush.msra.mxu0 0.0
      %717 = vmatpush.msra.mxu0 0.0
      %718 = vmatpush.msra.mxu0 0.0
      %719 = vmatpush.msra.mxu0 %v704
      %720 = vmatpush.msra.mxu0 %v702
      %721 = vmatmul.f32.gmra.mxu0 %v528
      %v722 = vpop.f32.mrf.mxu0
      %v723 = vadd.f32 0.0, %v722
      %724 = vdwg.mxu0
      %v725 = vadd.f32 %v699, %v723
      %v727 = vrot.slane %v725, 1
      %v729 = vadd.f32 %v550, %v727
      %s730 = sadd.s32 %s314, 1
      %p731 = scmp.ge.s32.totalorder %s730, 0
      %p732 = scmp.lt.s32.totalorder %s730, 40
      %p733 = pnand %p731, %p732
      %p734 = pneg %p733
      %v735 = vld [vmem:[%s253 + $0x6] sm:$0xff]
      %v736 = vld [vmem:[%s253 + $0xe] sm:$0x1]
      %737 = vrot.lane.b32.xlu0 %v735, 127
      %v738 = vpop.permute.xlu0 %737
      %739 = vrot.lane.b32.xlu0 %v736, 127
      %v740 = vpop.permute.xlu0 %739
      %v742 = vsel %vm343, %v740, 0
      %744 = vmatpush.msra.mxu0 0.0
      %745 = vmatpush.msra.mxu0 0.0
      %746 = vmatpush.msra.mxu0 0.0
      %747 = vmatpush.msra.mxu0 0.0
      %748 = vmatpush.msra.mxu0 0.0
      %749 = vmatpush.msra.mxu0 0.0
      %750 = vmatpush.msra.mxu0 0.0
      %751 = vmatpush.msra.mxu0 0.0
      %752 = vmatpush.msra.mxu0 0.0
      %753 = vmatpush.msra.mxu0 0.0
      %754 = vmatpush.msra.mxu0 0.0
      %755 = vmatpush.msra.mxu0 0.0
      %756 = vmatpush.msra.mxu0 0.0
      %757 = vmatpush.msra.mxu0 0.0
      %758 = vmatpush.msra.mxu0 %v742
      %759 = vmatpush.msra.mxu0 %v738
      %760 = vmatmul.f32.gmra.mxu0 %v338
      %v761 = vpop.f32.mrf.mxu0
      %v762 = vadd.f32 0.0, %v761
      %763 = vmatmul.f32.gmra.mxu0 %v341
      %v764 = vpop.f32.mrf.mxu0
      %v765 = vadd.f32 0.0, %v764
      %766 = vdwg.mxu0
      %v768 = vsel %vm343, %v736, 0
      %770 = vmatpush.msra.mxu0 0.0
      %771 = vmatpush.msra.mxu0 0.0
      %772 = vmatpush.msra.mxu0 0.0
      %773 = vmatpush.msra.mxu0 0.0
      %774 = vmatpush.msra.mxu0 0.0
      %775 = vmatpush.msra.mxu0 0.0
      %776 = vmatpush.msra.mxu0 0.0
      %777 = vmatpush.msra.mxu0 0.0
      %778 = vmatpush.msra.mxu0 0.0
      %779 = vmatpush.msra.mxu0 0.0
      %780 = vmatpush.msra.mxu0 0.0
      %781 = vmatpush.msra.mxu0 0.0
      %782 = vmatpush.msra.mxu0 0.0
      %783 = vmatpush.msra.mxu0 0.0
      %784 = vmatpush.msra.mxu0 %v768
      %785 = vmatpush.msra.mxu0 %v735
      %786 = vmatmul.f32.gmra.mxu0 %v371
      %v787 = vpop.f32.mrf.mxu0
      %v788 = vadd.f32 %v762, %v787
      %789 = vmatmul.f32.gmra.mxu0 %v374
      %v790 = vpop.f32.mrf.mxu0
      %v791 = vadd.f32 %v765, %v790
      %792 = vdwg.mxu0
      %793 = vrot.lane.b32.xlu0 %v735, 126
      %v794 = vpop.permute.xlu0 %793
      %795 = vrot.lane.b32.xlu0 %v736, 126
      %v796 = vpop.permute.xlu0 %795
      %v798 = vsel %vm343, %v796, 0
      %800 = vmatpush.msra.mxu0 0.0
      %801 = vmatpush.msra.mxu0 0.0
      %802 = vmatpush.msra.mxu0 0.0
      %803 = vmatpush.msra.mxu0 0.0
      %804 = vmatpush.msra.mxu0 0.0
      %805 = vmatpush.msra.mxu0 0.0
      %806 = vmatpush.msra.mxu0 0.0
      %807 = vmatpush.msra.mxu0 0.0
      %808 = vmatpush.msra.mxu0 0.0
      %809 = vmatpush.msra.mxu0 0.0
      %810 = vmatpush.msra.mxu0 0.0
      %811 = vmatpush.msra.mxu0 0.0
      %812 = vmatpush.msra.mxu0 0.0
      %813 = vmatpush.msra.mxu0 0.0
      %814 = vmatpush.msra.mxu0 %v798
      %815 = vmatpush.msra.mxu0 %v794
      %816 = vmatmul.f32.gmra.mxu0 %v410
      %v817 = vpop.f32.mrf.mxu0
      %v818 = vadd.f32 0.0, %v817
      %819 = vmatmul.f32.gmra.mxu0 %v413
      %v820 = vpop.f32.mrf.mxu0
      %v821 = vadd.f32 0.0, %v820
      %822 = vdwg.mxu0
      %v823 = vadd.f32 %v788, %v818
      %v824 = vadd.f32 %v791, %v821
      %v825 = vadd.f32 %v823, %v448
      %v826 = vadd.f32 %v824, %v453
      %v827 = vmax.f32 %v825, 0.0
      %v828 = vmax.f32 %v826, 0.0
      %s829 = scalar_select %p734, 1, 0
      %v830 = vstv %s829
      %vm831 = vcmp.eq.s32.totalorder %v830, 1
      %vm832 = vmand %vm831, %vm319
      %v833 = vsel %vm832, 1, 0
      %vm834 = vcmp.eq.s32.totalorder %v833, 1
      %v835 = vsel %vm834, %v827, 0.0
      %v836 = vsel %vm834, %v828, 0.0
      %837 = vrot.lane.b32.xlu0 %v835, 127
      %v838 = vpop.permute.xlu0 %837
      %839 = vrot.lane.b32.xlu0 %v836, 127
      %v840 = vpop.permute.xlu0 %839
      %841 = vmatpush.msra.mxu0 0.0
      %842 = vmatpush.msra.mxu0 0.0
      %843 = vmatpush.msra.mxu0 0.0
      %844 = vmatpush.msra.mxu0 0.0
      %845 = vmatpush.msra.mxu0 0.0
      %846 = vmatpush.msra.mxu0 0.0
      %847 = vmatpush.msra.mxu0 0.0
      %848 = vmatpush.msra.mxu0 0.0
      %849 = vmatpush.msra.mxu0 0.0
      %850 = vmatpush.msra.mxu0 0.0
      %851 = vmatpush.msra.mxu0 0.0
      %852 = vmatpush.msra.mxu0 0.0
      %853 = vmatpush.msra.mxu0 0.0
      %854 = vmatpush.msra.mxu0 0.0
      %855 = vmatpush.msra.mxu0 %v840
      %856 = vmatpush.msra.mxu0 %v838
      %857 = vmatmul.f32.gmra.mxu0 %v476
      %v858 = vpop.f32.mrf.mxu0
      %v859 = vadd.f32 0.0, %v858
      %860 = vdwg.mxu0
      %861 = vmatpush.msra.mxu0 0.0
      %862 = vmatpush.msra.mxu0 0.0
      %863 = vmatpush.msra.mxu0 0.0
      %864 = vmatpush.msra.mxu0 0.0
      %865 = vmatpush.msra.mxu0 0.0
      %866 = vmatpush.msra.mxu0 0.0
      %867 = vmatpush.msra.mxu0 0.0
      %868 = vmatpush.msra.mxu0 0.0
      %869 = vmatpush.msra.mxu0 0.0
      %870 = vmatpush.msra.mxu0 0.0
      %871 = vmatpush.msra.mxu0 0.0
      %872 = vmatpush.msra.mxu0 0.0
      %873 = vmatpush.msra.mxu0 0.0
      %874 = vmatpush.msra.mxu0 0.0
      %875 = vmatpush.msra.mxu0 %v836
      %876 = vmatpush.msra.mxu0 %v835
      %877 = vmatmul.f32.gmra.mxu0 %v499
      %v878 = vpop.f32.mrf.mxu0
      %v879 = vadd.f32 %v859, %v878
      %880 = vdwg.mxu0
      %881 = vrot.lane.b32.xlu0 %v835, 126
      %v882 = vpop.permute.xlu0 %881
      %883 = vrot.lane.b32.xlu0 %v836, 126
      %v884 = vpop.permute.xlu0 %883
      %885 = vmatpush.msra.mxu0 0.0
      %886 = vmatpush.msra.mxu0 0.0
      %887 = vmatpush.msra.mxu0 0.0
      %888 = vmatpush.msra.mxu0 0.0
      %889 = vmatpush.msra.mxu0 0.0
      %890 = vmatpush.msra.mxu0 0.0
      %891 = vmatpush.msra.mxu0 0.0
      %892 = vmatpush.msra.mxu0 0.0
      %893 = vmatpush.msra.mxu0 0.0
      %894 = vmatpush.msra.mxu0 0.0
      %895 = vmatpush.msra.mxu0 0.0
      %896 = vmatpush.msra.mxu0 0.0
      %897 = vmatpush.msra.mxu0 0.0
      %898 = vmatpush.msra.mxu0 0.0
      %899 = vmatpush.msra.mxu0 %v884
      %900 = vmatpush.msra.mxu0 %v882
      %901 = vmatmul.f32.gmra.mxu0 %v528
      %v902 = vpop.f32.mrf.mxu0
      %v903 = vadd.f32 0.0, %v902
      %904 = vdwg.mxu0
      %v905 = vadd.f32 %v879, %v903
      %v907 = vrot.slane %v905, 1
      %v909 = vadd.f32 %v725, %v907
      %v910 = vrot.slane %v905, 2
      %v912 = vadd.f32 %v729, %v910
      %vm913 = vcmask 188416
      %914 = vst.msk [vmem:[%s201] sm:$0x1] %vm913, %v912
      %s915 = sadd.s32 %s314, 2
      %p916 = scmp.ge.s32.totalorder %s915, 0
      %p917 = scmp.lt.s32.totalorder %s915, 40
      %p918 = pnand %p916, %p917
      %p919 = pneg %p918
      %v920 = vld [vmem:[%s253 + $0x9] sm:$0xff]
      %v921 = vld [vmem:[%s253 + $0x11] sm:$0x1]
      %v922 = vld [vmem:[%s1] sm:$0xff]
      %v923 = vld [vmem:[%s1 + $0x8] sm:$0xff]
      %924 = vrot.lane.b32.xlu0 %v920, 127
      %v925 = vpop.permute.xlu0 %924
      %926 = vrot.lane.b32.xlu0 %v921, 127
      %v927 = vpop.permute.xlu0 %926
      %v928 = vld [vmem:[%s333] sm:$0xff]
      %v929 = vld [vmem:[%s333 + $0x8] sm:$0xff]
      %v931 = vsel %vm336, %v928, 0
      %v934 = vsel %vm336, %v929, 0
      %v937 = vsel %vm343, %v927, 0
      %939 = vmatpush.msra.mxu0 0.0
      %940 = vmatpush.msra.mxu0 0.0
      %941 = vmatpush.msra.mxu0 0.0
      %942 = vmatpush.msra.mxu0 0.0
      %943 = vmatpush.msra.mxu0 0.0
      %944 = vmatpush.msra.mxu0 0.0
      %945 = vmatpush.msra.mxu0 0.0
      %946 = vmatpush.msra.mxu0 0.0
      %947 = vmatpush.msra.mxu0 0.0
      %948 = vmatpush.msra.mxu0 0.0
      %949 = vmatpush.msra.mxu0 0.0
      %950 = vmatpush.msra.mxu0 0.0
      %951 = vmatpush.msra.mxu0 0.0
      %952 = vmatpush.msra.mxu0 0.0
      %953 = vmatpush.msra.mxu0 %v937
      %954 = vmatpush.msra.mxu0 %v925
      %955 = vmatmul.f32.gmra.mxu0 %v931
      %v956 = vpop.f32.mrf.mxu0
      %v957 = vadd.f32 0.0, %v956
      %958 = vmatmul.f32.gmra.mxu0 %v934
      %v959 = vpop.f32.mrf.mxu0
      %v960 = vadd.f32 0.0, %v959
      %961 = vdwg.mxu0
      %v963 = vsel %vm336, %v922, 0
      %v966 = vsel %vm336, %v923, 0
      %v969 = vsel %vm343, %v921, 0
      %971 = vmatpush.msra.mxu0 0.0
      %972 = vmatpush.msra.mxu0 0.0
      %973 = vmatpush.msra.mxu0 0.0
      %974 = vmatpush.msra.mxu0 0.0
      %975 = vmatpush.msra.mxu0 0.0
      %976 = vmatpush.msra.mxu0 0.0
      %977 = vmatpush.msra.mxu0 0.0
      %978 = vmatpush.msra.mxu0 0.0
      %979 = vmatpush.msra.mxu0 0.0
      %980 = vmatpush.msra.mxu0 0.0
      %981 = vmatpush.msra.mxu0 0.0
      %982 = vmatpush.msra.mxu0 0.0
      %983 = vmatpush.msra.mxu0 0.0
      %984 = vmatpush.msra.mxu0 0.0
      %985 = vmatpush.msra.mxu0 %v969
      %986 = vmatpush.msra.mxu0 %v920
      %987 = vmatmul.f32.gmra.mxu0 %v963
      %v988 = vpop.f32.mrf.mxu0
      %v989 = vadd.f32 %v957, %v988
      %990 = vmatmul.f32.gmra.mxu0 %v966
      %v991 = vpop.f32.mrf.mxu0
      %v992 = vadd.f32 %v960, %v991
      %993 = vdwg.mxu0
      %994 = vrot.lane.b32.xlu0 %v920, 126
      %v995 = vpop.permute.xlu0 %994
      %996 = vrot.lane.b32.xlu0 %v921, 126
      %v997 = vpop.permute.xlu0 %996
      %v998 = vld [vmem:[%s406] sm:$0xff]
      %v999 = vld [vmem:[%s406 + $0x8] sm:$0xff]
      %v1001 = vsel %vm336, %v998, 0
      %v1004 = vsel %vm336, %v999, 0
      %v1007 = vsel %vm343, %v997, 0
      %1009 = vmatpush.msra.mxu0 0.0
      %1010 = vmatpush.msra.mxu0 0.0
      %1011 = vmatpush.msra.mxu0 0.0
      %1012 = vmatpush.msra.mxu0 0.0
      %1013 = vmatpush.msra.mxu0 0.0
      %1014 = vmatpush.msra.mxu0 0.0
      %1015 = vmatpush.msra.mxu0 0.0
      %1016 = vmatpush.msra.mxu0 0.0
      %1017 = vmatpush.msra.mxu0 0.0
      %1018 = vmatpush.msra.mxu0 0.0
      %1019 = vmatpush.msra.mxu0 0.0
      %1020 = vmatpush.msra.mxu0 0.0
      %1021 = vmatpush.msra.mxu0 0.0
      %1022 = vmatpush.msra.mxu0 0.0
      %1023 = vmatpush.msra.mxu0 %v1007
      %1024 = vmatpush.msra.mxu0 %v995
      %1025 = vmatmul.f32.gmra.mxu0 %v1001
      %v1026 = vpop.f32.mrf.mxu0
      %v1027 = vadd.f32 0.0, %v1026
      %1028 = vmatmul.f32.gmra.mxu0 %v1004
      %v1029 = vpop.f32.mrf.mxu0
      %v1030 = vadd.f32 0.0, %v1029
      %1031 = vdwg.mxu0
      %v1032 = vadd.f32 %v989, %v1027
      %v1033 = vadd.f32 %v992, %v1030
      %v1034 = vld [vmem:[%s3] sm:$0xff]
      %v1035 = vld [vmem:[%s3 + $0x8] sm:$0xff]
      %1037 = vset.pattern.permute.xlu0 0
      %1038 = vperm.xlu0 %1037, %v1034
      %v1039 = vpop.permute.xlu0 %1038
      %1042 = vset.pattern.permute.xlu0 0
      %1043 = vperm.xlu0 %1042, %v1035
      %v1044 = vpop.permute.xlu0 %1043
      %v1046 = vadd.f32 %v1032, %v1039
      %v1047 = vadd.f32 %v1033, %v1044
      %v1048 = vmax.f32 %v1046, 0.0
      %v1049 = vmax.f32 %v1047, 0.0
      %s1050 = scalar_select %p919, 1, 0
      %v1051 = vstv %s1050
      %vm1052 = vcmp.eq.s32.totalorder %v1051, 1
      %vm1053 = vmand %vm1052, %vm319
      %v1054 = vsel %vm1053, 1, 0
      %vm1055 = vcmp.eq.s32.totalorder %v1054, 1
      %v1056 = vsel %vm1055, %v1048, 0.0
      %v1057 = vsel %vm1055, %v1049, 0.0
      %v1058 = vld [vmem:[%s2] sm:$0x7]
      %1059 = vrot.lane.b32.xlu0 %v1056, 127
      %v1060 = vpop.permute.xlu0 %1059
      %1061 = vrot.lane.b32.xlu0 %v1057, 127
      %v1062 = vpop.permute.xlu0 %1061
      %v1063 = vld [vmem:[%s472] sm:$0x7]
      %v1065 = vsel %vm474, %v1063, 0
      %1067 = vmatpush.msra.mxu0 0.0
      %1068 = vmatpush.msra.mxu0 0.0
      %1069 = vmatpush.msra.mxu0 0.0
      %1070 = vmatpush.msra.mxu0 0.0
      %1071 = vmatpush.msra.mxu0 0.0
      %1072 = vmatpush.msra.mxu0 0.0
      %1073 = vmatpush.msra.mxu0 0.0
      %1074 = vmatpush.msra.mxu0 0.0
      %1075 = vmatpush.msra.mxu0 0.0
      %1076 = vmatpush.msra.mxu0 0.0
      %1077 = vmatpush.msra.mxu0 0.0
      %1078 = vmatpush.msra.mxu0 0.0
      %1079 = vmatpush.msra.mxu0 0.0
      %1080 = vmatpush.msra.mxu0 0.0
      %1081 = vmatpush.msra.mxu0 %v1062
      %1082 = vmatpush.msra.mxu0 %v1060
      %1083 = vmatmul.f32.gmra.mxu0 %v1065
      %v1084 = vpop.f32.mrf.mxu0
      %v1085 = vadd.f32 0.0, %v1084
      %1086 = vdwg.mxu0
      %v1088 = vsel %vm474, %v1058, 0
      %1090 = vmatpush.msra.mxu0 0.0
      %1091 = vmatpush.msra.mxu0 0.0
      %1092 = vmatpush.msra.mxu0 0.0
      %1093 = vmatpush.msra.mxu0 0.0
      %1094 = vmatpush.msra.mxu0 0.0
      %1095 = vmatpush.msra.mxu0 0.0
      %1096 = vmatpush.msra.mxu0 0.0
      %1097 = vmatpush.msra.mxu0 0.0
      %1098 = vmatpush.msra.mxu0 0.0
      %1099 = vmatpush.msra.mxu0 0.0
      %1100 = vmatpush.msra.mxu0 0.0
      %1101 = vmatpush.msra.mxu0 0.0
      %1102 = vmatpush.msra.mxu0 0.0
      %1103 = vmatpush.msra.mxu0 0.0
      %1104 = vmatpush.msra.mxu0 %v1057
      %1105 = vmatpush.msra.mxu0 %v1056
      %1106 = vmatmul.f32.gmra.mxu0 %v1088
      %v1107 = vpop.f32.mrf.mxu0
      %v1108 = vadd.f32 %v1085, %v1107
      %1109 = vdwg.mxu0
      %1110 = vrot.lane.b32.xlu0 %v1056, 126
      %v1111 = vpop.permute.xlu0 %1110
      %1112 = vrot.lane.b32.xlu0 %v1057, 126
      %v1113 = vpop.permute.xlu0 %1112
      %v1114 = vld [vmem:[%s525] sm:$0x7]
      %v1116 = vsel %vm474, %v1114, 0
      %1118 = vmatpush.msra.mxu0 0.0
      %1119 = vmatpush.msra.mxu0 0.0
      %1120 = vmatpush.msra.mxu0 0.0
      %1121 = vmatpush.msra.mxu0 0.0
      %1122 = vmatpush.msra.mxu0 0.0
      %1123 = vmatpush.msra.mxu0 0.0
      %1124 = vmatpush.msra.mxu0 0.0
      %1125 = vmatpush.msra.mxu0 0.0
      %1126 = vmatpush.msra.mxu0 0.0
      %1127 = vmatpush.msra.mxu0 0.0
      %1128 = vmatpush.msra.mxu0 0.0
      %1129 = vmatpush.msra.mxu0 0.0
      %1130 = vmatpush.msra.mxu0 0.0
      %1131 = vmatpush.msra.mxu0 0.0
      %1132 = vmatpush.msra.mxu0 %v1113
      %1133 = vmatpush.msra.mxu0 %v1111
      %1134 = vmatmul.f32.gmra.mxu0 %v1116
      %v1135 = vpop.f32.mrf.mxu0
      %v1136 = vadd.f32 0.0, %v1135
      %1137 = vdwg.mxu0
      %v1138 = vadd.f32 %v1108, %v1136
      %v1140 = vrot.slane %v1138, 1
      %v1142 = vadd.f32 %v905, %v1140
      %v1143 = vrot.slane %v1138, 2
      %v1145 = vadd.f32 %v909, %v1143
      %1146 = vst.msk [vmem:[%s201 + $0x1] sm:$0x1] %vm913, %v1145
      %s1147 = sadd.s32 %s314, 3
      %p1148 = scmp.ge.s32.totalorder %s1147, 0
      %p1149 = scmp.lt.s32.totalorder %s1147, 40
      %p1150 = pnand %p1148, %p1149
      %p1151 = pneg %p1150
      %v1152 = vld [vmem:[%s253 + $0xc] sm:$0xff]
      %v1153 = vld [vmem:[%s253 + $0x14] sm:$0x1]
      %v1154 = vld [vmem:[%s1] sm:$0xff]
      %v1155 = vld [vmem:[%s1 + $0x8] sm:$0xff]
      %1156 = vrot.lane.b32.xlu0 %v1152, 127
      %v1157 = vpop.permute.xlu0 %1156
      %1158 = vrot.lane.b32.xlu0 %v1153, 127
      %v1159 = vpop.permute.xlu0 %1158
      %v1160 = vld [vmem:[%s333] sm:$0xff]
      %v1161 = vld [vmem:[%s333 + $0x8] sm:$0xff]
      %v1163 = vsel %vm336, %v1160, 0
      %v1166 = vsel %vm336, %v1161, 0
      %v1169 = vsel %vm343, %v1159, 0
      %1171 = vmatpush.msra.mxu0 0.0
      %1172 = vmatpush.msra.mxu0 0.0
      %1173 = vmatpush.msra.mxu0 0.0
      %1174 = vmatpush.msra.mxu0 0.0
      %1175 = vmatpush.msra.mxu0 0.0
      %1176 = vmatpush.msra.mxu0 0.0
      %1177 = vmatpush.msra.mxu0 0.0
      %1178 = vmatpush.msra.mxu0 0.0
      %1179 = vmatpush.msra.mxu0 0.0
      %1180 = vmatpush.msra.mxu0 0.0
      %1181 = vmatpush.msra.mxu0 0.0
      %1182 = vmatpush.msra.mxu0 0.0
      %1183 = vmatpush.msra.mxu0 0.0
      %1184 = vmatpush.msra.mxu0 0.0
      %1185 = vmatpush.msra.mxu0 %v1169
      %1186 = vmatpush.msra.mxu0 %v1157
      %1187 = vmatmul.f32.gmra.mxu0 %v1163
      %v1188 = vpop.f32.mrf.mxu0
      %v1189 = vadd.f32 0.0, %v1188
      %1190 = vmatmul.f32.gmra.mxu0 %v1166
      %v1191 = vpop.f32.mrf.mxu0
      %v1192 = vadd.f32 0.0, %v1191
      %1193 = vdwg.mxu0
      %v1195 = vsel %vm336, %v1154, 0
      %v1198 = vsel %vm336, %v1155, 0
      %v1201 = vsel %vm343, %v1153, 0
      %1203 = vmatpush.msra.mxu0 0.0
      %1204 = vmatpush.msra.mxu0 0.0
      %1205 = vmatpush.msra.mxu0 0.0
      %1206 = vmatpush.msra.mxu0 0.0
      %1207 = vmatpush.msra.mxu0 0.0
      %1208 = vmatpush.msra.mxu0 0.0
      %1209 = vmatpush.msra.mxu0 0.0
      %1210 = vmatpush.msra.mxu0 0.0
      %1211 = vmatpush.msra.mxu0 0.0
      %1212 = vmatpush.msra.mxu0 0.0
      %1213 = vmatpush.msra.mxu0 0.0
      %1214 = vmatpush.msra.mxu0 0.0
      %1215 = vmatpush.msra.mxu0 0.0
      %1216 = vmatpush.msra.mxu0 0.0
      %1217 = vmatpush.msra.mxu0 %v1201
      %1218 = vmatpush.msra.mxu0 %v1152
      %1219 = vmatmul.f32.gmra.mxu0 %v1195
      %v1220 = vpop.f32.mrf.mxu0
      %v1221 = vadd.f32 %v1189, %v1220
      %1222 = vmatmul.f32.gmra.mxu0 %v1198
      %v1223 = vpop.f32.mrf.mxu0
      %v1224 = vadd.f32 %v1192, %v1223
      %1225 = vdwg.mxu0
      %1226 = vrot.lane.b32.xlu0 %v1152, 126
      %v1227 = vpop.permute.xlu0 %1226
      %1228 = vrot.lane.b32.xlu0 %v1153, 126
      %v1229 = vpop.permute.xlu0 %1228
      %v1230 = vld [vmem:[%s406] sm:$0xff]
      %v1231 = vld [vmem:[%s406 + $0x8] sm:$0xff]
      %v1233 = vsel %vm336, %v1230, 0
      %v1236 = vsel %vm336, %v1231, 0
      %v1239 = vsel %vm343, %v1229, 0
      %1241 = vmatpush.msra.mxu0 0.0
      %1242 = vmatpush.msra.mxu0 0.0
      %1243 = vmatpush.msra.mxu0 0.0
      %1244 = vmatpush.msra.mxu0 0.0
      %1245 = vmatpush.msra.mxu0 0.0
      %1246 = vmatpush.msra.mxu0 0.0
      %1247 = vmatpush.msra.mxu0 0.0
      %1248 = vmatpush.msra.mxu0 0.0
      %1249 = vmatpush.msra.mxu0 0.0
      %1250 = vmatpush.msra.mxu0 0.0
      %1251 = vmatpush.msra.mxu0 0.0
      %1252 = vmatpush.msra.mxu0 0.0
      %1253 = vmatpush.msra.mxu0 0.0
      %1254 = vmatpush.msra.mxu0 0.0
      %1255 = vmatpush.msra.mxu0 %v1239
      %1256 = vmatpush.msra.mxu0 %v1227
      %1257 = vmatmul.f32.gmra.mxu0 %v1233
      %v1258 = vpop.f32.mrf.mxu0
      %v1259 = vadd.f32 0.0, %v1258
      %1260 = vmatmul.f32.gmra.mxu0 %v1236
      %v1261 = vpop.f32.mrf.mxu0
      %v1262 = vadd.f32 0.0, %v1261
      %1263 = vdwg.mxu0
      %v1264 = vadd.f32 %v1221, %v1259
      %v1265 = vadd.f32 %v1224, %v1262
      %v1266 = vld [vmem:[%s3] sm:$0xff]
      %v1267 = vld [vmem:[%s3 + $0x8] sm:$0xff]
      %1269 = vset.pattern.permute.xlu0 0
      %1270 = vperm.xlu0 %1269, %v1266
      %v1271 = vpop.permute.xlu0 %1270
      %1274 = vset.pattern.permute.xlu0 0
      %1275 = vperm.xlu0 %1274, %v1267
      %v1276 = vpop.permute.xlu0 %1275
      %v1278 = vadd.f32 %v1264, %v1271
      %v1279 = vadd.f32 %v1265, %v1276
      %v1280 = vmax.f32 %v1278, 0.0
      %v1281 = vmax.f32 %v1279, 0.0
      %s1282 = scalar_select %p1151, 1, 0
      %v1283 = vstv %s1282
      %vm1284 = vcmp.eq.s32.totalorder %v1283, 1
      %vm1285 = vmand %vm1284, %vm319
      %v1286 = vsel %vm1285, 1, 0
      %vm1287 = vcmp.eq.s32.totalorder %v1286, 1
      %v1288 = vsel %vm1287, %v1280, 0.0
      %v1289 = vsel %vm1287, %v1281, 0.0
      %v1290 = vld [vmem:[%s2] sm:$0x7]
      %1291 = vrot.lane.b32.xlu0 %v1288, 127
      %v1292 = vpop.permute.xlu0 %1291
      %1293 = vrot.lane.b32.xlu0 %v1289, 127
      %v1294 = vpop.permute.xlu0 %1293
      %v1295 = vld [vmem:[%s472] sm:$0x7]
      %v1297 = vsel %vm474, %v1295, 0
      %1299 = vmatpush.msra.mxu0 0.0
      %1300 = vmatpush.msra.mxu0 0.0
      %1301 = vmatpush.msra.mxu0 0.0
      %1302 = vmatpush.msra.mxu0 0.0
      %1303 = vmatpush.msra.mxu0 0.0
      %1304 = vmatpush.msra.mxu0 0.0
      %1305 = vmatpush.msra.mxu0 0.0
      %1306 = vmatpush.msra.mxu0 0.0
      %1307 = vmatpush.msra.mxu0 0.0
      %1308 = vmatpush.msra.mxu0 0.0
      %1309 = vmatpush.msra.mxu0 0.0
      %1310 = vmatpush.msra.mxu0 0.0
      %1311 = vmatpush.msra.mxu0 0.0
      %1312 = vmatpush.msra.mxu0 0.0
      %1313 = vmatpush.msra.mxu0 %v1294
      %1314 = vmatpush.msra.mxu0 %v1292
      %1315 = vmatmul.f32.gmra.mxu0 %v1297
      %v1316 = vpop.f32.mrf.mxu0
      %v1317 = vadd.f32 0.0, %v1316
      %1318 = vdwg.mxu0
      %v1320 = vsel %vm474, %v1290, 0
      %1322 = vmatpush.msra.mxu0 0.0
      %1323 = vmatpush.msra.mxu0 0.0
      %1324 = vmatpush.msra.mxu0 0.0
      %1325 = vmatpush.msra.mxu0 0.0
      %1326 = vmatpush.msra.mxu0 0.0
      %1327 = vmatpush.msra.mxu0 0.0
      %1328 = vmatpush.msra.mxu0 0.0
      %1329 = vmatpush.msra.mxu0 0.0
      %1330 = vmatpush.msra.mxu0 0.0
      %1331 = vmatpush.msra.mxu0 0.0
      %1332 = vmatpush.msra.mxu0 0.0
      %1333 = vmatpush.msra.mxu0 0.0
      %1334 = vmatpush.msra.mxu0 0.0
      %1335 = vmatpush.msra.mxu0 0.0
      %1336 = vmatpush.msra.mxu0 %v1289
      %1337 = vmatpush.msra.mxu0 %v1288
      %1338 = vmatmul.f32.gmra.mxu0 %v1320
      %v1339 = vpop.f32.mrf.mxu0
      %v1340 = vadd.f32 %v1317, %v1339
      %1341 = vdwg.mxu0
      %1342 = vrot.lane.b32.xlu0 %v1288, 126
      %v1343 = vpop.permute.xlu0 %1342
      %1344 = vrot.lane.b32.xlu0 %v1289, 126
      %v1345 = vpop.permute.xlu0 %1344
      %v1346 = vld [vmem:[%s525] sm:$0x7]
      %v1348 = vsel %vm474, %v1346, 0
      %1350 = vmatpush.msra.mxu0 0.0
      %1351 = vmatpush.msra.mxu0 0.0
      %1352 = vmatpush.msra.mxu0 0.0
      %1353 = vmatpush.msra.mxu0 0.0
      %1354 = vmatpush.msra.mxu0 0.0
      %1355 = vmatpush.msra.mxu0 0.0
      %1356 = vmatpush.msra.mxu0 0.0
      %1357 = vmatpush.msra.mxu0 0.0
      %1358 = vmatpush.msra.mxu0 0.0
      %1359 = vmatpush.msra.mxu0 0.0
      %1360 = vmatpush.msra.mxu0 0.0
      %1361 = vmatpush.msra.mxu0 0.0
      %1362 = vmatpush.msra.mxu0 0.0
      %1363 = vmatpush.msra.mxu0 0.0
      %1364 = vmatpush.msra.mxu0 %v1345
      %1365 = vmatpush.msra.mxu0 %v1343
      %1366 = vmatmul.f32.gmra.mxu0 %v1348
      %v1367 = vpop.f32.mrf.mxu0
      %v1368 = vadd.f32 0.0, %v1367
      %1369 = vdwg.mxu0
      %v1370 = vadd.f32 %v1340, %v1368
      %v1372 = vrot.slane %v1370, 1
      %v1374 = vadd.f32 %v1138, %v1372
      %v1375 = vrot.slane %v1370, 2
      %v1377 = vadd.f32 %v1142, %v1375
      %1378 = vst.msk [vmem:[%s201 + $0x2] sm:$0x1] %vm913, %v1377
      %s1379 = sadd.s32 %s314, 4
      %p1380 = scmp.ge.s32.totalorder %s1379, 0
      %p1381 = scmp.lt.s32.totalorder %s1379, 40
      %p1382 = pnand %p1380, %p1381
      %p1383 = pneg %p1382
      %v1384 = vld [vmem:[%s253 + $0xf] sm:$0xff]
      %v1385 = vld [vmem:[%s253 + $0x17] sm:$0x1]
      %v1386 = vld [vmem:[%s1] sm:$0xff]
      %v1387 = vld [vmem:[%s1 + $0x8] sm:$0xff]
      %1388 = vrot.lane.b32.xlu0 %v1384, 127
      %v1389 = vpop.permute.xlu0 %1388
      %1390 = vrot.lane.b32.xlu0 %v1385, 127
      %v1391 = vpop.permute.xlu0 %1390
      %v1392 = vld [vmem:[%s333] sm:$0xff]
      %v1393 = vld [vmem:[%s333 + $0x8] sm:$0xff]
      %v1395 = vsel %vm336, %v1392, 0
      %v1398 = vsel %vm336, %v1393, 0
      %v1401 = vsel %vm343, %v1391, 0
      %1403 = vmatpush.msra.mxu0 0.0
      %1404 = vmatpush.msra.mxu0 0.0
      %1405 = vmatpush.msra.mxu0 0.0
      %1406 = vmatpush.msra.mxu0 0.0
      %1407 = vmatpush.msra.mxu0 0.0
      %1408 = vmatpush.msra.mxu0 0.0
      %1409 = vmatpush.msra.mxu0 0.0
      %1410 = vmatpush.msra.mxu0 0.0
      %1411 = vmatpush.msra.mxu0 0.0
      %1412 = vmatpush.msra.mxu0 0.0
      %1413 = vmatpush.msra.mxu0 0.0
      %1414 = vmatpush.msra.mxu0 0.0
      %1415 = vmatpush.msra.mxu0 0.0
      %1416 = vmatpush.msra.mxu0 0.0
      %1417 = vmatpush.msra.mxu0 %v1401
      %1418 = vmatpush.msra.mxu0 %v1389
      %1419 = vmatmul.f32.gmra.mxu0 %v1395
      %v1420 = vpop.f32.mrf.mxu0
      %v1421 = vadd.f32 0.0, %v1420
      %1422 = vmatmul.f32.gmra.mxu0 %v1398
      %v1423 = vpop.f32.mrf.mxu0
      %v1424 = vadd.f32 0.0, %v1423
      %1425 = vdwg.mxu0
      %v1427 = vsel %vm336, %v1386, 0
      %v1430 = vsel %vm336, %v1387, 0
      %v1433 = vsel %vm343, %v1385, 0
      %1435 = vmatpush.msra.mxu0 0.0
      %1436 = vmatpush.msra.mxu0 0.0
      %1437 = vmatpush.msra.mxu0 0.0
      %1438 = vmatpush.msra.mxu0 0.0
      %1439 = vmatpush.msra.mxu0 0.0
      %1440 = vmatpush.msra.mxu0 0.0
      %1441 = vmatpush.msra.mxu0 0.0
      %1442 = vmatpush.msra.mxu0 0.0
      %1443 = vmatpush.msra.mxu0 0.0
      %1444 = vmatpush.msra.mxu0 0.0
      %1445 = vmatpush.msra.mxu0 0.0
      %1446 = vmatpush.msra.mxu0 0.0
      %1447 = vmatpush.msra.mxu0 0.0
      %1448 = vmatpush.msra.mxu0 0.0
      %1449 = vmatpush.msra.mxu0 %v1433
      %1450 = vmatpush.msra.mxu0 %v1384
      %1451 = vmatmul.f32.gmra.mxu0 %v1427
      %v1452 = vpop.f32.mrf.mxu0
      %v1453 = vadd.f32 %v1421, %v1452
      %1454 = vmatmul.f32.gmra.mxu0 %v1430
      %v1455 = vpop.f32.mrf.mxu0
      %v1456 = vadd.f32 %v1424, %v1455
      %1457 = vdwg.mxu0
      %1458 = vrot.lane.b32.xlu0 %v1384, 126
      %v1459 = vpop.permute.xlu0 %1458
      %1460 = vrot.lane.b32.xlu0 %v1385, 126
      %v1461 = vpop.permute.xlu0 %1460
      %v1462 = vld [vmem:[%s406] sm:$0xff]
      %v1463 = vld [vmem:[%s406 + $0x8] sm:$0xff]
      %v1465 = vsel %vm336, %v1462, 0
      %v1468 = vsel %vm336, %v1463, 0
      %v1471 = vsel %vm343, %v1461, 0
      %1473 = vmatpush.msra.mxu0 0.0
      %1474 = vmatpush.msra.mxu0 0.0
      %1475 = vmatpush.msra.mxu0 0.0
      %1476 = vmatpush.msra.mxu0 0.0
      %1477 = vmatpush.msra.mxu0 0.0
      %1478 = vmatpush.msra.mxu0 0.0
      %1479 = vmatpush.msra.mxu0 0.0
      %1480 = vmatpush.msra.mxu0 0.0
      %1481 = vmatpush.msra.mxu0 0.0
      %1482 = vmatpush.msra.mxu0 0.0
      %1483 = vmatpush.msra.mxu0 0.0
      %1484 = vmatpush.msra.mxu0 0.0
      %1485 = vmatpush.msra.mxu0 0.0
      %1486 = vmatpush.msra.mxu0 0.0
      %1487 = vmatpush.msra.mxu0 %v1471
      %1488 = vmatpush.msra.mxu0 %v1459
      %1489 = vmatmul.f32.gmra.mxu0 %v1465
      %v1490 = vpop.f32.mrf.mxu0
      %v1491 = vadd.f32 0.0, %v1490
      %1492 = vmatmul.f32.gmra.mxu0 %v1468
      %v1493 = vpop.f32.mrf.mxu0
      %v1494 = vadd.f32 0.0, %v1493
      %1495 = vdwg.mxu0
      %v1496 = vadd.f32 %v1453, %v1491
      %v1497 = vadd.f32 %v1456, %v1494
      %v1498 = vld [vmem:[%s3] sm:$0xff]
      %v1499 = vld [vmem:[%s3 + $0x8] sm:$0xff]
      %1501 = vset.pattern.permute.xlu0 0
      %1502 = vperm.xlu0 %1501, %v1498
      %v1503 = vpop.permute.xlu0 %1502
      %1506 = vset.pattern.permute.xlu0 0
      %1507 = vperm.xlu0 %1506, %v1499
      %v1508 = vpop.permute.xlu0 %1507
      %v1510 = vadd.f32 %v1496, %v1503
      %v1511 = vadd.f32 %v1497, %v1508
      %v1512 = vmax.f32 %v1510, 0.0
      %v1513 = vmax.f32 %v1511, 0.0
      %s1514 = scalar_select %p1383, 1, 0
      %v1515 = vstv %s1514
      %vm1516 = vcmp.eq.s32.totalorder %v1515, 1
      %vm1517 = vmand %vm1516, %vm319
      %v1518 = vsel %vm1517, 1, 0
      %vm1519 = vcmp.eq.s32.totalorder %v1518, 1
      %v1520 = vsel %vm1519, %v1512, 0.0
      %v1521 = vsel %vm1519, %v1513, 0.0
      %v1522 = vld [vmem:[%s2] sm:$0x7]
      %1523 = vrot.lane.b32.xlu0 %v1520, 127
      %v1524 = vpop.permute.xlu0 %1523
      %1525 = vrot.lane.b32.xlu0 %v1521, 127
      %v1526 = vpop.permute.xlu0 %1525
      %v1527 = vld [vmem:[%s472] sm:$0x7]
      %v1529 = vsel %vm474, %v1527, 0
      %1531 = vmatpush.msra.mxu0 0.0
      %1532 = vmatpush.msra.mxu0 0.0
      %1533 = vmatpush.msra.mxu0 0.0
      %1534 = vmatpush.msra.mxu0 0.0
      %1535 = vmatpush.msra.mxu0 0.0
      %1536 = vmatpush.msra.mxu0 0.0
      %1537 = vmatpush.msra.mxu0 0.0
      %1538 = vmatpush.msra.mxu0 0.0
      %1539 = vmatpush.msra.mxu0 0.0
      %1540 = vmatpush.msra.mxu0 0.0
      %1541 = vmatpush.msra.mxu0 0.0
      %1542 = vmatpush.msra.mxu0 0.0
      %1543 = vmatpush.msra.mxu0 0.0
      %1544 = vmatpush.msra.mxu0 0.0
      %1545 = vmatpush.msra.mxu0 %v1526
      %1546 = vmatpush.msra.mxu0 %v1524
      %1547 = vmatmul.f32.gmra.mxu0 %v1529
      %v1548 = vpop.f32.mrf.mxu0
      %v1549 = vadd.f32 0.0, %v1548
      %1550 = vdwg.mxu0
      %v1552 = vsel %vm474, %v1522, 0
      %1554 = vmatpush.msra.mxu0 0.0
      %1555 = vmatpush.msra.mxu0 0.0
      %1556 = vmatpush.msra.mxu0 0.0
      %1557 = vmatpush.msra.mxu0 0.0
      %1558 = vmatpush.msra.mxu0 0.0
      %1559 = vmatpush.msra.mxu0 0.0
      %1560 = vmatpush.msra.mxu0 0.0
      %1561 = vmatpush.msra.mxu0 0.0
      %1562 = vmatpush.msra.mxu0 0.0
      %1563 = vmatpush.msra.mxu0 0.0
      %1564 = vmatpush.msra.mxu0 0.0
      %1565 = vmatpush.msra.mxu0 0.0
      %1566 = vmatpush.msra.mxu0 0.0
      %1567 = vmatpush.msra.mxu0 0.0
      %1568 = vmatpush.msra.mxu0 %v1521
      %1569 = vmatpush.msra.mxu0 %v1520
      %1570 = vmatmul.f32.gmra.mxu0 %v1552
      %v1571 = vpop.f32.mrf.mxu0
      %v1572 = vadd.f32 %v1549, %v1571
      %1573 = vdwg.mxu0
      %1574 = vrot.lane.b32.xlu0 %v1520, 126
      %v1575 = vpop.permute.xlu0 %1574
      %1576 = vrot.lane.b32.xlu0 %v1521, 126
      %v1577 = vpop.permute.xlu0 %1576
      %v1578 = vld [vmem:[%s525] sm:$0x7]
      %v1580 = vsel %vm474, %v1578, 0
      %1582 = vmatpush.msra.mxu0 0.0
      %1583 = vmatpush.msra.mxu0 0.0
      %1584 = vmatpush.msra.mxu0 0.0
      %1585 = vmatpush.msra.mxu0 0.0
      %1586 = vmatpush.msra.mxu0 0.0
      %1587 = vmatpush.msra.mxu0 0.0
      %1588 = vmatpush.msra.mxu0 0.0
      %1589 = vmatpush.msra.mxu0 0.0
      %1590 = vmatpush.msra.mxu0 0.0
      %1591 = vmatpush.msra.mxu0 0.0
      %1592 = vmatpush.msra.mxu0 0.0
      %1593 = vmatpush.msra.mxu0 0.0
      %1594 = vmatpush.msra.mxu0 0.0
      %1595 = vmatpush.msra.mxu0 0.0
      %1596 = vmatpush.msra.mxu0 %v1577
      %1597 = vmatpush.msra.mxu0 %v1575
      %1598 = vmatmul.f32.gmra.mxu0 %v1580
      %v1599 = vpop.f32.mrf.mxu0
      %v1600 = vadd.f32 0.0, %v1599
      %1601 = vdwg.mxu0
      %v1602 = vadd.f32 %v1572, %v1600
      %v1604 = vrot.slane %v1602, 1
      %v1606 = vadd.f32 %v1370, %v1604
      %v1607 = vrot.slane %v1602, 2
      %v1609 = vadd.f32 %v1374, %v1607
      %1610 = vst.msk [vmem:[%s201 + $0x3] sm:$0x1] %vm913, %v1609
      %s1611 = sadd.s32 %s314, 5
      %p1612 = scmp.ge.s32.totalorder %s1611, 0
      %p1613 = scmp.lt.s32.totalorder %s1611, 40
      %p1614 = pnand %p1612, %p1613
      %p1615 = pneg %p1614
      %v1616 = vld [vmem:[%s253 + $0x12] sm:$0xff]
      %v1617 = vld [vmem:[%s253 + $0x1a] sm:$0x1]
      %v1618 = vld [vmem:[%s1] sm:$0xff]
      %v1619 = vld [vmem:[%s1 + $0x8] sm:$0xff]
      %1620 = vrot.lane.b32.xlu0 %v1616, 127
      %v1621 = vpop.permute.xlu0 %1620
      %1622 = vrot.lane.b32.xlu0 %v1617, 127
      %v1623 = vpop.permute.xlu0 %1622
      %v1624 = vld [vmem:[%s333] sm:$0xff]
      %v1625 = vld [vmem:[%s333 + $0x8] sm:$0xff]
      %v1627 = vsel %vm336, %v1624, 0
      %v1630 = vsel %vm336, %v1625, 0
      %v1633 = vsel %vm343, %v1623, 0
      %1635 = vmatpush.msra.mxu0 0.0
      %1636 = vmatpush.msra.mxu0 0.0
      %1637 = vmatpush.msra.mxu0 0.0
      %1638 = vmatpush.msra.mxu0 0.0
      %1639 = vmatpush.msra.mxu0 0.0
      %1640 = vmatpush.msra.mxu0 0.0
      %1641 = vmatpush.msra.mxu0 0.0
      %1642 = vmatpush.msra.mxu0 0.0
      %1643 = vmatpush.msra.mxu0 0.0
      %1644 = vmatpush.msra.mxu0 0.0
      %1645 = vmatpush.msra.mxu0 0.0
      %1646 = vmatpush.msra.mxu0 0.0
      %1647 = vmatpush.msra.mxu0 0.0
      %1648 = vmatpush.msra.mxu0 0.0
      %1649 = vmatpush.msra.mxu0 %v1633
      %1650 = vmatpush.msra.mxu0 %v1621
      %1651 = vmatmul.f32.gmra.mxu0 %v1627
      %v1652 = vpop.f32.mrf.mxu0
      %v1653 = vadd.f32 0.0, %v1652
      %1654 = vmatmul.f32.gmra.mxu0 %v1630
      %v1655 = vpop.f32.mrf.mxu0
      %v1656 = vadd.f32 0.0, %v1655
      %1657 = vdwg.mxu0
      %v1659 = vsel %vm336, %v1618, 0
      %v1662 = vsel %vm336, %v1619, 0
      %v1665 = vsel %vm343, %v1617, 0
      %1667 = vmatpush.msra.mxu0 0.0
      %1668 = vmatpush.msra.mxu0 0.0
      %1669 = vmatpush.msra.mxu0 0.0
      %1670 = vmatpush.msra.mxu0 0.0
      %1671 = vmatpush.msra.mxu0 0.0
      %1672 = vmatpush.msra.mxu0 0.0
      %1673 = vmatpush.msra.mxu0 0.0
      %1674 = vmatpush.msra.mxu0 0.0
      %1675 = vmatpush.msra.mxu0 0.0
      %1676 = vmatpush.msra.mxu0 0.0
      %1677 = vmatpush.msra.mxu0 0.0
      %1678 = vmatpush.msra.mxu0 0.0
      %1679 = vmatpush.msra.mxu0 0.0
      %1680 = vmatpush.msra.mxu0 0.0
      %1681 = vmatpush.msra.mxu0 %v1665
      %1682 = vmatpush.msra.mxu0 %v1616
      %1683 = vmatmul.f32.gmra.mxu0 %v1659
      %v1684 = vpop.f32.mrf.mxu0
      %v1685 = vadd.f32 %v1653, %v1684
      %1686 = vmatmul.f32.gmra.mxu0 %v1662
      %v1687 = vpop.f32.mrf.mxu0
      %v1688 = vadd.f32 %v1656, %v1687
      %1689 = vdwg.mxu0
      %1690 = vrot.lane.b32.xlu0 %v1616, 126
      %v1691 = vpop.permute.xlu0 %1690
      %1692 = vrot.lane.b32.xlu0 %v1617, 126
      %v1693 = vpop.permute.xlu0 %1692
      %v1694 = vld [vmem:[%s406] sm:$0xff]
      %v1695 = vld [vmem:[%s406 + $0x8] sm:$0xff]
      %v1697 = vsel %vm336, %v1694, 0
      %v1700 = vsel %vm336, %v1695, 0
      %v1703 = vsel %vm343, %v1693, 0
      %1705 = vmatpush.msra.mxu0 0.0
      %1706 = vmatpush.msra.mxu0 0.0
      %1707 = vmatpush.msra.mxu0 0.0
      %1708 = vmatpush.msra.mxu0 0.0
      %1709 = vmatpush.msra.mxu0 0.0
      %1710 = vmatpush.msra.mxu0 0.0
      %1711 = vmatpush.msra.mxu0 0.0
      %1712 = vmatpush.msra.mxu0 0.0
      %1713 = vmatpush.msra.mxu0 0.0
      %1714 = vmatpush.msra.mxu0 0.0
      %1715 = vmatpush.msra.mxu0 0.0
      %1716 = vmatpush.msra.mxu0 0.0
      %1717 = vmatpush.msra.mxu0 0.0
      %1718 = vmatpush.msra.mxu0 0.0
      %1719 = vmatpush.msra.mxu0 %v1703
      %1720 = vmatpush.msra.mxu0 %v1691
      %1721 = vmatmul.f32.gmra.mxu0 %v1697
      %v1722 = vpop.f32.mrf.mxu0
      %v1723 = vadd.f32 0.0, %v1722
      %1724 = vmatmul.f32.gmra.mxu0 %v1700
      %v1725 = vpop.f32.mrf.mxu0
      %v1726 = vadd.f32 0.0, %v1725
      %1727 = vdwg.mxu0
      %v1728 = vadd.f32 %v1685, %v1723
      %v1729 = vadd.f32 %v1688, %v1726
      %v1730 = vld [vmem:[%s3] sm:$0xff]
      %v1731 = vld [vmem:[%s3 + $0x8] sm:$0xff]
      %1733 = vset.pattern.permute.xlu0 0
      %1734 = vperm.xlu0 %1733, %v1730
      %v1735 = vpop.permute.xlu0 %1734
      %1738 = vset.pattern.permute.xlu0 0
      %1739 = vperm.xlu0 %1738, %v1731
      %v1740 = vpop.permute.xlu0 %1739
      %v1742 = vadd.f32 %v1728, %v1735
      %v1743 = vadd.f32 %v1729, %v1740
      %v1744 = vmax.f32 %v1742, 0.0
      %v1745 = vmax.f32 %v1743, 0.0
      %s1746 = scalar_select %p1615, 1, 0
      %v1747 = vstv %s1746
      %vm1748 = vcmp.eq.s32.totalorder %v1747, 1
      %vm1749 = vmand %vm1748, %vm319
      %v1750 = vsel %vm1749, 1, 0
      %vm1751 = vcmp.eq.s32.totalorder %v1750, 1
      %v1752 = vsel %vm1751, %v1744, 0.0
      %v1753 = vsel %vm1751, %v1745, 0.0
      %v1754 = vld [vmem:[%s2] sm:$0x7]
      %1755 = vrot.lane.b32.xlu0 %v1752, 127
      %v1756 = vpop.permute.xlu0 %1755
      %1757 = vrot.lane.b32.xlu0 %v1753, 127
      %v1758 = vpop.permute.xlu0 %1757
      %v1759 = vld [vmem:[%s472] sm:$0x7]
      %v1761 = vsel %vm474, %v1759, 0
      %1763 = vmatpush.msra.mxu0 0.0
      %1764 = vmatpush.msra.mxu0 0.0
      %1765 = vmatpush.msra.mxu0 0.0
      %1766 = vmatpush.msra.mxu0 0.0
      %1767 = vmatpush.msra.mxu0 0.0
      %1768 = vmatpush.msra.mxu0 0.0
      %1769 = vmatpush.msra.mxu0 0.0
      %1770 = vmatpush.msra.mxu0 0.0
      %1771 = vmatpush.msra.mxu0 0.0
      %1772 = vmatpush.msra.mxu0 0.0
      %1773 = vmatpush.msra.mxu0 0.0
      %1774 = vmatpush.msra.mxu0 0.0
      %1775 = vmatpush.msra.mxu0 0.0
      %1776 = vmatpush.msra.mxu0 0.0
      %1777 = vmatpush.msra.mxu0 %v1758
      %1778 = vmatpush.msra.mxu0 %v1756
      %1779 = vmatmul.f32.gmra.mxu0 %v1761
      %v1780 = vpop.f32.mrf.mxu0
      %v1781 = vadd.f32 0.0, %v1780
      %1782 = vdwg.mxu0
      %v1784 = vsel %vm474, %v1754, 0
      %1786 = vmatpush.msra.mxu0 0.0
      %1787 = vmatpush.msra.mxu0 0.0
      %1788 = vmatpush.msra.mxu0 0.0
      %1789 = vmatpush.msra.mxu0 0.0
      %1790 = vmatpush.msra.mxu0 0.0
      %1791 = vmatpush.msra.mxu0 0.0
      %1792 = vmatpush.msra.mxu0 0.0
      %1793 = vmatpush.msra.mxu0 0.0
      %1794 = vmatpush.msra.mxu0 0.0
      %1795 = vmatpush.msra.mxu0 0.0
      %1796 = vmatpush.msra.mxu0 0.0
      %1797 = vmatpush.msra.mxu0 0.0
      %1798 = vmatpush.msra.mxu0 0.0
      %1799 = vmatpush.msra.mxu0 0.0
      %1800 = vmatpush.msra.mxu0 %v1753
      %1801 = vmatpush.msra.mxu0 %v1752
      %1802 = vmatmul.f32.gmra.mxu0 %v1784
      %v1803 = vpop.f32.mrf.mxu0
      %v1804 = vadd.f32 %v1781, %v1803
      %1805 = vdwg.mxu0
      %1806 = vrot.lane.b32.xlu0 %v1752, 126
      %v1807 = vpop.permute.xlu0 %1806
      %1808 = vrot.lane.b32.xlu0 %v1753, 126
      %v1809 = vpop.permute.xlu0 %1808
      %v1810 = vld [vmem:[%s525] sm:$0x7]
      %v1812 = vsel %vm474, %v1810, 0
      %1814 = vmatpush.msra.mxu0 0.0
      %1815 = vmatpush.msra.mxu0 0.0
      %1816 = vmatpush.msra.mxu0 0.0
      %1817 = vmatpush.msra.mxu0 0.0
      %1818 = vmatpush.msra.mxu0 0.0
      %1819 = vmatpush.msra.mxu0 0.0
      %1820 = vmatpush.msra.mxu0 0.0
      %1821 = vmatpush.msra.mxu0 0.0
      %1822 = vmatpush.msra.mxu0 0.0
      %1823 = vmatpush.msra.mxu0 0.0
      %1824 = vmatpush.msra.mxu0 0.0
      %1825 = vmatpush.msra.mxu0 0.0
      %1826 = vmatpush.msra.mxu0 0.0
      %1827 = vmatpush.msra.mxu0 0.0
      %1828 = vmatpush.msra.mxu0 %v1809
      %1829 = vmatpush.msra.mxu0 %v1807
      %1830 = vmatmul.f32.gmra.mxu0 %v1812
      %v1831 = vpop.f32.mrf.mxu0
      %v1832 = vadd.f32 0.0, %v1831
      %1833 = vdwg.mxu0
      %v1834 = vadd.f32 %v1804, %v1832
      %v1836 = vrot.slane %v1834, 1
      %v1838 = vadd.f32 %v1602, %v1836
      %v1839 = vrot.slane %v1834, 2
      %v1841 = vadd.f32 %v1606, %v1839
      %1842 = vst.msk [vmem:[%s201 + $0x4] sm:$0x1] %vm913, %v1841
      %s1843 = sadd.s32 %s314, 6
      %p1844 = scmp.ge.s32.totalorder %s1843, 0
      %p1845 = scmp.lt.s32.totalorder %s1843, 40
      %p1846 = pnand %p1844, %p1845
      %p1847 = pneg %p1846
      %v1848 = vld [vmem:[%s253 + $0x15] sm:$0xff]
      %v1849 = vld [vmem:[%s253 + $0x1d] sm:$0x1]
      %v1850 = vld [vmem:[%s1] sm:$0xff]
      %v1851 = vld [vmem:[%s1 + $0x8] sm:$0xff]
      %1852 = vrot.lane.b32.xlu0 %v1848, 127
      %v1853 = vpop.permute.xlu0 %1852
      %1854 = vrot.lane.b32.xlu0 %v1849, 127
      %v1855 = vpop.permute.xlu0 %1854
      %v1856 = vld [vmem:[%s333] sm:$0xff]
      %v1857 = vld [vmem:[%s333 + $0x8] sm:$0xff]
      %v1859 = vsel %vm336, %v1856, 0
      %v1862 = vsel %vm336, %v1857, 0
      %v1865 = vsel %vm343, %v1855, 0
      %1867 = vmatpush.msra.mxu0 0.0
      %1868 = vmatpush.msra.mxu0 0.0
      %1869 = vmatpush.msra.mxu0 0.0
      %1870 = vmatpush.msra.mxu0 0.0
      %1871 = vmatpush.msra.mxu0 0.0
      %1872 = vmatpush.msra.mxu0 0.0
      %1873 = vmatpush.msra.mxu0 0.0
      %1874 = vmatpush.msra.mxu0 0.0
      %1875 = vmatpush.msra.mxu0 0.0
      %1876 = vmatpush.msra.mxu0 0.0
      %1877 = vmatpush.msra.mxu0 0.0
      %1878 = vmatpush.msra.mxu0 0.0
      %1879 = vmatpush.msra.mxu0 0.0
      %1880 = vmatpush.msra.mxu0 0.0
      %1881 = vmatpush.msra.mxu0 %v1865
      %1882 = vmatpush.msra.mxu0 %v1853
      %1883 = vmatmul.f32.gmra.mxu0 %v1859
      %v1884 = vpop.f32.mrf.mxu0
      %v1885 = vadd.f32 0.0, %v1884
      %1886 = vmatmul.f32.gmra.mxu0 %v1862
      %v1887 = vpop.f32.mrf.mxu0
      %v1888 = vadd.f32 0.0, %v1887
      %1889 = vdwg.mxu0
      %v1891 = vsel %vm336, %v1850, 0
      %v1894 = vsel %vm336, %v1851, 0
      %v1897 = vsel %vm343, %v1849, 0
      %1899 = vmatpush.msra.mxu0 0.0
      %1900 = vmatpush.msra.mxu0 0.0
      %1901 = vmatpush.msra.mxu0 0.0
      %1902 = vmatpush.msra.mxu0 0.0
      %1903 = vmatpush.msra.mxu0 0.0
      %1904 = vmatpush.msra.mxu0 0.0
      %1905 = vmatpush.msra.mxu0 0.0
      %1906 = vmatpush.msra.mxu0 0.0
      %1907 = vmatpush.msra.mxu0 0.0
      %1908 = vmatpush.msra.mxu0 0.0
      %1909 = vmatpush.msra.mxu0 0.0
      %1910 = vmatpush.msra.mxu0 0.0
      %1911 = vmatpush.msra.mxu0 0.0
      %1912 = vmatpush.msra.mxu0 0.0
      %1913 = vmatpush.msra.mxu0 %v1897
      %1914 = vmatpush.msra.mxu0 %v1848
      %1915 = vmatmul.f32.gmra.mxu0 %v1891
      %v1916 = vpop.f32.mrf.mxu0
      %v1917 = vadd.f32 %v1885, %v1916
      %1918 = vmatmul.f32.gmra.mxu0 %v1894
      %v1919 = vpop.f32.mrf.mxu0
      %v1920 = vadd.f32 %v1888, %v1919
      %1921 = vdwg.mxu0
      %1922 = vrot.lane.b32.xlu0 %v1848, 126
      %v1923 = vpop.permute.xlu0 %1922
      %1924 = vrot.lane.b32.xlu0 %v1849, 126
      %v1925 = vpop.permute.xlu0 %1924
      %v1926 = vld [vmem:[%s406] sm:$0xff]
      %v1927 = vld [vmem:[%s406 + $0x8] sm:$0xff]
      %v1929 = vsel %vm336, %v1926, 0
      %v1932 = vsel %vm336, %v1927, 0
      %v1935 = vsel %vm343, %v1925, 0
      %1937 = vmatpush.msra.mxu0 0.0
      %1938 = vmatpush.msra.mxu0 0.0
      %1939 = vmatpush.msra.mxu0 0.0
      %1940 = vmatpush.msra.mxu0 0.0
      %1941 = vmatpush.msra.mxu0 0.0
      %1942 = vmatpush.msra.mxu0 0.0
      %1943 = vmatpush.msra.mxu0 0.0
      %1944 = vmatpush.msra.mxu0 0.0
      %1945 = vmatpush.msra.mxu0 0.0
      %1946 = vmatpush.msra.mxu0 0.0
      %1947 = vmatpush.msra.mxu0 0.0
      %1948 = vmatpush.msra.mxu0 0.0
      %1949 = vmatpush.msra.mxu0 0.0
      %1950 = vmatpush.msra.mxu0 0.0
      %1951 = vmatpush.msra.mxu0 %v1935
      %1952 = vmatpush.msra.mxu0 %v1923
      %1953 = vmatmul.f32.gmra.mxu0 %v1929
      %v1954 = vpop.f32.mrf.mxu0
      %v1955 = vadd.f32 0.0, %v1954
      %1956 = vmatmul.f32.gmra.mxu0 %v1932
      %v1957 = vpop.f32.mrf.mxu0
      %v1958 = vadd.f32 0.0, %v1957
      %1959 = vdwg.mxu0
      %v1960 = vadd.f32 %v1917, %v1955
      %v1961 = vadd.f32 %v1920, %v1958
      %v1962 = vld [vmem:[%s3] sm:$0xff]
      %v1963 = vld [vmem:[%s3 + $0x8] sm:$0xff]
      %1965 = vset.pattern.permute.xlu0 0
      %1966 = vperm.xlu0 %1965, %v1962
      %v1967 = vpop.permute.xlu0 %1966
      %1970 = vset.pattern.permute.xlu0 0
      %1971 = vperm.xlu0 %1970, %v1963
      %v1972 = vpop.permute.xlu0 %1971
      %v1974 = vadd.f32 %v1960, %v1967
      %v1975 = vadd.f32 %v1961, %v1972
      %v1976 = vmax.f32 %v1974, 0.0
      %v1977 = vmax.f32 %v1975, 0.0
      %s1978 = scalar_select %p1847, 1, 0
      %v1979 = vstv %s1978
      %vm1980 = vcmp.eq.s32.totalorder %v1979, 1
      %vm1981 = vmand %vm1980, %vm319
      %v1982 = vsel %vm1981, 1, 0
      %vm1983 = vcmp.eq.s32.totalorder %v1982, 1
      %v1984 = vsel %vm1983, %v1976, 0.0
      %v1985 = vsel %vm1983, %v1977, 0.0
      %v1986 = vld [vmem:[%s2] sm:$0x7]
      %1987 = vrot.lane.b32.xlu0 %v1984, 127
      %v1988 = vpop.permute.xlu0 %1987
      %1989 = vrot.lane.b32.xlu0 %v1985, 127
      %v1990 = vpop.permute.xlu0 %1989
      %v1991 = vld [vmem:[%s472] sm:$0x7]
      %v1993 = vsel %vm474, %v1991, 0
      %1995 = vmatpush.msra.mxu0 0.0
      %1996 = vmatpush.msra.mxu0 0.0
      %1997 = vmatpush.msra.mxu0 0.0
      %1998 = vmatpush.msra.mxu0 0.0
      %1999 = vmatpush.msra.mxu0 0.0
      %2000 = vmatpush.msra.mxu0 0.0
      %2001 = vmatpush.msra.mxu0 0.0
      %2002 = vmatpush.msra.mxu0 0.0
      %2003 = vmatpush.msra.mxu0 0.0
      %2004 = vmatpush.msra.mxu0 0.0
      %2005 = vmatpush.msra.mxu0 0.0
      %2006 = vmatpush.msra.mxu0 0.0
      %2007 = vmatpush.msra.mxu0 0.0
      %2008 = vmatpush.msra.mxu0 0.0
      %2009 = vmatpush.msra.mxu0 %v1990
      %2010 = vmatpush.msra.mxu0 %v1988
      %2011 = vmatmul.f32.gmra.mxu0 %v1993
      %v2012 = vpop.f32.mrf.mxu0
      %v2013 = vadd.f32 0.0, %v2012
      %2014 = vdwg.mxu0
      %v2016 = vsel %vm474, %v1986, 0
      %2018 = vmatpush.msra.mxu0 0.0
      %2019 = vmatpush.msra.mxu0 0.0
      %2020 = vmatpush.msra.mxu0 0.0
      %2021 = vmatpush.msra.mxu0 0.0
      %2022 = vmatpush.msra.mxu0 0.0
      %2023 = vmatpush.msra.mxu0 0.0
      %2024 = vmatpush.msra.mxu0 0.0
      %2025 = vmatpush.msra.mxu0 0.0
      %2026 = vmatpush.msra.mxu0 0.0
      %2027 = vmatpush.msra.mxu0 0.0
      %2028 = vmatpush.msra.mxu0 0.0
      %2029 = vmatpush.msra.mxu0 0.0
      %2030 = vmatpush.msra.mxu0 0.0
      %2031 = vmatpush.msra.mxu0 0.0
      %2032 = vmatpush.msra.mxu0 %v1985
      %2033 = vmatpush.msra.mxu0 %v1984
      %2034 = vmatmul.f32.gmra.mxu0 %v2016
      %v2035 = vpop.f32.mrf.mxu0
      %v2036 = vadd.f32 %v2013, %v2035
      %2037 = vdwg.mxu0
      %2038 = vrot.lane.b32.xlu0 %v1984, 126
      %v2039 = vpop.permute.xlu0 %2038
      %2040 = vrot.lane.b32.xlu0 %v1985, 126
      %v2041 = vpop.permute.xlu0 %2040
      %v2042 = vld [vmem:[%s525] sm:$0x7]
      %v2044 = vsel %vm474, %v2042, 0
      %2046 = vmatpush.msra.mxu0 0.0
      %2047 = vmatpush.msra.mxu0 0.0
      %2048 = vmatpush.msra.mxu0 0.0
      %2049 = vmatpush.msra.mxu0 0.0
      %2050 = vmatpush.msra.mxu0 0.0
      %2051 = vmatpush.msra.mxu0 0.0
      %2052 = vmatpush.msra.mxu0 0.0
      %2053 = vmatpush.msra.mxu0 0.0
      %2054 = vmatpush.msra.mxu0 0.0
      %2055 = vmatpush.msra.mxu0 0.0
      %2056 = vmatpush.msra.mxu0 0.0
      %2057 = vmatpush.msra.mxu0 0.0
      %2058 = vmatpush.msra.mxu0 0.0
      %2059 = vmatpush.msra.mxu0 0.0
      %2060 = vmatpush.msra.mxu0 %v2041
      %2061 = vmatpush.msra.mxu0 %v2039
      %2062 = vmatmul.f32.gmra.mxu0 %v2044
      %v2063 = vpop.f32.mrf.mxu0
      %v2064 = vadd.f32 0.0, %v2063
      %2065 = vdwg.mxu0
      %v2066 = vadd.f32 %v2036, %v2064
      %v2068 = vrot.slane %v2066, 1
      %v2070 = vadd.f32 %v1834, %v2068
      %v2071 = vrot.slane %v2066, 2
      %v2073 = vadd.f32 %v1838, %v2071
      %2074 = vst.msk [vmem:[%s201 + $0x5] sm:$0x1] %vm913, %v2073
      %s2075 = sadd.s32 %s314, 7
      %p2076 = scmp.ge.s32.totalorder %s2075, 0
      %p2077 = scmp.lt.s32.totalorder %s2075, 40
      %p2078 = pnand %p2076, %p2077
      %p2079 = pneg %p2078
      %v2080 = vld [vmem:[%s253 + $0x18] sm:$0xff]
      %v2081 = vld [vmem:[%s253 + $0x20] sm:$0x1]
      %v2082 = vld [vmem:[%s1] sm:$0xff]
      %v2083 = vld [vmem:[%s1 + $0x8] sm:$0xff]
      %2084 = vrot.lane.b32.xlu0 %v2080, 127
      %v2085 = vpop.permute.xlu0 %2084
      %2086 = vrot.lane.b32.xlu0 %v2081, 127
      %v2087 = vpop.permute.xlu0 %2086
      %v2088 = vld [vmem:[%s333] sm:$0xff]
      %v2089 = vld [vmem:[%s333 + $0x8] sm:$0xff]
      %v2091 = vsel %vm336, %v2088, 0
      %v2094 = vsel %vm336, %v2089, 0
      %v2097 = vsel %vm343, %v2087, 0
      %2099 = vmatpush.msra.mxu0 0.0
      %2100 = vmatpush.msra.mxu0 0.0
      %2101 = vmatpush.msra.mxu0 0.0
      %2102 = vmatpush.msra.mxu0 0.0
      %2103 = vmatpush.msra.mxu0 0.0
      %2104 = vmatpush.msra.mxu0 0.0
      %2105 = vmatpush.msra.mxu0 0.0
      %2106 = vmatpush.msra.mxu0 0.0
      %2107 = vmatpush.msra.mxu0 0.0
      %2108 = vmatpush.msra.mxu0 0.0
      %2109 = vmatpush.msra.mxu0 0.0
      %2110 = vmatpush.msra.mxu0 0.0
      %2111 = vmatpush.msra.mxu0 0.0
      %2112 = vmatpush.msra.mxu0 0.0
      %2113 = vmatpush.msra.mxu0 %v2097
      %2114 = vmatpush.msra.mxu0 %v2085
      %2115 = vmatmul.f32.gmra.mxu0 %v2091
      %v2116 = vpop.f32.mrf.mxu0
      %v2117 = vadd.f32 0.0, %v2116
      %2118 = vmatmul.f32.gmra.mxu0 %v2094
      %v2119 = vpop.f32.mrf.mxu0
      %v2120 = vadd.f32 0.0, %v2119
      %2121 = vdwg.mxu0
      %v2123 = vsel %vm336, %v2082, 0
      %v2126 = vsel %vm336, %v2083, 0
      %v2129 = vsel %vm343, %v2081, 0
      %2131 = vmatpush.msra.mxu0 0.0
      %2132 = vmatpush.msra.mxu0 0.0
      %2133 = vmatpush.msra.mxu0 0.0
      %2134 = vmatpush.msra.mxu0 0.0
      %2135 = vmatpush.msra.mxu0 0.0
      %2136 = vmatpush.msra.mxu0 0.0
      %2137 = vmatpush.msra.mxu0 0.0
      %2138 = vmatpush.msra.mxu0 0.0
      %2139 = vmatpush.msra.mxu0 0.0
      %2140 = vmatpush.msra.mxu0 0.0
      %2141 = vmatpush.msra.mxu0 0.0
      %2142 = vmatpush.msra.mxu0 0.0
      %2143 = vmatpush.msra.mxu0 0.0
      %2144 = vmatpush.msra.mxu0 0.0
      %2145 = vmatpush.msra.mxu0 %v2129
      %2146 = vmatpush.msra.mxu0 %v2080
      %2147 = vmatmul.f32.gmra.mxu0 %v2123
      %v2148 = vpop.f32.mrf.mxu0
      %v2149 = vadd.f32 %v2117, %v2148
      %2150 = vmatmul.f32.gmra.mxu0 %v2126
      %v2151 = vpop.f32.mrf.mxu0
      %v2152 = vadd.f32 %v2120, %v2151
      %2153 = vdwg.mxu0
      %2154 = vrot.lane.b32.xlu0 %v2080, 126
      %v2155 = vpop.permute.xlu0 %2154
      %2156 = vrot.lane.b32.xlu0 %v2081, 126
      %v2157 = vpop.permute.xlu0 %2156
      %v2158 = vld [vmem:[%s406] sm:$0xff]
      %v2159 = vld [vmem:[%s406 + $0x8] sm:$0xff]
      %v2161 = vsel %vm336, %v2158, 0
      %v2164 = vsel %vm336, %v2159, 0
      %v2167 = vsel %vm343, %v2157, 0
      %2169 = vmatpush.msra.mxu0 0.0
      %2170 = vmatpush.msra.mxu0 0.0
      %2171 = vmatpush.msra.mxu0 0.0
      %2172 = vmatpush.msra.mxu0 0.0
      %2173 = vmatpush.msra.mxu0 0.0
      %2174 = vmatpush.msra.mxu0 0.0
      %2175 = vmatpush.msra.mxu0 0.0
      %2176 = vmatpush.msra.mxu0 0.0
      %2177 = vmatpush.msra.mxu0 0.0
      %2178 = vmatpush.msra.mxu0 0.0
      %2179 = vmatpush.msra.mxu0 0.0
      %2180 = vmatpush.msra.mxu0 0.0
      %2181 = vmatpush.msra.mxu0 0.0
      %2182 = vmatpush.msra.mxu0 0.0
      %2183 = vmatpush.msra.mxu0 %v2167
      %2184 = vmatpush.msra.mxu0 %v2155
      %2185 = vmatmul.f32.gmra.mxu0 %v2161
      %v2186 = vpop.f32.mrf.mxu0
      %v2187 = vadd.f32 0.0, %v2186
      %2188 = vmatmul.f32.gmra.mxu0 %v2164
      %v2189 = vpop.f32.mrf.mxu0
      %v2190 = vadd.f32 0.0, %v2189
      %2191 = vdwg.mxu0
      %v2192 = vadd.f32 %v2149, %v2187
      %v2193 = vadd.f32 %v2152, %v2190
      %v2194 = vld [vmem:[%s3] sm:$0xff]
      %v2195 = vld [vmem:[%s3 + $0x8] sm:$0xff]
      %2197 = vset.pattern.permute.xlu0 0
      %2198 = vperm.xlu0 %2197, %v2194
      %v2199 = vpop.permute.xlu0 %2198
      %2202 = vset.pattern.permute.xlu0 0
      %2203 = vperm.xlu0 %2202, %v2195
      %v2204 = vpop.permute.xlu0 %2203
      %v2206 = vadd.f32 %v2192, %v2199
      %v2207 = vadd.f32 %v2193, %v2204
      %v2208 = vmax.f32 %v2206, 0.0
      %v2209 = vmax.f32 %v2207, 0.0
      %s2210 = scalar_select %p2079, 1, 0
      %v2211 = vstv %s2210
      %vm2212 = vcmp.eq.s32.totalorder %v2211, 1
      %vm2213 = vmand %vm2212, %vm319
      %v2214 = vsel %vm2213, 1, 0
      %vm2215 = vcmp.eq.s32.totalorder %v2214, 1
      %v2216 = vsel %vm2215, %v2208, 0.0
      %v2217 = vsel %vm2215, %v2209, 0.0
      %v2218 = vld [vmem:[%s2] sm:$0x7]
      %2219 = vrot.lane.b32.xlu0 %v2216, 127
      %v2220 = vpop.permute.xlu0 %2219
      %2221 = vrot.lane.b32.xlu0 %v2217, 127
      %v2222 = vpop.permute.xlu0 %2221
      %v2223 = vld [vmem:[%s472] sm:$0x7]
      %v2225 = vsel %vm474, %v2223, 0
      %2227 = vmatpush.msra.mxu0 0.0
      %2228 = vmatpush.msra.mxu0 0.0
      %2229 = vmatpush.msra.mxu0 0.0
      %2230 = vmatpush.msra.mxu0 0.0
      %2231 = vmatpush.msra.mxu0 0.0
      %2232 = vmatpush.msra.mxu0 0.0
      %2233 = vmatpush.msra.mxu0 0.0
      %2234 = vmatpush.msra.mxu0 0.0
      %2235 = vmatpush.msra.mxu0 0.0
      %2236 = vmatpush.msra.mxu0 0.0
      %2237 = vmatpush.msra.mxu0 0.0
      %2238 = vmatpush.msra.mxu0 0.0
      %2239 = vmatpush.msra.mxu0 0.0
      %2240 = vmatpush.msra.mxu0 0.0
      %2241 = vmatpush.msra.mxu0 %v2222
      %2242 = vmatpush.msra.mxu0 %v2220
      %2243 = vmatmul.f32.gmra.mxu0 %v2225
      %v2244 = vpop.f32.mrf.mxu0
      %v2245 = vadd.f32 0.0, %v2244
      %2246 = vdwg.mxu0
      %v2248 = vsel %vm474, %v2218, 0
      %2250 = vmatpush.msra.mxu0 0.0
      %2251 = vmatpush.msra.mxu0 0.0
      %2252 = vmatpush.msra.mxu0 0.0
      %2253 = vmatpush.msra.mxu0 0.0
      %2254 = vmatpush.msra.mxu0 0.0
      %2255 = vmatpush.msra.mxu0 0.0
      %2256 = vmatpush.msra.mxu0 0.0
      %2257 = vmatpush.msra.mxu0 0.0
      %2258 = vmatpush.msra.mxu0 0.0
      %2259 = vmatpush.msra.mxu0 0.0
      %2260 = vmatpush.msra.mxu0 0.0
      %2261 = vmatpush.msra.mxu0 0.0
      %2262 = vmatpush.msra.mxu0 0.0
      %2263 = vmatpush.msra.mxu0 0.0
      %2264 = vmatpush.msra.mxu0 %v2217
      %2265 = vmatpush.msra.mxu0 %v2216
      %2266 = vmatmul.f32.gmra.mxu0 %v2248
      %v2267 = vpop.f32.mrf.mxu0
      %v2268 = vadd.f32 %v2245, %v2267
      %2269 = vdwg.mxu0
      %2270 = vrot.lane.b32.xlu0 %v2216, 126
      %v2271 = vpop.permute.xlu0 %2270
      %2272 = vrot.lane.b32.xlu0 %v2217, 126
      %v2273 = vpop.permute.xlu0 %2272
      %v2274 = vld [vmem:[%s525] sm:$0x7]
      %v2276 = vsel %vm474, %v2274, 0
      %2278 = vmatpush.msra.mxu0 0.0
      %2279 = vmatpush.msra.mxu0 0.0
      %2280 = vmatpush.msra.mxu0 0.0
      %2281 = vmatpush.msra.mxu0 0.0
      %2282 = vmatpush.msra.mxu0 0.0
      %2283 = vmatpush.msra.mxu0 0.0
      %2284 = vmatpush.msra.mxu0 0.0
      %2285 = vmatpush.msra.mxu0 0.0
      %2286 = vmatpush.msra.mxu0 0.0
      %2287 = vmatpush.msra.mxu0 0.0
      %2288 = vmatpush.msra.mxu0 0.0
      %2289 = vmatpush.msra.mxu0 0.0
      %2290 = vmatpush.msra.mxu0 0.0
      %2291 = vmatpush.msra.mxu0 0.0
      %2292 = vmatpush.msra.mxu0 %v2273
      %2293 = vmatpush.msra.mxu0 %v2271
      %2294 = vmatmul.f32.gmra.mxu0 %v2276
      %v2295 = vpop.f32.mrf.mxu0
      %v2296 = vadd.f32 0.0, %v2295
      %2297 = vdwg.mxu0
      %v2298 = vadd.f32 %v2268, %v2296
      %v2300 = vrot.slane %v2298, 1
      %v2302 = vadd.f32 %v2066, %v2300
      %v2303 = vrot.slane %v2298, 2
      %v2305 = vadd.f32 %v2070, %v2303
      %2306 = vst.msk [vmem:[%s201 + $0x6] sm:$0x1] %vm913, %v2305
      %s2307 = sadd.s32 %s314, 8
      %p2308 = scmp.ge.s32.totalorder %s2307, 0
      %p2309 = scmp.lt.s32.totalorder %s2307, 40
      %p2310 = pnand %p2308, %p2309
      %p2311 = pneg %p2310
      %v2312 = vld [vmem:[%s253 + $0x1b] sm:$0xff]
      %v2313 = vld [vmem:[%s253 + $0x23] sm:$0x1]
      %v2314 = vld [vmem:[%s1] sm:$0xff]
      %v2315 = vld [vmem:[%s1 + $0x8] sm:$0xff]
      %2316 = vrot.lane.b32.xlu0 %v2312, 127
      %v2317 = vpop.permute.xlu0 %2316
      %2318 = vrot.lane.b32.xlu0 %v2313, 127
      %v2319 = vpop.permute.xlu0 %2318
      %v2320 = vld [vmem:[%s333] sm:$0xff]
      %v2321 = vld [vmem:[%s333 + $0x8] sm:$0xff]
      %v2323 = vsel %vm336, %v2320, 0
      %v2326 = vsel %vm336, %v2321, 0
      %v2329 = vsel %vm343, %v2319, 0
      %2331 = vmatpush.msra.mxu0 0.0
      %2332 = vmatpush.msra.mxu0 0.0
      %2333 = vmatpush.msra.mxu0 0.0
      %2334 = vmatpush.msra.mxu0 0.0
      %2335 = vmatpush.msra.mxu0 0.0
      %2336 = vmatpush.msra.mxu0 0.0
      %2337 = vmatpush.msra.mxu0 0.0
      %2338 = vmatpush.msra.mxu0 0.0
      %2339 = vmatpush.msra.mxu0 0.0
      %2340 = vmatpush.msra.mxu0 0.0
      %2341 = vmatpush.msra.mxu0 0.0
      %2342 = vmatpush.msra.mxu0 0.0
      %2343 = vmatpush.msra.mxu0 0.0
      %2344 = vmatpush.msra.mxu0 0.0
      %2345 = vmatpush.msra.mxu0 %v2329
      %2346 = vmatpush.msra.mxu0 %v2317
      %2347 = vmatmul.f32.gmra.mxu0 %v2323
      %v2348 = vpop.f32.mrf.mxu0
      %v2349 = vadd.f32 0.0, %v2348
      %2350 = vmatmul.f32.gmra.mxu0 %v2326
      %v2351 = vpop.f32.mrf.mxu0
      %v2352 = vadd.f32 0.0, %v2351
      %2353 = vdwg.mxu0
      %v2355 = vsel %vm336, %v2314, 0
      %v2358 = vsel %vm336, %v2315, 0
      %v2361 = vsel %vm343, %v2313, 0
      %2363 = vmatpush.msra.mxu0 0.0
      %2364 = vmatpush.msra.mxu0 0.0
      %2365 = vmatpush.msra.mxu0 0.0
      %2366 = vmatpush.msra.mxu0 0.0
      %2367 = vmatpush.msra.mxu0 0.0
      %2368 = vmatpush.msra.mxu0 0.0
      %2369 = vmatpush.msra.mxu0 0.0
      %2370 = vmatpush.msra.mxu0 0.0
      %2371 = vmatpush.msra.mxu0 0.0
      %2372 = vmatpush.msra.mxu0 0.0
      %2373 = vmatpush.msra.mxu0 0.0
      %2374 = vmatpush.msra.mxu0 0.0
      %2375 = vmatpush.msra.mxu0 0.0
      %2376 = vmatpush.msra.mxu0 0.0
      %2377 = vmatpush.msra.mxu0 %v2361
      %2378 = vmatpush.msra.mxu0 %v2312
      %2379 = vmatmul.f32.gmra.mxu0 %v2355
      %v2380 = vpop.f32.mrf.mxu0
      %v2381 = vadd.f32 %v2349, %v2380
      %2382 = vmatmul.f32.gmra.mxu0 %v2358
      %v2383 = vpop.f32.mrf.mxu0
      %v2384 = vadd.f32 %v2352, %v2383
      %2385 = vdwg.mxu0
      %2386 = vrot.lane.b32.xlu0 %v2312, 126
      %v2387 = vpop.permute.xlu0 %2386
      %2388 = vrot.lane.b32.xlu0 %v2313, 126
      %v2389 = vpop.permute.xlu0 %2388
      %v2390 = vld [vmem:[%s406] sm:$0xff]
      %v2391 = vld [vmem:[%s406 + $0x8] sm:$0xff]
      %v2393 = vsel %vm336, %v2390, 0
      %v2396 = vsel %vm336, %v2391, 0
      %v2399 = vsel %vm343, %v2389, 0
      %2401 = vmatpush.msra.mxu0 0.0
      %2402 = vmatpush.msra.mxu0 0.0
      %2403 = vmatpush.msra.mxu0 0.0
      %2404 = vmatpush.msra.mxu0 0.0
      %2405 = vmatpush.msra.mxu0 0.0
      %2406 = vmatpush.msra.mxu0 0.0
      %2407 = vmatpush.msra.mxu0 0.0
      %2408 = vmatpush.msra.mxu0 0.0
      %2409 = vmatpush.msra.mxu0 0.0
      %2410 = vmatpush.msra.mxu0 0.0
      %2411 = vmatpush.msra.mxu0 0.0
      %2412 = vmatpush.msra.mxu0 0.0
      %2413 = vmatpush.msra.mxu0 0.0
      %2414 = vmatpush.msra.mxu0 0.0
      %2415 = vmatpush.msra.mxu0 %v2399
      %2416 = vmatpush.msra.mxu0 %v2387
      %2417 = vmatmul.f32.gmra.mxu0 %v2393
      %v2418 = vpop.f32.mrf.mxu0
      %v2419 = vadd.f32 0.0, %v2418
      %2420 = vmatmul.f32.gmra.mxu0 %v2396
      %v2421 = vpop.f32.mrf.mxu0
      %v2422 = vadd.f32 0.0, %v2421
      %2423 = vdwg.mxu0
      %v2424 = vadd.f32 %v2381, %v2419
      %v2425 = vadd.f32 %v2384, %v2422
      %v2426 = vld [vmem:[%s3] sm:$0xff]
      %v2427 = vld [vmem:[%s3 + $0x8] sm:$0xff]
      %2429 = vset.pattern.permute.xlu0 0
      %2430 = vperm.xlu0 %2429, %v2426
      %v2431 = vpop.permute.xlu0 %2430
      %2434 = vset.pattern.permute.xlu0 0
      %2435 = vperm.xlu0 %2434, %v2427
      %v2436 = vpop.permute.xlu0 %2435
      %v2438 = vadd.f32 %v2424, %v2431
      %v2439 = vadd.f32 %v2425, %v2436
      %v2440 = vmax.f32 %v2438, 0.0
      %v2441 = vmax.f32 %v2439, 0.0
      %s2442 = scalar_select %p2311, 1, 0
      %v2443 = vstv %s2442
      %vm2444 = vcmp.eq.s32.totalorder %v2443, 1
      %vm2445 = vmand %vm2444, %vm319
      %v2446 = vsel %vm2445, 1, 0
      %vm2447 = vcmp.eq.s32.totalorder %v2446, 1
      %v2448 = vsel %vm2447, %v2440, 0.0
      %v2449 = vsel %vm2447, %v2441, 0.0
      %v2450 = vld [vmem:[%s2] sm:$0x7]
      %2451 = vrot.lane.b32.xlu0 %v2448, 127
      %v2452 = vpop.permute.xlu0 %2451
      %2453 = vrot.lane.b32.xlu0 %v2449, 127
      %v2454 = vpop.permute.xlu0 %2453
      %v2455 = vld [vmem:[%s472] sm:$0x7]
      %v2457 = vsel %vm474, %v2455, 0
      %2459 = vmatpush.msra.mxu0 0.0
      %2460 = vmatpush.msra.mxu0 0.0
      %2461 = vmatpush.msra.mxu0 0.0
      %2462 = vmatpush.msra.mxu0 0.0
      %2463 = vmatpush.msra.mxu0 0.0
      %2464 = vmatpush.msra.mxu0 0.0
      %2465 = vmatpush.msra.mxu0 0.0
      %2466 = vmatpush.msra.mxu0 0.0
      %2467 = vmatpush.msra.mxu0 0.0
      %2468 = vmatpush.msra.mxu0 0.0
      %2469 = vmatpush.msra.mxu0 0.0
      %2470 = vmatpush.msra.mxu0 0.0
      %2471 = vmatpush.msra.mxu0 0.0
      %2472 = vmatpush.msra.mxu0 0.0
      %2473 = vmatpush.msra.mxu0 %v2454
      %2474 = vmatpush.msra.mxu0 %v2452
      %2475 = vmatmul.f32.gmra.mxu0 %v2457
      %v2476 = vpop.f32.mrf.mxu0
      %v2477 = vadd.f32 0.0, %v2476
      %2478 = vdwg.mxu0
      %v2480 = vsel %vm474, %v2450, 0
      %2482 = vmatpush.msra.mxu0 0.0
      %2483 = vmatpush.msra.mxu0 0.0
      %2484 = vmatpush.msra.mxu0 0.0
      %2485 = vmatpush.msra.mxu0 0.0
      %2486 = vmatpush.msra.mxu0 0.0
      %2487 = vmatpush.msra.mxu0 0.0
      %2488 = vmatpush.msra.mxu0 0.0
      %2489 = vmatpush.msra.mxu0 0.0
      %2490 = vmatpush.msra.mxu0 0.0
      %2491 = vmatpush.msra.mxu0 0.0
      %2492 = vmatpush.msra.mxu0 0.0
      %2493 = vmatpush.msra.mxu0 0.0
      %2494 = vmatpush.msra.mxu0 0.0
      %2495 = vmatpush.msra.mxu0 0.0
      %2496 = vmatpush.msra.mxu0 %v2449
      %2497 = vmatpush.msra.mxu0 %v2448
      %2498 = vmatmul.f32.gmra.mxu0 %v2480
      %v2499 = vpop.f32.mrf.mxu0
      %v2500 = vadd.f32 %v2477, %v2499
      %2501 = vdwg.mxu0
      %2502 = vrot.lane.b32.xlu0 %v2448, 126
      %v2503 = vpop.permute.xlu0 %2502
      %2504 = vrot.lane.b32.xlu0 %v2449, 126
      %v2505 = vpop.permute.xlu0 %2504
      %v2506 = vld [vmem:[%s525] sm:$0x7]
      %v2508 = vsel %vm474, %v2506, 0
      %2510 = vmatpush.msra.mxu0 0.0
      %2511 = vmatpush.msra.mxu0 0.0
      %2512 = vmatpush.msra.mxu0 0.0
      %2513 = vmatpush.msra.mxu0 0.0
      %2514 = vmatpush.msra.mxu0 0.0
      %2515 = vmatpush.msra.mxu0 0.0
      %2516 = vmatpush.msra.mxu0 0.0
      %2517 = vmatpush.msra.mxu0 0.0
      %2518 = vmatpush.msra.mxu0 0.0
      %2519 = vmatpush.msra.mxu0 0.0
      %2520 = vmatpush.msra.mxu0 0.0
      %2521 = vmatpush.msra.mxu0 0.0
      %2522 = vmatpush.msra.mxu0 0.0
      %2523 = vmatpush.msra.mxu0 0.0
      %2524 = vmatpush.msra.mxu0 %v2505
      %2525 = vmatpush.msra.mxu0 %v2503
      %2526 = vmatmul.f32.gmra.mxu0 %v2508
      %v2527 = vpop.f32.mrf.mxu0
      %v2528 = vadd.f32 0.0, %v2527
      %2529 = vdwg.mxu0
      %v2530 = vadd.f32 %v2500, %v2528
      %v2532 = vrot.slane %v2530, 1
      %v2534 = vadd.f32 %v2298, %v2532
      %v2535 = vrot.slane %v2530, 2
      %v2537 = vadd.f32 %v2302, %v2535
      %2538 = vst.msk [vmem:[%s201 + $0x7] sm:$0x1] %vm913, %v2537
      %s2539 = sadd.s32 %s314, 9
      %p2540 = scmp.ge.s32.totalorder %s2539, 0
      %p2541 = scmp.lt.s32.totalorder %s2539, 40
      %p2542 = pnand %p2540, %p2541
      %p2543 = pneg %p2542
      %v2544 = vld [vmem:[%s253 + $0x1e] sm:$0xff]
      %v2545 = vld [vmem:[%s253 + $0x26] sm:$0x1]
      %v2546 = vld [vmem:[%s1] sm:$0xff]
      %v2547 = vld [vmem:[%s1 + $0x8] sm:$0xff]
      %2548 = vrot.lane.b32.xlu0 %v2544, 127
      %v2549 = vpop.permute.xlu0 %2548
      %2550 = vrot.lane.b32.xlu0 %v2545, 127
      %v2551 = vpop.permute.xlu0 %2550
      %v2552 = vld [vmem:[%s333] sm:$0xff]
      %v2553 = vld [vmem:[%s333 + $0x8] sm:$0xff]
      %v2555 = vsel %vm336, %v2552, 0
      %v2558 = vsel %vm336, %v2553, 0
      %v2561 = vsel %vm343, %v2551, 0
      %2563 = vmatpush.msra.mxu0 0.0
      %2564 = vmatpush.msra.mxu0 0.0
      %2565 = vmatpush.msra.mxu0 0.0
      %2566 = vmatpush.msra.mxu0 0.0
      %2567 = vmatpush.msra.mxu0 0.0
      %2568 = vmatpush.msra.mxu0 0.0
      %2569 = vmatpush.msra.mxu0 0.0
      %2570 = vmatpush.msra.mxu0 0.0
      %2571 = vmatpush.msra.mxu0 0.0
      %2572 = vmatpush.msra.mxu0 0.0
      %2573 = vmatpush.msra.mxu0 0.0
      %2574 = vmatpush.msra.mxu0 0.0
      %2575 = vmatpush.msra.mxu0 0.0
      %2576 = vmatpush.msra.mxu0 0.0
      %2577 = vmatpush.msra.mxu0 %v2561
      %2578 = vmatpush.msra.mxu0 %v2549
      %2579 = vmatmul.f32.gmra.mxu0 %v2555
      %v2580 = vpop.f32.mrf.mxu0
      %v2581 = vadd.f32 0.0, %v2580
      %2582 = vmatmul.f32.gmra.mxu0 %v2558
      %v2583 = vpop.f32.mrf.mxu0
      %v2584 = vadd.f32 0.0, %v2583
      %2585 = vdwg.mxu0
      %v2587 = vsel %vm336, %v2546, 0
      %v2590 = vsel %vm336, %v2547, 0
      %v2593 = vsel %vm343, %v2545, 0
      %2595 = vmatpush.msra.mxu0 0.0
      %2596 = vmatpush.msra.mxu0 0.0
      %2597 = vmatpush.msra.mxu0 0.0
      %2598 = vmatpush.msra.mxu0 0.0
      %2599 = vmatpush.msra.mxu0 0.0
      %2600 = vmatpush.msra.mxu0 0.0
      %2601 = vmatpush.msra.mxu0 0.0
      %2602 = vmatpush.msra.mxu0 0.0
      %2603 = vmatpush.msra.mxu0 0.0
      %2604 = vmatpush.msra.mxu0 0.0
      %2605 = vmatpush.msra.mxu0 0.0
      %2606 = vmatpush.msra.mxu0 0.0
      %2607 = vmatpush.msra.mxu0 0.0
      %2608 = vmatpush.msra.mxu0 0.0
      %2609 = vmatpush.msra.mxu0 %v2593
      %2610 = vmatpush.msra.mxu0 %v2544
      %2611 = vmatmul.f32.gmra.mxu0 %v2587
      %v2612 = vpop.f32.mrf.mxu0
      %v2613 = vadd.f32 %v2581, %v2612
      %2614 = vmatmul.f32.gmra.mxu0 %v2590
      %v2615 = vpop.f32.mrf.mxu0
      %v2616 = vadd.f32 %v2584, %v2615
      %2617 = vdwg.mxu0
      %2618 = vrot.lane.b32.xlu0 %v2544, 126
      %v2619 = vpop.permute.xlu0 %2618
      %2620 = vrot.lane.b32.xlu0 %v2545, 126
      %v2621 = vpop.permute.xlu0 %2620
      %v2622 = vld [vmem:[%s406] sm:$0xff]
      %v2623 = vld [vmem:[%s406 + $0x8] sm:$0xff]
      %v2625 = vsel %vm336, %v2622, 0
      %v2628 = vsel %vm336, %v2623, 0
      %v2631 = vsel %vm343, %v2621, 0
      %2633 = vmatpush.msra.mxu0 0.0
      %2634 = vmatpush.msra.mxu0 0.0
      %2635 = vmatpush.msra.mxu0 0.0
      %2636 = vmatpush.msra.mxu0 0.0
      %2637 = vmatpush.msra.mxu0 0.0
      %2638 = vmatpush.msra.mxu0 0.0
      %2639 = vmatpush.msra.mxu0 0.0
      %2640 = vmatpush.msra.mxu0 0.0
      %2641 = vmatpush.msra.mxu0 0.0
      %2642 = vmatpush.msra.mxu0 0.0
      %2643 = vmatpush.msra.mxu0 0.0
      %2644 = vmatpush.msra.mxu0 0.0
      %2645 = vmatpush.msra.mxu0 0.0
      %2646 = vmatpush.msra.mxu0 0.0
      %2647 = vmatpush.msra.mxu0 %v2631
      %2648 = vmatpush.msra.mxu0 %v2619
      %2649 = vmatmul.f32.gmra.mxu0 %v2625
      %v2650 = vpop.f32.mrf.mxu0
      %v2651 = vadd.f32 0.0, %v2650
      %2652 = vmatmul.f32.gmra.mxu0 %v2628
      %v2653 = vpop.f32.mrf.mxu0
      %v2654 = vadd.f32 0.0, %v2653
      %2655 = vdwg.mxu0
      %v2656 = vadd.f32 %v2613, %v2651
      %v2657 = vadd.f32 %v2616, %v2654
      %v2658 = vld [vmem:[%s3] sm:$0xff]
      %v2659 = vld [vmem:[%s3 + $0x8] sm:$0xff]
      %2661 = vset.pattern.permute.xlu0 0
      %2662 = vperm.xlu0 %2661, %v2658
      %v2663 = vpop.permute.xlu0 %2662
      %2666 = vset.pattern.permute.xlu0 0
      %2667 = vperm.xlu0 %2666, %v2659
      %v2668 = vpop.permute.xlu0 %2667
      %v2670 = vadd.f32 %v2656, %v2663
      %v2671 = vadd.f32 %v2657, %v2668
      %v2672 = vmax.f32 %v2670, 0.0
      %v2673 = vmax.f32 %v2671, 0.0
      %s2674 = scalar_select %p2543, 1, 0
      %v2675 = vstv %s2674
      %vm2676 = vcmp.eq.s32.totalorder %v2675, 1
      %vm2677 = vmand %vm2676, %vm319
      %v2678 = vsel %vm2677, 1, 0
      %vm2679 = vcmp.eq.s32.totalorder %v2678, 1
      %v2680 = vsel %vm2679, %v2672, 0.0
      %v2681 = vsel %vm2679, %v2673, 0.0
      %v2682 = vld [vmem:[%s2] sm:$0x7]
      %2683 = vrot.lane.b32.xlu0 %v2680, 127
      %v2684 = vpop.permute.xlu0 %2683
      %2685 = vrot.lane.b32.xlu0 %v2681, 127
      %v2686 = vpop.permute.xlu0 %2685
      %v2687 = vld [vmem:[%s472] sm:$0x7]
      %v2689 = vsel %vm474, %v2687, 0
      %2691 = vmatpush.msra.mxu0 0.0
      %2692 = vmatpush.msra.mxu0 0.0
      %2693 = vmatpush.msra.mxu0 0.0
      %2694 = vmatpush.msra.mxu0 0.0
      %2695 = vmatpush.msra.mxu0 0.0
      %2696 = vmatpush.msra.mxu0 0.0
      %2697 = vmatpush.msra.mxu0 0.0
      %2698 = vmatpush.msra.mxu0 0.0
      %2699 = vmatpush.msra.mxu0 0.0
      %2700 = vmatpush.msra.mxu0 0.0
      %2701 = vmatpush.msra.mxu0 0.0
      %2702 = vmatpush.msra.mxu0 0.0
      %2703 = vmatpush.msra.mxu0 0.0
      %2704 = vmatpush.msra.mxu0 0.0
      %2705 = vmatpush.msra.mxu0 %v2686
      %2706 = vmatpush.msra.mxu0 %v2684
      %2707 = vmatmul.f32.gmra.mxu0 %v2689
      %v2708 = vpop.f32.mrf.mxu0
      %v2709 = vadd.f32 0.0, %v2708
      %2710 = vdwg.mxu0
      %v2712 = vsel %vm474, %v2682, 0
      %2714 = vmatpush.msra.mxu0 0.0
      %2715 = vmatpush.msra.mxu0 0.0
      %2716 = vmatpush.msra.mxu0 0.0
      %2717 = vmatpush.msra.mxu0 0.0
      %2718 = vmatpush.msra.mxu0 0.0
      %2719 = vmatpush.msra.mxu0 0.0
      %2720 = vmatpush.msra.mxu0 0.0
      %2721 = vmatpush.msra.mxu0 0.0
      %2722 = vmatpush.msra.mxu0 0.0
      %2723 = vmatpush.msra.mxu0 0.0
      %2724 = vmatpush.msra.mxu0 0.0
      %2725 = vmatpush.msra.mxu0 0.0
      %2726 = vmatpush.msra.mxu0 0.0
      %2727 = vmatpush.msra.mxu0 0.0
      %2728 = vmatpush.msra.mxu0 %v2681
      %2729 = vmatpush.msra.mxu0 %v2680
      %2730 = vmatmul.f32.gmra.mxu0 %v2712
      %v2731 = vpop.f32.mrf.mxu0
      %v2732 = vadd.f32 %v2709, %v2731
      %2733 = vdwg.mxu0
      %2734 = vrot.lane.b32.xlu0 %v2680, 126
      %v2735 = vpop.permute.xlu0 %2734
      %2736 = vrot.lane.b32.xlu0 %v2681, 126
      %v2737 = vpop.permute.xlu0 %2736
      %v2738 = vld [vmem:[%s525] sm:$0x7]
      %v2740 = vsel %vm474, %v2738, 0
      %2742 = vmatpush.msra.mxu0 0.0
      %2743 = vmatpush.msra.mxu0 0.0
      %2744 = vmatpush.msra.mxu0 0.0
      %2745 = vmatpush.msra.mxu0 0.0
      %2746 = vmatpush.msra.mxu0 0.0
      %2747 = vmatpush.msra.mxu0 0.0
      %2748 = vmatpush.msra.mxu0 0.0
      %2749 = vmatpush.msra.mxu0 0.0
      %2750 = vmatpush.msra.mxu0 0.0
      %2751 = vmatpush.msra.mxu0 0.0
      %2752 = vmatpush.msra.mxu0 0.0
      %2753 = vmatpush.msra.mxu0 0.0
      %2754 = vmatpush.msra.mxu0 0.0
      %2755 = vmatpush.msra.mxu0 0.0
      %2756 = vmatpush.msra.mxu0 %v2737
      %2757 = vmatpush.msra.mxu0 %v2735
      %2758 = vmatmul.f32.gmra.mxu0 %v2740
      %v2759 = vpop.f32.mrf.mxu0
      %v2760 = vadd.f32 0.0, %v2759
      %2761 = vdwg.mxu0
      %v2762 = vadd.f32 %v2732, %v2760
      %v2764 = vrot.slane %v2762, 1
      %v2766 = vadd.f32 %v2530, %v2764
      %v2767 = vrot.slane %v2762, 2
      %v2769 = vadd.f32 %v2534, %v2767
      %2770 = vst.msk [vmem:[%s201 + $0x8] sm:$0x1] %vm913, %v2769
      %s2771 = sadd.s32 %s314, 10
      %p2772 = scmp.ge.s32.totalorder %s2771, 0
      %p2773 = scmp.lt.s32.totalorder %s2771, 40
      %p2774 = pnand %p2772, %p2773
      %p2775 = pneg %p2774
      %v2776 = vld [vmem:[%s253 + $0x21] sm:$0xff]
      %v2777 = vld [vmem:[%s253 + $0x29] sm:$0x1]
      %v2778 = vld [vmem:[%s1] sm:$0xff]
      %v2779 = vld [vmem:[%s1 + $0x8] sm:$0xff]
      %2780 = vrot.lane.b32.xlu0 %v2776, 127
      %v2781 = vpop.permute.xlu0 %2780
      %2782 = vrot.lane.b32.xlu0 %v2777, 127
      %v2783 = vpop.permute.xlu0 %2782
      %v2784 = vld [vmem:[%s333] sm:$0xff]
      %v2785 = vld [vmem:[%s333 + $0x8] sm:$0xff]
      %v2787 = vsel %vm336, %v2784, 0
      %v2790 = vsel %vm336, %v2785, 0
      %v2793 = vsel %vm343, %v2783, 0
      %2795 = vmatpush.msra.mxu0 0.0
      %2796 = vmatpush.msra.mxu0 0.0
      %2797 = vmatpush.msra.mxu0 0.0
      %2798 = vmatpush.msra.mxu0 0.0
      %2799 = vmatpush.msra.mxu0 0.0
      %2800 = vmatpush.msra.mxu0 0.0
      %2801 = vmatpush.msra.mxu0 0.0
      %2802 = vmatpush.msra.mxu0 0.0
      %2803 = vmatpush.msra.mxu0 0.0
      %2804 = vmatpush.msra.mxu0 0.0
      %2805 = vmatpush.msra.mxu0 0.0
      %2806 = vmatpush.msra.mxu0 0.0
      %2807 = vmatpush.msra.mxu0 0.0
      %2808 = vmatpush.msra.mxu0 0.0
      %2809 = vmatpush.msra.mxu0 %v2793
      %2810 = vmatpush.msra.mxu0 %v2781
      %2811 = vmatmul.f32.gmra.mxu0 %v2787
      %v2812 = vpop.f32.mrf.mxu0
      %v2813 = vadd.f32 0.0, %v2812
      %2814 = vmatmul.f32.gmra.mxu0 %v2790
      %v2815 = vpop.f32.mrf.mxu0
      %v2816 = vadd.f32 0.0, %v2815
      %2817 = vdwg.mxu0
      %v2819 = vsel %vm336, %v2778, 0
      %v2822 = vsel %vm336, %v2779, 0
      %v2825 = vsel %vm343, %v2777, 0
      %2827 = vmatpush.msra.mxu0 0.0
      %2828 = vmatpush.msra.mxu0 0.0
      %2829 = vmatpush.msra.mxu0 0.0
      %2830 = vmatpush.msra.mxu0 0.0
      %2831 = vmatpush.msra.mxu0 0.0
      %2832 = vmatpush.msra.mxu0 0.0
      %2833 = vmatpush.msra.mxu0 0.0
      %2834 = vmatpush.msra.mxu0 0.0
      %2835 = vmatpush.msra.mxu0 0.0
      %2836 = vmatpush.msra.mxu0 0.0
      %2837 = vmatpush.msra.mxu0 0.0
      %2838 = vmatpush.msra.mxu0 0.0
      %2839 = vmatpush.msra.mxu0 0.0
      %2840 = vmatpush.msra.mxu0 0.0
      %2841 = vmatpush.msra.mxu0 %v2825
      %2842 = vmatpush.msra.mxu0 %v2776
      %2843 = vmatmul.f32.gmra.mxu0 %v2819
      %v2844 = vpop.f32.mrf.mxu0
      %v2845 = vadd.f32 %v2813, %v2844
      %2846 = vmatmul.f32.gmra.mxu0 %v2822
      %v2847 = vpop.f32.mrf.mxu0
      %v2848 = vadd.f32 %v2816, %v2847
      %2849 = vdwg.mxu0
      %2850 = vrot.lane.b32.xlu0 %v2776, 126
      %v2851 = vpop.permute.xlu0 %2850
      %2852 = vrot.lane.b32.xlu0 %v2777, 126
      %v2853 = vpop.permute.xlu0 %2852
      %v2854 = vld [vmem:[%s406] sm:$0xff]
      %v2855 = vld [vmem:[%s406 + $0x8] sm:$0xff]
      %v2857 = vsel %vm336, %v2854, 0
      %v2860 = vsel %vm336, %v2855, 0
      %v2863 = vsel %vm343, %v2853, 0
      %2865 = vmatpush.msra.mxu0 0.0
      %2866 = vmatpush.msra.mxu0 0.0
      %2867 = vmatpush.msra.mxu0 0.0
      %2868 = vmatpush.msra.mxu0 0.0
      %2869 = vmatpush.msra.mxu0 0.0
      %2870 = vmatpush.msra.mxu0 0.0
      %2871 = vmatpush.msra.mxu0 0.0
      %2872 = vmatpush.msra.mxu0 0.0
      %2873 = vmatpush.msra.mxu0 0.0
      %2874 = vmatpush.msra.mxu0 0.0
      %2875 = vmatpush.msra.mxu0 0.0
      %2876 = vmatpush.msra.mxu0 0.0
      %2877 = vmatpush.msra.mxu0 0.0
      %2878 = vmatpush.msra.mxu0 0.0
      %2879 = vmatpush.msra.mxu0 %v2863
      %2880 = vmatpush.msra.mxu0 %v2851
      %2881 = vmatmul.f32.gmra.mxu0 %v2857
      %v2882 = vpop.f32.mrf.mxu0
      %v2883 = vadd.f32 0.0, %v2882
      %2884 = vmatmul.f32.gmra.mxu0 %v2860
      %v2885 = vpop.f32.mrf.mxu0
      %v2886 = vadd.f32 0.0, %v2885
      %2887 = vdwg.mxu0
      %v2888 = vadd.f32 %v2845, %v2883
      %v2889 = vadd.f32 %v2848, %v2886
      %v2890 = vld [vmem:[%s3] sm:$0xff]
      %v2891 = vld [vmem:[%s3 + $0x8] sm:$0xff]
      %2893 = vset.pattern.permute.xlu0 0
      %2894 = vperm.xlu0 %2893, %v2890
      %v2895 = vpop.permute.xlu0 %2894
      %2898 = vset.pattern.permute.xlu0 0
      %2899 = vperm.xlu0 %2898, %v2891
      %v2900 = vpop.permute.xlu0 %2899
      %v2902 = vadd.f32 %v2888, %v2895
      %v2903 = vadd.f32 %v2889, %v2900
      %v2904 = vmax.f32 %v2902, 0.0
      %v2905 = vmax.f32 %v2903, 0.0
      %s2906 = scalar_select %p2775, 1, 0
      %v2907 = vstv %s2906
      %vm2908 = vcmp.eq.s32.totalorder %v2907, 1
      %vm2909 = vmand %vm2908, %vm319
      %v2910 = vsel %vm2909, 1, 0
      %vm2911 = vcmp.eq.s32.totalorder %v2910, 1
      %v2912 = vsel %vm2911, %v2904, 0.0
      %v2913 = vsel %vm2911, %v2905, 0.0
      %v2914 = vld [vmem:[%s2] sm:$0x7]
      %2915 = vrot.lane.b32.xlu0 %v2912, 127
      %v2916 = vpop.permute.xlu0 %2915
      %2917 = vrot.lane.b32.xlu0 %v2913, 127
      %v2918 = vpop.permute.xlu0 %2917
      %v2919 = vld [vmem:[%s472] sm:$0x7]
      %v2921 = vsel %vm474, %v2919, 0
      %2923 = vmatpush.msra.mxu0 0.0
      %2924 = vmatpush.msra.mxu0 0.0
      %2925 = vmatpush.msra.mxu0 0.0
      %2926 = vmatpush.msra.mxu0 0.0
      %2927 = vmatpush.msra.mxu0 0.0
      %2928 = vmatpush.msra.mxu0 0.0
      %2929 = vmatpush.msra.mxu0 0.0
      %2930 = vmatpush.msra.mxu0 0.0
      %2931 = vmatpush.msra.mxu0 0.0
      %2932 = vmatpush.msra.mxu0 0.0
      %2933 = vmatpush.msra.mxu0 0.0
      %2934 = vmatpush.msra.mxu0 0.0
      %2935 = vmatpush.msra.mxu0 0.0
      %2936 = vmatpush.msra.mxu0 0.0
      %2937 = vmatpush.msra.mxu0 %v2918
      %2938 = vmatpush.msra.mxu0 %v2916
      %2939 = vmatmul.f32.gmra.mxu0 %v2921
      %v2940 = vpop.f32.mrf.mxu0
      %v2941 = vadd.f32 0.0, %v2940
      %2942 = vdwg.mxu0
      %v2944 = vsel %vm474, %v2914, 0
      %2946 = vmatpush.msra.mxu0 0.0
      %2947 = vmatpush.msra.mxu0 0.0
      %2948 = vmatpush.msra.mxu0 0.0
      %2949 = vmatpush.msra.mxu0 0.0
      %2950 = vmatpush.msra.mxu0 0.0
      %2951 = vmatpush.msra.mxu0 0.0
      %2952 = vmatpush.msra.mxu0 0.0
      %2953 = vmatpush.msra.mxu0 0.0
      %2954 = vmatpush.msra.mxu0 0.0
      %2955 = vmatpush.msra.mxu0 0.0
      %2956 = vmatpush.msra.mxu0 0.0
      %2957 = vmatpush.msra.mxu0 0.0
      %2958 = vmatpush.msra.mxu0 0.0
      %2959 = vmatpush.msra.mxu0 0.0
      %2960 = vmatpush.msra.mxu0 %v2913
      %2961 = vmatpush.msra.mxu0 %v2912
      %2962 = vmatmul.f32.gmra.mxu0 %v2944
      %v2963 = vpop.f32.mrf.mxu0
      %v2964 = vadd.f32 %v2941, %v2963
      %2965 = vdwg.mxu0
      %2966 = vrot.lane.b32.xlu0 %v2912, 126
      %v2967 = vpop.permute.xlu0 %2966
      %2968 = vrot.lane.b32.xlu0 %v2913, 126
      %v2969 = vpop.permute.xlu0 %2968
      %v2970 = vld [vmem:[%s525] sm:$0x7]
      %v2972 = vsel %vm474, %v2970, 0
      %2974 = vmatpush.msra.mxu0 0.0
      %2975 = vmatpush.msra.mxu0 0.0
      %2976 = vmatpush.msra.mxu0 0.0
      %2977 = vmatpush.msra.mxu0 0.0
      %2978 = vmatpush.msra.mxu0 0.0
      %2979 = vmatpush.msra.mxu0 0.0
      %2980 = vmatpush.msra.mxu0 0.0
      %2981 = vmatpush.msra.mxu0 0.0
      %2982 = vmatpush.msra.mxu0 0.0
      %2983 = vmatpush.msra.mxu0 0.0
      %2984 = vmatpush.msra.mxu0 0.0
      %2985 = vmatpush.msra.mxu0 0.0
      %2986 = vmatpush.msra.mxu0 0.0
      %2987 = vmatpush.msra.mxu0 0.0
      %2988 = vmatpush.msra.mxu0 %v2969
      %2989 = vmatpush.msra.mxu0 %v2967
      %2990 = vmatmul.f32.gmra.mxu0 %v2972
      %v2991 = vpop.f32.mrf.mxu0
      %v2992 = vadd.f32 0.0, %v2991
      %2993 = vdwg.mxu0
      %v2994 = vadd.f32 %v2964, %v2992
      %v2996 = vrot.slane %v2994, 1
      %v2998 = vadd.f32 %v2762, %v2996
      %v2999 = vrot.slane %v2994, 2
      %v3001 = vadd.f32 %v2766, %v2999
      %3002 = vst.msk [vmem:[%s201 + $0x9] sm:$0x1] %vm913, %v3001
      %s3003 = sadd.s32 %s314, 11
      %p3004 = scmp.ge.s32.totalorder %s3003, 0
      %p3005 = scmp.lt.s32.totalorder %s3003, 40
      %p3006 = pnand %p3004, %p3005
      %p3007 = pneg %p3006
      %v3008 = vld [vmem:[%s253 + $0x24] sm:$0xff]
      %v3009 = vld [vmem:[%s253 + $0x2c] sm:$0x1]
      %v3010 = vld [vmem:[%s1] sm:$0xff]
      %v3011 = vld [vmem:[%s1 + $0x8] sm:$0xff]
      %3012 = vrot.lane.b32.xlu0 %v3008, 127
      %v3013 = vpop.permute.xlu0 %3012
      %3014 = vrot.lane.b32.xlu0 %v3009, 127
      %v3015 = vpop.permute.xlu0 %3014
      %v3016 = vld [vmem:[%s333] sm:$0xff]
      %v3017 = vld [vmem:[%s333 + $0x8] sm:$0xff]
      %v3019 = vsel %vm336, %v3016, 0
      %v3022 = vsel %vm336, %v3017, 0
      %v3025 = vsel %vm343, %v3015, 0
      %3027 = vmatpush.msra.mxu0 0.0
      %3028 = vmatpush.msra.mxu0 0.0
      %3029 = vmatpush.msra.mxu0 0.0
      %3030 = vmatpush.msra.mxu0 0.0
      %3031 = vmatpush.msra.mxu0 0.0
      %3032 = vmatpush.msra.mxu0 0.0
      %3033 = vmatpush.msra.mxu0 0.0
      %3034 = vmatpush.msra.mxu0 0.0
      %3035 = vmatpush.msra.mxu0 0.0
      %3036 = vmatpush.msra.mxu0 0.0
      %3037 = vmatpush.msra.mxu0 0.0
      %3038 = vmatpush.msra.mxu0 0.0
      %3039 = vmatpush.msra.mxu0 0.0
      %3040 = vmatpush.msra.mxu0 0.0
      %3041 = vmatpush.msra.mxu0 %v3025
      %3042 = vmatpush.msra.mxu0 %v3013
      %3043 = vmatmul.f32.gmra.mxu0 %v3019
      %v3044 = vpop.f32.mrf.mxu0
      %v3045 = vadd.f32 0.0, %v3044
      %3046 = vmatmul.f32.gmra.mxu0 %v3022
      %v3047 = vpop.f32.mrf.mxu0
      %v3048 = vadd.f32 0.0, %v3047
      %3049 = vdwg.mxu0
      %v3051 = vsel %vm336, %v3010, 0
      %v3054 = vsel %vm336, %v3011, 0
      %v3057 = vsel %vm343, %v3009, 0
      %3059 = vmatpush.msra.mxu0 0.0
      %3060 = vmatpush.msra.mxu0 0.0
      %3061 = vmatpush.msra.mxu0 0.0
      %3062 = vmatpush.msra.mxu0 0.0
      %3063 = vmatpush.msra.mxu0 0.0
      %3064 = vmatpush.msra.mxu0 0.0
      %3065 = vmatpush.msra.mxu0 0.0
      %3066 = vmatpush.msra.mxu0 0.0
      %3067 = vmatpush.msra.mxu0 0.0
      %3068 = vmatpush.msra.mxu0 0.0
      %3069 = vmatpush.msra.mxu0 0.0
      %3070 = vmatpush.msra.mxu0 0.0
      %3071 = vmatpush.msra.mxu0 0.0
      %3072 = vmatpush.msra.mxu0 0.0
      %3073 = vmatpush.msra.mxu0 %v3057
      %3074 = vmatpush.msra.mxu0 %v3008
      %3075 = vmatmul.f32.gmra.mxu0 %v3051
      %v3076 = vpop.f32.mrf.mxu0
      %v3077 = vadd.f32 %v3045, %v3076
      %3078 = vmatmul.f32.gmra.mxu0 %v3054
      %v3079 = vpop.f32.mrf.mxu0
      %v3080 = vadd.f32 %v3048, %v3079
      %3081 = vdwg.mxu0
      %3082 = vrot.lane.b32.xlu0 %v3008, 126
      %v3083 = vpop.permute.xlu0 %3082
      %3084 = vrot.lane.b32.xlu0 %v3009, 126
      %v3085 = vpop.permute.xlu0 %3084
      %v3086 = vld [vmem:[%s406] sm:$0xff]
      %v3087 = vld [vmem:[%s406 + $0x8] sm:$0xff]
      %v3089 = vsel %vm336, %v3086, 0
      %v3092 = vsel %vm336, %v3087, 0
      %v3095 = vsel %vm343, %v3085, 0
      %3097 = vmatpush.msra.mxu0 0.0
      %3098 = vmatpush.msra.mxu0 0.0
      %3099 = vmatpush.msra.mxu0 0.0
      %3100 = vmatpush.msra.mxu0 0.0
      %3101 = vmatpush.msra.mxu0 0.0
      %3102 = vmatpush.msra.mxu0 0.0
      %3103 = vmatpush.msra.mxu0 0.0
      %3104 = vmatpush.msra.mxu0 0.0
      %3105 = vmatpush.msra.mxu0 0.0
      %3106 = vmatpush.msra.mxu0 0.0
      %3107 = vmatpush.msra.mxu0 0.0
      %3108 = vmatpush.msra.mxu0 0.0
      %3109 = vmatpush.msra.mxu0 0.0
      %3110 = vmatpush.msra.mxu0 0.0
      %3111 = vmatpush.msra.mxu0 %v3095
      %3112 = vmatpush.msra.mxu0 %v3083
      %3113 = vmatmul.f32.gmra.mxu0 %v3089
      %v3114 = vpop.f32.mrf.mxu0
      %v3115 = vadd.f32 0.0, %v3114
      %3116 = vmatmul.f32.gmra.mxu0 %v3092
      %v3117 = vpop.f32.mrf.mxu0
      %v3118 = vadd.f32 0.0, %v3117
      %3119 = vdwg.mxu0
      %v3120 = vadd.f32 %v3077, %v3115
      %v3121 = vadd.f32 %v3080, %v3118
      %v3122 = vld [vmem:[%s3] sm:$0xff]
      %v3123 = vld [vmem:[%s3 + $0x8] sm:$0xff]
      %3125 = vset.pattern.permute.xlu0 0
      %3126 = vperm.xlu0 %3125, %v3122
      %v3127 = vpop.permute.xlu0 %3126
      %3130 = vset.pattern.permute.xlu0 0
      %3131 = vperm.xlu0 %3130, %v3123
      %v3132 = vpop.permute.xlu0 %3131
      %v3134 = vadd.f32 %v3120, %v3127
      %v3135 = vadd.f32 %v3121, %v3132
      %v3136 = vmax.f32 %v3134, 0.0
      %v3137 = vmax.f32 %v3135, 0.0
      %s3138 = scalar_select %p3007, 1, 0
      %v3139 = vstv %s3138
      %vm3140 = vcmp.eq.s32.totalorder %v3139, 1
      %vm3141 = vmand %vm3140, %vm319
      %v3142 = vsel %vm3141, 1, 0
      %vm3143 = vcmp.eq.s32.totalorder %v3142, 1
      %v3144 = vsel %vm3143, %v3136, 0.0
      %v3145 = vsel %vm3143, %v3137, 0.0
      %v3146 = vld [vmem:[%s2] sm:$0x7]
      %3147 = vrot.lane.b32.xlu0 %v3144, 127
      %v3148 = vpop.permute.xlu0 %3147
      %3149 = vrot.lane.b32.xlu0 %v3145, 127
      %v3150 = vpop.permute.xlu0 %3149
      %v3151 = vld [vmem:[%s472] sm:$0x7]
      %v3153 = vsel %vm474, %v3151, 0
      %3155 = vmatpush.msra.mxu0 0.0
      %3156 = vmatpush.msra.mxu0 0.0
      %3157 = vmatpush.msra.mxu0 0.0
      %3158 = vmatpush.msra.mxu0 0.0
      %3159 = vmatpush.msra.mxu0 0.0
      %3160 = vmatpush.msra.mxu0 0.0
      %3161 = vmatpush.msra.mxu0 0.0
      %3162 = vmatpush.msra.mxu0 0.0
      %3163 = vmatpush.msra.mxu0 0.0
      %3164 = vmatpush.msra.mxu0 0.0
      %3165 = vmatpush.msra.mxu0 0.0
      %3166 = vmatpush.msra.mxu0 0.0
      %3167 = vmatpush.msra.mxu0 0.0
      %3168 = vmatpush.msra.mxu0 0.0
      %3169 = vmatpush.msra.mxu0 %v3150
      %3170 = vmatpush.msra.mxu0 %v3148
      %3171 = vmatmul.f32.gmra.mxu0 %v3153
      %v3172 = vpop.f32.mrf.mxu0
      %v3173 = vadd.f32 0.0, %v3172
      %3174 = vdwg.mxu0
      %v3176 = vsel %vm474, %v3146, 0
      %3178 = vmatpush.msra.mxu0 0.0
      %3179 = vmatpush.msra.mxu0 0.0
      %3180 = vmatpush.msra.mxu0 0.0
      %3181 = vmatpush.msra.mxu0 0.0
      %3182 = vmatpush.msra.mxu0 0.0
      %3183 = vmatpush.msra.mxu0 0.0
      %3184 = vmatpush.msra.mxu0 0.0
      %3185 = vmatpush.msra.mxu0 0.0
      %3186 = vmatpush.msra.mxu0 0.0
      %3187 = vmatpush.msra.mxu0 0.0
      %3188 = vmatpush.msra.mxu0 0.0
      %3189 = vmatpush.msra.mxu0 0.0
      %3190 = vmatpush.msra.mxu0 0.0
      %3191 = vmatpush.msra.mxu0 0.0
      %3192 = vmatpush.msra.mxu0 %v3145
      %3193 = vmatpush.msra.mxu0 %v3144
      %3194 = vmatmul.f32.gmra.mxu0 %v3176
      %v3195 = vpop.f32.mrf.mxu0
      %v3196 = vadd.f32 %v3173, %v3195
      %3197 = vdwg.mxu0
      %3198 = vrot.lane.b32.xlu0 %v3144, 126
      %v3199 = vpop.permute.xlu0 %3198
      %3200 = vrot.lane.b32.xlu0 %v3145, 126
      %v3201 = vpop.permute.xlu0 %3200
      %v3202 = vld [vmem:[%s525] sm:$0x7]
      %v3204 = vsel %vm474, %v3202, 0
      %3206 = vmatpush.msra.mxu0 0.0
      %3207 = vmatpush.msra.mxu0 0.0
      %3208 = vmatpush.msra.mxu0 0.0
      %3209 = vmatpush.msra.mxu0 0.0
      %3210 = vmatpush.msra.mxu0 0.0
      %3211 = vmatpush.msra.mxu0 0.0
      %3212 = vmatpush.msra.mxu0 0.0
      %3213 = vmatpush.msra.mxu0 0.0
      %3214 = vmatpush.msra.mxu0 0.0
      %3215 = vmatpush.msra.mxu0 0.0
      %3216 = vmatpush.msra.mxu0 0.0
      %3217 = vmatpush.msra.mxu0 0.0
      %3218 = vmatpush.msra.mxu0 0.0
      %3219 = vmatpush.msra.mxu0 0.0
      %3220 = vmatpush.msra.mxu0 %v3201
      %3221 = vmatpush.msra.mxu0 %v3199
      %3222 = vmatmul.f32.gmra.mxu0 %v3204
      %v3223 = vpop.f32.mrf.mxu0
      %v3224 = vadd.f32 0.0, %v3223
      %3225 = vdwg.mxu0
      %v3226 = vadd.f32 %v3196, %v3224
      %v3228 = vrot.slane %v3226, 1
      %v3230 = vadd.f32 %v2994, %v3228
      %v3231 = vrot.slane %v3226, 2
      %v3233 = vadd.f32 %v2998, %v3231
      %3234 = vst.msk [vmem:[%s201 + $0xa] sm:$0x1] %vm913, %v3233
      %s3235 = sadd.s32 %s314, 12
      %p3236 = scmp.ge.s32.totalorder %s3235, 0
      %p3237 = scmp.lt.s32.totalorder %s3235, 40
      %p3238 = pnand %p3236, %p3237
      %p3239 = pneg %p3238
      %v3240 = vld [vmem:[%s253 + $0x27] sm:$0xff]
      %v3241 = vld [vmem:[%s253 + $0x2f] sm:$0x1]
      %v3242 = vld [vmem:[%s1] sm:$0xff]
      %v3243 = vld [vmem:[%s1 + $0x8] sm:$0xff]
      %3244 = vrot.lane.b32.xlu0 %v3240, 127
      %v3245 = vpop.permute.xlu0 %3244
      %3246 = vrot.lane.b32.xlu0 %v3241, 127
      %v3247 = vpop.permute.xlu0 %3246
      %v3248 = vld [vmem:[%s333] sm:$0xff]
      %v3249 = vld [vmem:[%s333 + $0x8] sm:$0xff]
      %v3251 = vsel %vm336, %v3248, 0
      %v3254 = vsel %vm336, %v3249, 0
      %v3257 = vsel %vm343, %v3247, 0
      %3259 = vmatpush.msra.mxu0 0.0
      %3260 = vmatpush.msra.mxu0 0.0
      %3261 = vmatpush.msra.mxu0 0.0
      %3262 = vmatpush.msra.mxu0 0.0
      %3263 = vmatpush.msra.mxu0 0.0
      %3264 = vmatpush.msra.mxu0 0.0
      %3265 = vmatpush.msra.mxu0 0.0
      %3266 = vmatpush.msra.mxu0 0.0
      %3267 = vmatpush.msra.mxu0 0.0
      %3268 = vmatpush.msra.mxu0 0.0
      %3269 = vmatpush.msra.mxu0 0.0
      %3270 = vmatpush.msra.mxu0 0.0
      %3271 = vmatpush.msra.mxu0 0.0
      %3272 = vmatpush.msra.mxu0 0.0
      %3273 = vmatpush.msra.mxu0 %v3257
      %3274 = vmatpush.msra.mxu0 %v3245
      %3275 = vmatmul.f32.gmra.mxu0 %v3251
      %v3276 = vpop.f32.mrf.mxu0
      %v3277 = vadd.f32 0.0, %v3276
      %3278 = vmatmul.f32.gmra.mxu0 %v3254
      %v3279 = vpop.f32.mrf.mxu0
      %v3280 = vadd.f32 0.0, %v3279
      %3281 = vdwg.mxu0
      %v3283 = vsel %vm336, %v3242, 0
      %v3286 = vsel %vm336, %v3243, 0
      %v3289 = vsel %vm343, %v3241, 0
      %3291 = vmatpush.msra.mxu0 0.0
      %3292 = vmatpush.msra.mxu0 0.0
      %3293 = vmatpush.msra.mxu0 0.0
      %3294 = vmatpush.msra.mxu0 0.0
      %3295 = vmatpush.msra.mxu0 0.0
      %3296 = vmatpush.msra.mxu0 0.0
      %3297 = vmatpush.msra.mxu0 0.0
      %3298 = vmatpush.msra.mxu0 0.0
      %3299 = vmatpush.msra.mxu0 0.0
      %3300 = vmatpush.msra.mxu0 0.0
      %3301 = vmatpush.msra.mxu0 0.0
      %3302 = vmatpush.msra.mxu0 0.0
      %3303 = vmatpush.msra.mxu0 0.0
      %3304 = vmatpush.msra.mxu0 0.0
      %3305 = vmatpush.msra.mxu0 %v3289
      %3306 = vmatpush.msra.mxu0 %v3240
      %3307 = vmatmul.f32.gmra.mxu0 %v3283
      %v3308 = vpop.f32.mrf.mxu0
      %v3309 = vadd.f32 %v3277, %v3308
      %3310 = vmatmul.f32.gmra.mxu0 %v3286
      %v3311 = vpop.f32.mrf.mxu0
      %v3312 = vadd.f32 %v3280, %v3311
      %3313 = vdwg.mxu0
      %3314 = vrot.lane.b32.xlu0 %v3240, 126
      %v3315 = vpop.permute.xlu0 %3314
      %3316 = vrot.lane.b32.xlu0 %v3241, 126
      %v3317 = vpop.permute.xlu0 %3316
      %v3318 = vld [vmem:[%s406] sm:$0xff]
      %v3319 = vld [vmem:[%s406 + $0x8] sm:$0xff]
      %v3321 = vsel %vm336, %v3318, 0
      %v3324 = vsel %vm336, %v3319, 0
      %v3327 = vsel %vm343, %v3317, 0
      %3329 = vmatpush.msra.mxu0 0.0
      %3330 = vmatpush.msra.mxu0 0.0
      %3331 = vmatpush.msra.mxu0 0.0
      %3332 = vmatpush.msra.mxu0 0.0
      %3333 = vmatpush.msra.mxu0 0.0
      %3334 = vmatpush.msra.mxu0 0.0
      %3335 = vmatpush.msra.mxu0 0.0
      %3336 = vmatpush.msra.mxu0 0.0
      %3337 = vmatpush.msra.mxu0 0.0
      %3338 = vmatpush.msra.mxu0 0.0
      %3339 = vmatpush.msra.mxu0 0.0
      %3340 = vmatpush.msra.mxu0 0.0
      %3341 = vmatpush.msra.mxu0 0.0
      %3342 = vmatpush.msra.mxu0 0.0
      %3343 = vmatpush.msra.mxu0 %v3327
      %3344 = vmatpush.msra.mxu0 %v3315
      %3345 = vmatmul.f32.gmra.mxu0 %v3321
      %v3346 = vpop.f32.mrf.mxu0
      %v3347 = vadd.f32 0.0, %v3346
      %3348 = vmatmul.f32.gmra.mxu0 %v3324
      %v3349 = vpop.f32.mrf.mxu0
      %v3350 = vadd.f32 0.0, %v3349
      %3351 = vdwg.mxu0
      %v3352 = vadd.f32 %v3309, %v3347
      %v3353 = vadd.f32 %v3312, %v3350
      %v3354 = vld [vmem:[%s3] sm:$0xff]
      %v3355 = vld [vmem:[%s3 + $0x8] sm:$0xff]
      %3357 = vset.pattern.permute.xlu0 0
      %3358 = vperm.xlu0 %3357, %v3354
      %v3359 = vpop.permute.xlu0 %3358
      %3362 = vset.pattern.permute.xlu0 0
      %3363 = vperm.xlu0 %3362, %v3355
      %v3364 = vpop.permute.xlu0 %3363
      %v3366 = vadd.f32 %v3352, %v3359
      %v3367 = vadd.f32 %v3353, %v3364
      %v3368 = vmax.f32 %v3366, 0.0
      %v3369 = vmax.f32 %v3367, 0.0
      %s3370 = scalar_select %p3239, 1, 0
      %v3371 = vstv %s3370
      %vm3372 = vcmp.eq.s32.totalorder %v3371, 1
      %vm3373 = vmand %vm3372, %vm319
      %v3374 = vsel %vm3373, 1, 0
      %vm3375 = vcmp.eq.s32.totalorder %v3374, 1
      %v3376 = vsel %vm3375, %v3368, 0.0
      %v3377 = vsel %vm3375, %v3369, 0.0
      %v3378 = vld [vmem:[%s2] sm:$0x7]
      %3379 = vrot.lane.b32.xlu0 %v3376, 127
      %v3380 = vpop.permute.xlu0 %3379
      %3381 = vrot.lane.b32.xlu0 %v3377, 127
      %v3382 = vpop.permute.xlu0 %3381
      %v3383 = vld [vmem:[%s472] sm:$0x7]
      %v3385 = vsel %vm474, %v3383, 0
      %3387 = vmatpush.msra.mxu0 0.0
      %3388 = vmatpush.msra.mxu0 0.0
      %3389 = vmatpush.msra.mxu0 0.0
      %3390 = vmatpush.msra.mxu0 0.0
      %3391 = vmatpush.msra.mxu0 0.0
      %3392 = vmatpush.msra.mxu0 0.0
      %3393 = vmatpush.msra.mxu0 0.0
      %3394 = vmatpush.msra.mxu0 0.0
      %3395 = vmatpush.msra.mxu0 0.0
      %3396 = vmatpush.msra.mxu0 0.0
      %3397 = vmatpush.msra.mxu0 0.0
      %3398 = vmatpush.msra.mxu0 0.0
      %3399 = vmatpush.msra.mxu0 0.0
      %3400 = vmatpush.msra.mxu0 0.0
      %3401 = vmatpush.msra.mxu0 %v3382
      %3402 = vmatpush.msra.mxu0 %v3380
      %3403 = vmatmul.f32.gmra.mxu0 %v3385
      %v3404 = vpop.f32.mrf.mxu0
      %v3405 = vadd.f32 0.0, %v3404
      %3406 = vdwg.mxu0
      %v3408 = vsel %vm474, %v3378, 0
      %3410 = vmatpush.msra.mxu0 0.0
      %3411 = vmatpush.msra.mxu0 0.0
      %3412 = vmatpush.msra.mxu0 0.0
      %3413 = vmatpush.msra.mxu0 0.0
      %3414 = vmatpush.msra.mxu0 0.0
      %3415 = vmatpush.msra.mxu0 0.0
      %3416 = vmatpush.msra.mxu0 0.0
      %3417 = vmatpush.msra.mxu0 0.0
      %3418 = vmatpush.msra.mxu0 0.0
      %3419 = vmatpush.msra.mxu0 0.0
      %3420 = vmatpush.msra.mxu0 0.0
      %3421 = vmatpush.msra.mxu0 0.0
      %3422 = vmatpush.msra.mxu0 0.0
      %3423 = vmatpush.msra.mxu0 0.0
      %3424 = vmatpush.msra.mxu0 %v3377
      %3425 = vmatpush.msra.mxu0 %v3376
      %3426 = vmatmul.f32.gmra.mxu0 %v3408
      %v3427 = vpop.f32.mrf.mxu0
      %v3428 = vadd.f32 %v3405, %v3427
      %3429 = vdwg.mxu0
      %3430 = vrot.lane.b32.xlu0 %v3376, 126
      %v3431 = vpop.permute.xlu0 %3430
      %3432 = vrot.lane.b32.xlu0 %v3377, 126
      %v3433 = vpop.permute.xlu0 %3432
      %v3434 = vld [vmem:[%s525] sm:$0x7]
      %v3436 = vsel %vm474, %v3434, 0
      %3438 = vmatpush.msra.mxu0 0.0
      %3439 = vmatpush.msra.mxu0 0.0
      %3440 = vmatpush.msra.mxu0 0.0
      %3441 = vmatpush.msra.mxu0 0.0
      %3442 = vmatpush.msra.mxu0 0.0
      %3443 = vmatpush.msra.mxu0 0.0
      %3444 = vmatpush.msra.mxu0 0.0
      %3445 = vmatpush.msra.mxu0 0.0
      %3446 = vmatpush.msra.mxu0 0.0
      %3447 = vmatpush.msra.mxu0 0.0
      %3448 = vmatpush.msra.mxu0 0.0
      %3449 = vmatpush.msra.mxu0 0.0
      %3450 = vmatpush.msra.mxu0 0.0
      %3451 = vmatpush.msra.mxu0 0.0
      %3452 = vmatpush.msra.mxu0 %v3433
      %3453 = vmatpush.msra.mxu0 %v3431
      %3454 = vmatmul.f32.gmra.mxu0 %v3436
      %v3455 = vpop.f32.mrf.mxu0
      %v3456 = vadd.f32 0.0, %v3455
      %3457 = vdwg.mxu0
      %v3458 = vadd.f32 %v3428, %v3456
      %v3460 = vrot.slane %v3458, 1
      %v3462 = vadd.f32 %v3226, %v3460
      %v3463 = vrot.slane %v3458, 2
      %v3465 = vadd.f32 %v3230, %v3463
      %3466 = vst.msk [vmem:[%s201 + $0xb] sm:$0x1] %vm913, %v3465
      %s3467 = sadd.s32 %s314, 13
      %p3468 = scmp.ge.s32.totalorder %s3467, 0
      %p3469 = scmp.lt.s32.totalorder %s3467, 40
      %p3470 = pnand %p3468, %p3469
      %p3471 = pneg %p3470
      %v3472 = vld [vmem:[%s253 + $0x2a] sm:$0xff]
      %v3473 = vld [vmem:[%s253 + $0x32] sm:$0x1]
      %v3474 = vld [vmem:[%s1] sm:$0xff]
      %v3475 = vld [vmem:[%s1 + $0x8] sm:$0xff]
      %3476 = vrot.lane.b32.xlu0 %v3472, 127
      %v3477 = vpop.permute.xlu0 %3476
      %3478 = vrot.lane.b32.xlu0 %v3473, 127
      %v3479 = vpop.permute.xlu0 %3478
      %v3480 = vld [vmem:[%s333] sm:$0xff]
      %v3481 = vld [vmem:[%s333 + $0x8] sm:$0xff]
      %v3483 = vsel %vm336, %v3480, 0
      %v3486 = vsel %vm336, %v3481, 0
      %v3489 = vsel %vm343, %v3479, 0
      %3491 = vmatpush.msra.mxu0 0.0
      %3492 = vmatpush.msra.mxu0 0.0
      %3493 = vmatpush.msra.mxu0 0.0
      %3494 = vmatpush.msra.mxu0 0.0
      %3495 = vmatpush.msra.mxu0 0.0
      %3496 = vmatpush.msra.mxu0 0.0
      %3497 = vmatpush.msra.mxu0 0.0
      %3498 = vmatpush.msra.mxu0 0.0
      %3499 = vmatpush.msra.mxu0 0.0
      %3500 = vmatpush.msra.mxu0 0.0
      %3501 = vmatpush.msra.mxu0 0.0
      %3502 = vmatpush.msra.mxu0 0.0
      %3503 = vmatpush.msra.mxu0 0.0
      %3504 = vmatpush.msra.mxu0 0.0
      %3505 = vmatpush.msra.mxu0 %v3489
      %3506 = vmatpush.msra.mxu0 %v3477
      %3507 = vmatmul.f32.gmra.mxu0 %v3483
      %v3508 = vpop.f32.mrf.mxu0
      %v3509 = vadd.f32 0.0, %v3508
      %3510 = vmatmul.f32.gmra.mxu0 %v3486
      %v3511 = vpop.f32.mrf.mxu0
      %v3512 = vadd.f32 0.0, %v3511
      %3513 = vdwg.mxu0
      %v3515 = vsel %vm336, %v3474, 0
      %v3518 = vsel %vm336, %v3475, 0
      %v3521 = vsel %vm343, %v3473, 0
      %3523 = vmatpush.msra.mxu0 0.0
      %3524 = vmatpush.msra.mxu0 0.0
      %3525 = vmatpush.msra.mxu0 0.0
      %3526 = vmatpush.msra.mxu0 0.0
      %3527 = vmatpush.msra.mxu0 0.0
      %3528 = vmatpush.msra.mxu0 0.0
      %3529 = vmatpush.msra.mxu0 0.0
      %3530 = vmatpush.msra.mxu0 0.0
      %3531 = vmatpush.msra.mxu0 0.0
      %3532 = vmatpush.msra.mxu0 0.0
      %3533 = vmatpush.msra.mxu0 0.0
      %3534 = vmatpush.msra.mxu0 0.0
      %3535 = vmatpush.msra.mxu0 0.0
      %3536 = vmatpush.msra.mxu0 0.0
      %3537 = vmatpush.msra.mxu0 %v3521
      %3538 = vmatpush.msra.mxu0 %v3472
      %3539 = vmatmul.f32.gmra.mxu0 %v3515
      %v3540 = vpop.f32.mrf.mxu0
      %v3541 = vadd.f32 %v3509, %v3540
      %3542 = vmatmul.f32.gmra.mxu0 %v3518
      %v3543 = vpop.f32.mrf.mxu0
      %v3544 = vadd.f32 %v3512, %v3543
      %3545 = vdwg.mxu0
      %3546 = vrot.lane.b32.xlu0 %v3472, 126
      %v3547 = vpop.permute.xlu0 %3546
      %3548 = vrot.lane.b32.xlu0 %v3473, 126
      %v3549 = vpop.permute.xlu0 %3548
      %v3550 = vld [vmem:[%s406] sm:$0xff]
      %v3551 = vld [vmem:[%s406 + $0x8] sm:$0xff]
      %v3553 = vsel %vm336, %v3550, 0
      %v3556 = vsel %vm336, %v3551, 0
      %v3559 = vsel %vm343, %v3549, 0
      %3561 = vmatpush.msra.mxu0 0.0
      %3562 = vmatpush.msra.mxu0 0.0
      %3563 = vmatpush.msra.mxu0 0.0
      %3564 = vmatpush.msra.mxu0 0.0
      %3565 = vmatpush.msra.mxu0 0.0
      %3566 = vmatpush.msra.mxu0 0.0
      %3567 = vmatpush.msra.mxu0 0.0
      %3568 = vmatpush.msra.mxu0 0.0
      %3569 = vmatpush.msra.mxu0 0.0
      %3570 = vmatpush.msra.mxu0 0.0
      %3571 = vmatpush.msra.mxu0 0.0
      %3572 = vmatpush.msra.mxu0 0.0
      %3573 = vmatpush.msra.mxu0 0.0
      %3574 = vmatpush.msra.mxu0 0.0
      %3575 = vmatpush.msra.mxu0 %v3559
      %3576 = vmatpush.msra.mxu0 %v3547
      %3577 = vmatmul.f32.gmra.mxu0 %v3553
      %v3578 = vpop.f32.mrf.mxu0
      %v3579 = vadd.f32 0.0, %v3578
      %3580 = vmatmul.f32.gmra.mxu0 %v3556
      %v3581 = vpop.f32.mrf.mxu0
      %v3582 = vadd.f32 0.0, %v3581
      %3583 = vdwg.mxu0
      %v3584 = vadd.f32 %v3541, %v3579
      %v3585 = vadd.f32 %v3544, %v3582
      %v3586 = vld [vmem:[%s3] sm:$0xff]
      %v3587 = vld [vmem:[%s3 + $0x8] sm:$0xff]
      %3589 = vset.pattern.permute.xlu0 0
      %3590 = vperm.xlu0 %3589, %v3586
      %v3591 = vpop.permute.xlu0 %3590
      %3594 = vset.pattern.permute.xlu0 0
      %3595 = vperm.xlu0 %3594, %v3587
      %v3596 = vpop.permute.xlu0 %3595
      %v3598 = vadd.f32 %v3584, %v3591
      %v3599 = vadd.f32 %v3585, %v3596
      %v3600 = vmax.f32 %v3598, 0.0
      %v3601 = vmax.f32 %v3599, 0.0
      %s3602 = scalar_select %p3471, 1, 0
      %v3603 = vstv %s3602
      %vm3604 = vcmp.eq.s32.totalorder %v3603, 1
      %vm3605 = vmand %vm3604, %vm319
      %v3606 = vsel %vm3605, 1, 0
      %vm3607 = vcmp.eq.s32.totalorder %v3606, 1
      %v3608 = vsel %vm3607, %v3600, 0.0
      %v3609 = vsel %vm3607, %v3601, 0.0
      %v3610 = vld [vmem:[%s2] sm:$0x7]
      %3611 = vrot.lane.b32.xlu0 %v3608, 127
      %v3612 = vpop.permute.xlu0 %3611
      %3613 = vrot.lane.b32.xlu0 %v3609, 127
      %v3614 = vpop.permute.xlu0 %3613
      %v3615 = vld [vmem:[%s472] sm:$0x7]
      %v3617 = vsel %vm474, %v3615, 0
      %3619 = vmatpush.msra.mxu0 0.0
      %3620 = vmatpush.msra.mxu0 0.0
      %3621 = vmatpush.msra.mxu0 0.0
      %3622 = vmatpush.msra.mxu0 0.0
      %3623 = vmatpush.msra.mxu0 0.0
      %3624 = vmatpush.msra.mxu0 0.0
      %3625 = vmatpush.msra.mxu0 0.0
      %3626 = vmatpush.msra.mxu0 0.0
      %3627 = vmatpush.msra.mxu0 0.0
      %3628 = vmatpush.msra.mxu0 0.0
      %3629 = vmatpush.msra.mxu0 0.0
      %3630 = vmatpush.msra.mxu0 0.0
      %3631 = vmatpush.msra.mxu0 0.0
      %3632 = vmatpush.msra.mxu0 0.0
      %3633 = vmatpush.msra.mxu0 %v3614
      %3634 = vmatpush.msra.mxu0 %v3612
      %3635 = vmatmul.f32.gmra.mxu0 %v3617
      %v3636 = vpop.f32.mrf.mxu0
      %v3637 = vadd.f32 0.0, %v3636
      %3638 = vdwg.mxu0
      %v3640 = vsel %vm474, %v3610, 0
      %3642 = vmatpush.msra.mxu0 0.0
      %3643 = vmatpush.msra.mxu0 0.0
      %3644 = vmatpush.msra.mxu0 0.0
      %3645 = vmatpush.msra.mxu0 0.0
      %3646 = vmatpush.msra.mxu0 0.0
      %3647 = vmatpush.msra.mxu0 0.0
      %3648 = vmatpush.msra.mxu0 0.0
      %3649 = vmatpush.msra.mxu0 0.0
      %3650 = vmatpush.msra.mxu0 0.0
      %3651 = vmatpush.msra.mxu0 0.0
      %3652 = vmatpush.msra.mxu0 0.0
      %3653 = vmatpush.msra.mxu0 0.0
      %3654 = vmatpush.msra.mxu0 0.0
      %3655 = vmatpush.msra.mxu0 0.0
      %3656 = vmatpush.msra.mxu0 %v3609
      %3657 = vmatpush.msra.mxu0 %v3608
      %3658 = vmatmul.f32.gmra.mxu0 %v3640
      %v3659 = vpop.f32.mrf.mxu0
      %v3660 = vadd.f32 %v3637, %v3659
      %3661 = vdwg.mxu0
      %3662 = vrot.lane.b32.xlu0 %v3608, 126
      %v3663 = vpop.permute.xlu0 %3662
      %3664 = vrot.lane.b32.xlu0 %v3609, 126
      %v3665 = vpop.permute.xlu0 %3664
      %v3666 = vld [vmem:[%s525] sm:$0x7]
      %v3668 = vsel %vm474, %v3666, 0
      %3670 = vmatpush.msra.mxu0 0.0
      %3671 = vmatpush.msra.mxu0 0.0
      %3672 = vmatpush.msra.mxu0 0.0
      %3673 = vmatpush.msra.mxu0 0.0
      %3674 = vmatpush.msra.mxu0 0.0
      %3675 = vmatpush.msra.mxu0 0.0
      %3676 = vmatpush.msra.mxu0 0.0
      %3677 = vmatpush.msra.mxu0 0.0
      %3678 = vmatpush.msra.mxu0 0.0
      %3679 = vmatpush.msra.mxu0 0.0
      %3680 = vmatpush.msra.mxu0 0.0
      %3681 = vmatpush.msra.mxu0 0.0
      %3682 = vmatpush.msra.mxu0 0.0
      %3683 = vmatpush.msra.mxu0 0.0
      %3684 = vmatpush.msra.mxu0 %v3665
      %3685 = vmatpush.msra.mxu0 %v3663
      %3686 = vmatmul.f32.gmra.mxu0 %v3668
      %v3687 = vpop.f32.mrf.mxu0
      %v3688 = vadd.f32 0.0, %v3687
      %3689 = vdwg.mxu0
      %v3690 = vadd.f32 %v3660, %v3688
      %v3692 = vrot.slane %v3690, 1
      %v3694 = vadd.f32 %v3458, %v3692
      %v3695 = vrot.slane %v3690, 2
      %v3697 = vadd.f32 %v3462, %v3695
      %3698 = vst.msk [vmem:[%s201 + $0xc] sm:$0x1] %vm913, %v3697
      %s3699 = sadd.s32 %s314, 14
      %p3700 = scmp.ge.s32.totalorder %s3699, 0
      %p3701 = scmp.lt.s32.totalorder %s3699, 40
      %p3702 = pnand %p3700, %p3701
      %p3703 = pneg %p3702
      %v3704 = vld [vmem:[%s253 + $0x2d] sm:$0xff]
      %v3705 = vld [vmem:[%s253 + $0x35] sm:$0x1]
      %v3706 = vld [vmem:[%s1] sm:$0xff]
      %v3707 = vld [vmem:[%s1 + $0x8] sm:$0xff]
      %3708 = vrot.lane.b32.xlu0 %v3704, 127
      %v3709 = vpop.permute.xlu0 %3708
      %3710 = vrot.lane.b32.xlu0 %v3705, 127
      %v3711 = vpop.permute.xlu0 %3710
      %v3712 = vld [vmem:[%s333] sm:$0xff]
      %v3713 = vld [vmem:[%s333 + $0x8] sm:$0xff]
      %v3715 = vsel %vm336, %v3712, 0
      %v3718 = vsel %vm336, %v3713, 0
      %v3721 = vsel %vm343, %v3711, 0
      %3723 = vmatpush.msra.mxu0 0.0
      %3724 = vmatpush.msra.mxu0 0.0
      %3725 = vmatpush.msra.mxu0 0.0
      %3726 = vmatpush.msra.mxu0 0.0
      %3727 = vmatpush.msra.mxu0 0.0
      %3728 = vmatpush.msra.mxu0 0.0
      %3729 = vmatpush.msra.mxu0 0.0
      %3730 = vmatpush.msra.mxu0 0.0
      %3731 = vmatpush.msra.mxu0 0.0
      %3732 = vmatpush.msra.mxu0 0.0
      %3733 = vmatpush.msra.mxu0 0.0
      %3734 = vmatpush.msra.mxu0 0.0
      %3735 = vmatpush.msra.mxu0 0.0
      %3736 = vmatpush.msra.mxu0 0.0
      %3737 = vmatpush.msra.mxu0 %v3721
      %3738 = vmatpush.msra.mxu0 %v3709
      %3739 = vmatmul.f32.gmra.mxu0 %v3715
      %v3740 = vpop.f32.mrf.mxu0
      %v3741 = vadd.f32 0.0, %v3740
      %3742 = vmatmul.f32.gmra.mxu0 %v3718
      %v3743 = vpop.f32.mrf.mxu0
      %v3744 = vadd.f32 0.0, %v3743
      %3745 = vdwg.mxu0
      %v3747 = vsel %vm336, %v3706, 0
      %v3750 = vsel %vm336, %v3707, 0
      %v3753 = vsel %vm343, %v3705, 0
      %3755 = vmatpush.msra.mxu0 0.0
      %3756 = vmatpush.msra.mxu0 0.0
      %3757 = vmatpush.msra.mxu0 0.0
      %3758 = vmatpush.msra.mxu0 0.0
      %3759 = vmatpush.msra.mxu0 0.0
      %3760 = vmatpush.msra.mxu0 0.0
      %3761 = vmatpush.msra.mxu0 0.0
      %3762 = vmatpush.msra.mxu0 0.0
      %3763 = vmatpush.msra.mxu0 0.0
      %3764 = vmatpush.msra.mxu0 0.0
      %3765 = vmatpush.msra.mxu0 0.0
      %3766 = vmatpush.msra.mxu0 0.0
      %3767 = vmatpush.msra.mxu0 0.0
      %3768 = vmatpush.msra.mxu0 0.0
      %3769 = vmatpush.msra.mxu0 %v3753
      %3770 = vmatpush.msra.mxu0 %v3704
      %3771 = vmatmul.f32.gmra.mxu0 %v3747
      %v3772 = vpop.f32.mrf.mxu0
      %v3773 = vadd.f32 %v3741, %v3772
      %3774 = vmatmul.f32.gmra.mxu0 %v3750
      %v3775 = vpop.f32.mrf.mxu0
      %v3776 = vadd.f32 %v3744, %v3775
      %3777 = vdwg.mxu0
      %3778 = vrot.lane.b32.xlu0 %v3704, 126
      %v3779 = vpop.permute.xlu0 %3778
      %3780 = vrot.lane.b32.xlu0 %v3705, 126
      %v3781 = vpop.permute.xlu0 %3780
      %v3782 = vld [vmem:[%s406] sm:$0xff]
      %v3783 = vld [vmem:[%s406 + $0x8] sm:$0xff]
      %v3785 = vsel %vm336, %v3782, 0
      %v3788 = vsel %vm336, %v3783, 0
      %v3791 = vsel %vm343, %v3781, 0
      %3793 = vmatpush.msra.mxu0 0.0
      %3794 = vmatpush.msra.mxu0 0.0
      %3795 = vmatpush.msra.mxu0 0.0
      %3796 = vmatpush.msra.mxu0 0.0
      %3797 = vmatpush.msra.mxu0 0.0
      %3798 = vmatpush.msra.mxu0 0.0
      %3799 = vmatpush.msra.mxu0 0.0
      %3800 = vmatpush.msra.mxu0 0.0
      %3801 = vmatpush.msra.mxu0 0.0
      %3802 = vmatpush.msra.mxu0 0.0
      %3803 = vmatpush.msra.mxu0 0.0
      %3804 = vmatpush.msra.mxu0 0.0
      %3805 = vmatpush.msra.mxu0 0.0
      %3806 = vmatpush.msra.mxu0 0.0
      %3807 = vmatpush.msra.mxu0 %v3791
      %3808 = vmatpush.msra.mxu0 %v3779
      %3809 = vmatmul.f32.gmra.mxu0 %v3785
      %v3810 = vpop.f32.mrf.mxu0
      %v3811 = vadd.f32 0.0, %v3810
      %3812 = vmatmul.f32.gmra.mxu0 %v3788
      %v3813 = vpop.f32.mrf.mxu0
      %v3814 = vadd.f32 0.0, %v3813
      %3815 = vdwg.mxu0
      %v3816 = vadd.f32 %v3773, %v3811
      %v3817 = vadd.f32 %v3776, %v3814
      %v3818 = vld [vmem:[%s3] sm:$0xff]
      %v3819 = vld [vmem:[%s3 + $0x8] sm:$0xff]
      %3821 = vset.pattern.permute.xlu0 0
      %3822 = vperm.xlu0 %3821, %v3818
      %v3823 = vpop.permute.xlu0 %3822
      %3826 = vset.pattern.permute.xlu0 0
      %3827 = vperm.xlu0 %3826, %v3819
      %v3828 = vpop.permute.xlu0 %3827
      %v3830 = vadd.f32 %v3816, %v3823
      %v3831 = vadd.f32 %v3817, %v3828
      %v3832 = vmax.f32 %v3830, 0.0
      %v3833 = vmax.f32 %v3831, 0.0
      %s3834 = scalar_select %p3703, 1, 0
      %v3835 = vstv %s3834
      %vm3836 = vcmp.eq.s32.totalorder %v3835, 1
      %vm3837 = vmand %vm3836, %vm319
      %v3838 = vsel %vm3837, 1, 0
      %vm3839 = vcmp.eq.s32.totalorder %v3838, 1
      %v3840 = vsel %vm3839, %v3832, 0.0
      %v3841 = vsel %vm3839, %v3833, 0.0
      %v3842 = vld [vmem:[%s2] sm:$0x7]
      %3843 = vrot.lane.b32.xlu0 %v3840, 127
      %v3844 = vpop.permute.xlu0 %3843
      %3845 = vrot.lane.b32.xlu0 %v3841, 127
      %v3846 = vpop.permute.xlu0 %3845
      %v3847 = vld [vmem:[%s472] sm:$0x7]
      %v3849 = vsel %vm474, %v3847, 0
      %3851 = vmatpush.msra.mxu0 0.0
      %3852 = vmatpush.msra.mxu0 0.0
      %3853 = vmatpush.msra.mxu0 0.0
      %3854 = vmatpush.msra.mxu0 0.0
      %3855 = vmatpush.msra.mxu0 0.0
      %3856 = vmatpush.msra.mxu0 0.0
      %3857 = vmatpush.msra.mxu0 0.0
      %3858 = vmatpush.msra.mxu0 0.0
      %3859 = vmatpush.msra.mxu0 0.0
      %3860 = vmatpush.msra.mxu0 0.0
      %3861 = vmatpush.msra.mxu0 0.0
      %3862 = vmatpush.msra.mxu0 0.0
      %3863 = vmatpush.msra.mxu0 0.0
      %3864 = vmatpush.msra.mxu0 0.0
      %3865 = vmatpush.msra.mxu0 %v3846
      %3866 = vmatpush.msra.mxu0 %v3844
      %3867 = vmatmul.f32.gmra.mxu0 %v3849
      %v3868 = vpop.f32.mrf.mxu0
      %v3869 = vadd.f32 0.0, %v3868
      %3870 = vdwg.mxu0
      %v3872 = vsel %vm474, %v3842, 0
      %3874 = vmatpush.msra.mxu0 0.0
      %3875 = vmatpush.msra.mxu0 0.0
      %3876 = vmatpush.msra.mxu0 0.0
      %3877 = vmatpush.msra.mxu0 0.0
      %3878 = vmatpush.msra.mxu0 0.0
      %3879 = vmatpush.msra.mxu0 0.0
      %3880 = vmatpush.msra.mxu0 0.0
      %3881 = vmatpush.msra.mxu0 0.0
      %3882 = vmatpush.msra.mxu0 0.0
      %3883 = vmatpush.msra.mxu0 0.0
      %3884 = vmatpush.msra.mxu0 0.0
      %3885 = vmatpush.msra.mxu0 0.0
      %3886 = vmatpush.msra.mxu0 0.0
      %3887 = vmatpush.msra.mxu0 0.0
      %3888 = vmatpush.msra.mxu0 %v3841
      %3889 = vmatpush.msra.mxu0 %v3840
      %3890 = vmatmul.f32.gmra.mxu0 %v3872
      %v3891 = vpop.f32.mrf.mxu0
      %v3892 = vadd.f32 %v3869, %v3891
      %3893 = vdwg.mxu0
      %3894 = vrot.lane.b32.xlu0 %v3840, 126
      %v3895 = vpop.permute.xlu0 %3894
      %3896 = vrot.lane.b32.xlu0 %v3841, 126
      %v3897 = vpop.permute.xlu0 %3896
      %v3898 = vld [vmem:[%s525] sm:$0x7]
      %v3900 = vsel %vm474, %v3898, 0
      %3902 = vmatpush.msra.mxu0 0.0
      %3903 = vmatpush.msra.mxu0 0.0
      %3904 = vmatpush.msra.mxu0 0.0
      %3905 = vmatpush.msra.mxu0 0.0
      %3906 = vmatpush.msra.mxu0 0.0
      %3907 = vmatpush.msra.mxu0 0.0
      %3908 = vmatpush.msra.mxu0 0.0
      %3909 = vmatpush.msra.mxu0 0.0
      %3910 = vmatpush.msra.mxu0 0.0
      %3911 = vmatpush.msra.mxu0 0.0
      %3912 = vmatpush.msra.mxu0 0.0
      %3913 = vmatpush.msra.mxu0 0.0
      %3914 = vmatpush.msra.mxu0 0.0
      %3915 = vmatpush.msra.mxu0 0.0
      %3916 = vmatpush.msra.mxu0 %v3897
      %3917 = vmatpush.msra.mxu0 %v3895
      %3918 = vmatmul.f32.gmra.mxu0 %v3900
      %v3919 = vpop.f32.mrf.mxu0
      %v3920 = vadd.f32 0.0, %v3919
      %3921 = vdwg.mxu0
      %v3922 = vadd.f32 %v3892, %v3920
      %v3924 = vrot.slane %v3922, 1
      %v3926 = vadd.f32 %v3690, %v3924
      %v3927 = vrot.slane %v3922, 2
      %v3929 = vadd.f32 %v3694, %v3927
      %3930 = vst.msk [vmem:[%s201 + $0xd] sm:$0x1] %vm913, %v3929
      %s3931 = sadd.s32 %s314, 15
      %p3932 = scmp.ge.s32.totalorder %s3931, 0
      %p3933 = scmp.lt.s32.totalorder %s3931, 40
      %p3934 = pnand %p3932, %p3933
      %p3935 = pneg %p3934
      %v3936 = vld [vmem:[%s253 + $0x30] sm:$0xff]
      %v3937 = vld [vmem:[%s253 + $0x38] sm:$0x1]
      %v3938 = vld [vmem:[%s1] sm:$0xff]
      %v3939 = vld [vmem:[%s1 + $0x8] sm:$0xff]
      %3940 = vrot.lane.b32.xlu0 %v3936, 127
      %v3941 = vpop.permute.xlu0 %3940
      %3942 = vrot.lane.b32.xlu0 %v3937, 127
      %v3943 = vpop.permute.xlu0 %3942
      %v3944 = vld [vmem:[%s333] sm:$0xff]
      %v3945 = vld [vmem:[%s333 + $0x8] sm:$0xff]
      %v3947 = vsel %vm336, %v3944, 0
      %v3950 = vsel %vm336, %v3945, 0
      %v3953 = vsel %vm343, %v3943, 0
      %3955 = vmatpush.msra.mxu0 0.0
      %3956 = vmatpush.msra.mxu0 0.0
      %3957 = vmatpush.msra.mxu0 0.0
      %3958 = vmatpush.msra.mxu0 0.0
      %3959 = vmatpush.msra.mxu0 0.0
      %3960 = vmatpush.msra.mxu0 0.0
      %3961 = vmatpush.msra.mxu0 0.0
      %3962 = vmatpush.msra.mxu0 0.0
      %3963 = vmatpush.msra.mxu0 0.0
      %3964 = vmatpush.msra.mxu0 0.0
      %3965 = vmatpush.msra.mxu0 0.0
      %3966 = vmatpush.msra.mxu0 0.0
      %3967 = vmatpush.msra.mxu0 0.0
      %3968 = vmatpush.msra.mxu0 0.0
      %3969 = vmatpush.msra.mxu0 %v3953
      %3970 = vmatpush.msra.mxu0 %v3941
      %3971 = vmatmul.f32.gmra.mxu0 %v3947
      %v3972 = vpop.f32.mrf.mxu0
      %v3973 = vadd.f32 0.0, %v3972
      %3974 = vmatmul.f32.gmra.mxu0 %v3950
      %v3975 = vpop.f32.mrf.mxu0
      %v3976 = vadd.f32 0.0, %v3975
      %3977 = vdwg.mxu0
      %v3979 = vsel %vm336, %v3938, 0
      %v3982 = vsel %vm336, %v3939, 0
      %v3985 = vsel %vm343, %v3937, 0
      %3987 = vmatpush.msra.mxu0 0.0
      %3988 = vmatpush.msra.mxu0 0.0
      %3989 = vmatpush.msra.mxu0 0.0
      %3990 = vmatpush.msra.mxu0 0.0
      %3991 = vmatpush.msra.mxu0 0.0
      %3992 = vmatpush.msra.mxu0 0.0
      %3993 = vmatpush.msra.mxu0 0.0
      %3994 = vmatpush.msra.mxu0 0.0
      %3995 = vmatpush.msra.mxu0 0.0
      %3996 = vmatpush.msra.mxu0 0.0
      %3997 = vmatpush.msra.mxu0 0.0
      %3998 = vmatpush.msra.mxu0 0.0
      %3999 = vmatpush.msra.mxu0 0.0
      %4000 = vmatpush.msra.mxu0 0.0
      %4001 = vmatpush.msra.mxu0 %v3985
      %4002 = vmatpush.msra.mxu0 %v3936
      %4003 = vmatmul.f32.gmra.mxu0 %v3979
      %v4004 = vpop.f32.mrf.mxu0
      %v4005 = vadd.f32 %v3973, %v4004
      %4006 = vmatmul.f32.gmra.mxu0 %v3982
      %v4007 = vpop.f32.mrf.mxu0
      %v4008 = vadd.f32 %v3976, %v4007
      %4009 = vdwg.mxu0
      %4010 = vrot.lane.b32.xlu0 %v3936, 126
      %v4011 = vpop.permute.xlu0 %4010
      %4012 = vrot.lane.b32.xlu0 %v3937, 126
      %v4013 = vpop.permute.xlu0 %4012
      %v4014 = vld [vmem:[%s406] sm:$0xff]
      %v4015 = vld [vmem:[%s406 + $0x8] sm:$0xff]
      %v4017 = vsel %vm336, %v4014, 0
      %v4020 = vsel %vm336, %v4015, 0
      %v4023 = vsel %vm343, %v4013, 0
      %4025 = vmatpush.msra.mxu0 0.0
      %4026 = vmatpush.msra.mxu0 0.0
      %4027 = vmatpush.msra.mxu0 0.0
      %4028 = vmatpush.msra.mxu0 0.0
      %4029 = vmatpush.msra.mxu0 0.0
      %4030 = vmatpush.msra.mxu0 0.0
      %4031 = vmatpush.msra.mxu0 0.0
      %4032 = vmatpush.msra.mxu0 0.0
      %4033 = vmatpush.msra.mxu0 0.0
      %4034 = vmatpush.msra.mxu0 0.0
      %4035 = vmatpush.msra.mxu0 0.0
      %4036 = vmatpush.msra.mxu0 0.0
      %4037 = vmatpush.msra.mxu0 0.0
      %4038 = vmatpush.msra.mxu0 0.0
      %4039 = vmatpush.msra.mxu0 %v4023
      %4040 = vmatpush.msra.mxu0 %v4011
      %4041 = vmatmul.f32.gmra.mxu0 %v4017
      %v4042 = vpop.f32.mrf.mxu0
      %v4043 = vadd.f32 0.0, %v4042
      %4044 = vmatmul.f32.gmra.mxu0 %v4020
      %v4045 = vpop.f32.mrf.mxu0
      %v4046 = vadd.f32 0.0, %v4045
      %4047 = vdwg.mxu0
      %v4048 = vadd.f32 %v4005, %v4043
      %v4049 = vadd.f32 %v4008, %v4046
      %v4050 = vld [vmem:[%s3] sm:$0xff]
      %v4051 = vld [vmem:[%s3 + $0x8] sm:$0xff]
      %4053 = vset.pattern.permute.xlu0 0
      %4054 = vperm.xlu0 %4053, %v4050
      %v4055 = vpop.permute.xlu0 %4054
      %4058 = vset.pattern.permute.xlu0 0
      %4059 = vperm.xlu0 %4058, %v4051
      %v4060 = vpop.permute.xlu0 %4059
      %v4062 = vadd.f32 %v4048, %v4055
      %v4063 = vadd.f32 %v4049, %v4060
      %v4064 = vmax.f32 %v4062, 0.0
      %v4065 = vmax.f32 %v4063, 0.0
      %s4066 = scalar_select %p3935, 1, 0
      %v4067 = vstv %s4066
      %vm4068 = vcmp.eq.s32.totalorder %v4067, 1
      %vm4069 = vmand %vm4068, %vm319
      %v4070 = vsel %vm4069, 1, 0
      %vm4071 = vcmp.eq.s32.totalorder %v4070, 1
      %v4072 = vsel %vm4071, %v4064, 0.0
      %v4073 = vsel %vm4071, %v4065, 0.0
      %v4074 = vld [vmem:[%s2] sm:$0x7]
      %4075 = vrot.lane.b32.xlu0 %v4072, 127
      %v4076 = vpop.permute.xlu0 %4075
      %4077 = vrot.lane.b32.xlu0 %v4073, 127
      %v4078 = vpop.permute.xlu0 %4077
      %v4079 = vld [vmem:[%s472] sm:$0x7]
      %v4081 = vsel %vm474, %v4079, 0
      %4083 = vmatpush.msra.mxu0 0.0
      %4084 = vmatpush.msra.mxu0 0.0
      %4085 = vmatpush.msra.mxu0 0.0
      %4086 = vmatpush.msra.mxu0 0.0
      %4087 = vmatpush.msra.mxu0 0.0
      %4088 = vmatpush.msra.mxu0 0.0
      %4089 = vmatpush.msra.mxu0 0.0
      %4090 = vmatpush.msra.mxu0 0.0
      %4091 = vmatpush.msra.mxu0 0.0
      %4092 = vmatpush.msra.mxu0 0.0
      %4093 = vmatpush.msra.mxu0 0.0
      %4094 = vmatpush.msra.mxu0 0.0
      %4095 = vmatpush.msra.mxu0 0.0
      %4096 = vmatpush.msra.mxu0 0.0
      %4097 = vmatpush.msra.mxu0 %v4078
      %4098 = vmatpush.msra.mxu0 %v4076
      %4099 = vmatmul.f32.gmra.mxu0 %v4081
      %v4100 = vpop.f32.mrf.mxu0
      %v4101 = vadd.f32 0.0, %v4100
      %4102 = vdwg.mxu0
      %v4104 = vsel %vm474, %v4074, 0
      %4106 = vmatpush.msra.mxu0 0.0
      %4107 = vmatpush.msra.mxu0 0.0
      %4108 = vmatpush.msra.mxu0 0.0
      %4109 = vmatpush.msra.mxu0 0.0
      %4110 = vmatpush.msra.mxu0 0.0
      %4111 = vmatpush.msra.mxu0 0.0
      %4112 = vmatpush.msra.mxu0 0.0
      %4113 = vmatpush.msra.mxu0 0.0
      %4114 = vmatpush.msra.mxu0 0.0
      %4115 = vmatpush.msra.mxu0 0.0
      %4116 = vmatpush.msra.mxu0 0.0
      %4117 = vmatpush.msra.mxu0 0.0
      %4118 = vmatpush.msra.mxu0 0.0
      %4119 = vmatpush.msra.mxu0 0.0
      %4120 = vmatpush.msra.mxu0 %v4073
      %4121 = vmatpush.msra.mxu0 %v4072
      %4122 = vmatmul.f32.gmra.mxu0 %v4104
      %v4123 = vpop.f32.mrf.mxu0
      %v4124 = vadd.f32 %v4101, %v4123
      %4125 = vdwg.mxu0
      %4126 = vrot.lane.b32.xlu0 %v4072, 126
      %v4127 = vpop.permute.xlu0 %4126
      %4128 = vrot.lane.b32.xlu0 %v4073, 126
      %v4129 = vpop.permute.xlu0 %4128
      %v4130 = vld [vmem:[%s525] sm:$0x7]
      %v4132 = vsel %vm474, %v4130, 0
      %4134 = vmatpush.msra.mxu0 0.0
      %4135 = vmatpush.msra.mxu0 0.0
      %4136 = vmatpush.msra.mxu0 0.0
      %4137 = vmatpush.msra.mxu0 0.0
      %4138 = vmatpush.msra.mxu0 0.0
      %4139 = vmatpush.msra.mxu0 0.0
      %4140 = vmatpush.msra.mxu0 0.0
      %4141 = vmatpush.msra.mxu0 0.0
      %4142 = vmatpush.msra.mxu0 0.0
      %4143 = vmatpush.msra.mxu0 0.0
      %4144 = vmatpush.msra.mxu0 0.0
      %4145 = vmatpush.msra.mxu0 0.0
      %4146 = vmatpush.msra.mxu0 0.0
      %4147 = vmatpush.msra.mxu0 0.0
      %4148 = vmatpush.msra.mxu0 %v4129
      %4149 = vmatpush.msra.mxu0 %v4127
      %4150 = vmatmul.f32.gmra.mxu0 %v4132
      %v4151 = vpop.f32.mrf.mxu0
      %v4152 = vadd.f32 0.0, %v4151
      %4153 = vdwg.mxu0
      %v4154 = vadd.f32 %v4124, %v4152
      %v4156 = vrot.slane %v4154, 1
      %v4158 = vadd.f32 %v3922, %v4156
      %v4159 = vrot.slane %v4154, 2
      %v4161 = vadd.f32 %v3926, %v4159
      %4162 = vst.msk [vmem:[%s201 + $0xe] sm:$0x1] %vm913, %v4161
      %s4163 = sadd.s32 %s314, 16
      %p4164 = scmp.ge.s32.totalorder %s4163, 0
      %p4165 = scmp.lt.s32.totalorder %s4163, 40
      %p4166 = pnand %p4164, %p4165
      %p4167 = pneg %p4166
      %v4168 = vld [vmem:[%s253 + $0x33] sm:$0xff]
      %v4169 = vld [vmem:[%s253 + $0x3b] sm:$0x1]
      %v4170 = vld [vmem:[%s1] sm:$0xff]
      %v4171 = vld [vmem:[%s1 + $0x8] sm:$0xff]
      %4172 = vrot.lane.b32.xlu0 %v4168, 127
      %v4173 = vpop.permute.xlu0 %4172
      %4174 = vrot.lane.b32.xlu0 %v4169, 127
      %v4175 = vpop.permute.xlu0 %4174
      %v4176 = vld [vmem:[%s333] sm:$0xff]
      %v4177 = vld [vmem:[%s333 + $0x8] sm:$0xff]
      %v4179 = vsel %vm336, %v4176, 0
      %v4182 = vsel %vm336, %v4177, 0
      %v4185 = vsel %vm343, %v4175, 0
      %4187 = vmatpush.msra.mxu0 0.0
      %4188 = vmatpush.msra.mxu0 0.0
      %4189 = vmatpush.msra.mxu0 0.0
      %4190 = vmatpush.msra.mxu0 0.0
      %4191 = vmatpush.msra.mxu0 0.0
      %4192 = vmatpush.msra.mxu0 0.0
      %4193 = vmatpush.msra.mxu0 0.0
      %4194 = vmatpush.msra.mxu0 0.0
      %4195 = vmatpush.msra.mxu0 0.0
      %4196 = vmatpush.msra.mxu0 0.0
      %4197 = vmatpush.msra.mxu0 0.0
      %4198 = vmatpush.msra.mxu0 0.0
      %4199 = vmatpush.msra.mxu0 0.0
      %4200 = vmatpush.msra.mxu0 0.0
      %4201 = vmatpush.msra.mxu0 %v4185
      %4202 = vmatpush.msra.mxu0 %v4173
      %4203 = vmatmul.f32.gmra.mxu0 %v4179
      %v4204 = vpop.f32.mrf.mxu0
      %v4205 = vadd.f32 0.0, %v4204
      %4206 = vmatmul.f32.gmra.mxu0 %v4182
      %v4207 = vpop.f32.mrf.mxu0
      %v4208 = vadd.f32 0.0, %v4207
      %4209 = vdwg.mxu0
      %v4211 = vsel %vm336, %v4170, 0
      %v4214 = vsel %vm336, %v4171, 0
      %v4217 = vsel %vm343, %v4169, 0
      %4219 = vmatpush.msra.mxu0 0.0
      %4220 = vmatpush.msra.mxu0 0.0
      %4221 = vmatpush.msra.mxu0 0.0
      %4222 = vmatpush.msra.mxu0 0.0
      %4223 = vmatpush.msra.mxu0 0.0
      %4224 = vmatpush.msra.mxu0 0.0
      %4225 = vmatpush.msra.mxu0 0.0
      %4226 = vmatpush.msra.mxu0 0.0
      %4227 = vmatpush.msra.mxu0 0.0
      %4228 = vmatpush.msra.mxu0 0.0
      %4229 = vmatpush.msra.mxu0 0.0
      %4230 = vmatpush.msra.mxu0 0.0
      %4231 = vmatpush.msra.mxu0 0.0
      %4232 = vmatpush.msra.mxu0 0.0
      %4233 = vmatpush.msra.mxu0 %v4217
      %4234 = vmatpush.msra.mxu0 %v4168
      %4235 = vmatmul.f32.gmra.mxu0 %v4211
      %v4236 = vpop.f32.mrf.mxu0
      %v4237 = vadd.f32 %v4205, %v4236
      %4238 = vmatmul.f32.gmra.mxu0 %v4214
      %v4239 = vpop.f32.mrf.mxu0
      %v4240 = vadd.f32 %v4208, %v4239
      %4241 = vdwg.mxu0
      %4242 = vrot.lane.b32.xlu0 %v4168, 126
      %v4243 = vpop.permute.xlu0 %4242
      %4244 = vrot.lane.b32.xlu0 %v4169, 126
      %v4245 = vpop.permute.xlu0 %4244
      %v4246 = vld [vmem:[%s406] sm:$0xff]
      %v4247 = vld [vmem:[%s406 + $0x8] sm:$0xff]
      %v4249 = vsel %vm336, %v4246, 0
      %v4252 = vsel %vm336, %v4247, 0
      %v4255 = vsel %vm343, %v4245, 0
      %4257 = vmatpush.msra.mxu0 0.0
      %4258 = vmatpush.msra.mxu0 0.0
      %4259 = vmatpush.msra.mxu0 0.0
      %4260 = vmatpush.msra.mxu0 0.0
      %4261 = vmatpush.msra.mxu0 0.0
      %4262 = vmatpush.msra.mxu0 0.0
      %4263 = vmatpush.msra.mxu0 0.0
      %4264 = vmatpush.msra.mxu0 0.0
      %4265 = vmatpush.msra.mxu0 0.0
      %4266 = vmatpush.msra.mxu0 0.0
      %4267 = vmatpush.msra.mxu0 0.0
      %4268 = vmatpush.msra.mxu0 0.0
      %4269 = vmatpush.msra.mxu0 0.0
      %4270 = vmatpush.msra.mxu0 0.0
      %4271 = vmatpush.msra.mxu0 %v4255
      %4272 = vmatpush.msra.mxu0 %v4243
      %4273 = vmatmul.f32.gmra.mxu0 %v4249
      %v4274 = vpop.f32.mrf.mxu0
      %v4275 = vadd.f32 0.0, %v4274
      %4276 = vmatmul.f32.gmra.mxu0 %v4252
      %v4277 = vpop.f32.mrf.mxu0
      %v4278 = vadd.f32 0.0, %v4277
      %4279 = vdwg.mxu0
      %v4280 = vadd.f32 %v4237, %v4275
      %v4281 = vadd.f32 %v4240, %v4278
      %v4282 = vld [vmem:[%s3] sm:$0xff]
      %v4283 = vld [vmem:[%s3 + $0x8] sm:$0xff]
      %4285 = vset.pattern.permute.xlu0 0
      %4286 = vperm.xlu0 %4285, %v4282
      %v4287 = vpop.permute.xlu0 %4286
      %4290 = vset.pattern.permute.xlu0 0
      %4291 = vperm.xlu0 %4290, %v4283
      %v4292 = vpop.permute.xlu0 %4291
      %v4294 = vadd.f32 %v4280, %v4287
      %v4295 = vadd.f32 %v4281, %v4292
      %v4296 = vmax.f32 %v4294, 0.0
      %v4297 = vmax.f32 %v4295, 0.0
      %s4298 = scalar_select %p4167, 1, 0
      %v4299 = vstv %s4298
      %vm4300 = vcmp.eq.s32.totalorder %v4299, 1
      %vm4301 = vmand %vm4300, %vm319
      %v4302 = vsel %vm4301, 1, 0
      %vm4303 = vcmp.eq.s32.totalorder %v4302, 1
      %v4304 = vsel %vm4303, %v4296, 0.0
      %v4305 = vsel %vm4303, %v4297, 0.0
      %v4306 = vld [vmem:[%s2] sm:$0x7]
      %4307 = vrot.lane.b32.xlu0 %v4304, 127
      %v4308 = vpop.permute.xlu0 %4307
      %4309 = vrot.lane.b32.xlu0 %v4305, 127
      %v4310 = vpop.permute.xlu0 %4309
      %v4311 = vld [vmem:[%s472] sm:$0x7]
      %v4313 = vsel %vm474, %v4311, 0
      %4315 = vmatpush.msra.mxu0 0.0
      %4316 = vmatpush.msra.mxu0 0.0
      %4317 = vmatpush.msra.mxu0 0.0
      %4318 = vmatpush.msra.mxu0 0.0
      %4319 = vmatpush.msra.mxu0 0.0
      %4320 = vmatpush.msra.mxu0 0.0
      %4321 = vmatpush.msra.mxu0 0.0
      %4322 = vmatpush.msra.mxu0 0.0
      %4323 = vmatpush.msra.mxu0 0.0
      %4324 = vmatpush.msra.mxu0 0.0
      %4325 = vmatpush.msra.mxu0 0.0
      %4326 = vmatpush.msra.mxu0 0.0
      %4327 = vmatpush.msra.mxu0 0.0
      %4328 = vmatpush.msra.mxu0 0.0
      %4329 = vmatpush.msra.mxu0 %v4310
      %4330 = vmatpush.msra.mxu0 %v4308
      %4331 = vmatmul.f32.gmra.mxu0 %v4313
      %v4332 = vpop.f32.mrf.mxu0
      %v4333 = vadd.f32 0.0, %v4332
      %4334 = vdwg.mxu0
      %v4336 = vsel %vm474, %v4306, 0
      %4338 = vmatpush.msra.mxu0 0.0
      %4339 = vmatpush.msra.mxu0 0.0
      %4340 = vmatpush.msra.mxu0 0.0
      %4341 = vmatpush.msra.mxu0 0.0
      %4342 = vmatpush.msra.mxu0 0.0
      %4343 = vmatpush.msra.mxu0 0.0
      %4344 = vmatpush.msra.mxu0 0.0
      %4345 = vmatpush.msra.mxu0 0.0
      %4346 = vmatpush.msra.mxu0 0.0
      %4347 = vmatpush.msra.mxu0 0.0
      %4348 = vmatpush.msra.mxu0 0.0
      %4349 = vmatpush.msra.mxu0 0.0
      %4350 = vmatpush.msra.mxu0 0.0
      %4351 = vmatpush.msra.mxu0 0.0
      %4352 = vmatpush.msra.mxu0 %v4305
      %4353 = vmatpush.msra.mxu0 %v4304
      %4354 = vmatmul.f32.gmra.mxu0 %v4336
      %v4355 = vpop.f32.mrf.mxu0
      %v4356 = vadd.f32 %v4333, %v4355
      %4357 = vdwg.mxu0
      %4358 = vrot.lane.b32.xlu0 %v4304, 126
      %v4359 = vpop.permute.xlu0 %4358
      %4360 = vrot.lane.b32.xlu0 %v4305, 126
      %v4361 = vpop.permute.xlu0 %4360
      %v4362 = vld [vmem:[%s525] sm:$0x7]
      %v4364 = vsel %vm474, %v4362, 0
      %4366 = vmatpush.msra.mxu0 0.0
      %4367 = vmatpush.msra.mxu0 0.0
      %4368 = vmatpush.msra.mxu0 0.0
      %4369 = vmatpush.msra.mxu0 0.0
      %4370 = vmatpush.msra.mxu0 0.0
      %4371 = vmatpush.msra.mxu0 0.0
      %4372 = vmatpush.msra.mxu0 0.0
      %4373 = vmatpush.msra.mxu0 0.0
      %4374 = vmatpush.msra.mxu0 0.0
      %4375 = vmatpush.msra.mxu0 0.0
      %4376 = vmatpush.msra.mxu0 0.0
      %4377 = vmatpush.msra.mxu0 0.0
      %4378 = vmatpush.msra.mxu0 0.0
      %4379 = vmatpush.msra.mxu0 0.0
      %4380 = vmatpush.msra.mxu0 %v4361
      %4381 = vmatpush.msra.mxu0 %v4359
      %4382 = vmatmul.f32.gmra.mxu0 %v4364
      %v4383 = vpop.f32.mrf.mxu0
      %v4384 = vadd.f32 0.0, %v4383
      %4385 = vdwg.mxu0
      %v4386 = vadd.f32 %v4356, %v4384
      %v4388 = vrot.slane %v4386, 2
      %v4390 = vadd.f32 %v4158, %v4388
      %4391 = vst.msk [vmem:[%s201 + $0xf] sm:$0x1] %vm913, %v4390
      %v4392 = vld [vmem:[%s201] sm:$0xff]
      %v4393 = vld [vmem:[%s201 + $0x8] sm:$0xff]
      %s4394 = sld [smem:[#allocation4]]
      %v4395 = vstv %s4394
      %v4396 = vadd.f32 %v4392, %v4395
      %v4397 = vadd.f32 %v4393, %v4395
      %v4398 = vmax.f32 %v4396, -60.0
      %v4399 = vmax.f32 %v4397, -60.0
      %v4400 = vsub.f32 0.0, %v4398
      %v4401 = vsub.f32 0.0, %v4399
      %v4402 = vmul.f32 %v4400, 1.442695
      %v4403 = vpow.pop %v4402
      %v4404 = vmul.f32 %v4401, 1.442695
      %v4405 = vpow.pop %v4404
      %v4406 = vadd.f32 %v4403, 1.0
      %v4407 = vadd.f32 %v4405, 1.0
      %v4408 = vmul.f32 %v4403, 0.01
      %v4409 = vmul.f32 %v4405, 0.01
      %v4410 = vadd.f32 %v4408, 10.0
      %v4411 = vadd.f32 %v4409, 10.0
      %v4412 = vrcp.pop %v4410
      %v4413 = vmul.f32 %v4410, %v4412
      %v4414 = vsub.f32 1.0, %v4413
      %v4415 = vmul.f32 %v4412, %v4414
      %v4416 = vadd.f32 %v4412, %v4415
      %vm4417 = vweird.f32 %v4410
      %vm4418 = vweird.f32 %v4412
      %vm4419 = vmor %vm4417, %vm4418
      %v4420 = vsel %vm4419, %v4412, %v4416
      %v4421 = vand.u32 2147483647, %v4410
      %vm4422 = vcmp.eq.f32.partialorder %v4421, 8.507059e+37
      %v4423 = vand.u32 %v4410, 2147483648
      %v4424 = vor.u32 1.1754944e-38, %v4423
      %v4425 = vsel %vm4422, %v4424, %v4420
      %v4426 = vmul.f32 %v4406, %v4425
      %v4427 = vrcp.pop %v4411
      %v4428 = vmul.f32 %v4411, %v4427
      %v4429 = vsub.f32 1.0, %v4428
      %v4430 = vmul.f32 %v4427, %v4429
      %v4431 = vadd.f32 %v4427, %v4430
      %vm4432 = vweird.f32 %v4411
      %vm4433 = vweird.f32 %v4427
      %vm4434 = vmor %vm4432, %vm4433
      %v4435 = vsel %vm4434, %v4427, %v4431
      %v4436 = vand.u32 2147483647, %v4411
      %vm4437 = vcmp.eq.f32.partialorder %v4436, 8.507059e+37
      %v4438 = vand.u32 %v4411, 2147483648
      %v4439 = vor.u32 1.1754944e-38, %v4438
      %v4440 = vsel %vm4437, %v4439, %v4435
      %v4441 = vmul.f32 %v4407, %v4440
      %vm4442 = vcmask 195584
      %4443 = vst.msk [vmem:[%s201] sm:$0xff] %vm4442, %v4426
      %4444 = vst.msk [vmem:[%s201 + $0x8] sm:$0xff] %vm4442, %v4441
      %s4445 = smul.u32 2, %s22
      %p4446 = scmp.lt.s32.totalorder %s21, 1
      %s4447 = scalar_select %p4446, %s21, 1
      %p4448 = scmp.lt.s32.totalorder %s4445, 5
      %s4449 = scalar_select %p4448, %s4445, 5
      %s4450 = smul.addr %s4447, 6
      %s4451 = sadd.s32 %s4449, %s4450
      %s4452 = smul.addr %s4451, 8
      %s4453 = scalar_lea.vmem %s5, %s4452
      // Predicated region
      $region89: #{depthnet_forward.1} parent=35 // pred_check
        %p4454 = pneg %p133
      $region90: #{depthnet_forward.1} parent=35 // pred_check_branch
        %4456 = sbr.rel (%p4454) target = $region92
      $region91: #{depthnet_forward.1} parent=35 // pred_region
        %s4457 = smul.u32 2, %s22
      $region92: #{depthnet_forward.1} parent=35 // pred_fallthru
        _
    $region36: #{depthnet_forward.1} parent=5 // pred_fallthru
      _
    %p4458 = scmp.le.s32.totalorder 2, %s12
    // Predicated region
    $region93: #{depthnet_forward.1} parent=5 // pred_check
      %p4459 = pneg %p4458
    $region94: #{depthnet_forward.1} parent=5 // pred_check_branch
      %4461 = sbr.rel (%p4459) target = $region96
    $region95: #{depthnet_forward.1} parent=5 // pred_region
      %s4462 = ssub.s32 %s12, 2
      // Predicated region
      $region97: #{depthnet_forward.1} parent=95 // pred_check
        %p4463 = pneg %p139
      $region98: #{depthnet_forward.1} parent=95 // pred_check_branch
        %4465 = sbr.rel (%p4463) target = $region100
      $region99: #{depthnet_forward.1} parent=95 // pred_region
        %s4466 = smul.u32 2, %s24
        %p4467 = scmp.lt.s32.totalorder %s23, 1
        %s4468 = scalar_select %p4467, %s23, 1
        %p4469 = scmp.lt.s32.totalorder %s4466, 5
        %s4470 = scalar_select %p4469, %s4466, 5
        %s4471 = smul.addr %s4468, 6
        %s4472 = sadd.s32 %s4470, %s4471
        %s4473 = smul.addr %s4472, 8
        %s4474 = scalar_lea.vmem %s5, %s4473
      $region100: #{depthnet_forward.1} parent=95 // pred_fallthru
        _
    $region96: #{depthnet_forward.1} parent=5 // pred_fallthru
      _
  $region6: #{depthnet_forward.1} parent=0 // loop_footer
    %s16 = sadd.s32 1, %s12
  $region7: #{depthnet_forward.1} parent=0 // loop_footer_branch
    %11 = sbr.rel target = $region3
  $region8: #{depthnet_forward.1} parent=0 // loop_exit
    _
  %4475 = vsyncmov [#allocation3]
  %s4476 = vpop.sfrf %4475
  %p4477 = scmp.eq.s32.totalorder %s4476, 0
  %p4478 = pneg %p4477
  %4480 = shalt.err (%p4478)
  %s4481 = scalar_lea.sflag [#allocation3], 1
  %4482 = vsyncmov %s4481
  %s4483 = vpop.sfrf %4482
  %p4484 = scmp.eq.s32.totalorder %s4483, 0
  %p4485 = pneg %p4484
  %4487 = shalt.err (%p4485)

</llo_original>
